<compile_context>
chip_gen: v5e
topology: v5e:2x2
jax: 0.10.0
libtpu: 0.0.40
codegen_flags: <defaults>
</compile_context>

<pallas_src>
import jax
import jax.numpy as jnp
from jax import lax
from jax.experimental import pallas as pl
from jax.experimental.pallas import tpu as pltpu


def _vmem():
    return pl.BlockSpec(memory_space=pltpu.MemorySpace.VMEM)


# ----------------------------------------------------------------------------
# Fused ATAE-LSTM kernel
#
# Packed gate lane layout (8 chunks of width H):
#   [ i_f | i_b | f_f | f_b | g_f | g_b | o_f | o_b ]
# so that a packed hidden state hp = [h_fwd | h_bwd] (B, 2H) times the packed
# recurrent weight (2H, 8H) yields both directions' gates in one matmul, and
# the i/f/g/o slices below are contiguous 2H-wide lane blocks shared by both
# directions.
# ----------------------------------------------------------------------------
def _atae_kernel(xa_ref, xm_ref, mask_ref,
                 a_wih_ref, a_whh_ref, a_b_ref,
                 l1_wih_ref, l1_whh_ref, l1_b_ref,
                 l2_wih_ref, l2_whh_ref, l2_b_ref,
                 we_ref, wa_ref, ba_ref,
                 w1_ref, b1_ref, w2_ref, b2_ref,
                 logits_ref, attn_ref,
                 gx_ref, o1f_ref, o1b_ref, o2f_ref, o2b_ref):
    A, B, _ = xa_ref.shape
    S = xm_ref.shape[0]
    H = a_whh_ref.shape[0] // 2
    H2 = 2 * H
    G8 = 8 * H

    # ------------------------------------------------------------------
    # One fused bidirectional LSTM recurrence.  gx_ref[t] holds the packed
    # input-projection pre-activations: lanes [:8H] are the forward-direction
    # contribution of x[t], lanes [8H:] the backward-direction contribution
    # of x[t].  Only h @ W_hh remains on the serial critical path.
    # ------------------------------------------------------------------
    def run_bilstm(T, whh_ref, outf_ref, outb_ref):
        whh = whh_ref[...]                                            # (2H, 8H)

        def step(t, carry):
            hp, cp = carry                                            # (B, 2H) packed [fwd|bwd]
            hw = jnp.dot(hp, whh, preferred_element_type=jnp.float32)  # (B, 8H) - one MXU push
            gx_t = gx_ref[t]                                          # fwd half used
            gx_r = gx_ref[T - 1 - t]                                  # bwd half used
            gates = hw + gx_t[:, :G8] + gx_r[:, G8:]                  # (B, 8H)
            sig = jax.nn.sigmoid(gates)                               # full-width EUP push
            th = jnp.tanh(gates)                                      # full-width EUP push
            i_g = sig[:, 0 * H2:1 * H2]
            f_g = sig[:, 1 * H2:2 * H2]
            g_g = th[:, 2 * H2:3 * H2]
            o_g = sig[:, 3 * H2:4 * H2]
            cp_new = f_g * cp + i_g * g_g                             # (B, 2H) packed
            hp_new = o_g * jnp.tanh(cp_new)                           # (B, 2H) packed
            if outf_ref is not None:
                outf_ref[t] = hp_new[:, :H]                           # fwd output at time t
                outb_ref[T - 1 - t] = hp_new[:, H:]                   # bwd output at time T-1-t
            return hp_new, cp_new

        z = jnp.zeros((B, H2), jnp.float32)
        hp, _ = lax.fori_loop(0, T, step, (z, z), unroll=True)
        return hp                                                     # [h_fwd_last | h_bwd_last]

    # ---------------- aspect bi-LSTM (only final hidden states needed) ------
    a_wih = a_wih_ref[...]
    a_b = a_b_ref[...]
    for t in range(A):                                                # hoisted input projections
        gx_ref[t] = jnp.dot(xa_ref[t], a_wih,
                            preferred_element_type=jnp.float32) + a_b
    aspect_repr = run_bilstm(A, a_whh_ref, None, None)                # (B, 2H)

    # ---------------- main bi-LSTM, layer 1 ----------------------------------
    l1_wih = l1_wih_ref[...]
    l1_b = l1_b_ref[...]
    for t in range(S):
        gx_ref[t] = jnp.dot(xm_ref[t], l1_wih,
                            preferred_element_type=jnp.float32) + l1_b
    run_bilstm(S, l1_whh_ref, o1f_ref, o1b_ref)

    # ---------------- main bi-LSTM, layer 2 (input = [fwd | bwd] of layer 1) -
    l2_wih = l2_wih_ref[...]                                          # (2H, 16H)
    l2_b = l2_b_ref[...]
    for t in range(S):
        gx_ref[t] = (jnp.dot(o1f_ref[t], l2_wih[:H],
                             preferred_element_type=jnp.float32)
                     + jnp.dot(o1b_ref[t], l2_wih[H:],
                               preferred_element_type=jnp.float32)
                     + l2_b)
    run_bilstm(S, l2_whh_ref, o2f_ref, o2b_ref)

    # ---------------- ATAE attention + classifier head ----------------------
    o2f = o2f_ref[...]                                                # (S, B, H) fwd half of enc
    o2b = o2b_ref[...]                                                # (S, B, H) bwd half of enc
    we = we_ref[...]                                                  # (1, 2H) attention row
    se_sb = (jnp.sum(o2f * we[:, :H], axis=2)
             + jnp.sum(o2b * we[:, H:], axis=2))                      # (S, B)
    score_enc = jnp.transpose(se_sb)                                  # (B, S)
    score_asp = jnp.dot(aspect_repr, wa_ref[...],
                        preferred_element_type=jnp.float32)           # (B, 1)
    scores = score_enc + score_asp + ba_ref[...]                      # (B, S)
    scores = jnp.where(mask_ref[...] == 0.0, -1e9, scores)

    m = jnp.max(scores, axis=1, keepdims=True)
    e = jnp.exp(scores - m)
    attn = e / jnp.sum(e, axis=1, keepdims=True)                      # (B, S)
    attn_ref[...] = attn

    attn_sb = jnp.transpose(attn)                                     # (S, B)
    ctx_f = jnp.sum(attn_sb[:, :, None] * o2f, axis=0)                # (B, H)
    ctx_b = jnp.sum(attn_sb[:, :, None] * o2b, axis=0)                # (B, H)

    # dropout = identity (inference)
    # TODO(synk): training-mode dropout is not implemented (eval semantics).
    w1 = w1_ref[...]                                                  # (2H, H)
    h1 = jnp.maximum(
        jnp.dot(ctx_f, w1[:H], preferred_element_type=jnp.float32)
        + jnp.dot(ctx_b, w1[H:], preferred_element_type=jnp.float32)
        + b1_ref[...], 0.0)
    logits_ref[...] = (jnp.dot(h1, w2_ref[...],
                               preferred_element_type=jnp.float32)
                       + b2_ref[...])


# ----------------------------------------------------------------------------
# One-time weight packing (plain JAX, done outside the forward)
# ----------------------------------------------------------------------------
def _expand_gate_cols(w, H, offset):
    """Scatter the 4 gate blocks (i,f,g,o) of w:(D,4H) into a (D,8H) layout
    with per-gate [fwd|bwd] lane pairs.  offset 0 -> fwd lanes, 1 -> bwd."""
    D = w.shape[0]
    out = jnp.zeros((D, 8 * H), w.dtype)
    for k in range(4):
        out = out.at[:, (2 * k + offset) * H:(2 * k + offset + 1) * H].set(
            w[:, k * H:(k + 1) * H])
    return out


def _pack_bilstm_layer(p, H):
    wih = jnp.concatenate([_expand_gate_cols(p["wih_f"], H, 0),
                           _expand_gate_cols(p["wih_b"], H, 1)], axis=1)   # (D, 16H)
    b = jnp.concatenate([_expand_gate_cols(p["b_f"], H, 0),
                         _expand_gate_cols(p["b_b"], H, 1)], axis=1)       # (1, 16H)
    whh = jnp.concatenate([_expand_gate_cols(p["whh_f"], H, 0),
                           _expand_gate_cols(p["whh_b"], H, 1)], axis=0)   # (2H, 8H)
    return {"wih": wih, "whh": whh, "b": b}


def pack_params(params):
    H = params["fc1_w"].shape[1]
    return {
        "embedding": params["embedding"],
        "aspect": _pack_bilstm_layer(params["aspect_lstm"], H),
        "layers": [_pack_bilstm_layer(p, H) for p in params["lstm_layers"]],
        "we_row": jnp.transpose(params["w_att_enc"]),      # (1, 2H)
        "wa_col": params["w_att_asp"],                     # (2H, 1)
        "b_att": params["b_att"],                          # (1, 1)
        "fc1_w": params["fc1_w"], "fc1_b": params["fc1_b"],
        "fc2_w": params["fc2_w"], "fc2_b": params["fc2_b"],
    }


# ----------------------------------------------------------------------------
# Forward (XLA glue + single fused Pallas kernel)
# ----------------------------------------------------------------------------
def atae_lstm_forward(packed, sentence, aspect):
    emb = packed["embedding"]
    sent_emb = jnp.take(emb, sentence, axis=0)             # (B, S, E)
    asp_emb = jnp.take(emb, aspect, axis=0)                # (B, A, E)
    mask = (sentence != 0).astype(jnp.float32)             # (B, S)

    B, S, E = sent_emb.shape
    A = asp_emb.shape[1]
    H = packed["fc1_w"].shape[1]
    C = packed["fc2_w"].shape[1]

    asp_mean = jnp.mean(asp_emb, axis=1, keepdims=True)    # (B, 1, E)
    combined = jnp.concatenate(
        [sent_emb, jnp.broadcast_to(asp_mean, (B, S, E))], axis=2)   # (B, S, 2E)
    xm = jnp.transpose(combined, (1, 0, 2))                # (S, B, 2E) time-major
    xa = jnp.transpose(asp_emb, (1, 0, 2))                 # (A, B, E)  time-major

    l1, l2 = packed["layers"]                              # 2-layer main LSTM
    tmax = max(S, A)

    logits, attn = pl.pallas_call(
        _atae_kernel,
        out_shape=(jax.ShapeDtypeStruct((B, C), jnp.float32),
                   jax.ShapeDtypeStruct((B, S), jnp.float32)),
        in_specs=[_vmem()] * 19,
        out_specs=(_vmem(), _vmem()),
        scratch_shapes=[
            pltpu.VMEM((tmax, B, 16 * H), jnp.float32),    # packed gate pre-activations
            pltpu.VMEM((S, B, H), jnp.float32),            # layer-1 fwd outputs
            pltpu.VMEM((S, B, H), jnp.float32),            # layer-1 bwd outputs
            pltpu.VMEM((S, B, H), jnp.float32),            # layer-2 fwd outputs
            pltpu.VMEM((S, B, H), jnp.float32),            # layer-2 bwd outputs
        ],
    )(xa, xm, mask,
      packed["aspect"]["wih"], packed["aspect"]["whh"], packed["aspect"]["b"],
      l1["wih"], l1["whh"], l1["b"],
      l2["wih"], l2["whh"], l2["b"],
      packed["we_row"], packed["wa_col"], packed["b_att"],
      packed["fc1_w"], packed["fc1_b"], packed["fc2_w"], packed["fc2_b"])
    return logits, attn


# ----------------------------------------------------------------------------
# Pure-JAX reference (same math) for correctness checking
# ----------------------------------------------------------------------------
def _ref_bilstm(x_sbd, p):
    S, B, _ = x_sbd.shape
    H = p["whh_f"].shape[0]

    def cell(x_t, h, c, wih, whh, b):
        gates = x_t @ wih + h @ whh + b
        i = jax.nn.sigmoid(gates[:, :H])
        f = jax.nn.sigmoid(gates[:, H:2 * H])
        g = jnp.tanh(gates[:, 2 * H:3 * H])
        o = jax.nn.sigmoid(gates[:, 3 * H:])
        c = f * c + i * g
        h = o * jnp.tanh(c)
        return h, c

    def scan_dir(xs, wih, whh, b):
        def step(carry, x_t):
            h, c = cell(x_t, carry[0], carry[1], wih, whh, b)
            return (h, c), h
        init = (jnp.zeros((B, H), jnp.float32), jnp.zeros((B, H), jnp.float32))
        _, hs = lax.scan(step, init, xs)
        return hs

    out_f = scan_dir(x_sbd, p["wih_f"], p["whh_f"], p["b_f"])
    out_b = scan_dir(x_sbd[::-1], p["wih_b"], p["whh_b"], p["b_b"])[::-1]
    return out_f, out_b


def ref_forward(params, sentence, aspect):
    emb = params["embedding"]
    sent_emb = jnp.take(emb, sentence, axis=0)
    asp_emb = jnp.take(emb, aspect, axis=0)
    mask = (sentence != 0).astype(jnp.float32)

    af, ab = _ref_bilstm(jnp.transpose(asp_emb, (1, 0, 2)), params["aspect_lstm"])
    aspect_repr = jnp.concatenate([af[-1], ab[0]], axis=1)

    B, S, E = sent_emb.shape
    asp_mean = jnp.mean(asp_emb, axis=1, keepdims=True)
    combined = jnp.concatenate([sent_emb, jnp.broadcast_to(asp_mean, (B, S, E))], axis=2)

    x = jnp.transpose(combined, (1, 0, 2))
    for layer_p in params["lstm_layers"]:
        f, b = _ref_bilstm(x, layer_p)
        x = jnp.concatenate([f, b], axis=2)
    lstm_out = jnp.transpose(x, (1, 0, 2))

    scores = (lstm_out @ params["w_att_enc"])[..., 0] \
        + (aspect_repr @ params["w_att_asp"]) + params["b_att"]
    scores = jnp.where(mask == 0.0, -1e9, scores)
    attn = jax.nn.softmax(scores, axis=1)
    weighted = jnp.einsum("bs,bsd->bd", attn, lstm_out)
    h1 = jax.nn.relu(weighted @ params["fc1_w"] + params["fc1_b"])
    logits = h1 @ params["fc2_w"] + params["fc2_b"]
    return logits, attn


# ----------------------------------------------------------------------------
# Deterministic parameter init (shapes follow the PyTorch module)
# ----------------------------------------------------------------------------
def init_params(key, vocab_size, embed_dim, hidden_dim, num_classes, num_layers=2):
    keys = iter(jax.random.split(key, 64))

    def nrm(shape, scale=0.1):
        return (scale * jax.random.normal(next(keys), shape)).astype(jnp.float32)

    H, E = hidden_dim, embed_dim
    embedding = nrm((vocab_size, E)).at[0].set(0.0)   # padding_idx=0 -> zero row

    def lstm_layer_params(in_dim):
        # weights stored transposed (in_dim, 4H) / (H, 4H); bias = b_ih + b_hh -> (1, 4H)
        return {
            "wih_f": nrm((in_dim, 4 * H)), "whh_f": nrm((H, 4 * H)), "b_f": nrm((1, 4 * H)),
            "wih_b": nrm((in_dim, 4 * H)), "whh_b": nrm((H, 4 * H)), "b_b": nrm((1, 4 * H)),
        }

    w_att = nrm((4 * H, 1))   # nn.Linear(4H, 1) weight (transposed)
    params = {
        "embedding": embedding,
        "aspect_lstm": lstm_layer_params(E),
        "lstm_layers": [lstm_layer_params(2 * E)]
        + [lstm_layer_params(2 * H) for _ in range(num_layers - 1)],
        "w_att_enc": w_att[:2 * H],        # multiplies encoder_outputs part
        "w_att_asp": w_att[2 * H:],        # multiplies repeated aspect_repr part
        "b_att": nrm((1, 1)),
        "fc1_w": nrm((2 * H, H)), "fc1_b": nrm((1, H)),
        "fc2_w": nrm((H, num_classes)), "fc2_b": nrm((1, num_classes)),
    }
    return params


if __name__ == "__main__":
    VOCAB, E, H, C = 50, 32, 32, 3
    B, S, A = 2, 8, 4

    key = jax.random.PRNGKey(0)
    kp, ks, ka = jax.random.split(key, 3)

    params = init_params(kp, VOCAB, E, H, C, num_layers=2)
    packed = pack_params(params)

    sentence = jax.random.randint(ks, (B, S), 1, VOCAB).astype(jnp.int32)
    sentence = sentence.at[0, -2:].set(0)      # padding tokens -> exercises the mask
    sentence = sentence.at[1, -1:].set(0)
    aspect = jax.random.randint(ka, (B, A), 1, VOCAB).astype(jnp.int32)

    fwd = jax.jit(atae_lstm_forward)
    logits, attn = fwd(packed, sentence, aspect)
    jax.block_until_ready((logits, attn))

    logits_ref, attn_ref = jax.jit(ref_forward)(params, sentence, aspect)
    jax.block_until_ready((logits_ref, attn_ref))

    assert logits.shape == (B, C) and attn.shape == (B, S)
    assert jnp.allclose(logits, logits_ref, atol=2e-2, rtol=2e-2)
    assert jnp.allclose(attn, attn_ref, atol=2e-2, rtol=2e-2)

    print("KERNEL_OK")
</pallas_src>

<mosaic_0001>
module attributes {stable_mosaic.version = 11 : i64} {
  func.func @_atae_kernel(%arg0: memref<4x2x32xf32, #tpu.memory_space<vmem>>, %arg1: memref<8x2x64xf32, #tpu.memory_space<vmem>>, %arg2: memref<2x8xf32, #tpu.memory_space<vmem>>, %arg3: memref<32x512xf32, #tpu.memory_space<vmem>>, %arg4: memref<64x256xf32, #tpu.memory_space<vmem>>, %arg5: memref<1x512xf32, #tpu.memory_space<vmem>>, %arg6: memref<64x512xf32, #tpu.memory_space<vmem>>, %arg7: memref<64x256xf32, #tpu.memory_space<vmem>>, %arg8: memref<1x512xf32, #tpu.memory_space<vmem>>, %arg9: memref<64x512xf32, #tpu.memory_space<vmem>>, %arg10: memref<64x256xf32, #tpu.memory_space<vmem>>, %arg11: memref<1x512xf32, #tpu.memory_space<vmem>>, %arg12: memref<1x64xf32, #tpu.memory_space<vmem>>, %arg13: memref<64x1xf32, #tpu.memory_space<vmem>>, %arg14: memref<1x1xf32, #tpu.memory_space<vmem>>, %arg15: memref<64x32xf32, #tpu.memory_space<vmem>>, %arg16: memref<1x32xf32, #tpu.memory_space<vmem>>, %arg17: memref<32x3xf32, #tpu.memory_space<vmem>>, %arg18: memref<1x3xf32, #tpu.memory_space<vmem>>, %arg19: memref<2x3xf32, #tpu.memory_space<vmem>>, %arg20: memref<2x8xf32, #tpu.memory_space<vmem>>, %arg21: memref<8x2x512xf32, #tpu.memory_space<vmem>>, %arg22: memref<8x2x32xf32, #tpu.memory_space<vmem>>, %arg23: memref<8x2x32xf32, #tpu.memory_space<vmem>>, %arg24: memref<8x2x32xf32, #tpu.memory_space<vmem>>, %arg25: memref<8x2x32xf32, #tpu.memory_space<vmem>>) attributes {dimension_semantics = [], scalar_prefetch = 0 : i64, scratch_operands = 5 : i64, tpu.core_type = #tpu.core_type<tc>} {
    %c0 = arith.constant 0 : index
    %c0_0 = arith.constant 0 : index
    %0 = vector.load %arg3[%c0, %c0_0] : memref<32x512xf32, #tpu.memory_space<vmem>>, vector<32x512xf32>
    %c0_1 = arith.constant 0 : index
    %c0_2 = arith.constant 0 : index
    %1 = vector.load %arg5[%c0_1, %c0_2] : memref<1x512xf32, #tpu.memory_space<vmem>>, vector<1x512xf32>
    %c0_3 = arith.constant 0 : index
    %c0_4 = arith.constant 0 : index
    %c0_5 = arith.constant 0 : index
    %2 = vector.load %arg0[%c0_3, %c0_4, %c0_5] : memref<4x2x32xf32, #tpu.memory_space<vmem>>, vector<1x2x32xf32>
    %3 = vector.shape_cast %2 : vector<1x2x32xf32> to vector<2x32xf32>
    %cst = arith.constant dense<0.000000e+00> : vector<2x512xf32>
    %4 = tpu.matmul %3, %0, %cst {dimension_numbers = #tpu.dot_dimension_numbers<[1], [0], [0], [1], [0, 0, 1, 1], [], []>} : vector<2x32xf32>, vector<32x512xf32>, vector<2x512xf32> -> vector<2x512xf32>
    %5 = vector.broadcast %1 : vector<1x512xf32> to vector<2x512xf32>
    %6 = arith.addf %4, %5 : vector<2x512xf32>
    %c0_6 = arith.constant 0 : index
    %c0_7 = arith.constant 0 : index
    %c0_8 = arith.constant 0 : index
    %7 = vector.load %arg21[%c0_6, %c0_7, %c0_8] : memref<8x2x512xf32, #tpu.memory_space<vmem>>, vector<1x2x512xf32>
    %8 = vector.shape_cast %7 : vector<1x2x512xf32> to vector<2x512xf32>
    %9 = vector.shape_cast %6 : vector<2x512xf32> to vector<1x2x512xf32>
    tpu.vector_store %arg21[%c0_6, %c0_7, %c0_8], %9 {strides = array<i32>} : memref<8x2x512xf32, #tpu.memory_space<vmem>>, vector<1x2x512xf32>,
    %c1 = arith.constant 1 : index
    %c0_9 = arith.constant 0 : index
    %c0_10 = arith.constant 0 : index
    %10 = vector.load %arg0[%c1, %c0_9, %c0_10] : memref<4x2x32xf32, #tpu.memory_space<vmem>>, vector<1x2x32xf32>
    %11 = vector.shape_cast %10 : vector<1x2x32xf32> to vector<2x32xf32>
    %cst_11 = arith.constant dense<0.000000e+00> : vector<2x512xf32>
    %12 = tpu.matmul %11, %0, %cst_11 {dimension_numbers = #tpu.dot_dimension_numbers<[1], [0], [0], [1], [0, 0, 1, 1], [], []>} : vector<2x32xf32>, vector<32x512xf32>, vector<2x512xf32> -> vector<2x512xf32>
    %13 = vector.broadcast %1 : vector<1x512xf32> to vector<2x512xf32>
    %14 = arith.addf %12, %13 : vector<2x512xf32>
    %c1_12 = arith.constant 1 : index
    %c0_13 = arith.constant 0 : index
    %c0_14 = arith.constant 0 : index
    %15 = vector.load %arg21[%c1_12, %c0_13, %c0_14] : memref<8x2x512xf32, #tpu.memory_space<vmem>>, vector<1x2x512xf32>
    %16 = vector.shape_cast %15 : vector<1x2x512xf32> to vector<2x512xf32>
    %17 = vector.shape_cast %14 : vector<2x512xf32> to vector<1x2x512xf32>
    tpu.vector_store %arg21[%c1_12, %c0_13, %c0_14], %17 {strides = array<i32>} : memref<8x2x512xf32, #tpu.memory_space<vmem>>, vector<1x2x512xf32>,
    %c2 = arith.constant 2 : index
    %c0_15 = arith.constant 0 : index
    %c0_16 = arith.constant 0 : index
    %18 = vector.load %arg0[%c2, %c0_15, %c0_16] : memref<4x2x32xf32, #tpu.memory_space<vmem>>, vector<1x2x32xf32>
    %19 = vector.shape_cast %18 : vector<1x2x32xf32> to vector<2x32xf32>
    %cst_17 = arith.constant dense<0.000000e+00> : vector<2x512xf32>
    %20 = tpu.matmul %19, %0, %cst_17 {dimension_numbers = #tpu.dot_dimension_numbers<[1], [0], [0], [1], [0, 0, 1, 1], [], []>} : vector<2x32xf32>, vector<32x512xf32>, vector<2x512xf32> -> vector<2x512xf32>
    %21 = vector.broadcast %1 : vector<1x512xf32> to vector<2x512xf32>
    %22 = arith.addf %20, %21 : vector<2x512xf32>
    %c2_18 = arith.constant 2 : index
    %c0_19 = arith.constant 0 : index
    %c0_20 = arith.constant 0 : index
    %23 = vector.load %arg21[%c2_18, %c0_19, %c0_20] : memref<8x2x512xf32, #tpu.memory_space<vmem>>, vector<1x2x512xf32>
    %24 = vector.shape_cast %23 : vector<1x2x512xf32> to vector<2x512xf32>
    %25 = vector.shape_cast %22 : vector<2x512xf32> to vector<1x2x512xf32>
    tpu.vector_store %arg21[%c2_18, %c0_19, %c0_20], %25 {strides = array<i32>} : memref<8x2x512xf32, #tpu.memory_space<vmem>>, vector<1x2x512xf32>,
    %c3 = arith.constant 3 : index
    %c0_21 = arith.constant 0 : index
    %c0_22 = arith.constant 0 : index
    %26 = vector.load %arg0[%c3, %c0_21, %c0_22] : memref<4x2x32xf32, #tpu.memory_space<vmem>>, vector<1x2x32xf32>
    %27 = vector.shape_cast %26 : vector<1x2x32xf32> to vector<2x32xf32>
    %cst_23 = arith.constant dense<0.000000e+00> : vector<2x512xf32>
    %28 = tpu.matmul %27, %0, %cst_23 {dimension_numbers = #tpu.dot_dimension_numbers<[1], [0], [0], [1], [0, 0, 1, 1], [], []>} : vector<2x32xf32>, vector<32x512xf32>, vector<2x512xf32> -> vector<2x512xf32>
    %29 = vector.broadcast %1 : vector<1x512xf32> to vector<2x512xf32>
    %30 = arith.addf %28, %29 : vector<2x512xf32>
    %c3_24 = arith.constant 3 : index
    %c0_25 = arith.constant 0 : index
    %c0_26 = arith.constant 0 : index
    %31 = vector.load %arg21[%c3_24, %c0_25, %c0_26] : memref<8x2x512xf32, #tpu.memory_space<vmem>>, vector<1x2x512xf32>
    %32 = vector.shape_cast %31 : vector<1x2x512xf32> to vector<2x512xf32>
    %33 = vector.shape_cast %30 : vector<2x512xf32> to vector<1x2x512xf32>
    tpu.vector_store %arg21[%c3_24, %c0_25, %c0_26], %33 {strides = array<i32>} : memref<8x2x512xf32, #tpu.memory_space<vmem>>, vector<1x2x512xf32>,
    %c0_27 = arith.constant 0 : index
    %c0_28 = arith.constant 0 : index
    %34 = vector.load %arg4[%c0_27, %c0_28] : memref<64x256xf32, #tpu.memory_space<vmem>>, vector<64x256xf32>
    %cst_29 = arith.constant 0.000000e+00 : f32
    %35 = vector.broadcast %cst_29 : f32 to vector<2x64xf32>
    %c0_i32 = arith.constant 0 : i32
    %cst_30 = arith.constant dense<0.000000e+00> : vector<2x256xf32>
    %36 = tpu.matmul %35, %34, %cst_30 {dimension_numbers = #tpu.dot_dimension_numbers<[1], [0], [0], [1], [0, 0, 1, 1], [], []>} : vector<2x64xf32>, vector<64x256xf32>, vector<2x256xf32> -> vector<2x256xf32>
    %37 = arith.index_cast %c0_i32 : i32 to index
    %c0_31 = arith.constant 0 : index
    %c0_32 = arith.constant 0 : index
    %38 = vector.load %arg21[%37, %c0_31, %c0_32] : memref<8x2x512xf32, #tpu.memory_space<vmem>>, vector<1x2x512xf32>
    %39 = vector.shape_cast %38 : vector<1x2x512xf32> to vector<2x512xf32>
    %c3_i32 = arith.constant 3 : i32
    %40 = arith.subi %c3_i32, %c0_i32 : i32
    %41 = arith.index_cast %40 : i32 to index
    %c0_33 = arith.constant 0 : index
    %c0_34 = arith.constant 0 : index
    %42 = vector.load %arg21[%41, %c0_33, %c0_34] : memref<8x2x512xf32, #tpu.memory_space<vmem>>, vector<1x2x512xf32>
    %43 = vector.shape_cast %42 : vector<1x2x512xf32> to vector<2x512xf32>
    %44 = vector.extract_strided_slice %39 {offsets = [0, 0], sizes = [2, 256], strides = [1, 1]} : vector<2x512xf32> to vector<2x256xf32>
    %45 = arith.addf %36, %44 : vector<2x256xf32>
    %46 = vector.extract_strided_slice %43 {offsets = [0, 256], sizes = [2, 256], strides = [1, 1]} : vector<2x512xf32> to vector<2x256xf32>
    %47 = arith.addf %45, %46 : vector<2x256xf32>
    %48 = arith.negf %47 : vector<2x256xf32>
    %49 = math.exp %48 : vector<2x256xf32>
    %cst_35 = arith.constant 1.000000e+00 : f32
    %50 = vector.broadcast %cst_35 : f32 to vector<2x256xf32>
    %51 = arith.addf %50, %49 : vector<2x256xf32>
    %52 = arith.divf %50, %51 : vector<2x256xf32>
    %53 = math.tanh %47 : vector<2x256xf32>
    %54 = vector.extract_strided_slice %52 {offsets = [0, 0], sizes = [2, 64], strides = [1, 1]} : vector<2x256xf32> to vector<2x64xf32>
    %55 = vector.extract_strided_slice %52 {offsets = [0, 64], sizes = [2, 64], strides = [1, 1]} : vector<2x256xf32> to vector<2x64xf32>
    %56 = vector.extract_strided_slice %53 {offsets = [0, 128], sizes = [2, 64], strides = [1, 1]} : vector<2x256xf32> to vector<2x64xf32>
    %57 = vector.extract_strided_slice %52 {offsets = [0, 192], sizes = [2, 64], strides = [1, 1]} : vector<2x256xf32> to vector<2x64xf32>
    %58 = arith.mulf %55, %35 : vector<2x64xf32>
    %59 = arith.mulf %54, %56 : vector<2x64xf32>
    %60 = arith.addf %58, %59 : vector<2x64xf32>
    %61 = math.tanh %60 : vector<2x64xf32>
    %62 = arith.mulf %57, %61 : vector<2x64xf32>
    %c1_i32 = arith.constant 1 : i32
    %cst_36 = arith.constant dense<0.000000e+00> : vector<2x256xf32>
    %63 = tpu.matmul %62, %34, %cst_36 {dimension_numbers = #tpu.dot_dimension_numbers<[1], [0], [0], [1], [0, 0, 1, 1], [], []>} : vector<2x64xf32>, vector<64x256xf32>, vector<2x256xf32> -> vector<2x256xf32>
    %64 = arith.index_cast %c1_i32 : i32 to index
    %c0_37 = arith.constant 0 : index
    %c0_38 = arith.constant 0 : index
    %65 = vector.load %arg21[%64, %c0_37, %c0_38] : memref<8x2x512xf32, #tpu.memory_space<vmem>>, vector<1x2x512xf32>
    %66 = vector.shape_cast %65 : vector<1x2x512xf32> to vector<2x512xf32>
    %c3_i32_39 = arith.constant 3 : i32
    %67 = arith.subi %c3_i32_39, %c1_i32 : i32
    %68 = arith.index_cast %67 : i32 to index
    %c0_40 = arith.constant 0 : index
    %c0_41 = arith.constant 0 : index
    %69 = vector.load %arg21[%68, %c0_40, %c0_41] : memref<8x2x512xf32, #tpu.memory_space<vmem>>, vector<1x2x512xf32>
    %70 = vector.shape_cast %69 : vector<1x2x512xf32> to vector<2x512xf32>
    %71 = vector.extract_strided_slice %66 {offsets = [0, 0], sizes = [2, 256], strides = [1, 1]} : vector<2x512xf32> to vector<2x256xf32>
    %72 = arith.addf %63, %71 : vector<2x256xf32>
    %73 = vector.extract_strided_slice %70 {offsets = [0, 256], sizes = [2, 256], strides = [1, 1]} : vector<2x512xf32> to vector<2x256xf32>
    %74 = arith.addf %72, %73 : vector<2x256xf32>
    %75 = arith.negf %74 : vector<2x256xf32>
    %76 = math.exp %75 : vector<2x256xf32>
    %cst_42 = arith.constant 1.000000e+00 : f32
    %77 = vector.broadcast %cst_42 : f32 to vector<2x256xf32>
    %78 = arith.addf %77, %76 : vector<2x256xf32>
    %79 = arith.divf %77, %78 : vector<2x256xf32>
    %80 = math.tanh %74 : vector<2x256xf32>
    %81 = vector.extract_strided_slice %79 {offsets = [0, 0], sizes = [2, 64], strides = [1, 1]} : vector<2x256xf32> to vector<2x64xf32>
    %82 = vector.extract_strided_slice %79 {offsets = [0, 64], sizes = [2, 64], strides = [1, 1]} : vector<2x256xf32> to vector<2x64xf32>
    %83 = vector.extract_strided_slice %80 {offsets = [0, 128], sizes = [2, 64], strides = [1, 1]} : vector<2x256xf32> to vector<2x64xf32>
    %84 = vector.extract_strided_slice %79 {offsets = [0, 192], sizes = [2, 64], strides = [1, 1]} : vector<2x256xf32> to vector<2x64xf32>
    %85 = arith.mulf %82, %60 : vector<2x64xf32>
    %86 = arith.mulf %81, %83 : vector<2x64xf32>
    %87 = arith.addf %85, %86 : vector<2x64xf32>
    %88 = math.tanh %87 : vector<2x64xf32>
    %89 = arith.mulf %84, %88 : vector<2x64xf32>
    %c2_i32 = arith.constant 2 : i32
    %cst_43 = arith.constant dense<0.000000e+00> : vector<2x256xf32>
    %90 = tpu.matmul %89, %34, %cst_43 {dimension_numbers = #tpu.dot_dimension_numbers<[1], [0], [0], [1], [0, 0, 1, 1], [], []>} : vector<2x64xf32>, vector<64x256xf32>, vector<2x256xf32> -> vector<2x256xf32>
    %91 = arith.index_cast %c2_i32 : i32 to index
    %c0_44 = arith.constant 0 : index
    %c0_45 = arith.constant 0 : index
    %92 = vector.load %arg21[%91, %c0_44, %c0_45] : memref<8x2x512xf32, #tpu.memory_space<vmem>>, vector<1x2x512xf32>
    %93 = vector.shape_cast %92 : vector<1x2x512xf32> to vector<2x512xf32>
    %c3_i32_46 = arith.constant 3 : i32
    %94 = arith.subi %c3_i32_46, %c2_i32 : i32
    %95 = arith.index_cast %94 : i32 to index
    %c0_47 = arith.constant 0 : index
    %c0_48 = arith.constant 0 : index
    %96 = vector.load %arg21[%95, %c0_47, %c0_48] : memref<8x2x512xf32, #tpu.memory_space<vmem>>, vector<1x2x512xf32>
    %97 = vector.shape_cast %96 : vector<1x2x512xf32> to vector<2x512xf32>
    %98 = vector.extract_strided_slice %93 {offsets = [0, 0], sizes = [2, 256], strides = [1, 1]} : vector<2x512xf32> to vector<2x256xf32>
    %99 = arith.addf %90, %98 : vector<2x256xf32>
    %100 = vector.extract_strided_slice %97 {offsets = [0, 256], sizes = [2, 256], strides = [1, 1]} : vector<2x512xf32> to vector<2x256xf32>
    %101 = arith.addf %99, %100 : vector<2x256xf32>
    %102 = arith.negf %101 : vector<2x256xf32>
    %103 = math.exp %102 : vector<2x256xf32>
    %cst_49 = arith.constant 1.000000e+00 : f32
    %104 = vector.broadcast %cst_49 : f32 to vector<2x256xf32>
    %105 = arith.addf %104, %103 : vector<2x256xf32>
    %106 = arith.divf %104, %105 : vector<2x256xf32>
    %107 = math.tanh %101 : vector<2x256xf32>
    %108 = vector.extract_strided_slice %106 {offsets = [0, 0], sizes = [2, 64], strides = [1, 1]} : vector<2x256xf32> to vector<2x64xf32>
    %109 = vector.extract_strided_slice %106 {offsets = [0, 64], sizes = [2, 64], strides = [1, 1]} : vector<2x256xf32> to vector<2x64xf32>
    %110 = vector.extract_strided_slice %107 {offsets = [0, 128], sizes = [2, 64], strides = [1, 1]} : vector<2x256xf32> to vector<2x64xf32>
    %111 = vector.extract_strided_slice %106 {offsets = [0, 192], sizes = [2, 64], strides = [1, 1]} : vector<2x256xf32> to vector<2x64xf32>
    %112 = arith.mulf %109, %87 : vector<2x64xf32>
    %113 = arith.mulf %108, %110 : vector<2x64xf32>
    %114 = arith.addf %112, %113 : vector<2x64xf32>
    %115 = math.tanh %114 : vector<2x64xf32>
    %116 = arith.mulf %111, %115 : vector<2x64xf32>
    %c3_i32_50 = arith.constant 3 : i32
    %cst_51 = arith.constant dense<0.000000e+00> : vector<2x256xf32>
    %117 = tpu.matmul %116, %34, %cst_51 {dimension_numbers = #tpu.dot_dimension_numbers<[1], [0], [0], [1], [0, 0, 1, 1], [], []>} : vector<2x64xf32>, vector<64x256xf32>, vector<2x256xf32> -> vector<2x256xf32>
    %118 = arith.index_cast %c3_i32_50 : i32 to index
    %c0_52 = arith.constant 0 : index
    %c0_53 = arith.constant 0 : index
    %119 = vector.load %arg21[%118, %c0_52, %c0_53] : memref<8x2x512xf32, #tpu.memory_space<vmem>>, vector<1x2x512xf32>
    %120 = vector.shape_cast %119 : vector<1x2x512xf32> to vector<2x512xf32>
    %c3_i32_54 = arith.constant 3 : i32
    %121 = arith.subi %c3_i32_54, %c3_i32_50 : i32
    %122 = arith.index_cast %121 : i32 to index
    %c0_55 = arith.constant 0 : index
    %c0_56 = arith.constant 0 : index
    %123 = vector.load %arg21[%122, %c0_55, %c0_56] : memref<8x2x512xf32, #tpu.memory_space<vmem>>, vector<1x2x512xf32>
    %124 = vector.shape_cast %123 : vector<1x2x512xf32> to vector<2x512xf32>
    %125 = vector.extract_strided_slice %120 {offsets = [0, 0], sizes = [2, 256], strides = [1, 1]} : vector<2x512xf32> to vector<2x256xf32>
    %126 = arith.addf %117, %125 : vector<2x256xf32>
    %127 = vector.extract_strided_slice %124 {offsets = [0, 256], sizes = [2, 256], strides = [1, 1]} : vector<2x512xf32> to vector<2x256xf32>
    %128 = arith.addf %126, %127 : vector<2x256xf32>
    %129 = arith.negf %128 : vector<2x256xf32>
    %130 = math.exp %129 : vector<2x256xf32>
    %cst_57 = arith.constant 1.000000e+00 : f32
    %131 = vector.broadcast %cst_57 : f32 to vector<2x256xf32>
    %132 = arith.addf %131, %130 : vector<2x256xf32>
    %133 = arith.divf %131, %132 : vector<2x256xf32>
    %134 = math.tanh %128 : vector<2x256xf32>
    %135 = vector.extract_strided_slice %133 {offsets = [0, 0], sizes = [2, 64], strides = [1, 1]} : vector<2x256xf32> to vector<2x64xf32>
    %136 = vector.extract_strided_slice %133 {offsets = [0, 64], sizes = [2, 64], strides = [1, 1]} : vector<2x256xf32> to vector<2x64xf32>
    %137 = vector.extract_strided_slice %134 {offsets = [0, 128], sizes = [2, 64], strides = [1, 1]} : vector<2x256xf32> to vector<2x64xf32>
    %138 = vector.extract_strided_slice %133 {offsets = [0, 192], sizes = [2, 64], strides = [1, 1]} : vector<2x256xf32> to vector<2x64xf32>
    %139 = arith.mulf %136, %114 : vector<2x64xf32>
    %140 = arith.mulf %135, %137 : vector<2x64xf32>
    %141 = arith.addf %139, %140 : vector<2x64xf32>
    %142 = math.tanh %141 : vector<2x64xf32>
    %143 = arith.mulf %138, %142 : vector<2x64xf32>
    %c4_i32 = arith.constant 4 : i32
    %c0_58 = arith.constant 0 : index
    %c0_59 = arith.constant 0 : index
    %144 = vector.load %arg6[%c0_58, %c0_59] : memref<64x512xf32, #tpu.memory_space<vmem>>, vector<64x512xf32>
    %c0_60 = arith.constant 0 : index
    %c0_61 = arith.constant 0 : index
    %145 = vector.load %arg8[%c0_60, %c0_61] : memref<1x512xf32, #tpu.memory_space<vmem>>, vector<1x512xf32>
    %c0_62 = arith.constant 0 : index
    %c0_63 = arith.constant 0 : index
    %c0_64 = arith.constant 0 : index
    %146 = vector.load %arg1[%c0_62, %c0_63, %c0_64] : memref<8x2x64xf32, #tpu.memory_space<vmem>>, vector<1x2x64xf32>
    %147 = vector.shape_cast %146 : vector<1x2x64xf32> to vector<2x64xf32>
    %cst_65 = arith.constant dense<0.000000e+00> : vector<2x512xf32>
    %148 = tpu.matmul %147, %144, %cst_65 {dimension_numbers = #tpu.dot_dimension_numbers<[1], [0], [0], [1], [0, 0, 1, 1], [], []>} : vector<2x64xf32>, vector<64x512xf32>, vector<2x512xf32> -> vector<2x512xf32>
    %149 = vector.broadcast %145 : vector<1x512xf32> to vector<2x512xf32>
    %150 = arith.addf %148, %149 : vector<2x512xf32>
    %c0_66 = arith.constant 0 : index
    %c0_67 = arith.constant 0 : index
    %c0_68 = arith.constant 0 : index
    %151 = vector.load %arg21[%c0_66, %c0_67, %c0_68] : memref<8x2x512xf32, #tpu.memory_space<vmem>>, vector<1x2x512xf32>
    %152 = vector.shape_cast %151 : vector<1x2x512xf32> to vector<2x512xf32>
    %153 = vector.shape_cast %150 : vector<2x512xf32> to vector<1x2x512xf32>
    tpu.vector_store %arg21[%c0_66, %c0_67, %c0_68], %153 {strides = array<i32>} : memref<8x2x512xf32, #tpu.memory_space<vmem>>, vector<1x2x512xf32>,
    %c1_69 = arith.constant 1 : index
    %c0_70 = arith.constant 0 : index
    %c0_71 = arith.constant 0 : index
    %154 = vector.load %arg1[%c1_69, %c0_70, %c0_71] : memref<8x2x64xf32, #tpu.memory_space<vmem>>, vector<1x2x64xf32>
    %155 = vector.shape_cast %154 : vector<1x2x64xf32> to vector<2x64xf32>
    %cst_72 = arith.constant dense<0.000000e+00> : vector<2x512xf32>
    %156 = tpu.matmul %155, %144, %cst_72 {dimension_numbers = #tpu.dot_dimension_numbers<[1], [0], [0], [1], [0, 0, 1, 1], [], []>} : vector<2x64xf32>, vector<64x512xf32>, vector<2x512xf32> -> vector<2x512xf32>
    %157 = vector.broadcast %145 : vector<1x512xf32> to vector<2x512xf32>
    %158 = arith.addf %156, %157 : vector<2x512xf32>
    %c1_73 = arith.constant 1 : index
    %c0_74 = arith.constant 0 : index
    %c0_75 = arith.constant 0 : index
    %159 = vector.load %arg21[%c1_73, %c0_74, %c0_75] : memref<8x2x512xf32, #tpu.memory_space<vmem>>, vector<1x2x512xf32>
    %160 = vector.shape_cast %159 : vector<1x2x512xf32> to vector<2x512xf32>
    %161 = vector.shape_cast %158 : vector<2x512xf32> to vector<1x2x512xf32>
    tpu.vector_store %arg21[%c1_73, %c0_74, %c0_75], %161 {strides = array<i32>} : memref<8x2x512xf32, #tpu.memory_space<vmem>>, vector<1x2x512xf32>,
    %c2_76 = arith.constant 2 : index
    %c0_77 = arith.constant 0 : index
    %c0_78 = arith.constant 0 : index
    %162 = vector.load %arg1[%c2_76, %c0_77, %c0_78] : memref<8x2x64xf32, #tpu.memory_space<vmem>>, vector<1x2x64xf32>
    %163 = vector.shape_cast %162 : vector<1x2x64xf32> to vector<2x64xf32>
    %cst_79 = arith.constant dense<0.000000e+00> : vector<2x512xf32>
    %164 = tpu.matmul %163, %144, %cst_79 {dimension_numbers = #tpu.dot_dimension_numbers<[1], [0], [0], [1], [0, 0, 1, 1], [], []>} : vector<2x64xf32>, vector<64x512xf32>, vector<2x512xf32> -> vector<2x512xf32>
    %165 = vector.broadcast %145 : vector<1x512xf32> to vector<2x512xf32>
    %166 = arith.addf %164, %165 : vector<2x512xf32>
    %c2_80 = arith.constant 2 : index
    %c0_81 = arith.constant 0 : index
    %c0_82 = arith.constant 0 : index
    %167 = vector.load %arg21[%c2_80, %c0_81, %c0_82] : memref<8x2x512xf32, #tpu.memory_space<vmem>>, vector<1x2x512xf32>
    %168 = vector.shape_cast %167 : vector<1x2x512xf32> to vector<2x512xf32>
    %169 = vector.shape_cast %166 : vector<2x512xf32> to vector<1x2x512xf32>
    tpu.vector_store %arg21[%c2_80, %c0_81, %c0_82], %169 {strides = array<i32>} : memref<8x2x512xf32, #tpu.memory_space<vmem>>, vector<1x2x512xf32>,
    %c3_83 = arith.constant 3 : index
    %c0_84 = arith.constant 0 : index
    %c0_85 = arith.constant 0 : index
    %170 = vector.load %arg1[%c3_83, %c0_84, %c0_85] : memref<8x2x64xf32, #tpu.memory_space<vmem>>, vector<1x2x64xf32>
    %171 = vector.shape_cast %170 : vector<1x2x64xf32> to vector<2x64xf32>
    %cst_86 = arith.constant dense<0.000000e+00> : vector<2x512xf32>
    %172 = tpu.matmul %171, %144, %cst_86 {dimension_numbers = #tpu.dot_dimension_numbers<[1], [0], [0], [1], [0, 0, 1, 1], [], []>} : vector<2x64xf32>, vector<64x512xf32>, vector<2x512xf32> -> vector<2x512xf32>
    %173 = vector.broadcast %145 : vector<1x512xf32> to vector<2x512xf32>
    %174 = arith.addf %172, %173 : vector<2x512xf32>
    %c3_87 = arith.constant 3 : index
    %c0_88 = arith.constant 0 : index
    %c0_89 = arith.constant 0 : index
    %175 = vector.load %arg21[%c3_87, %c0_88, %c0_89] : memref<8x2x512xf32, #tpu.memory_space<vmem>>, vector<1x2x512xf32>
    %176 = vector.shape_cast %175 : vector<1x2x512xf32> to vector<2x512xf32>
    %177 = vector.shape_cast %174 : vector<2x512xf32> to vector<1x2x512xf32>
    tpu.vector_store %arg21[%c3_87, %c0_88, %c0_89], %177 {strides = array<i32>} : memref<8x2x512xf32, #tpu.memory_space<vmem>>, vector<1x2x512xf32>,
    %c4 = arith.constant 4 : index
    %c0_90 = arith.constant 0 : index
    %c0_91 = arith.constant 0 : index
    %178 = vector.load %arg1[%c4, %c0_90, %c0_91] : memref<8x2x64xf32, #tpu.memory_space<vmem>>, vector<1x2x64xf32>
    %179 = vector.shape_cast %178 : vector<1x2x64xf32> to vector<2x64xf32>
    %cst_92 = arith.constant dense<0.000000e+00> : vector<2x512xf32>
    %180 = tpu.matmul %179, %144, %cst_92 {dimension_numbers = #tpu.dot_dimension_numbers<[1], [0], [0], [1], [0, 0, 1, 1], [], []>} : vector<2x64xf32>, vector<64x512xf32>, vector<2x512xf32> -> vector<2x512xf32>
    %181 = vector.broadcast %145 : vector<1x512xf32> to vector<2x512xf32>
    %182 = arith.addf %180, %181 : vector<2x512xf32>
    %c4_93 = arith.constant 4 : index
    %c0_94 = arith.constant 0 : index
    %c0_95 = arith.constant 0 : index
    %183 = vector.load %arg21[%c4_93, %c0_94, %c0_95] : memref<8x2x512xf32, #tpu.memory_space<vmem>>, vector<1x2x512xf32>
    %184 = vector.shape_cast %183 : vector<1x2x512xf32> to vector<2x512xf32>
    %185 = vector.shape_cast %182 : vector<2x512xf32> to vector<1x2x512xf32>
    tpu.vector_store %arg21[%c4_93, %c0_94, %c0_95], %185 {strides = array<i32>} : memref<8x2x512xf32, #tpu.memory_space<vmem>>, vector<1x2x512xf32>,
    %c5 = arith.constant 5 : index
    %c0_96 = arith.constant 0 : index
    %c0_97 = arith.constant 0 : index
    %186 = vector.load %arg1[%c5, %c0_96, %c0_97] : memref<8x2x64xf32, #tpu.memory_space<vmem>>, vector<1x2x64xf32>
    %187 = vector.shape_cast %186 : vector<1x2x64xf32> to vector<2x64xf32>
    %cst_98 = arith.constant dense<0.000000e+00> : vector<2x512xf32>
    %188 = tpu.matmul %187, %144, %cst_98 {dimension_numbers = #tpu.dot_dimension_numbers<[1], [0], [0], [1], [0, 0, 1, 1], [], []>} : vector<2x64xf32>, vector<64x512xf32>, vector<2x512xf32> -> vector<2x512xf32>
    %189 = vector.broadcast %145 : vector<1x512xf32> to vector<2x512xf32>
    %190 = arith.addf %188, %189 : vector<2x512xf32>
    %c5_99 = arith.constant 5 : index
    %c0_100 = arith.constant 0 : index
    %c0_101 = arith.constant 0 : index
    %191 = vector.load %arg21[%c5_99, %c0_100, %c0_101] : memref<8x2x512xf32, #tpu.memory_space<vmem>>, vector<1x2x512xf32>
    %192 = vector.shape_cast %191 : vector<1x2x512xf32> to vector<2x512xf32>
    %193 = vector.shape_cast %190 : vector<2x512xf32> to vector<1x2x512xf32>
    tpu.vector_store %arg21[%c5_99, %c0_100, %c0_101], %193 {strides = array<i32>} : memref<8x2x512xf32, #tpu.memory_space<vmem>>, vector<1x2x512xf32>,
    %c6 = arith.constant 6 : index
    %c0_102 = arith.constant 0 : index
    %c0_103 = arith.constant 0 : index
    %194 = vector.load %arg1[%c6, %c0_102, %c0_103] : memref<8x2x64xf32, #tpu.memory_space<vmem>>, vector<1x2x64xf32>
    %195 = vector.shape_cast %194 : vector<1x2x64xf32> to vector<2x64xf32>
    %cst_104 = arith.constant dense<0.000000e+00> : vector<2x512xf32>
    %196 = tpu.matmul %195, %144, %cst_104 {dimension_numbers = #tpu.dot_dimension_numbers<[1], [0], [0], [1], [0, 0, 1, 1], [], []>} : vector<2x64xf32>, vector<64x512xf32>, vector<2x512xf32> -> vector<2x512xf32>
    %197 = vector.broadcast %145 : vector<1x512xf32> to vector<2x512xf32>
    %198 = arith.addf %196, %197 : vector<2x512xf32>
    %c6_105 = arith.constant 6 : index
    %c0_106 = arith.constant 0 : index
    %c0_107 = arith.constant 0 : index
    %199 = vector.load %arg21[%c6_105, %c0_106, %c0_107] : memref<8x2x512xf32, #tpu.memory_space<vmem>>, vector<1x2x512xf32>
    %200 = vector.shape_cast %199 : vector<1x2x512xf32> to vector<2x512xf32>
    %201 = vector.shape_cast %198 : vector<2x512xf32> to vector<1x2x512xf32>
    tpu.vector_store %arg21[%c6_105, %c0_106, %c0_107], %201 {strides = array<i32>} : memref<8x2x512xf32, #tpu.memory_space<vmem>>, vector<1x2x512xf32>,
    %c7 = arith.constant 7 : index
    %c0_108 = arith.constant 0 : index
    %c0_109 = arith.constant 0 : index
    %202 = vector.load %arg1[%c7, %c0_108, %c0_109] : memref<8x2x64xf32, #tpu.memory_space<vmem>>, vector<1x2x64xf32>
    %203 = vector.shape_cast %202 : vector<1x2x64xf32> to vector<2x64xf32>
    %cst_110 = arith.constant dense<0.000000e+00> : vector<2x512xf32>
    %204 = tpu.matmul %203, %144, %cst_110 {dimension_numbers = #tpu.dot_dimension_numbers<[1], [0], [0], [1], [0, 0, 1, 1], [], []>} : vector<2x64xf32>, vector<64x512xf32>, vector<2x512xf32> -> vector<2x512xf32>
    %205 = vector.broadcast %145 : vector<1x512xf32> to vector<2x512xf32>
    %206 = arith.addf %204, %205 : vector<2x512xf32>
    %c7_111 = arith.constant 7 : index
    %c0_112 = arith.constant 0 : index
    %c0_113 = arith.constant 0 : index
    %207 = vector.load %arg21[%c7_111, %c0_112, %c0_113] : memref<8x2x512xf32, #tpu.memory_space<vmem>>, vector<1x2x512xf32>
    %208 = vector.shape_cast %207 : vector<1x2x512xf32> to vector<2x512xf32>
    %209 = vector.shape_cast %206 : vector<2x512xf32> to vector<1x2x512xf32>
    tpu.vector_store %arg21[%c7_111, %c0_112, %c0_113], %209 {strides = array<i32>} : memref<8x2x512xf32, #tpu.memory_space<vmem>>, vector<1x2x512xf32>,
    %c0_114 = arith.constant 0 : index
    %c0_115 = arith.constant 0 : index
    %210 = vector.load %arg7[%c0_114, %c0_115] : memref<64x256xf32, #tpu.memory_space<vmem>>, vector<64x256xf32>
    %cst_116 = arith.constant 0.000000e+00 : f32
    %211 = vector.broadcast %cst_116 : f32 to vector<2x64xf32>
    %c0_i32_117 = arith.constant 0 : i32
    %cst_118 = arith.constant dense<0.000000e+00> : vector<2x256xf32>
    %212 = tpu.matmul %211, %210, %cst_118 {dimension_numbers = #tpu.dot_dimension_numbers<[1], [0], [0], [1], [0, 0, 1, 1], [], []>} : vector<2x64xf32>, vector<64x256xf32>, vector<2x256xf32> -> vector<2x256xf32>
    %213 = arith.index_cast %c0_i32_117 : i32 to index
    %c0_119 = arith.constant 0 : index
    %c0_120 = arith.constant 0 : index
    %214 = vector.load %arg21[%213, %c0_119, %c0_120] : memref<8x2x512xf32, #tpu.memory_space<vmem>>, vector<1x2x512xf32>
    %215 = vector.shape_cast %214 : vector<1x2x512xf32> to vector<2x512xf32>
    %c7_i32 = arith.constant 7 : i32
    %216 = arith.subi %c7_i32, %c0_i32_117 : i32
    %217 = arith.index_cast %216 : i32 to index
    %c0_121 = arith.constant 0 : index
    %c0_122 = arith.constant 0 : index
    %218 = vector.load %arg21[%217, %c0_121, %c0_122] : memref<8x2x512xf32, #tpu.memory_space<vmem>>, vector<1x2x512xf32>
    %219 = vector.shape_cast %218 : vector<1x2x512xf32> to vector<2x512xf32>
    %220 = vector.extract_strided_slice %215 {offsets = [0, 0], sizes = [2, 256], strides = [1, 1]} : vector<2x512xf32> to vector<2x256xf32>
    %221 = arith.addf %212, %220 : vector<2x256xf32>
    %222 = vector.extract_strided_slice %219 {offsets = [0, 256], sizes = [2, 256], strides = [1, 1]} : vector<2x512xf32> to vector<2x256xf32>
    %223 = arith.addf %221, %222 : vector<2x256xf32>
    %224 = arith.negf %223 : vector<2x256xf32>
    %225 = math.exp %224 : vector<2x256xf32>
    %cst_123 = arith.constant 1.000000e+00 : f32
    %226 = vector.broadcast %cst_123 : f32 to vector<2x256xf32>
    %227 = arith.addf %226, %225 : vector<2x256xf32>
    %228 = arith.divf %226, %227 : vector<2x256xf32>
    %229 = math.tanh %223 : vector<2x256xf32>
    %230 = vector.extract_strided_slice %228 {offsets = [0, 0], sizes = [2, 64], strides = [1, 1]} : vector<2x256xf32> to vector<2x64xf32>
    %231 = vector.extract_strided_slice %228 {offsets = [0, 64], sizes = [2, 64], strides = [1, 1]} : vector<2x256xf32> to vector<2x64xf32>
    %232 = vector.extract_strided_slice %229 {offsets = [0, 128], sizes = [2, 64], strides = [1, 1]} : vector<2x256xf32> to vector<2x64xf32>
    %233 = vector.extract_strided_slice %228 {offsets = [0, 192], sizes = [2, 64], strides = [1, 1]} : vector<2x256xf32> to vector<2x64xf32>
    %234 = arith.mulf %231, %211 : vector<2x64xf32>
    %235 = arith.mulf %230, %232 : vector<2x64xf32>
    %236 = arith.addf %234, %235 : vector<2x64xf32>
    %237 = math.tanh %236 : vector<2x64xf32>
    %238 = arith.mulf %233, %237 : vector<2x64xf32>
    %239 = vector.extract_strided_slice %238 {offsets = [0, 0], sizes = [2, 32], strides = [1, 1]} : vector<2x64xf32> to vector<2x32xf32>
    %240 = arith.index_cast %c0_i32_117 : i32 to index
    %c0_124 = arith.constant 0 : index
    %c0_125 = arith.constant 0 : index
    %241 = vector.load %arg22[%240, %c0_124, %c0_125] : memref<8x2x32xf32, #tpu.memory_space<vmem>>, vector<1x2x32xf32>
    %242 = vector.shape_cast %241 : vector<1x2x32xf32> to vector<2x32xf32>
    %243 = vector.shape_cast %239 : vector<2x32xf32> to vector<1x2x32xf32>
    tpu.vector_store %arg22[%240, %c0_124, %c0_125], %243 {strides = array<i32>} : memref<8x2x32xf32, #tpu.memory_space<vmem>>, vector<1x2x32xf32>,
    %244 = vector.extract_strided_slice %238 {offsets = [0, 32], sizes = [2, 32], strides = [1, 1]} : vector<2x64xf32> to vector<2x32xf32>
    %c7_i32_126 = arith.constant 7 : i32
    %245 = arith.subi %c7_i32_126, %c0_i32_117 : i32
    %246 = arith.index_cast %245 : i32 to index
    %c0_127 = arith.constant 0 : index
    %c0_128 = arith.constant 0 : index
    %247 = vector.load %arg23[%246, %c0_127, %c0_128] : memref<8x2x32xf32, #tpu.memory_space<vmem>>, vector<1x2x32xf32>
    %248 = vector.shape_cast %247 : vector<1x2x32xf32> to vector<2x32xf32>
    %249 = vector.shape_cast %244 : vector<2x32xf32> to vector<1x2x32xf32>
    tpu.vector_store %arg23[%246, %c0_127, %c0_128], %249 {strides = array<i32>} : memref<8x2x32xf32, #tpu.memory_space<vmem>>, vector<1x2x32xf32>,
    %c1_i32_129 = arith.constant 1 : i32
    %cst_130 = arith.constant dense<0.000000e+00> : vector<2x256xf32>
    %250 = tpu.matmul %238, %210, %cst_130 {dimension_numbers = #tpu.dot_dimension_numbers<[1], [0], [0], [1], [0, 0, 1, 1], [], []>} : vector<2x64xf32>, vector<64x256xf32>, vector<2x256xf32> -> vector<2x256xf32>
    %251 = arith.index_cast %c1_i32_129 : i32 to index
    %c0_131 = arith.constant 0 : index
    %c0_132 = arith.constant 0 : index
    %252 = vector.load %arg21[%251, %c0_131, %c0_132] : memref<8x2x512xf32, #tpu.memory_space<vmem>>, vector<1x2x512xf32>
    %253 = vector.shape_cast %252 : vector<1x2x512xf32> to vector<2x512xf32>
    %c7_i32_133 = arith.constant 7 : i32
    %254 = arith.subi %c7_i32_133, %c1_i32_129 : i32
    %255 = arith.index_cast %254 : i32 to index
    %c0_134 = arith.constant 0 : index
    %c0_135 = arith.constant 0 : index
    %256 = vector.load %arg21[%255, %c0_134, %c0_135] : memref<8x2x512xf32, #tpu.memory_space<vmem>>, vector<1x2x512xf32>
    %257 = vector.shape_cast %256 : vector<1x2x512xf32> to vector<2x512xf32>
    %258 = vector.extract_strided_slice %253 {offsets = [0, 0], sizes = [2, 256], strides = [1, 1]} : vector<2x512xf32> to vector<2x256xf32>
    %259 = arith.addf %250, %258 : vector<2x256xf32>
    %260 = vector.extract_strided_slice %257 {offsets = [0, 256], sizes = [2, 256], strides = [1, 1]} : vector<2x512xf32> to vector<2x256xf32>
    %261 = arith.addf %259, %260 : vector<2x256xf32>
    %262 = arith.negf %261 : vector<2x256xf32>
    %263 = math.exp %262 : vector<2x256xf32>
    %cst_136 = arith.constant 1.000000e+00 : f32
    %264 = vector.broadcast %cst_136 : f32 to vector<2x256xf32>
    %265 = arith.addf %264, %263 : vector<2x256xf32>
    %266 = arith.divf %264, %265 : vector<2x256xf32>
    %267 = math.tanh %261 : vector<2x256xf32>
    %268 = vector.extract_strided_slice %266 {offsets = [0, 0], sizes = [2, 64], strides = [1, 1]} : vector<2x256xf32> to vector<2x64xf32>
    %269 = vector.extract_strided_slice %266 {offsets = [0, 64], sizes = [2, 64], strides = [1, 1]} : vector<2x256xf32> to vector<2x64xf32>
    %270 = vector.extract_strided_slice %267 {offsets = [0, 128], sizes = [2, 64], strides = [1, 1]} : vector<2x256xf32> to vector<2x64xf32>
    %271 = vector.extract_strided_slice %266 {offsets = [0, 192], sizes = [2, 64], strides = [1, 1]} : vector<2x256xf32> to vector<2x64xf32>
    %272 = arith.mulf %269, %236 : vector<2x64xf32>
    %273 = arith.mulf %268, %270 : vector<2x64xf32>
    %274 = arith.addf %272, %273 : vector<2x64xf32>
    %275 = math.tanh %274 : vector<2x64xf32>
    %276 = arith.mulf %271, %275 : vector<2x64xf32>
    %277 = vector.extract_strided_slice %276 {offsets = [0, 0], sizes = [2, 32], strides = [1, 1]} : vector<2x64xf32> to vector<2x32xf32>
    %278 = arith.index_cast %c1_i32_129 : i32 to index
    %c0_137 = arith.constant 0 : index
    %c0_138 = arith.constant 0 : index
    %279 = vector.load %arg22[%278, %c0_137, %c0_138] : memref<8x2x32xf32, #tpu.memory_space<vmem>>, vector<1x2x32xf32>
    %280 = vector.shape_cast %279 : vector<1x2x32xf32> to vector<2x32xf32>
    %281 = vector.shape_cast %277 : vector<2x32xf32> to vector<1x2x32xf32>
    tpu.vector_store %arg22[%278, %c0_137, %c0_138], %281 {strides = array<i32>} : memref<8x2x32xf32, #tpu.memory_space<vmem>>, vector<1x2x32xf32>,
    %282 = vector.extract_strided_slice %276 {offsets = [0, 32], sizes = [2, 32], strides = [1, 1]} : vector<2x64xf32> to vector<2x32xf32>
    %c7_i32_139 = arith.constant 7 : i32
    %283 = arith.subi %c7_i32_139, %c1_i32_129 : i32
    %284 = arith.index_cast %283 : i32 to index
    %c0_140 = arith.constant 0 : index
    %c0_141 = arith.constant 0 : index
    %285 = vector.load %arg23[%284, %c0_140, %c0_141] : memref<8x2x32xf32, #tpu.memory_space<vmem>>, vector<1x2x32xf32>
    %286 = vector.shape_cast %285 : vector<1x2x32xf32> to vector<2x32xf32>
    %287 = vector.shape_cast %282 : vector<2x32xf32> to vector<1x2x32xf32>
    tpu.vector_store %arg23[%284, %c0_140, %c0_141], %287 {strides = array<i32>} : memref<8x2x32xf32, #tpu.memory_space<vmem>>, vector<1x2x32xf32>,
    %c2_i32_142 = arith.constant 2 : i32
    %cst_143 = arith.constant dense<0.000000e+00> : vector<2x256xf32>
    %288 = tpu.matmul %276, %210, %cst_143 {dimension_numbers = #tpu.dot_dimension_numbers<[1], [0], [0], [1], [0, 0, 1, 1], [], []>} : vector<2x64xf32>, vector<64x256xf32>, vector<2x256xf32> -> vector<2x256xf32>
    %289 = arith.index_cast %c2_i32_142 : i32 to index
    %c0_144 = arith.constant 0 : index
    %c0_145 = arith.constant 0 : index
    %290 = vector.load %arg21[%289, %c0_144, %c0_145] : memref<8x2x512xf32, #tpu.memory_space<vmem>>, vector<1x2x512xf32>
    %291 = vector.shape_cast %290 : vector<1x2x512xf32> to vector<2x512xf32>
    %c7_i32_146 = arith.constant 7 : i32
    %292 = arith.subi %c7_i32_146, %c2_i32_142 : i32
    %293 = arith.index_cast %292 : i32 to index
    %c0_147 = arith.constant 0 : index
    %c0_148 = arith.constant 0 : index
    %294 = vector.load %arg21[%293, %c0_147, %c0_148] : memref<8x2x512xf32, #tpu.memory_space<vmem>>, vector<1x2x512xf32>
    %295 = vector.shape_cast %294 : vector<1x2x512xf32> to vector<2x512xf32>
    %296 = vector.extract_strided_slice %291 {offsets = [0, 0], sizes = [2, 256], strides = [1, 1]} : vector<2x512xf32> to vector<2x256xf32>
    %297 = arith.addf %288, %296 : vector<2x256xf32>
    %298 = vector.extract_strided_slice %295 {offsets = [0, 256], sizes = [2, 256], strides = [1, 1]} : vector<2x512xf32> to vector<2x256xf32>
    %299 = arith.addf %297, %298 : vector<2x256xf32>
    %300 = arith.negf %299 : vector<2x256xf32>
    %301 = math.exp %300 : vector<2x256xf32>
    %cst_149 = arith.constant 1.000000e+00 : f32
    %302 = vector.broadcast %cst_149 : f32 to vector<2x256xf32>
    %303 = arith.addf %302, %301 : vector<2x256xf32>
    %304 = arith.divf %302, %303 : vector<2x256xf32>
    %305 = math.tanh %299 : vector<2x256xf32>
    %306 = vector.extract_strided_slice %304 {offsets = [0, 0], sizes = [2, 64], strides = [1, 1]} : vector<2x256xf32> to vector<2x64xf32>
    %307 = vector.extract_strided_slice %304 {offsets = [0, 64], sizes = [2, 64], strides = [1, 1]} : vector<2x256xf32> to vector<2x64xf32>
    %308 = vector.extract_strided_slice %305 {offsets = [0, 128], sizes = [2, 64], strides = [1, 1]} : vector<2x256xf32> to vector<2x64xf32>
    %309 = vector.extract_strided_slice %304 {offsets = [0, 192], sizes = [2, 64], strides = [1, 1]} : vector<2x256xf32> to vector<2x64xf32>
    %310 = arith.mulf %307, %274 : vector<2x64xf32>
    %311 = arith.mulf %306, %308 : vector<2x64xf32>
    %312 = arith.addf %310, %311 : vector<2x64xf32>
    %313 = math.tanh %312 : vector<2x64xf32>
    %314 = arith.mulf %309, %313 : vector<2x64xf32>
    %315 = vector.extract_strided_slice %314 {offsets = [0, 0], sizes = [2, 32], strides = [1, 1]} : vector<2x64xf32> to vector<2x32xf32>
    %316 = arith.index_cast %c2_i32_142 : i32 to index
    %c0_150 = arith.constant 0 : index
    %c0_151 = arith.constant 0 : index
    %317 = vector.load %arg22[%316, %c0_150, %c0_151] : memref<8x2x32xf32, #tpu.memory_space<vmem>>, vector<1x2x32xf32>
    %318 = vector.shape_cast %317 : vector<1x2x32xf32> to vector<2x32xf32>
    %319 = vector.shape_cast %315 : vector<2x32xf32> to vector<1x2x32xf32>
    tpu.vector_store %arg22[%316, %c0_150, %c0_151], %319 {strides = array<i32>} : memref<8x2x32xf32, #tpu.memory_space<vmem>>, vector<1x2x32xf32>,
    %320 = vector.extract_strided_slice %314 {offsets = [0, 32], sizes = [2, 32], strides = [1, 1]} : vector<2x64xf32> to vector<2x32xf32>
    %c7_i32_152 = arith.constant 7 : i32
    %321 = arith.subi %c7_i32_152, %c2_i32_142 : i32
    %322 = arith.index_cast %321 : i32 to index
    %c0_153 = arith.constant 0 : index
    %c0_154 = arith.constant 0 : index
    %323 = vector.load %arg23[%322, %c0_153, %c0_154] : memref<8x2x32xf32, #tpu.memory_space<vmem>>, vector<1x2x32xf32>
    %324 = vector.shape_cast %323 : vector<1x2x32xf32> to vector<2x32xf32>
    %325 = vector.shape_cast %320 : vector<2x32xf32> to vector<1x2x32xf32>
    tpu.vector_store %arg23[%322, %c0_153, %c0_154], %325 {strides = array<i32>} : memref<8x2x32xf32, #tpu.memory_space<vmem>>, vector<1x2x32xf32>,
    %c3_i32_155 = arith.constant 3 : i32
    %cst_156 = arith.constant dense<0.000000e+00> : vector<2x256xf32>
    %326 = tpu.matmul %314, %210, %cst_156 {dimension_numbers = #tpu.dot_dimension_numbers<[1], [0], [0], [1], [0, 0, 1, 1], [], []>} : vector<2x64xf32>, vector<64x256xf32>, vector<2x256xf32> -> vector<2x256xf32>
    %327 = arith.index_cast %c3_i32_155 : i32 to index
    %c0_157 = arith.constant 0 : index
    %c0_158 = arith.constant 0 : index
    %328 = vector.load %arg21[%327, %c0_157, %c0_158] : memref<8x2x512xf32, #tpu.memory_space<vmem>>, vector<1x2x512xf32>
    %329 = vector.shape_cast %328 : vector<1x2x512xf32> to vector<2x512xf32>
    %c7_i32_159 = arith.constant 7 : i32
    %330 = arith.subi %c7_i32_159, %c3_i32_155 : i32
    %331 = arith.index_cast %330 : i32 to index
    %c0_160 = arith.constant 0 : index
    %c0_161 = arith.constant 0 : index
    %332 = vector.load %arg21[%331, %c0_160, %c0_161] : memref<8x2x512xf32, #tpu.memory_space<vmem>>, vector<1x2x512xf32>
    %333 = vector.shape_cast %332 : vector<1x2x512xf32> to vector<2x512xf32>
    %334 = vector.extract_strided_slice %329 {offsets = [0, 0], sizes = [2, 256], strides = [1, 1]} : vector<2x512xf32> to vector<2x256xf32>
    %335 = arith.addf %326, %334 : vector<2x256xf32>
    %336 = vector.extract_strided_slice %333 {offsets = [0, 256], sizes = [2, 256], strides = [1, 1]} : vector<2x512xf32> to vector<2x256xf32>
    %337 = arith.addf %335, %336 : vector<2x256xf32>
    %338 = arith.negf %337 : vector<2x256xf32>
    %339 = math.exp %338 : vector<2x256xf32>
    %cst_162 = arith.constant 1.000000e+00 : f32
    %340 = vector.broadcast %cst_162 : f32 to vector<2x256xf32>
    %341 = arith.addf %340, %339 : vector<2x256xf32>
    %342 = arith.divf %340, %341 : vector<2x256xf32>
    %343 = math.tanh %337 : vector<2x256xf32>
    %344 = vector.extract_strided_slice %342 {offsets = [0, 0], sizes = [2, 64], strides = [1, 1]} : vector<2x256xf32> to vector<2x64xf32>
    %345 = vector.extract_strided_slice %342 {offsets = [0, 64], sizes = [2, 64], strides = [1, 1]} : vector<2x256xf32> to vector<2x64xf32>
    %346 = vector.extract_strided_slice %343 {offsets = [0, 128], sizes = [2, 64], strides = [1, 1]} : vector<2x256xf32> to vector<2x64xf32>
    %347 = vector.extract_strided_slice %342 {offsets = [0, 192], sizes = [2, 64], strides = [1, 1]} : vector<2x256xf32> to vector<2x64xf32>
    %348 = arith.mulf %345, %312 : vector<2x64xf32>
    %349 = arith.mulf %344, %346 : vector<2x64xf32>
    %350 = arith.addf %348, %349 : vector<2x64xf32>
    %351 = math.tanh %350 : vector<2x64xf32>
    %352 = arith.mulf %347, %351 : vector<2x64xf32>
    %353 = vector.extract_strided_slice %352 {offsets = [0, 0], sizes = [2, 32], strides = [1, 1]} : vector<2x64xf32> to vector<2x32xf32>
    %354 = arith.index_cast %c3_i32_155 : i32 to index
    %c0_163 = arith.constant 0 : index
    %c0_164 = arith.constant 0 : index
    %355 = vector.load %arg22[%354, %c0_163, %c0_164] : memref<8x2x32xf32, #tpu.memory_space<vmem>>, vector<1x2x32xf32>
    %356 = vector.shape_cast %355 : vector<1x2x32xf32> to vector<2x32xf32>
    %357 = vector.shape_cast %353 : vector<2x32xf32> to vector<1x2x32xf32>
    tpu.vector_store %arg22[%354, %c0_163, %c0_164], %357 {strides = array<i32>} : memref<8x2x32xf32, #tpu.memory_space<vmem>>, vector<1x2x32xf32>,
    %358 = vector.extract_strided_slice %352 {offsets = [0, 32], sizes = [2, 32], strides = [1, 1]} : vector<2x64xf32> to vector<2x32xf32>
    %c7_i32_165 = arith.constant 7 : i32
    %359 = arith.subi %c7_i32_165, %c3_i32_155 : i32
    %360 = arith.index_cast %359 : i32 to index
    %c0_166 = arith.constant 0 : index
    %c0_167 = arith.constant 0 : index
    %361 = vector.load %arg23[%360, %c0_166, %c0_167] : memref<8x2x32xf32, #tpu.memory_space<vmem>>, vector<1x2x32xf32>
    %362 = vector.shape_cast %361 : vector<1x2x32xf32> to vector<2x32xf32>
    %363 = vector.shape_cast %358 : vector<2x32xf32> to vector<1x2x32xf32>
    tpu.vector_store %arg23[%360, %c0_166, %c0_167], %363 {strides = array<i32>} : memref<8x2x32xf32, #tpu.memory_space<vmem>>, vector<1x2x32xf32>,
    %c4_i32_168 = arith.constant 4 : i32
    %cst_169 = arith.constant dense<0.000000e+00> : vector<2x256xf32>
    %364 = tpu.matmul %352, %210, %cst_169 {dimension_numbers = #tpu.dot_dimension_numbers<[1], [0], [0], [1], [0, 0, 1, 1], [], []>} : vector<2x64xf32>, vector<64x256xf32>, vector<2x256xf32> -> vector<2x256xf32>
    %365 = arith.index_cast %c4_i32_168 : i32 to index
    %c0_170 = arith.constant 0 : index
    %c0_171 = arith.constant 0 : index
    %366 = vector.load %arg21[%365, %c0_170, %c0_171] : memref<8x2x512xf32, #tpu.memory_space<vmem>>, vector<1x2x512xf32>
    %367 = vector.shape_cast %366 : vector<1x2x512xf32> to vector<2x512xf32>
    %c7_i32_172 = arith.constant 7 : i32
    %368 = arith.subi %c7_i32_172, %c4_i32_168 : i32
    %369 = arith.index_cast %368 : i32 to index
    %c0_173 = arith.constant 0 : index
    %c0_174 = arith.constant 0 : index
    %370 = vector.load %arg21[%369, %c0_173, %c0_174] : memref<8x2x512xf32, #tpu.memory_space<vmem>>, vector<1x2x512xf32>
    %371 = vector.shape_cast %370 : vector<1x2x512xf32> to vector<2x512xf32>
    %372 = vector.extract_strided_slice %367 {offsets = [0, 0], sizes = [2, 256], strides = [1, 1]} : vector<2x512xf32> to vector<2x256xf32>
    %373 = arith.addf %364, %372 : vector<2x256xf32>
    %374 = vector.extract_strided_slice %371 {offsets = [0, 256], sizes = [2, 256], strides = [1, 1]} : vector<2x512xf32> to vector<2x256xf32>
    %375 = arith.addf %373, %374 : vector<2x256xf32>
    %376 = arith.negf %375 : vector<2x256xf32>
    %377 = math.exp %376 : vector<2x256xf32>
    %cst_175 = arith.constant 1.000000e+00 : f32
    %378 = vector.broadcast %cst_175 : f32 to vector<2x256xf32>
    %379 = arith.addf %378, %377 : vector<2x256xf32>
    %380 = arith.divf %378, %379 : vector<2x256xf32>
    %381 = math.tanh %375 : vector<2x256xf32>
    %382 = vector.extract_strided_slice %380 {offsets = [0, 0], sizes = [2, 64], strides = [1, 1]} : vector<2x256xf32> to vector<2x64xf32>
    %383 = vector.extract_strided_slice %380 {offsets = [0, 64], sizes = [2, 64], strides = [1, 1]} : vector<2x256xf32> to vector<2x64xf32>
    %384 = vector.extract_strided_slice %381 {offsets = [0, 128], sizes = [2, 64], strides = [1, 1]} : vector<2x256xf32> to vector<2x64xf32>
    %385 = vector.extract_strided_slice %380 {offsets = [0, 192], sizes = [2, 64], strides = [1, 1]} : vector<2x256xf32> to vector<2x64xf32>
    %386 = arith.mulf %383, %350 : vector<2x64xf32>
    %387 = arith.mulf %382, %384 : vector<2x64xf32>
    %388 = arith.addf %386, %387 : vector<2x64xf32>
    %389 = math.tanh %388 : vector<2x64xf32>
    %390 = arith.mulf %385, %389 : vector<2x64xf32>
    %391 = vector.extract_strided_slice %390 {offsets = [0, 0], sizes = [2, 32], strides = [1, 1]} : vector<2x64xf32> to vector<2x32xf32>
    %392 = arith.index_cast %c4_i32_168 : i32 to index
    %c0_176 = arith.constant 0 : index
    %c0_177 = arith.constant 0 : index
    %393 = vector.load %arg22[%392, %c0_176, %c0_177] : memref<8x2x32xf32, #tpu.memory_space<vmem>>, vector<1x2x32xf32>
    %394 = vector.shape_cast %393 : vector<1x2x32xf32> to vector<2x32xf32>
    %395 = vector.shape_cast %391 : vector<2x32xf32> to vector<1x2x32xf32>
    tpu.vector_store %arg22[%392, %c0_176, %c0_177], %395 {strides = array<i32>} : memref<8x2x32xf32, #tpu.memory_space<vmem>>, vector<1x2x32xf32>,
    %396 = vector.extract_strided_slice %390 {offsets = [0, 32], sizes = [2, 32], strides = [1, 1]} : vector<2x64xf32> to vector<2x32xf32>
    %c7_i32_178 = arith.constant 7 : i32
    %397 = arith.subi %c7_i32_178, %c4_i32_168 : i32
    %398 = arith.index_cast %397 : i32 to index
    %c0_179 = arith.constant 0 : index
    %c0_180 = arith.constant 0 : index
    %399 = vector.load %arg23[%398, %c0_179, %c0_180] : memref<8x2x32xf32, #tpu.memory_space<vmem>>, vector<1x2x32xf32>
    %400 = vector.shape_cast %399 : vector<1x2x32xf32> to vector<2x32xf32>
    %401 = vector.shape_cast %396 : vector<2x32xf32> to vector<1x2x32xf32>
    tpu.vector_store %arg23[%398, %c0_179, %c0_180], %401 {strides = array<i32>} : memref<8x2x32xf32, #tpu.memory_space<vmem>>, vector<1x2x32xf32>,
    %c5_i32 = arith.constant 5 : i32
    %cst_181 = arith.constant dense<0.000000e+00> : vector<2x256xf32>
    %402 = tpu.matmul %390, %210, %cst_181 {dimension_numbers = #tpu.dot_dimension_numbers<[1], [0], [0], [1], [0, 0, 1, 1], [], []>} : vector<2x64xf32>, vector<64x256xf32>, vector<2x256xf32> -> vector<2x256xf32>
    %403 = arith.index_cast %c5_i32 : i32 to index
    %c0_182 = arith.constant 0 : index
    %c0_183 = arith.constant 0 : index
    %404 = vector.load %arg21[%403, %c0_182, %c0_183] : memref<8x2x512xf32, #tpu.memory_space<vmem>>, vector<1x2x512xf32>
    %405 = vector.shape_cast %404 : vector<1x2x512xf32> to vector<2x512xf32>
    %c7_i32_184 = arith.constant 7 : i32
    %406 = arith.subi %c7_i32_184, %c5_i32 : i32
    %407 = arith.index_cast %406 : i32 to index
    %c0_185 = arith.constant 0 : index
    %c0_186 = arith.constant 0 : index
    %408 = vector.load %arg21[%407, %c0_185, %c0_186] : memref<8x2x512xf32, #tpu.memory_space<vmem>>, vector<1x2x512xf32>
    %409 = vector.shape_cast %408 : vector<1x2x512xf32> to vector<2x512xf32>
    %410 = vector.extract_strided_slice %405 {offsets = [0, 0], sizes = [2, 256], strides = [1, 1]} : vector<2x512xf32> to vector<2x256xf32>
    %411 = arith.addf %402, %410 : vector<2x256xf32>
    %412 = vector.extract_strided_slice %409 {offsets = [0, 256], sizes = [2, 256], strides = [1, 1]} : vector<2x512xf32> to vector<2x256xf32>
    %413 = arith.addf %411, %412 : vector<2x256xf32>
    %414 = arith.negf %413 : vector<2x256xf32>
    %415 = math.exp %414 : vector<2x256xf32>
    %cst_187 = arith.constant 1.000000e+00 : f32
    %416 = vector.broadcast %cst_187 : f32 to vector<2x256xf32>
    %417 = arith.addf %416, %415 : vector<2x256xf32>
    %418 = arith.divf %416, %417 : vector<2x256xf32>
    %419 = math.tanh %413 : vector<2x256xf32>
    %420 = vector.extract_strided_slice %418 {offsets = [0, 0], sizes = [2, 64], strides = [1, 1]} : vector<2x256xf32> to vector<2x64xf32>
    %421 = vector.extract_strided_slice %418 {offsets = [0, 64], sizes = [2, 64], strides = [1, 1]} : vector<2x256xf32> to vector<2x64xf32>
    %422 = vector.extract_strided_slice %419 {offsets = [0, 128], sizes = [2, 64], strides = [1, 1]} : vector<2x256xf32> to vector<2x64xf32>
    %423 = vector.extract_strided_slice %418 {offsets = [0, 192], sizes = [2, 64], strides = [1, 1]} : vector<2x256xf32> to vector<2x64xf32>
    %424 = arith.mulf %421, %388 : vector<2x64xf32>
    %425 = arith.mulf %420, %422 : vector<2x64xf32>
    %426 = arith.addf %424, %425 : vector<2x64xf32>
    %427 = math.tanh %426 : vector<2x64xf32>
    %428 = arith.mulf %423, %427 : vector<2x64xf32>
    %429 = vector.extract_strided_slice %428 {offsets = [0, 0], sizes = [2, 32], strides = [1, 1]} : vector<2x64xf32> to vector<2x32xf32>
    %430 = arith.index_cast %c5_i32 : i32 to index
    %c0_188 = arith.constant 0 : index
    %c0_189 = arith.constant 0 : index
    %431 = vector.load %arg22[%430, %c0_188, %c0_189] : memref<8x2x32xf32, #tpu.memory_space<vmem>>, vector<1x2x32xf32>
    %432 = vector.shape_cast %431 : vector<1x2x32xf32> to vector<2x32xf32>
    %433 = vector.shape_cast %429 : vector<2x32xf32> to vector<1x2x32xf32>
    tpu.vector_store %arg22[%430, %c0_188, %c0_189], %433 {strides = array<i32>} : memref<8x2x32xf32, #tpu.memory_space<vmem>>, vector<1x2x32xf32>,
    %434 = vector.extract_strided_slice %428 {offsets = [0, 32], sizes = [2, 32], strides = [1, 1]} : vector<2x64xf32> to vector<2x32xf32>
    %c7_i32_190 = arith.constant 7 : i32
    %435 = arith.subi %c7_i32_190, %c5_i32 : i32
    %436 = arith.index_cast %435 : i32 to index
    %c0_191 = arith.constant 0 : index
    %c0_192 = arith.constant 0 : index
    %437 = vector.load %arg23[%436, %c0_191, %c0_192] : memref<8x2x32xf32, #tpu.memory_space<vmem>>, vector<1x2x32xf32>
    %438 = vector.shape_cast %437 : vector<1x2x32xf32> to vector<2x32xf32>
    %439 = vector.shape_cast %434 : vector<2x32xf32> to vector<1x2x32xf32>
    tpu.vector_store %arg23[%436, %c0_191, %c0_192], %439 {strides = array<i32>} : memref<8x2x32xf32, #tpu.memory_space<vmem>>, vector<1x2x32xf32>,
    %c6_i32 = arith.constant 6 : i32
    %cst_193 = arith.constant dense<0.000000e+00> : vector<2x256xf32>
    %440 = tpu.matmul %428, %210, %cst_193 {dimension_numbers = #tpu.dot_dimension_numbers<[1], [0], [0], [1], [0, 0, 1, 1], [], []>} : vector<2x64xf32>, vector<64x256xf32>, vector<2x256xf32> -> vector<2x256xf32>
    %441 = arith.index_cast %c6_i32 : i32 to index
    %c0_194 = arith.constant 0 : index
    %c0_195 = arith.constant 0 : index
    %442 = vector.load %arg21[%441, %c0_194, %c0_195] : memref<8x2x512xf32, #tpu.memory_space<vmem>>, vector<1x2x512xf32>
    %443 = vector.shape_cast %442 : vector<1x2x512xf32> to vector<2x512xf32>
    %c7_i32_196 = arith.constant 7 : i32
    %444 = arith.subi %c7_i32_196, %c6_i32 : i32
    %445 = arith.index_cast %444 : i32 to index
    %c0_197 = arith.constant 0 : index
    %c0_198 = arith.constant 0 : index
    %446 = vector.load %arg21[%445, %c0_197, %c0_198] : memref<8x2x512xf32, #tpu.memory_space<vmem>>, vector<1x2x512xf32>
    %447 = vector.shape_cast %446 : vector<1x2x512xf32> to vector<2x512xf32>
    %448 = vector.extract_strided_slice %443 {offsets = [0, 0], sizes = [2, 256], strides = [1, 1]} : vector<2x512xf32> to vector<2x256xf32>
    %449 = arith.addf %440, %448 : vector<2x256xf32>
    %450 = vector.extract_strided_slice %447 {offsets = [0, 256], sizes = [2, 256], strides = [1, 1]} : vector<2x512xf32> to vector<2x256xf32>
    %451 = arith.addf %449, %450 : vector<2x256xf32>
    %452 = arith.negf %451 : vector<2x256xf32>
    %453 = math.exp %452 : vector<2x256xf32>
    %cst_199 = arith.constant 1.000000e+00 : f32
    %454 = vector.broadcast %cst_199 : f32 to vector<2x256xf32>
    %455 = arith.addf %454, %453 : vector<2x256xf32>
    %456 = arith.divf %454, %455 : vector<2x256xf32>
    %457 = math.tanh %451 : vector<2x256xf32>
    %458 = vector.extract_strided_slice %456 {offsets = [0, 0], sizes = [2, 64], strides = [1, 1]} : vector<2x256xf32> to vector<2x64xf32>
    %459 = vector.extract_strided_slice %456 {offsets = [0, 64], sizes = [2, 64], strides = [1, 1]} : vector<2x256xf32> to vector<2x64xf32>
    %460 = vector.extract_strided_slice %457 {offsets = [0, 128], sizes = [2, 64], strides = [1, 1]} : vector<2x256xf32> to vector<2x64xf32>
    %461 = vector.extract_strided_slice %456 {offsets = [0, 192], sizes = [2, 64], strides = [1, 1]} : vector<2x256xf32> to vector<2x64xf32>
    %462 = arith.mulf %459, %426 : vector<2x64xf32>
    %463 = arith.mulf %458, %460 : vector<2x64xf32>
    %464 = arith.addf %462, %463 : vector<2x64xf32>
    %465 = math.tanh %464 : vector<2x64xf32>
    %466 = arith.mulf %461, %465 : vector<2x64xf32>
    %467 = vector.extract_strided_slice %466 {offsets = [0, 0], sizes = [2, 32], strides = [1, 1]} : vector<2x64xf32> to vector<2x32xf32>
    %468 = arith.index_cast %c6_i32 : i32 to index
    %c0_200 = arith.constant 0 : index
    %c0_201 = arith.constant 0 : index
    %469 = vector.load %arg22[%468, %c0_200, %c0_201] : memref<8x2x32xf32, #tpu.memory_space<vmem>>, vector<1x2x32xf32>
    %470 = vector.shape_cast %469 : vector<1x2x32xf32> to vector<2x32xf32>
    %471 = vector.shape_cast %467 : vector<2x32xf32> to vector<1x2x32xf32>
    tpu.vector_store %arg22[%468, %c0_200, %c0_201], %471 {strides = array<i32>} : memref<8x2x32xf32, #tpu.memory_space<vmem>>, vector<1x2x32xf32>,
    %472 = vector.extract_strided_slice %466 {offsets = [0, 32], sizes = [2, 32], strides = [1, 1]} : vector<2x64xf32> to vector<2x32xf32>
    %c7_i32_202 = arith.constant 7 : i32
    %473 = arith.subi %c7_i32_202, %c6_i32 : i32
    %474 = arith.index_cast %473 : i32 to index
    %c0_203 = arith.constant 0 : index
    %c0_204 = arith.constant 0 : index
    %475 = vector.load %arg23[%474, %c0_203, %c0_204] : memref<8x2x32xf32, #tpu.memory_space<vmem>>, vector<1x2x32xf32>
    %476 = vector.shape_cast %475 : vector<1x2x32xf32> to vector<2x32xf32>
    %477 = vector.shape_cast %472 : vector<2x32xf32> to vector<1x2x32xf32>
    tpu.vector_store %arg23[%474, %c0_203, %c0_204], %477 {strides = array<i32>} : memref<8x2x32xf32, #tpu.memory_space<vmem>>, vector<1x2x32xf32>,
    %c7_i32_205 = arith.constant 7 : i32
    %cst_206 = arith.constant dense<0.000000e+00> : vector<2x256xf32>
    %478 = tpu.matmul %466, %210, %cst_206 {dimension_numbers = #tpu.dot_dimension_numbers<[1], [0], [0], [1], [0, 0, 1, 1], [], []>} : vector<2x64xf32>, vector<64x256xf32>, vector<2x256xf32> -> vector<2x256xf32>
    %479 = arith.index_cast %c7_i32_205 : i32 to index
    %c0_207 = arith.constant 0 : index
    %c0_208 = arith.constant 0 : index
    %480 = vector.load %arg21[%479, %c0_207, %c0_208] : memref<8x2x512xf32, #tpu.memory_space<vmem>>, vector<1x2x512xf32>
    %481 = vector.shape_cast %480 : vector<1x2x512xf32> to vector<2x512xf32>
    %c7_i32_209 = arith.constant 7 : i32
    %482 = arith.subi %c7_i32_209, %c7_i32_205 : i32
    %483 = arith.index_cast %482 : i32 to index
    %c0_210 = arith.constant 0 : index
    %c0_211 = arith.constant 0 : index
    %484 = vector.load %arg21[%483, %c0_210, %c0_211] : memref<8x2x512xf32, #tpu.memory_space<vmem>>, vector<1x2x512xf32>
    %485 = vector.shape_cast %484 : vector<1x2x512xf32> to vector<2x512xf32>
    %486 = vector.extract_strided_slice %481 {offsets = [0, 0], sizes = [2, 256], strides = [1, 1]} : vector<2x512xf32> to vector<2x256xf32>
    %487 = arith.addf %478, %486 : vector<2x256xf32>
    %488 = vector.extract_strided_slice %485 {offsets = [0, 256], sizes = [2, 256], strides = [1, 1]} : vector<2x512xf32> to vector<2x256xf32>
    %489 = arith.addf %487, %488 : vector<2x256xf32>
    %490 = arith.negf %489 : vector<2x256xf32>
    %491 = math.exp %490 : vector<2x256xf32>
    %cst_212 = arith.constant 1.000000e+00 : f32
    %492 = vector.broadcast %cst_212 : f32 to vector<2x256xf32>
    %493 = arith.addf %492, %491 : vector<2x256xf32>
    %494 = arith.divf %492, %493 : vector<2x256xf32>
    %495 = math.tanh %489 : vector<2x256xf32>
    %496 = vector.extract_strided_slice %494 {offsets = [0, 0], sizes = [2, 64], strides = [1, 1]} : vector<2x256xf32> to vector<2x64xf32>
    %497 = vector.extract_strided_slice %494 {offsets = [0, 64], sizes = [2, 64], strides = [1, 1]} : vector<2x256xf32> to vector<2x64xf32>
    %498 = vector.extract_strided_slice %495 {offsets = [0, 128], sizes = [2, 64], strides = [1, 1]} : vector<2x256xf32> to vector<2x64xf32>
    %499 = vector.extract_strided_slice %494 {offsets = [0, 192], sizes = [2, 64], strides = [1, 1]} : vector<2x256xf32> to vector<2x64xf32>
    %500 = arith.mulf %497, %464 : vector<2x64xf32>
    %501 = arith.mulf %496, %498 : vector<2x64xf32>
    %502 = arith.addf %500, %501 : vector<2x64xf32>
    %503 = math.tanh %502 : vector<2x64xf32>
    %504 = arith.mulf %499, %503 : vector<2x64xf32>
    %505 = vector.extract_strided_slice %504 {offsets = [0, 0], sizes = [2, 32], strides = [1, 1]} : vector<2x64xf32> to vector<2x32xf32>
    %506 = arith.index_cast %c7_i32_205 : i32 to index
    %c0_213 = arith.constant 0 : index
    %c0_214 = arith.constant 0 : index
    %507 = vector.load %arg22[%506, %c0_213, %c0_214] : memref<8x2x32xf32, #tpu.memory_space<vmem>>, vector<1x2x32xf32>
    %508 = vector.shape_cast %507 : vector<1x2x32xf32> to vector<2x32xf32>
    %509 = vector.shape_cast %505 : vector<2x32xf32> to vector<1x2x32xf32>
    tpu.vector_store %arg22[%506, %c0_213, %c0_214], %509 {strides = array<i32>} : memref<8x2x32xf32, #tpu.memory_space<vmem>>, vector<1x2x32xf32>,
    %510 = vector.extract_strided_slice %504 {offsets = [0, 32], sizes = [2, 32], strides = [1, 1]} : vector<2x64xf32> to vector<2x32xf32>
    %c7_i32_215 = arith.constant 7 : i32
    %511 = arith.subi %c7_i32_215, %c7_i32_205 : i32
    %512 = arith.index_cast %511 : i32 to index
    %c0_216 = arith.constant 0 : index
    %c0_217 = arith.constant 0 : index
    %513 = vector.load %arg23[%512, %c0_216, %c0_217] : memref<8x2x32xf32, #tpu.memory_space<vmem>>, vector<1x2x32xf32>
    %514 = vector.shape_cast %513 : vector<1x2x32xf32> to vector<2x32xf32>
    %515 = vector.shape_cast %510 : vector<2x32xf32> to vector<1x2x32xf32>
    tpu.vector_store %arg23[%512, %c0_216, %c0_217], %515 {strides = array<i32>} : memref<8x2x32xf32, #tpu.memory_space<vmem>>, vector<1x2x32xf32>,
    %c8_i32 = arith.constant 8 : i32
    %c0_218 = arith.constant 0 : index
    %c0_219 = arith.constant 0 : index
    %516 = vector.load %arg9[%c0_218, %c0_219] : memref<64x512xf32, #tpu.memory_space<vmem>>, vector<64x512xf32>
    %c0_220 = arith.constant 0 : index
    %c0_221 = arith.constant 0 : index
    %517 = vector.load %arg11[%c0_220, %c0_221] : memref<1x512xf32, #tpu.memory_space<vmem>>, vector<1x512xf32>
    %c0_222 = arith.constant 0 : index
    %c0_223 = arith.constant 0 : index
    %c0_224 = arith.constant 0 : index
    %518 = vector.load %arg22[%c0_222, %c0_223, %c0_224] : memref<8x2x32xf32, #tpu.memory_space<vmem>>, vector<1x2x32xf32>
    %519 = vector.shape_cast %518 : vector<1x2x32xf32> to vector<2x32xf32>
    %520 = vector.extract_strided_slice %516 {offsets = [0, 0], sizes = [32, 512], strides = [1, 1]} : vector<64x512xf32> to vector<32x512xf32>
    %cst_225 = arith.constant dense<0.000000e+00> : vector<2x512xf32>
    %521 = tpu.matmul %519, %520, %cst_225 {dimension_numbers = #tpu.dot_dimension_numbers<[1], [0], [0], [1], [0, 0, 1, 1], [], []>} : vector<2x32xf32>, vector<32x512xf32>, vector<2x512xf32> -> vector<2x512xf32>
    %c0_226 = arith.constant 0 : index
    %c0_227 = arith.constant 0 : index
    %c0_228 = arith.constant 0 : index
    %522 = vector.load %arg23[%c0_226, %c0_227, %c0_228] : memref<8x2x32xf32, #tpu.memory_space<vmem>>, vector<1x2x32xf32>
    %523 = vector.shape_cast %522 : vector<1x2x32xf32> to vector<2x32xf32>
    %524 = vector.extract_strided_slice %516 {offsets = [32, 0], sizes = [32, 512], strides = [1, 1]} : vector<64x512xf32> to vector<32x512xf32>
    %cst_229 = arith.constant dense<0.000000e+00> : vector<2x512xf32>
    %525 = tpu.matmul %523, %524, %cst_229 {dimension_numbers = #tpu.dot_dimension_numbers<[1], [0], [0], [1], [0, 0, 1, 1], [], []>} : vector<2x32xf32>, vector<32x512xf32>, vector<2x512xf32> -> vector<2x512xf32>
    %526 = arith.addf %521, %525 : vector<2x512xf32>
    %527 = vector.broadcast %517 : vector<1x512xf32> to vector<2x512xf32>
    %528 = arith.addf %526, %527 : vector<2x512xf32>
    %c0_230 = arith.constant 0 : index
    %c0_231 = arith.constant 0 : index
    %c0_232 = arith.constant 0 : index
    %529 = vector.load %arg21[%c0_230, %c0_231, %c0_232] : memref<8x2x512xf32, #tpu.memory_space<vmem>>, vector<1x2x512xf32>
    %530 = vector.shape_cast %529 : vector<1x2x512xf32> to vector<2x512xf32>
    %531 = vector.shape_cast %528 : vector<2x512xf32> to vector<1x2x512xf32>
    tpu.vector_store %arg21[%c0_230, %c0_231, %c0_232], %531 {strides = array<i32>} : memref<8x2x512xf32, #tpu.memory_space<vmem>>, vector<1x2x512xf32>,
    %c1_233 = arith.constant 1 : index
    %c0_234 = arith.constant 0 : index
    %c0_235 = arith.constant 0 : index
    %532 = vector.load %arg22[%c1_233, %c0_234, %c0_235] : memref<8x2x32xf32, #tpu.memory_space<vmem>>, vector<1x2x32xf32>
    %533 = vector.shape_cast %532 : vector<1x2x32xf32> to vector<2x32xf32>
    %534 = vector.extract_strided_slice %516 {offsets = [0, 0], sizes = [32, 512], strides = [1, 1]} : vector<64x512xf32> to vector<32x512xf32>
    %cst_236 = arith.constant dense<0.000000e+00> : vector<2x512xf32>
    %535 = tpu.matmul %533, %534, %cst_236 {dimension_numbers = #tpu.dot_dimension_numbers<[1], [0], [0], [1], [0, 0, 1, 1], [], []>} : vector<2x32xf32>, vector<32x512xf32>, vector<2x512xf32> -> vector<2x512xf32>
    %c1_237 = arith.constant 1 : index
    %c0_238 = arith.constant 0 : index
    %c0_239 = arith.constant 0 : index
    %536 = vector.load %arg23[%c1_237, %c0_238, %c0_239] : memref<8x2x32xf32, #tpu.memory_space<vmem>>, vector<1x2x32xf32>
    %537 = vector.shape_cast %536 : vector<1x2x32xf32> to vector<2x32xf32>
    %538 = vector.extract_strided_slice %516 {offsets = [32, 0], sizes = [32, 512], strides = [1, 1]} : vector<64x512xf32> to vector<32x512xf32>
    %cst_240 = arith.constant dense<0.000000e+00> : vector<2x512xf32>
    %539 = tpu.matmul %537, %538, %cst_240 {dimension_numbers = #tpu.dot_dimension_numbers<[1], [0], [0], [1], [0, 0, 1, 1], [], []>} : vector<2x32xf32>, vector<32x512xf32>, vector<2x512xf32> -> vector<2x512xf32>
    %540 = arith.addf %535, %539 : vector<2x512xf32>
    %541 = vector.broadcast %517 : vector<1x512xf32> to vector<2x512xf32>
    %542 = arith.addf %540, %541 : vector<2x512xf32>
    %c1_241 = arith.constant 1 : index
    %c0_242 = arith.constant 0 : index
    %c0_243 = arith.constant 0 : index
    %543 = vector.load %arg21[%c1_241, %c0_242, %c0_243] : memref<8x2x512xf32, #tpu.memory_space<vmem>>, vector<1x2x512xf32>
    %544 = vector.shape_cast %543 : vector<1x2x512xf32> to vector<2x512xf32>
    %545 = vector.shape_cast %542 : vector<2x512xf32> to vector<1x2x512xf32>
    tpu.vector_store %arg21[%c1_241, %c0_242, %c0_243], %545 {strides = array<i32>} : memref<8x2x512xf32, #tpu.memory_space<vmem>>, vector<1x2x512xf32>,
    %c2_244 = arith.constant 2 : index
    %c0_245 = arith.constant 0 : index
    %c0_246 = arith.constant 0 : index
    %546 = vector.load %arg22[%c2_244, %c0_245, %c0_246] : memref<8x2x32xf32, #tpu.memory_space<vmem>>, vector<1x2x32xf32>
    %547 = vector.shape_cast %546 : vector<1x2x32xf32> to vector<2x32xf32>
    %548 = vector.extract_strided_slice %516 {offsets = [0, 0], sizes = [32, 512], strides = [1, 1]} : vector<64x512xf32> to vector<32x512xf32>
    %cst_247 = arith.constant dense<0.000000e+00> : vector<2x512xf32>
    %549 = tpu.matmul %547, %548, %cst_247 {dimension_numbers = #tpu.dot_dimension_numbers<[1], [0], [0], [1], [0, 0, 1, 1], [], []>} : vector<2x32xf32>, vector<32x512xf32>, vector<2x512xf32> -> vector<2x512xf32>
    %c2_248 = arith.constant 2 : index
    %c0_249 = arith.constant 0 : index
    %c0_250 = arith.constant 0 : index
    %550 = vector.load %arg23[%c2_248, %c0_249, %c0_250] : memref<8x2x32xf32, #tpu.memory_space<vmem>>, vector<1x2x32xf32>
    %551 = vector.shape_cast %550 : vector<1x2x32xf32> to vector<2x32xf32>
    %552 = vector.extract_strided_slice %516 {offsets = [32, 0], sizes = [32, 512], strides = [1, 1]} : vector<64x512xf32> to vector<32x512xf32>
    %cst_251 = arith.constant dense<0.000000e+00> : vector<2x512xf32>
    %553 = tpu.matmul %551, %552, %cst_251 {dimension_numbers = #tpu.dot_dimension_numbers<[1], [0], [0], [1], [0, 0, 1, 1], [], []>} : vector<2x32xf32>, vector<32x512xf32>, vector<2x512xf32> -> vector<2x512xf32>
    %554 = arith.addf %549, %553 : vector<2x512xf32>
    %555 = vector.broadcast %517 : vector<1x512xf32> to vector<2x512xf32>
    %556 = arith.addf %554, %555 : vector<2x512xf32>
    %c2_252 = arith.constant 2 : index
    %c0_253 = arith.constant 0 : index
    %c0_254 = arith.constant 0 : index
    %557 = vector.load %arg21[%c2_252, %c0_253, %c0_254] : memref<8x2x512xf32, #tpu.memory_space<vmem>>, vector<1x2x512xf32>
    %558 = vector.shape_cast %557 : vector<1x2x512xf32> to vector<2x512xf32>
    %559 = vector.shape_cast %556 : vector<2x512xf32> to vector<1x2x512xf32>
    tpu.vector_store %arg21[%c2_252, %c0_253, %c0_254], %559 {strides = array<i32>} : memref<8x2x512xf32, #tpu.memory_space<vmem>>, vector<1x2x512xf32>,
    %c3_255 = arith.constant 3 : index
    %c0_256 = arith.constant 0 : index
    %c0_257 = arith.constant 0 : index
    %560 = vector.load %arg22[%c3_255, %c0_256, %c0_257] : memref<8x2x32xf32, #tpu.memory_space<vmem>>, vector<1x2x32xf32>
    %561 = vector.shape_cast %560 : vector<1x2x32xf32> to vector<2x32xf32>
    %562 = vector.extract_strided_slice %516 {offsets = [0, 0], sizes = [32, 512], strides = [1, 1]} : vector<64x512xf32> to vector<32x512xf32>
    %cst_258 = arith.constant dense<0.000000e+00> : vector<2x512xf32>
    %563 = tpu.matmul %561, %562, %cst_258 {dimension_numbers = #tpu.dot_dimension_numbers<[1], [0], [0], [1], [0, 0, 1, 1], [], []>} : vector<2x32xf32>, vector<32x512xf32>, vector<2x512xf32> -> vector<2x512xf32>
    %c3_259 = arith.constant 3 : index
    %c0_260 = arith.constant 0 : index
    %c0_261 = arith.constant 0 : index
    %564 = vector.load %arg23[%c3_259, %c0_260, %c0_261] : memref<8x2x32xf32, #tpu.memory_space<vmem>>, vector<1x2x32xf32>
    %565 = vector.shape_cast %564 : vector<1x2x32xf32> to vector<2x32xf32>
    %566 = vector.extract_strided_slice %516 {offsets = [32, 0], sizes = [32, 512], strides = [1, 1]} : vector<64x512xf32> to vector<32x512xf32>
    %cst_262 = arith.constant dense<0.000000e+00> : vector<2x512xf32>
    %567 = tpu.matmul %565, %566, %cst_262 {dimension_numbers = #tpu.dot_dimension_numbers<[1], [0], [0], [1], [0, 0, 1, 1], [], []>} : vector<2x32xf32>, vector<32x512xf32>, vector<2x512xf32> -> vector<2x512xf32>
    %568 = arith.addf %563, %567 : vector<2x512xf32>
    %569 = vector.broadcast %517 : vector<1x512xf32> to vector<2x512xf32>
    %570 = arith.addf %568, %569 : vector<2x512xf32>
    %c3_263 = arith.constant 3 : index
    %c0_264 = arith.constant 0 : index
    %c0_265 = arith.constant 0 : index
    %571 = vector.load %arg21[%c3_263, %c0_264, %c0_265] : memref<8x2x512xf32, #tpu.memory_space<vmem>>, vector<1x2x512xf32>
    %572 = vector.shape_cast %571 : vector<1x2x512xf32> to vector<2x512xf32>
    %573 = vector.shape_cast %570 : vector<2x512xf32> to vector<1x2x512xf32>
    tpu.vector_store %arg21[%c3_263, %c0_264, %c0_265], %573 {strides = array<i32>} : memref<8x2x512xf32, #tpu.memory_space<vmem>>, vector<1x2x512xf32>,
    %c4_266 = arith.constant 4 : index
    %c0_267 = arith.constant 0 : index
    %c0_268 = arith.constant 0 : index
    %574 = vector.load %arg22[%c4_266, %c0_267, %c0_268] : memref<8x2x32xf32, #tpu.memory_space<vmem>>, vector<1x2x32xf32>
    %575 = vector.shape_cast %574 : vector<1x2x32xf32> to vector<2x32xf32>
    %576 = vector.extract_strided_slice %516 {offsets = [0, 0], sizes = [32, 512], strides = [1, 1]} : vector<64x512xf32> to vector<32x512xf32>
    %cst_269 = arith.constant dense<0.000000e+00> : vector<2x512xf32>
    %577 = tpu.matmul %575, %576, %cst_269 {dimension_numbers = #tpu.dot_dimension_numbers<[1], [0], [0], [1], [0, 0, 1, 1], [], []>} : vector<2x32xf32>, vector<32x512xf32>, vector<2x512xf32> -> vector<2x512xf32>
    %c4_270 = arith.constant 4 : index
    %c0_271 = arith.constant 0 : index
    %c0_272 = arith.constant 0 : index
    %578 = vector.load %arg23[%c4_270, %c0_271, %c0_272] : memref<8x2x32xf32, #tpu.memory_space<vmem>>, vector<1x2x32xf32>
    %579 = vector.shape_cast %578 : vector<1x2x32xf32> to vector<2x32xf32>
    %580 = vector.extract_strided_slice %516 {offsets = [32, 0], sizes = [32, 512], strides = [1, 1]} : vector<64x512xf32> to vector<32x512xf32>
    %cst_273 = arith.constant dense<0.000000e+00> : vector<2x512xf32>
    %581 = tpu.matmul %579, %580, %cst_273 {dimension_numbers = #tpu.dot_dimension_numbers<[1], [0], [0], [1], [0, 0, 1, 1], [], []>} : vector<2x32xf32>, vector<32x512xf32>, vector<2x512xf32> -> vector<2x512xf32>
    %582 = arith.addf %577, %581 : vector<2x512xf32>
    %583 = vector.broadcast %517 : vector<1x512xf32> to vector<2x512xf32>
    %584 = arith.addf %582, %583 : vector<2x512xf32>
    %c4_274 = arith.constant 4 : index
    %c0_275 = arith.constant 0 : index
    %c0_276 = arith.constant 0 : index
    %585 = vector.load %arg21[%c4_274, %c0_275, %c0_276] : memref<8x2x512xf32, #tpu.memory_space<vmem>>, vector<1x2x512xf32>
    %586 = vector.shape_cast %585 : vector<1x2x512xf32> to vector<2x512xf32>
    %587 = vector.shape_cast %584 : vector<2x512xf32> to vector<1x2x512xf32>
    tpu.vector_store %arg21[%c4_274, %c0_275, %c0_276], %587 {strides = array<i32>} : memref<8x2x512xf32, #tpu.memory_space<vmem>>, vector<1x2x512xf32>,
    %c5_277 = arith.constant 5 : index
    %c0_278 = arith.constant 0 : index
    %c0_279 = arith.constant 0 : index
    %588 = vector.load %arg22[%c5_277, %c0_278, %c0_279] : memref<8x2x32xf32, #tpu.memory_space<vmem>>, vector<1x2x32xf32>
    %589 = vector.shape_cast %588 : vector<1x2x32xf32> to vector<2x32xf32>
    %590 = vector.extract_strided_slice %516 {offsets = [0, 0], sizes = [32, 512], strides = [1, 1]} : vector<64x512xf32> to vector<32x512xf32>
    %cst_280 = arith.constant dense<0.000000e+00> : vector<2x512xf32>
    %591 = tpu.matmul %589, %590, %cst_280 {dimension_numbers = #tpu.dot_dimension_numbers<[1], [0], [0], [1], [0, 0, 1, 1], [], []>} : vector<2x32xf32>, vector<32x512xf32>, vector<2x512xf32> -> vector<2x512xf32>
    %c5_281 = arith.constant 5 : index
    %c0_282 = arith.constant 0 : index
    %c0_283 = arith.constant 0 : index
    %592 = vector.load %arg23[%c5_281, %c0_282, %c0_283] : memref<8x2x32xf32, #tpu.memory_space<vmem>>, vector<1x2x32xf32>
    %593 = vector.shape_cast %592 : vector<1x2x32xf32> to vector<2x32xf32>
    %594 = vector.extract_strided_slice %516 {offsets = [32, 0], sizes = [32, 512], strides = [1, 1]} : vector<64x512xf32> to vector<32x512xf32>
    %cst_284 = arith.constant dense<0.000000e+00> : vector<2x512xf32>
    %595 = tpu.matmul %593, %594, %cst_284 {dimension_numbers = #tpu.dot_dimension_numbers<[1], [0], [0], [1], [0, 0, 1, 1], [], []>} : vector<2x32xf32>, vector<32x512xf32>, vector<2x512xf32> -> vector<2x512xf32>
    %596 = arith.addf %591, %595 : vector<2x512xf32>
    %597 = vector.broadcast %517 : vector<1x512xf32> to vector<2x512xf32>
    %598 = arith.addf %596, %597 : vector<2x512xf32>
    %c5_285 = arith.constant 5 : index
    %c0_286 = arith.constant 0 : index
    %c0_287 = arith.constant 0 : index
    %599 = vector.load %arg21[%c5_285, %c0_286, %c0_287] : memref<8x2x512xf32, #tpu.memory_space<vmem>>, vector<1x2x512xf32>
    %600 = vector.shape_cast %599 : vector<1x2x512xf32> to vector<2x512xf32>
    %601 = vector.shape_cast %598 : vector<2x512xf32> to vector<1x2x512xf32>
    tpu.vector_store %arg21[%c5_285, %c0_286, %c0_287], %601 {strides = array<i32>} : memref<8x2x512xf32, #tpu.memory_space<vmem>>, vector<1x2x512xf32>,
    %c6_288 = arith.constant 6 : index
    %c0_289 = arith.constant 0 : index
    %c0_290 = arith.constant 0 : index
    %602 = vector.load %arg22[%c6_288, %c0_289, %c0_290] : memref<8x2x32xf32, #tpu.memory_space<vmem>>, vector<1x2x32xf32>
    %603 = vector.shape_cast %602 : vector<1x2x32xf32> to vector<2x32xf32>
    %604 = vector.extract_strided_slice %516 {offsets = [0, 0], sizes = [32, 512], strides = [1, 1]} : vector<64x512xf32> to vector<32x512xf32>
    %cst_291 = arith.constant dense<0.000000e+00> : vector<2x512xf32>
    %605 = tpu.matmul %603, %604, %cst_291 {dimension_numbers = #tpu.dot_dimension_numbers<[1], [0], [0], [1], [0, 0, 1, 1], [], []>} : vector<2x32xf32>, vector<32x512xf32>, vector<2x512xf32> -> vector<2x512xf32>
    %c6_292 = arith.constant 6 : index
    %c0_293 = arith.constant 0 : index
    %c0_294 = arith.constant 0 : index
    %606 = vector.load %arg23[%c6_292, %c0_293, %c0_294] : memref<8x2x32xf32, #tpu.memory_space<vmem>>, vector<1x2x32xf32>
    %607 = vector.shape_cast %606 : vector<1x2x32xf32> to vector<2x32xf32>
    %608 = vector.extract_strided_slice %516 {offsets = [32, 0], sizes = [32, 512], strides = [1, 1]} : vector<64x512xf32> to vector<32x512xf32>
    %cst_295 = arith.constant dense<0.000000e+00> : vector<2x512xf32>
    %609 = tpu.matmul %607, %608, %cst_295 {dimension_numbers = #tpu.dot_dimension_numbers<[1], [0], [0], [1], [0, 0, 1, 1], [], []>} : vector<2x32xf32>, vector<32x512xf32>, vector<2x512xf32> -> vector<2x512xf32>
    %610 = arith.addf %605, %609 : vector<2x512xf32>
    %611 = vector.broadcast %517 : vector<1x512xf32> to vector<2x512xf32>
    %612 = arith.addf %610, %611 : vector<2x512xf32>
    %c6_296 = arith.constant 6 : index
    %c0_297 = arith.constant 0 : index
    %c0_298 = arith.constant 0 : index
    %613 = vector.load %arg21[%c6_296, %c0_297, %c0_298] : memref<8x2x512xf32, #tpu.memory_space<vmem>>, vector<1x2x512xf32>
    %614 = vector.shape_cast %613 : vector<1x2x512xf32> to vector<2x512xf32>
    %615 = vector.shape_cast %612 : vector<2x512xf32> to vector<1x2x512xf32>
    tpu.vector_store %arg21[%c6_296, %c0_297, %c0_298], %615 {strides = array<i32>} : memref<8x2x512xf32, #tpu.memory_space<vmem>>, vector<1x2x512xf32>,
    %c7_299 = arith.constant 7 : index
    %c0_300 = arith.constant 0 : index
    %c0_301 = arith.constant 0 : index
    %616 = vector.load %arg22[%c7_299, %c0_300, %c0_301] : memref<8x2x32xf32, #tpu.memory_space<vmem>>, vector<1x2x32xf32>
    %617 = vector.shape_cast %616 : vector<1x2x32xf32> to vector<2x32xf32>
    %618 = vector.extract_strided_slice %516 {offsets = [0, 0], sizes = [32, 512], strides = [1, 1]} : vector<64x512xf32> to vector<32x512xf32>
    %cst_302 = arith.constant dense<0.000000e+00> : vector<2x512xf32>
    %619 = tpu.matmul %617, %618, %cst_302 {dimension_numbers = #tpu.dot_dimension_numbers<[1], [0], [0], [1], [0, 0, 1, 1], [], []>} : vector<2x32xf32>, vector<32x512xf32>, vector<2x512xf32> -> vector<2x512xf32>
    %c7_303 = arith.constant 7 : index
    %c0_304 = arith.constant 0 : index
    %c0_305 = arith.constant 0 : index
    %620 = vector.load %arg23[%c7_303, %c0_304, %c0_305] : memref<8x2x32xf32, #tpu.memory_space<vmem>>, vector<1x2x32xf32>
    %621 = vector.shape_cast %620 : vector<1x2x32xf32> to vector<2x32xf32>
    %622 = vector.extract_strided_slice %516 {offsets = [32, 0], sizes = [32, 512], strides = [1, 1]} : vector<64x512xf32> to vector<32x512xf32>
    %cst_306 = arith.constant dense<0.000000e+00> : vector<2x512xf32>
    %623 = tpu.matmul %621, %622, %cst_306 {dimension_numbers = #tpu.dot_dimension_numbers<[1], [0], [0], [1], [0, 0, 1, 1], [], []>} : vector<2x32xf32>, vector<32x512xf32>, vector<2x512xf32> -> vector<2x512xf32>
    %624 = arith.addf %619, %623 : vector<2x512xf32>
    %625 = vector.broadcast %517 : vector<1x512xf32> to vector<2x512xf32>
    %626 = arith.addf %624, %625 : vector<2x512xf32>
    %c7_307 = arith.constant 7 : index
    %c0_308 = arith.constant 0 : index
    %c0_309 = arith.constant 0 : index
    %627 = vector.load %arg21[%c7_307, %c0_308, %c0_309] : memref<8x2x512xf32, #tpu.memory_space<vmem>>, vector<1x2x512xf32>
    %628 = vector.shape_cast %627 : vector<1x2x512xf32> to vector<2x512xf32>
    %629 = vector.shape_cast %626 : vector<2x512xf32> to vector<1x2x512xf32>
    tpu.vector_store %arg21[%c7_307, %c0_308, %c0_309], %629 {strides = array<i32>} : memref<8x2x512xf32, #tpu.memory_space<vmem>>, vector<1x2x512xf32>,
    %c0_310 = arith.constant 0 : index
    %c0_311 = arith.constant 0 : index
    %630 = vector.load %arg10[%c0_310, %c0_311] : memref<64x256xf32, #tpu.memory_space<vmem>>, vector<64x256xf32>
    %cst_312 = arith.constant 0.000000e+00 : f32
    %631 = vector.broadcast %cst_312 : f32 to vector<2x64xf32>
    %c0_i32_313 = arith.constant 0 : i32
    %cst_314 = arith.constant dense<0.000000e+00> : vector<2x256xf32>
    %632 = tpu.matmul %631, %630, %cst_314 {dimension_numbers = #tpu.dot_dimension_numbers<[1], [0], [0], [1], [0, 0, 1, 1], [], []>} : vector<2x64xf32>, vector<64x256xf32>, vector<2x256xf32> -> vector<2x256xf32>
    %633 = arith.index_cast %c0_i32_313 : i32 to index
    %c0_315 = arith.constant 0 : index
    %c0_316 = arith.constant 0 : index
    %634 = vector.load %arg21[%633, %c0_315, %c0_316] : memref<8x2x512xf32, #tpu.memory_space<vmem>>, vector<1x2x512xf32>
    %635 = vector.shape_cast %634 : vector<1x2x512xf32> to vector<2x512xf32>
    %c7_i32_317 = arith.constant 7 : i32
    %636 = arith.subi %c7_i32_317, %c0_i32_313 : i32
    %637 = arith.index_cast %636 : i32 to index
    %c0_318 = arith.constant 0 : index
    %c0_319 = arith.constant 0 : index
    %638 = vector.load %arg21[%637, %c0_318, %c0_319] : memref<8x2x512xf32, #tpu.memory_space<vmem>>, vector<1x2x512xf32>
    %639 = vector.shape_cast %638 : vector<1x2x512xf32> to vector<2x512xf32>
    %640 = vector.extract_strided_slice %635 {offsets = [0, 0], sizes = [2, 256], strides = [1, 1]} : vector<2x512xf32> to vector<2x256xf32>
    %641 = arith.addf %632, %640 : vector<2x256xf32>
    %642 = vector.extract_strided_slice %639 {offsets = [0, 256], sizes = [2, 256], strides = [1, 1]} : vector<2x512xf32> to vector<2x256xf32>
    %643 = arith.addf %641, %642 : vector<2x256xf32>
    %644 = arith.negf %643 : vector<2x256xf32>
    %645 = math.exp %644 : vector<2x256xf32>
    %cst_320 = arith.constant 1.000000e+00 : f32
    %646 = vector.broadcast %cst_320 : f32 to vector<2x256xf32>
    %647 = arith.addf %646, %645 : vector<2x256xf32>
    %648 = arith.divf %646, %647 : vector<2x256xf32>
    %649 = math.tanh %643 : vector<2x256xf32>
    %650 = vector.extract_strided_slice %648 {offsets = [0, 0], sizes = [2, 64], strides = [1, 1]} : vector<2x256xf32> to vector<2x64xf32>
    %651 = vector.extract_strided_slice %648 {offsets = [0, 64], sizes = [2, 64], strides = [1, 1]} : vector<2x256xf32> to vector<2x64xf32>
    %652 = vector.extract_strided_slice %649 {offsets = [0, 128], sizes = [2, 64], strides = [1, 1]} : vector<2x256xf32> to vector<2x64xf32>
    %653 = vector.extract_strided_slice %648 {offsets = [0, 192], sizes = [2, 64], strides = [1, 1]} : vector<2x256xf32> to vector<2x64xf32>
    %654 = arith.mulf %651, %631 : vector<2x64xf32>
    %655 = arith.mulf %650, %652 : vector<2x64xf32>
    %656 = arith.addf %654, %655 : vector<2x64xf32>
    %657 = math.tanh %656 : vector<2x64xf32>
    %658 = arith.mulf %653, %657 : vector<2x64xf32>
    %659 = vector.extract_strided_slice %658 {offsets = [0, 0], sizes = [2, 32], strides = [1, 1]} : vector<2x64xf32> to vector<2x32xf32>
    %660 = arith.index_cast %c0_i32_313 : i32 to index
    %c0_321 = arith.constant 0 : index
    %c0_322 = arith.constant 0 : index
    %661 = vector.load %arg24[%660, %c0_321, %c0_322] : memref<8x2x32xf32, #tpu.memory_space<vmem>>, vector<1x2x32xf32>
    %662 = vector.shape_cast %661 : vector<1x2x32xf32> to vector<2x32xf32>
    %663 = vector.shape_cast %659 : vector<2x32xf32> to vector<1x2x32xf32>
    tpu.vector_store %arg24[%660, %c0_321, %c0_322], %663 {strides = array<i32>} : memref<8x2x32xf32, #tpu.memory_space<vmem>>, vector<1x2x32xf32>,
    %664 = vector.extract_strided_slice %658 {offsets = [0, 32], sizes = [2, 32], strides = [1, 1]} : vector<2x64xf32> to vector<2x32xf32>
    %c7_i32_323 = arith.constant 7 : i32
    %665 = arith.subi %c7_i32_323, %c0_i32_313 : i32
    %666 = arith.index_cast %665 : i32 to index
    %c0_324 = arith.constant 0 : index
    %c0_325 = arith.constant 0 : index
    %667 = vector.load %arg25[%666, %c0_324, %c0_325] : memref<8x2x32xf32, #tpu.memory_space<vmem>>, vector<1x2x32xf32>
    %668 = vector.shape_cast %667 : vector<1x2x32xf32> to vector<2x32xf32>
    %669 = vector.shape_cast %664 : vector<2x32xf32> to vector<1x2x32xf32>
    tpu.vector_store %arg25[%666, %c0_324, %c0_325], %669 {strides = array<i32>} : memref<8x2x32xf32, #tpu.memory_space<vmem>>, vector<1x2x32xf32>,
    %c1_i32_326 = arith.constant 1 : i32
    %cst_327 = arith.constant dense<0.000000e+00> : vector<2x256xf32>
    %670 = tpu.matmul %658, %630, %cst_327 {dimension_numbers = #tpu.dot_dimension_numbers<[1], [0], [0], [1], [0, 0, 1, 1], [], []>} : vector<2x64xf32>, vector<64x256xf32>, vector<2x256xf32> -> vector<2x256xf32>
    %671 = arith.index_cast %c1_i32_326 : i32 to index
    %c0_328 = arith.constant 0 : index
    %c0_329 = arith.constant 0 : index
    %672 = vector.load %arg21[%671, %c0_328, %c0_329] : memref<8x2x512xf32, #tpu.memory_space<vmem>>, vector<1x2x512xf32>
    %673 = vector.shape_cast %672 : vector<1x2x512xf32> to vector<2x512xf32>
    %c7_i32_330 = arith.constant 7 : i32
    %674 = arith.subi %c7_i32_330, %c1_i32_326 : i32
    %675 = arith.index_cast %674 : i32 to index
    %c0_331 = arith.constant 0 : index
    %c0_332 = arith.constant 0 : index
    %676 = vector.load %arg21[%675, %c0_331, %c0_332] : memref<8x2x512xf32, #tpu.memory_space<vmem>>, vector<1x2x512xf32>
    %677 = vector.shape_cast %676 : vector<1x2x512xf32> to vector<2x512xf32>
    %678 = vector.extract_strided_slice %673 {offsets = [0, 0], sizes = [2, 256], strides = [1, 1]} : vector<2x512xf32> to vector<2x256xf32>
    %679 = arith.addf %670, %678 : vector<2x256xf32>
    %680 = vector.extract_strided_slice %677 {offsets = [0, 256], sizes = [2, 256], strides = [1, 1]} : vector<2x512xf32> to vector<2x256xf32>
    %681 = arith.addf %679, %680 : vector<2x256xf32>
    %682 = arith.negf %681 : vector<2x256xf32>
    %683 = math.exp %682 : vector<2x256xf32>
    %cst_333 = arith.constant 1.000000e+00 : f32
    %684 = vector.broadcast %cst_333 : f32 to vector<2x256xf32>
    %685 = arith.addf %684, %683 : vector<2x256xf32>
    %686 = arith.divf %684, %685 : vector<2x256xf32>
    %687 = math.tanh %681 : vector<2x256xf32>
    %688 = vector.extract_strided_slice %686 {offsets = [0, 0], sizes = [2, 64], strides = [1, 1]} : vector<2x256xf32> to vector<2x64xf32>
    %689 = vector.extract_strided_slice %686 {offsets = [0, 64], sizes = [2, 64], strides = [1, 1]} : vector<2x256xf32> to vector<2x64xf32>
    %690 = vector.extract_strided_slice %687 {offsets = [0, 128], sizes = [2, 64], strides = [1, 1]} : vector<2x256xf32> to vector<2x64xf32>
    %691 = vector.extract_strided_slice %686 {offsets = [0, 192], sizes = [2, 64], strides = [1, 1]} : vector<2x256xf32> to vector<2x64xf32>
    %692 = arith.mulf %689, %656 : vector<2x64xf32>
    %693 = arith.mulf %688, %690 : vector<2x64xf32>
    %694 = arith.addf %692, %693 : vector<2x64xf32>
    %695 = math.tanh %694 : vector<2x64xf32>
    %696 = arith.mulf %691, %695 : vector<2x64xf32>
    %697 = vector.extract_strided_slice %696 {offsets = [0, 0], sizes = [2, 32], strides = [1, 1]} : vector<2x64xf32> to vector<2x32xf32>
    %698 = arith.index_cast %c1_i32_326 : i32 to index
    %c0_334 = arith.constant 0 : index
    %c0_335 = arith.constant 0 : index
    %699 = vector.load %arg24[%698, %c0_334, %c0_335] : memref<8x2x32xf32, #tpu.memory_space<vmem>>, vector<1x2x32xf32>
    %700 = vector.shape_cast %699 : vector<1x2x32xf32> to vector<2x32xf32>
    %701 = vector.shape_cast %697 : vector<2x32xf32> to vector<1x2x32xf32>
    tpu.vector_store %arg24[%698, %c0_334, %c0_335], %701 {strides = array<i32>} : memref<8x2x32xf32, #tpu.memory_space<vmem>>, vector<1x2x32xf32>,
    %702 = vector.extract_strided_slice %696 {offsets = [0, 32], sizes = [2, 32], strides = [1, 1]} : vector<2x64xf32> to vector<2x32xf32>
    %c7_i32_336 = arith.constant 7 : i32
    %703 = arith.subi %c7_i32_336, %c1_i32_326 : i32
    %704 = arith.index_cast %703 : i32 to index
    %c0_337 = arith.constant 0 : index
    %c0_338 = arith.constant 0 : index
    %705 = vector.load %arg25[%704, %c0_337, %c0_338] : memref<8x2x32xf32, #tpu.memory_space<vmem>>, vector<1x2x32xf32>
    %706 = vector.shape_cast %705 : vector<1x2x32xf32> to vector<2x32xf32>
    %707 = vector.shape_cast %702 : vector<2x32xf32> to vector<1x2x32xf32>
    tpu.vector_store %arg25[%704, %c0_337, %c0_338], %707 {strides = array<i32>} : memref<8x2x32xf32, #tpu.memory_space<vmem>>, vector<1x2x32xf32>,
    %c2_i32_339 = arith.constant 2 : i32
    %cst_340 = arith.constant dense<0.000000e+00> : vector<2x256xf32>
    %708 = tpu.matmul %696, %630, %cst_340 {dimension_numbers = #tpu.dot_dimension_numbers<[1], [0], [0], [1], [0, 0, 1, 1], [], []>} : vector<2x64xf32>, vector<64x256xf32>, vector<2x256xf32> -> vector<2x256xf32>
    %709 = arith.index_cast %c2_i32_339 : i32 to index
    %c0_341 = arith.constant 0 : index
    %c0_342 = arith.constant 0 : index
    %710 = vector.load %arg21[%709, %c0_341, %c0_342] : memref<8x2x512xf32, #tpu.memory_space<vmem>>, vector<1x2x512xf32>
    %711 = vector.shape_cast %710 : vector<1x2x512xf32> to vector<2x512xf32>
    %c7_i32_343 = arith.constant 7 : i32
    %712 = arith.subi %c7_i32_343, %c2_i32_339 : i32
    %713 = arith.index_cast %712 : i32 to index
    %c0_344 = arith.constant 0 : index
    %c0_345 = arith.constant 0 : index
    %714 = vector.load %arg21[%713, %c0_344, %c0_345] : memref<8x2x512xf32, #tpu.memory_space<vmem>>, vector<1x2x512xf32>
    %715 = vector.shape_cast %714 : vector<1x2x512xf32> to vector<2x512xf32>
    %716 = vector.extract_strided_slice %711 {offsets = [0, 0], sizes = [2, 256], strides = [1, 1]} : vector<2x512xf32> to vector<2x256xf32>
    %717 = arith.addf %708, %716 : vector<2x256xf32>
    %718 = vector.extract_strided_slice %715 {offsets = [0, 256], sizes = [2, 256], strides = [1, 1]} : vector<2x512xf32> to vector<2x256xf32>
    %719 = arith.addf %717, %718 : vector<2x256xf32>
    %720 = arith.negf %719 : vector<2x256xf32>
    %721 = math.exp %720 : vector<2x256xf32>
    %cst_346 = arith.constant 1.000000e+00 : f32
    %722 = vector.broadcast %cst_346 : f32 to vector<2x256xf32>
    %723 = arith.addf %722, %721 : vector<2x256xf32>
    %724 = arith.divf %722, %723 : vector<2x256xf32>
    %725 = math.tanh %719 : vector<2x256xf32>
    %726 = vector.extract_strided_slice %724 {offsets = [0, 0], sizes = [2, 64], strides = [1, 1]} : vector<2x256xf32> to vector<2x64xf32>
    %727 = vector.extract_strided_slice %724 {offsets = [0, 64], sizes = [2, 64], strides = [1, 1]} : vector<2x256xf32> to vector<2x64xf32>
    %728 = vector.extract_strided_slice %725 {offsets = [0, 128], sizes = [2, 64], strides = [1, 1]} : vector<2x256xf32> to vector<2x64xf32>
    %729 = vector.extract_strided_slice %724 {offsets = [0, 192], sizes = [2, 64], strides = [1, 1]} : vector<2x256xf32> to vector<2x64xf32>
    %730 = arith.mulf %727, %694 : vector<2x64xf32>
    %731 = arith.mulf %726, %728 : vector<2x64xf32>
    %732 = arith.addf %730, %731 : vector<2x64xf32>
    %733 = math.tanh %732 : vector<2x64xf32>
    %734 = arith.mulf %729, %733 : vector<2x64xf32>
    %735 = vector.extract_strided_slice %734 {offsets = [0, 0], sizes = [2, 32], strides = [1, 1]} : vector<2x64xf32> to vector<2x32xf32>
    %736 = arith.index_cast %c2_i32_339 : i32 to index
    %c0_347 = arith.constant 0 : index
    %c0_348 = arith.constant 0 : index
    %737 = vector.load %arg24[%736, %c0_347, %c0_348] : memref<8x2x32xf32, #tpu.memory_space<vmem>>, vector<1x2x32xf32>
    %738 = vector.shape_cast %737 : vector<1x2x32xf32> to vector<2x32xf32>
    %739 = vector.shape_cast %735 : vector<2x32xf32> to vector<1x2x32xf32>
    tpu.vector_store %arg24[%736, %c0_347, %c0_348], %739 {strides = array<i32>} : memref<8x2x32xf32, #tpu.memory_space<vmem>>, vector<1x2x32xf32>,
    %740 = vector.extract_strided_slice %734 {offsets = [0, 32], sizes = [2, 32], strides = [1, 1]} : vector<2x64xf32> to vector<2x32xf32>
    %c7_i32_349 = arith.constant 7 : i32
    %741 = arith.subi %c7_i32_349, %c2_i32_339 : i32
    %742 = arith.index_cast %741 : i32 to index
    %c0_350 = arith.constant 0 : index
    %c0_351 = arith.constant 0 : index
    %743 = vector.load %arg25[%742, %c0_350, %c0_351] : memref<8x2x32xf32, #tpu.memory_space<vmem>>, vector<1x2x32xf32>
    %744 = vector.shape_cast %743 : vector<1x2x32xf32> to vector<2x32xf32>
    %745 = vector.shape_cast %740 : vector<2x32xf32> to vector<1x2x32xf32>
    tpu.vector_store %arg25[%742, %c0_350, %c0_351], %745 {strides = array<i32>} : memref<8x2x32xf32, #tpu.memory_space<vmem>>, vector<1x2x32xf32>,
    %c3_i32_352 = arith.constant 3 : i32
    %cst_353 = arith.constant dense<0.000000e+00> : vector<2x256xf32>
    %746 = tpu.matmul %734, %630, %cst_353 {dimension_numbers = #tpu.dot_dimension_numbers<[1], [0], [0], [1], [0, 0, 1, 1], [], []>} : vector<2x64xf32>, vector<64x256xf32>, vector<2x256xf32> -> vector<2x256xf32>
    %747 = arith.index_cast %c3_i32_352 : i32 to index
    %c0_354 = arith.constant 0 : index
    %c0_355 = arith.constant 0 : index
    %748 = vector.load %arg21[%747, %c0_354, %c0_355] : memref<8x2x512xf32, #tpu.memory_space<vmem>>, vector<1x2x512xf32>
    %749 = vector.shape_cast %748 : vector<1x2x512xf32> to vector<2x512xf32>
    %c7_i32_356 = arith.constant 7 : i32
    %750 = arith.subi %c7_i32_356, %c3_i32_352 : i32
    %751 = arith.index_cast %750 : i32 to index
    %c0_357 = arith.constant 0 : index
    %c0_358 = arith.constant 0 : index
    %752 = vector.load %arg21[%751, %c0_357, %c0_358] : memref<8x2x512xf32, #tpu.memory_space<vmem>>, vector<1x2x512xf32>
    %753 = vector.shape_cast %752 : vector<1x2x512xf32> to vector<2x512xf32>
    %754 = vector.extract_strided_slice %749 {offsets = [0, 0], sizes = [2, 256], strides = [1, 1]} : vector<2x512xf32> to vector<2x256xf32>
    %755 = arith.addf %746, %754 : vector<2x256xf32>
    %756 = vector.extract_strided_slice %753 {offsets = [0, 256], sizes = [2, 256], strides = [1, 1]} : vector<2x512xf32> to vector<2x256xf32>
    %757 = arith.addf %755, %756 : vector<2x256xf32>
    %758 = arith.negf %757 : vector<2x256xf32>
    %759 = math.exp %758 : vector<2x256xf32>
    %cst_359 = arith.constant 1.000000e+00 : f32
    %760 = vector.broadcast %cst_359 : f32 to vector<2x256xf32>
    %761 = arith.addf %760, %759 : vector<2x256xf32>
    %762 = arith.divf %760, %761 : vector<2x256xf32>
    %763 = math.tanh %757 : vector<2x256xf32>
    %764 = vector.extract_strided_slice %762 {offsets = [0, 0], sizes = [2, 64], strides = [1, 1]} : vector<2x256xf32> to vector<2x64xf32>
    %765 = vector.extract_strided_slice %762 {offsets = [0, 64], sizes = [2, 64], strides = [1, 1]} : vector<2x256xf32> to vector<2x64xf32>
    %766 = vector.extract_strided_slice %763 {offsets = [0, 128], sizes = [2, 64], strides = [1, 1]} : vector<2x256xf32> to vector<2x64xf32>
    %767 = vector.extract_strided_slice %762 {offsets = [0, 192], sizes = [2, 64], strides = [1, 1]} : vector<2x256xf32> to vector<2x64xf32>
    %768 = arith.mulf %765, %732 : vector<2x64xf32>
    %769 = arith.mulf %764, %766 : vector<2x64xf32>
    %770 = arith.addf %768, %769 : vector<2x64xf32>
    %771 = math.tanh %770 : vector<2x64xf32>
    %772 = arith.mulf %767, %771 : vector<2x64xf32>
    %773 = vector.extract_strided_slice %772 {offsets = [0, 0], sizes = [2, 32], strides = [1, 1]} : vector<2x64xf32> to vector<2x32xf32>
    %774 = arith.index_cast %c3_i32_352 : i32 to index
    %c0_360 = arith.constant 0 : index
    %c0_361 = arith.constant 0 : index
    %775 = vector.load %arg24[%774, %c0_360, %c0_361] : memref<8x2x32xf32, #tpu.memory_space<vmem>>, vector<1x2x32xf32>
    %776 = vector.shape_cast %775 : vector<1x2x32xf32> to vector<2x32xf32>
    %777 = vector.shape_cast %773 : vector<2x32xf32> to vector<1x2x32xf32>
    tpu.vector_store %arg24[%774, %c0_360, %c0_361], %777 {strides = array<i32>} : memref<8x2x32xf32, #tpu.memory_space<vmem>>, vector<1x2x32xf32>,
    %778 = vector.extract_strided_slice %772 {offsets = [0, 32], sizes = [2, 32], strides = [1, 1]} : vector<2x64xf32> to vector<2x32xf32>
    %c7_i32_362 = arith.constant 7 : i32
    %779 = arith.subi %c7_i32_362, %c3_i32_352 : i32
    %780 = arith.index_cast %779 : i32 to index
    %c0_363 = arith.constant 0 : index
    %c0_364 = arith.constant 0 : index
    %781 = vector.load %arg25[%780, %c0_363, %c0_364] : memref<8x2x32xf32, #tpu.memory_space<vmem>>, vector<1x2x32xf32>
    %782 = vector.shape_cast %781 : vector<1x2x32xf32> to vector<2x32xf32>
    %783 = vector.shape_cast %778 : vector<2x32xf32> to vector<1x2x32xf32>
    tpu.vector_store %arg25[%780, %c0_363, %c0_364], %783 {strides = array<i32>} : memref<8x2x32xf32, #tpu.memory_space<vmem>>, vector<1x2x32xf32>,
    %c4_i32_365 = arith.constant 4 : i32
    %cst_366 = arith.constant dense<0.000000e+00> : vector<2x256xf32>
    %784 = tpu.matmul %772, %630, %cst_366 {dimension_numbers = #tpu.dot_dimension_numbers<[1], [0], [0], [1], [0, 0, 1, 1], [], []>} : vector<2x64xf32>, vector<64x256xf32>, vector<2x256xf32> -> vector<2x256xf32>
    %785 = arith.index_cast %c4_i32_365 : i32 to index
    %c0_367 = arith.constant 0 : index
    %c0_368 = arith.constant 0 : index
    %786 = vector.load %arg21[%785, %c0_367, %c0_368] : memref<8x2x512xf32, #tpu.memory_space<vmem>>, vector<1x2x512xf32>
    %787 = vector.shape_cast %786 : vector<1x2x512xf32> to vector<2x512xf32>
    %c7_i32_369 = arith.constant 7 : i32
    %788 = arith.subi %c7_i32_369, %c4_i32_365 : i32
    %789 = arith.index_cast %788 : i32 to index
    %c0_370 = arith.constant 0 : index
    %c0_371 = arith.constant 0 : index
    %790 = vector.load %arg21[%789, %c0_370, %c0_371] : memref<8x2x512xf32, #tpu.memory_space<vmem>>, vector<1x2x512xf32>
    %791 = vector.shape_cast %790 : vector<1x2x512xf32> to vector<2x512xf32>
    %792 = vector.extract_strided_slice %787 {offsets = [0, 0], sizes = [2, 256], strides = [1, 1]} : vector<2x512xf32> to vector<2x256xf32>
    %793 = arith.addf %784, %792 : vector<2x256xf32>
    %794 = vector.extract_strided_slice %791 {offsets = [0, 256], sizes = [2, 256], strides = [1, 1]} : vector<2x512xf32> to vector<2x256xf32>
    %795 = arith.addf %793, %794 : vector<2x256xf32>
    %796 = arith.negf %795 : vector<2x256xf32>
    %797 = math.exp %796 : vector<2x256xf32>
    %cst_372 = arith.constant 1.000000e+00 : f32
    %798 = vector.broadcast %cst_372 : f32 to vector<2x256xf32>
    %799 = arith.addf %798, %797 : vector<2x256xf32>
    %800 = arith.divf %798, %799 : vector<2x256xf32>
    %801 = math.tanh %795 : vector<2x256xf32>
    %802 = vector.extract_strided_slice %800 {offsets = [0, 0], sizes = [2, 64], strides = [1, 1]} : vector<2x256xf32> to vector<2x64xf32>
    %803 = vector.extract_strided_slice %800 {offsets = [0, 64], sizes = [2, 64], strides = [1, 1]} : vector<2x256xf32> to vector<2x64xf32>
    %804 = vector.extract_strided_slice %801 {offsets = [0, 128], sizes = [2, 64], strides = [1, 1]} : vector<2x256xf32> to vector<2x64xf32>
    %805 = vector.extract_strided_slice %800 {offsets = [0, 192], sizes = [2, 64], strides = [1, 1]} : vector<2x256xf32> to vector<2x64xf32>
    %806 = arith.mulf %803, %770 : vector<2x64xf32>
    %807 = arith.mulf %802, %804 : vector<2x64xf32>
    %808 = arith.addf %806, %807 : vector<2x64xf32>
    %809 = math.tanh %808 : vector<2x64xf32>
    %810 = arith.mulf %805, %809 : vector<2x64xf32>
    %811 = vector.extract_strided_slice %810 {offsets = [0, 0], sizes = [2, 32], strides = [1, 1]} : vector<2x64xf32> to vector<2x32xf32>
    %812 = arith.index_cast %c4_i32_365 : i32 to index
    %c0_373 = arith.constant 0 : index
    %c0_374 = arith.constant 0 : index
    %813 = vector.load %arg24[%812, %c0_373, %c0_374] : memref<8x2x32xf32, #tpu.memory_space<vmem>>, vector<1x2x32xf32>
    %814 = vector.shape_cast %813 : vector<1x2x32xf32> to vector<2x32xf32>
    %815 = vector.shape_cast %811 : vector<2x32xf32> to vector<1x2x32xf32>
    tpu.vector_store %arg24[%812, %c0_373, %c0_374], %815 {strides = array<i32>} : memref<8x2x32xf32, #tpu.memory_space<vmem>>, vector<1x2x32xf32>,
    %816 = vector.extract_strided_slice %810 {offsets = [0, 32], sizes = [2, 32], strides = [1, 1]} : vector<2x64xf32> to vector<2x32xf32>
    %c7_i32_375 = arith.constant 7 : i32
    %817 = arith.subi %c7_i32_375, %c4_i32_365 : i32
    %818 = arith.index_cast %817 : i32 to index
    %c0_376 = arith.constant 0 : index
    %c0_377 = arith.constant 0 : index
    %819 = vector.load %arg25[%818, %c0_376, %c0_377] : memref<8x2x32xf32, #tpu.memory_space<vmem>>, vector<1x2x32xf32>
    %820 = vector.shape_cast %819 : vector<1x2x32xf32> to vector<2x32xf32>
    %821 = vector.shape_cast %816 : vector<2x32xf32> to vector<1x2x32xf32>
    tpu.vector_store %arg25[%818, %c0_376, %c0_377], %821 {strides = array<i32>} : memref<8x2x32xf32, #tpu.memory_space<vmem>>, vector<1x2x32xf32>,
    %c5_i32_378 = arith.constant 5 : i32
    %cst_379 = arith.constant dense<0.000000e+00> : vector<2x256xf32>
    %822 = tpu.matmul %810, %630, %cst_379 {dimension_numbers = #tpu.dot_dimension_numbers<[1], [0], [0], [1], [0, 0, 1, 1], [], []>} : vector<2x64xf32>, vector<64x256xf32>, vector<2x256xf32> -> vector<2x256xf32>
    %823 = arith.index_cast %c5_i32_378 : i32 to index
    %c0_380 = arith.constant 0 : index
    %c0_381 = arith.constant 0 : index
    %824 = vector.load %arg21[%823, %c0_380, %c0_381] : memref<8x2x512xf32, #tpu.memory_space<vmem>>, vector<1x2x512xf32>
    %825 = vector.shape_cast %824 : vector<1x2x512xf32> to vector<2x512xf32>
    %c7_i32_382 = arith.constant 7 : i32
    %826 = arith.subi %c7_i32_382, %c5_i32_378 : i32
    %827 = arith.index_cast %826 : i32 to index
    %c0_383 = arith.constant 0 : index
    %c0_384 = arith.constant 0 : index
    %828 = vector.load %arg21[%827, %c0_383, %c0_384] : memref<8x2x512xf32, #tpu.memory_space<vmem>>, vector<1x2x512xf32>
    %829 = vector.shape_cast %828 : vector<1x2x512xf32> to vector<2x512xf32>
    %830 = vector.extract_strided_slice %825 {offsets = [0, 0], sizes = [2, 256], strides = [1, 1]} : vector<2x512xf32> to vector<2x256xf32>
    %831 = arith.addf %822, %830 : vector<2x256xf32>
    %832 = vector.extract_strided_slice %829 {offsets = [0, 256], sizes = [2, 256], strides = [1, 1]} : vector<2x512xf32> to vector<2x256xf32>
    %833 = arith.addf %831, %832 : vector<2x256xf32>
    %834 = arith.negf %833 : vector<2x256xf32>
    %835 = math.exp %834 : vector<2x256xf32>
    %cst_385 = arith.constant 1.000000e+00 : f32
    %836 = vector.broadcast %cst_385 : f32 to vector<2x256xf32>
    %837 = arith.addf %836, %835 : vector<2x256xf32>
    %838 = arith.divf %836, %837 : vector<2x256xf32>
    %839 = math.tanh %833 : vector<2x256xf32>
    %840 = vector.extract_strided_slice %838 {offsets = [0, 0], sizes = [2, 64], strides = [1, 1]} : vector<2x256xf32> to vector<2x64xf32>
    %841 = vector.extract_strided_slice %838 {offsets = [0, 64], sizes = [2, 64], strides = [1, 1]} : vector<2x256xf32> to vector<2x64xf32>
    %842 = vector.extract_strided_slice %839 {offsets = [0, 128], sizes = [2, 64], strides = [1, 1]} : vector<2x256xf32> to vector<2x64xf32>
    %843 = vector.extract_strided_slice %838 {offsets = [0, 192], sizes = [2, 64], strides = [1, 1]} : vector<2x256xf32> to vector<2x64xf32>
    %844 = arith.mulf %841, %808 : vector<2x64xf32>
    %845 = arith.mulf %840, %842 : vector<2x64xf32>
    %846 = arith.addf %844, %845 : vector<2x64xf32>
    %847 = math.tanh %846 : vector<2x64xf32>
    %848 = arith.mulf %843, %847 : vector<2x64xf32>
    %849 = vector.extract_strided_slice %848 {offsets = [0, 0], sizes = [2, 32], strides = [1, 1]} : vector<2x64xf32> to vector<2x32xf32>
    %850 = arith.index_cast %c5_i32_378 : i32 to index
    %c0_386 = arith.constant 0 : index
    %c0_387 = arith.constant 0 : index
    %851 = vector.load %arg24[%850, %c0_386, %c0_387] : memref<8x2x32xf32, #tpu.memory_space<vmem>>, vector<1x2x32xf32>
    %852 = vector.shape_cast %851 : vector<1x2x32xf32> to vector<2x32xf32>
    %853 = vector.shape_cast %849 : vector<2x32xf32> to vector<1x2x32xf32>
    tpu.vector_store %arg24[%850, %c0_386, %c0_387], %853 {strides = array<i32>} : memref<8x2x32xf32, #tpu.memory_space<vmem>>, vector<1x2x32xf32>,
    %854 = vector.extract_strided_slice %848 {offsets = [0, 32], sizes = [2, 32], strides = [1, 1]} : vector<2x64xf32> to vector<2x32xf32>
    %c7_i32_388 = arith.constant 7 : i32
    %855 = arith.subi %c7_i32_388, %c5_i32_378 : i32
    %856 = arith.index_cast %855 : i32 to index
    %c0_389 = arith.constant 0 : index
    %c0_390 = arith.constant 0 : index
    %857 = vector.load %arg25[%856, %c0_389, %c0_390] : memref<8x2x32xf32, #tpu.memory_space<vmem>>, vector<1x2x32xf32>
    %858 = vector.shape_cast %857 : vector<1x2x32xf32> to vector<2x32xf32>
    %859 = vector.shape_cast %854 : vector<2x32xf32> to vector<1x2x32xf32>
    tpu.vector_store %arg25[%856, %c0_389, %c0_390], %859 {strides = array<i32>} : memref<8x2x32xf32, #tpu.memory_space<vmem>>, vector<1x2x32xf32>,
    %c6_i32_391 = arith.constant 6 : i32
    %cst_392 = arith.constant dense<0.000000e+00> : vector<2x256xf32>
    %860 = tpu.matmul %848, %630, %cst_392 {dimension_numbers = #tpu.dot_dimension_numbers<[1], [0], [0], [1], [0, 0, 1, 1], [], []>} : vector<2x64xf32>, vector<64x256xf32>, vector<2x256xf32> -> vector<2x256xf32>
    %861 = arith.index_cast %c6_i32_391 : i32 to index
    %c0_393 = arith.constant 0 : index
    %c0_394 = arith.constant 0 : index
    %862 = vector.load %arg21[%861, %c0_393, %c0_394] : memref<8x2x512xf32, #tpu.memory_space<vmem>>, vector<1x2x512xf32>
    %863 = vector.shape_cast %862 : vector<1x2x512xf32> to vector<2x512xf32>
    %c7_i32_395 = arith.constant 7 : i32
    %864 = arith.subi %c7_i32_395, %c6_i32_391 : i32
    %865 = arith.index_cast %864 : i32 to index
    %c0_396 = arith.constant 0 : index
    %c0_397 = arith.constant 0 : index
    %866 = vector.load %arg21[%865, %c0_396, %c0_397] : memref<8x2x512xf32, #tpu.memory_space<vmem>>, vector<1x2x512xf32>
    %867 = vector.shape_cast %866 : vector<1x2x512xf32> to vector<2x512xf32>
    %868 = vector.extract_strided_slice %863 {offsets = [0, 0], sizes = [2, 256], strides = [1, 1]} : vector<2x512xf32> to vector<2x256xf32>
    %869 = arith.addf %860, %868 : vector<2x256xf32>
    %870 = vector.extract_strided_slice %867 {offsets = [0, 256], sizes = [2, 256], strides = [1, 1]} : vector<2x512xf32> to vector<2x256xf32>
    %871 = arith.addf %869, %870 : vector<2x256xf32>
    %872 = arith.negf %871 : vector<2x256xf32>
    %873 = math.exp %872 : vector<2x256xf32>
    %cst_398 = arith.constant 1.000000e+00 : f32
    %874 = vector.broadcast %cst_398 : f32 to vector<2x256xf32>
    %875 = arith.addf %874, %873 : vector<2x256xf32>
    %876 = arith.divf %874, %875 : vector<2x256xf32>
    %877 = math.tanh %871 : vector<2x256xf32>
    %878 = vector.extract_strided_slice %876 {offsets = [0, 0], sizes = [2, 64], strides = [1, 1]} : vector<2x256xf32> to vector<2x64xf32>
    %879 = vector.extract_strided_slice %876 {offsets = [0, 64], sizes = [2, 64], strides = [1, 1]} : vector<2x256xf32> to vector<2x64xf32>
    %880 = vector.extract_strided_slice %877 {offsets = [0, 128], sizes = [2, 64], strides = [1, 1]} : vector<2x256xf32> to vector<2x64xf32>
    %881 = vector.extract_strided_slice %876 {offsets = [0, 192], sizes = [2, 64], strides = [1, 1]} : vector<2x256xf32> to vector<2x64xf32>
    %882 = arith.mulf %879, %846 : vector<2x64xf32>
    %883 = arith.mulf %878, %880 : vector<2x64xf32>
    %884 = arith.addf %882, %883 : vector<2x64xf32>
    %885 = math.tanh %884 : vector<2x64xf32>
    %886 = arith.mulf %881, %885 : vector<2x64xf32>
    %887 = vector.extract_strided_slice %886 {offsets = [0, 0], sizes = [2, 32], strides = [1, 1]} : vector<2x64xf32> to vector<2x32xf32>
    %888 = arith.index_cast %c6_i32_391 : i32 to index
    %c0_399 = arith.constant 0 : index
    %c0_400 = arith.constant 0 : index
    %889 = vector.load %arg24[%888, %c0_399, %c0_400] : memref<8x2x32xf32, #tpu.memory_space<vmem>>, vector<1x2x32xf32>
    %890 = vector.shape_cast %889 : vector<1x2x32xf32> to vector<2x32xf32>
    %891 = vector.shape_cast %887 : vector<2x32xf32> to vector<1x2x32xf32>
    tpu.vector_store %arg24[%888, %c0_399, %c0_400], %891 {strides = array<i32>} : memref<8x2x32xf32, #tpu.memory_space<vmem>>, vector<1x2x32xf32>,
    %892 = vector.extract_strided_slice %886 {offsets = [0, 32], sizes = [2, 32], strides = [1, 1]} : vector<2x64xf32> to vector<2x32xf32>
    %c7_i32_401 = arith.constant 7 : i32
    %893 = arith.subi %c7_i32_401, %c6_i32_391 : i32
    %894 = arith.index_cast %893 : i32 to index
    %c0_402 = arith.constant 0 : index
    %c0_403 = arith.constant 0 : index
    %895 = vector.load %arg25[%894, %c0_402, %c0_403] : memref<8x2x32xf32, #tpu.memory_space<vmem>>, vector<1x2x32xf32>
    %896 = vector.shape_cast %895 : vector<1x2x32xf32> to vector<2x32xf32>
    %897 = vector.shape_cast %892 : vector<2x32xf32> to vector<1x2x32xf32>
    tpu.vector_store %arg25[%894, %c0_402, %c0_403], %897 {strides = array<i32>} : memref<8x2x32xf32, #tpu.memory_space<vmem>>, vector<1x2x32xf32>,
    %c7_i32_404 = arith.constant 7 : i32
    %cst_405 = arith.constant dense<0.000000e+00> : vector<2x256xf32>
    %898 = tpu.matmul %886, %630, %cst_405 {dimension_numbers = #tpu.dot_dimension_numbers<[1], [0], [0], [1], [0, 0, 1, 1], [], []>} : vector<2x64xf32>, vector<64x256xf32>, vector<2x256xf32> -> vector<2x256xf32>
    %899 = arith.index_cast %c7_i32_404 : i32 to index
    %c0_406 = arith.constant 0 : index
    %c0_407 = arith.constant 0 : index
    %900 = vector.load %arg21[%899, %c0_406, %c0_407] : memref<8x2x512xf32, #tpu.memory_space<vmem>>, vector<1x2x512xf32>
    %901 = vector.shape_cast %900 : vector<1x2x512xf32> to vector<2x512xf32>
    %c7_i32_408 = arith.constant 7 : i32
    %902 = arith.subi %c7_i32_408, %c7_i32_404 : i32
    %903 = arith.index_cast %902 : i32 to index
    %c0_409 = arith.constant 0 : index
    %c0_410 = arith.constant 0 : index
    %904 = vector.load %arg21[%903, %c0_409, %c0_410] : memref<8x2x512xf32, #tpu.memory_space<vmem>>, vector<1x2x512xf32>
    %905 = vector.shape_cast %904 : vector<1x2x512xf32> to vector<2x512xf32>
    %906 = vector.extract_strided_slice %901 {offsets = [0, 0], sizes = [2, 256], strides = [1, 1]} : vector<2x512xf32> to vector<2x256xf32>
    %907 = arith.addf %898, %906 : vector<2x256xf32>
    %908 = vector.extract_strided_slice %905 {offsets = [0, 256], sizes = [2, 256], strides = [1, 1]} : vector<2x512xf32> to vector<2x256xf32>
    %909 = arith.addf %907, %908 : vector<2x256xf32>
    %910 = arith.negf %909 : vector<2x256xf32>
    %911 = math.exp %910 : vector<2x256xf32>
    %cst_411 = arith.constant 1.000000e+00 : f32
    %912 = vector.broadcast %cst_411 : f32 to vector<2x256xf32>
    %913 = arith.addf %912, %911 : vector<2x256xf32>
    %914 = arith.divf %912, %913 : vector<2x256xf32>
    %915 = math.tanh %909 : vector<2x256xf32>
    %916 = vector.extract_strided_slice %914 {offsets = [0, 0], sizes = [2, 64], strides = [1, 1]} : vector<2x256xf32> to vector<2x64xf32>
    %917 = vector.extract_strided_slice %914 {offsets = [0, 64], sizes = [2, 64], strides = [1, 1]} : vector<2x256xf32> to vector<2x64xf32>
    %918 = vector.extract_strided_slice %915 {offsets = [0, 128], sizes = [2, 64], strides = [1, 1]} : vector<2x256xf32> to vector<2x64xf32>
    %919 = vector.extract_strided_slice %914 {offsets = [0, 192], sizes = [2, 64], strides = [1, 1]} : vector<2x256xf32> to vector<2x64xf32>
    %920 = arith.mulf %917, %884 : vector<2x64xf32>
    %921 = arith.mulf %916, %918 : vector<2x64xf32>
    %922 = arith.addf %920, %921 : vector<2x64xf32>
    %923 = math.tanh %922 : vector<2x64xf32>
    %924 = arith.mulf %919, %923 : vector<2x64xf32>
    %925 = vector.extract_strided_slice %924 {offsets = [0, 0], sizes = [2, 32], strides = [1, 1]} : vector<2x64xf32> to vector<2x32xf32>
    %926 = arith.index_cast %c7_i32_404 : i32 to index
    %c0_412 = arith.constant 0 : index
    %c0_413 = arith.constant 0 : index
    %927 = vector.load %arg24[%926, %c0_412, %c0_413] : memref<8x2x32xf32, #tpu.memory_space<vmem>>, vector<1x2x32xf32>
    %928 = vector.shape_cast %927 : vector<1x2x32xf32> to vector<2x32xf32>
    %929 = vector.shape_cast %925 : vector<2x32xf32> to vector<1x2x32xf32>
    tpu.vector_store %arg24[%926, %c0_412, %c0_413], %929 {strides = array<i32>} : memref<8x2x32xf32, #tpu.memory_space<vmem>>, vector<1x2x32xf32>,
    %930 = vector.extract_strided_slice %924 {offsets = [0, 32], sizes = [2, 32], strides = [1, 1]} : vector<2x64xf32> to vector<2x32xf32>
    %c7_i32_414 = arith.constant 7 : i32
    %931 = arith.subi %c7_i32_414, %c7_i32_404 : i32
    %932 = arith.index_cast %931 : i32 to index
    %c0_415 = arith.constant 0 : index
    %c0_416 = arith.constant 0 : index
    %933 = vector.load %arg25[%932, %c0_415, %c0_416] : memref<8x2x32xf32, #tpu.memory_space<vmem>>, vector<1x2x32xf32>
    %934 = vector.shape_cast %933 : vector<1x2x32xf32> to vector<2x32xf32>
    %935 = vector.shape_cast %930 : vector<2x32xf32> to vector<1x2x32xf32>
    tpu.vector_store %arg25[%932, %c0_415, %c0_416], %935 {strides = array<i32>} : memref<8x2x32xf32, #tpu.memory_space<vmem>>, vector<1x2x32xf32>,
    %c8_i32_417 = arith.constant 8 : i32
    %c0_418 = arith.constant 0 : index
    %c0_419 = arith.constant 0 : index
    %c0_420 = arith.constant 0 : index
    %936 = vector.load %arg24[%c0_418, %c0_419, %c0_420] : memref<8x2x32xf32, #tpu.memory_space<vmem>>, vector<8x2x32xf32>
    %c0_421 = arith.constant 0 : index
    %c0_422 = arith.constant 0 : index
    %c0_423 = arith.constant 0 : index
    %937 = vector.load %arg25[%c0_421, %c0_422, %c0_423] : memref<8x2x32xf32, #tpu.memory_space<vmem>>, vector<8x2x32xf32>
    %c0_424 = arith.constant 0 : index
    %c0_425 = arith.constant 0 : index
    %938 = vector.load %arg12[%c0_424, %c0_425] : memref<1x64xf32, #tpu.memory_space<vmem>>, vector<1x64xf32>
    %939 = vector.extract_strided_slice %938 {offsets = [0, 0], sizes = [1, 32], strides = [1, 1]} : vector<1x64xf32> to vector<1x32xf32>
    %940 = vector.shape_cast %939 : vector<1x32xf32> to vector<1x1x32xf32>
    %941 = vector.broadcast %940 : vector<1x1x32xf32> to vector<8x2x32xf32>
    %942 = arith.mulf %936, %941 : vector<8x2x32xf32>
    %cst_426 = arith.constant dense<0.000000e+00> : vector<8x2xf32>
    %943 = vector.multi_reduction <add>, %942, %cst_426 [2] : vector<8x2x32xf32> to vector<8x2xf32>
    %944 = vector.extract_strided_slice %938 {offsets = [0, 32], sizes = [1, 32], strides = [1, 1]} : vector<1x64xf32> to vector<1x32xf32>
    %945 = vector.shape_cast %944 : vector<1x32xf32> to vector<1x1x32xf32>
    %946 = vector.broadcast %945 : vector<1x1x32xf32> to vector<8x2x32xf32>
    %947 = arith.mulf %937, %946 : vector<8x2x32xf32>
    %cst_427 = arith.constant dense<0.000000e+00> : vector<8x2xf32>
    %948 = vector.multi_reduction <add>, %947, %cst_427 [2] : vector<8x2x32xf32> to vector<8x2xf32>
    %949 = arith.addf %943, %948 : vector<8x2xf32>
    %950 = tpu.transpose %949, [1, 0] : vector<8x2xf32> -> vector<2x8xf32>
    %c0_428 = arith.constant 0 : index
    %c0_429 = arith.constant 0 : index
    %951 = vector.load %arg13[%c0_428, %c0_429] : memref<64x1xf32, #tpu.memory_space<vmem>>, vector<64x1xf32>
    %cst_430 = arith.constant dense<0.000000e+00> : vector<2x1xf32>
    %952 = tpu.matmul %143, %951, %cst_430 {dimension_numbers = #tpu.dot_dimension_numbers<[1], [0], [0], [1], [0, 0, 1, 1], [], []>} : vector<2x64xf32>, vector<64x1xf32>, vector<2x1xf32> -> vector<2x1xf32>
    %953 = vector.broadcast %952 : vector<2x1xf32> to vector<2x8xf32>
    %954 = arith.addf %950, %953 : vector<2x8xf32>
    %c0_431 = arith.constant 0 : index
    %c0_432 = arith.constant 0 : index
    %955 = vector.load %arg14[%c0_431, %c0_432] : memref<1x1xf32, #tpu.memory_space<vmem>>, vector<1x1xf32>
    %956 = vector.broadcast %955 : vector<1x1xf32> to vector<2x8xf32>
    %957 = arith.addf %954, %956 : vector<2x8xf32>
    %c0_433 = arith.constant 0 : index
    %c0_434 = arith.constant 0 : index
    %958 = vector.load %arg2[%c0_433, %c0_434] : memref<2x8xf32, #tpu.memory_space<vmem>>, vector<2x8xf32>
    %cst_435 = arith.constant 0.000000e+00 : f32
    %959 = vector.broadcast %cst_435 : f32 to vector<2x8xf32>
    %960 = arith.cmpf oeq, %958, %959 : vector<2x8xf32>
    %cst_436 = arith.constant -1.000000e+09 : f32
    %961 = vector.broadcast %cst_436 : f32 to vector<2x8xf32>
    %962 = arith.select %960, %961, %957 : vector<2x8xi1>, vector<2x8xf32>
    %cst_437 = arith.constant dense<0xFF800000> : vector<2xf32>
    %963 = vector.multi_reduction <maximumf>, %962, %cst_437 [1] : vector<2x8xf32> to vector<2xf32>
    %964 = vector.shape_cast %963 : vector<2xf32> to vector<2x1xf32>
    %965 = vector.broadcast %964 : vector<2x1xf32> to vector<2x8xf32>
    %966 = arith.subf %962, %965 : vector<2x8xf32>
    %967 = math.exp %966 : vector<2x8xf32>
    %cst_438 = arith.constant dense<0.000000e+00> : vector<2xf32>
    %968 = vector.multi_reduction <add>, %967, %cst_438 [1] : vector<2x8xf32> to vector<2xf32>
    %969 = vector.shape_cast %968 : vector<2xf32> to vector<2x1xf32>
    %970 = vector.broadcast %969 : vector<2x1xf32> to vector<2x8xf32>
    %971 = arith.divf %967, %970 : vector<2x8xf32>
    %c0_439 = arith.constant 0 : index
    %c0_440 = arith.constant 0 : index
    %972 = vector.load %arg20[%c0_439, %c0_440] : memref<2x8xf32, #tpu.memory_space<vmem>>, vector<2x8xf32>
    tpu.vector_store %arg20[%c0_439, %c0_440], %971 {strides = array<i32>} : memref<2x8xf32, #tpu.memory_space<vmem>>, vector<2x8xf32>,
    %973 = tpu.transpose %971, [1, 0] : vector<2x8xf32> -> vector<8x2xf32>
    %974 = vector.shape_cast %973 : vector<8x2xf32> to vector<8x2x1xf32>
    %975 = vector.broadcast %974 : vector<8x2x1xf32> to vector<8x2x32xf32>
    %976 = arith.mulf %975, %936 : vector<8x2x32xf32>
    %cst_441 = arith.constant dense<0.000000e+00> : vector<2x32xf32>
    %977 = vector.multi_reduction <add>, %976, %cst_441 [0] : vector<8x2x32xf32> to vector<2x32xf32>
    %978 = vector.shape_cast %973 : vector<8x2xf32> to vector<8x2x1xf32>
    %979 = vector.broadcast %978 : vector<8x2x1xf32> to vector<8x2x32xf32>
    %980 = arith.mulf %979, %937 : vector<8x2x32xf32>
    %cst_442 = arith.constant dense<0.000000e+00> : vector<2x32xf32>
    %981 = vector.multi_reduction <add>, %980, %cst_442 [0] : vector<8x2x32xf32> to vector<2x32xf32>
    %c0_443 = arith.constant 0 : index
    %c0_444 = arith.constant 0 : index
    %982 = vector.load %arg15[%c0_443, %c0_444] : memref<64x32xf32, #tpu.memory_space<vmem>>, vector<64x32xf32>
    %983 = vector.extract_strided_slice %982 {offsets = [0, 0], sizes = [32, 32], strides = [1, 1]} : vector<64x32xf32> to vector<32x32xf32>
    %cst_445 = arith.constant dense<0.000000e+00> : vector<2x32xf32>
    %984 = tpu.matmul %977, %983, %cst_445 {dimension_numbers = #tpu.dot_dimension_numbers<[1], [0], [0], [1], [0, 0, 1, 1], [], []>} : vector<2x32xf32>, vector<32x32xf32>, vector<2x32xf32> -> vector<2x32xf32>
    %985 = vector.extract_strided_slice %982 {offsets = [32, 0], sizes = [32, 32], strides = [1, 1]} : vector<64x32xf32> to vector<32x32xf32>
    %cst_446 = arith.constant dense<0.000000e+00> : vector<2x32xf32>
    %986 = tpu.matmul %981, %985, %cst_446 {dimension_numbers = #tpu.dot_dimension_numbers<[1], [0], [0], [1], [0, 0, 1, 1], [], []>} : vector<2x32xf32>, vector<32x32xf32>, vector<2x32xf32> -> vector<2x32xf32>
    %987 = arith.addf %984, %986 : vector<2x32xf32>
    %c0_447 = arith.constant 0 : index
    %c0_448 = arith.constant 0 : index
    %988 = vector.load %arg16[%c0_447, %c0_448] : memref<1x32xf32, #tpu.memory_space<vmem>>, vector<1x32xf32>
    %989 = vector.broadcast %988 : vector<1x32xf32> to vector<2x32xf32>
    %990 = arith.addf %987, %989 : vector<2x32xf32>
    %cst_449 = arith.constant 0.000000e+00 : f32
    %991 = vector.broadcast %cst_449 : f32 to vector<2x32xf32>
    %992 = arith.maximumf %990, %991 : vector<2x32xf32>
    %c0_450 = arith.constant 0 : index
    %c0_451 = arith.constant 0 : index
    %993 = vector.load %arg17[%c0_450, %c0_451] : memref<32x3xf32, #tpu.memory_space<vmem>>, vector<32x3xf32>
    %cst_452 = arith.constant dense<0.000000e+00> : vector<2x3xf32>
    %994 = tpu.matmul %992, %993, %cst_452 {dimension_numbers = #tpu.dot_dimension_numbers<[1], [0], [0], [1], [0, 0, 1, 1], [], []>} : vector<2x32xf32>, vector<32x3xf32>, vector<2x3xf32> -> vector<2x3xf32>
    %c0_453 = arith.constant 0 : index
    %c0_454 = arith.constant 0 : index
    %995 = vector.load %arg18[%c0_453, %c0_454] : memref<1x3xf32, #tpu.memory_space<vmem>>, vector<1x3xf32>
    %996 = vector.broadcast %995 : vector<1x3xf32> to vector<2x3xf32>
    %997 = arith.addf %994, %996 : vector<2x3xf32>
    %c0_455 = arith.constant 0 : index
    %c0_456 = arith.constant 0 : index
    %998 = vector.load %arg19[%c0_455, %c0_456] : memref<2x3xf32, #tpu.memory_space<vmem>>, vector<2x3xf32>
    tpu.vector_store %arg19[%c0_455, %c0_456], %997 {strides = array<i32>} : memref<2x3xf32, #tpu.memory_space<vmem>>, vector<2x3xf32>,
    return
  }
}

</mosaic_0001>

<llo_original>
// kernel: atae_lstm_forward.1
$region0: #{atae_lstm_forward.1}
  #allocation0 [shape = 'u32[]', space=smem, size = 0x4, offset = 0x4, fixed_abs, tag = 'smem constant byte address 0x4 - core index']
  #allocation1 [shape = 'u32[72,128]{1,0:T(1,128)}', space=vmem, size = 0x9000, scoped, tag = 'internal scratch']
  #allocation2 [shape = 'f32[8,2,512]{2,1,0:T(2,128)}', space=vmem, size = 0x8000, scoped, tag = 'scratch operand']
  #allocation3 [shape = 'f32[8,2,32]{2,1,0:T(2,128)}', space=vmem, size = 0x2000, scoped, tag = 'scratch operand']
  #allocation4 [shape = 'f32[8,2,32]{2,1,0:T(2,128)}', space=vmem, size = 0x2000, scoped, tag = 'scratch operand']
  #allocation5 [shape = 'f32[8,2,32]{2,1,0:T(2,128)}', space=vmem, size = 0x2000, scoped, tag = 'scratch operand']
  #allocation6 [shape = 'f32[8,2,32]{2,1,0:T(2,128)}', space=vmem, size = 0x2000, scoped, tag = 'scratch operand']
  #allocation7 [shape = 'f32[1,1]{1,0:T(1,128)S(1)}', space=vmem, size = 0x200, scoped, tag = 'scoped memory for atae_lstm_forward.1']
  %s0 = inlined_call_operand.vmem [shape: f32[4,2,32], index: 0, kind: input, shape index: {}]
  %s1 = inlined_call_operand.vmem [shape: f32[8,2,64], index: 1, kind: input, shape index: {}]
  %s2 = inlined_call_operand.vmem [shape: f32[2,8], index: 2, kind: input, shape index: {}]
  %s3 = inlined_call_operand.vmem [shape: f32[32,512], index: 3, kind: input, shape index: {}]
  %s4 = inlined_call_operand.vmem [shape: f32[64,256], index: 4, kind: input, shape index: {}]
  %s5 = inlined_call_operand.vmem [shape: f32[1,512], index: 5, kind: input, shape index: {}]
  %s6 = inlined_call_operand.vmem [shape: f32[64,512], index: 6, kind: input, shape index: {}]
  %s7 = inlined_call_operand.hbm [shape: f32[64,256], index: 7, kind: input, shape index: {}]
  %s8 = inlined_call_operand.vmem [shape: f32[1,512], index: 8, kind: input, shape index: {}]
  %s9 = inlined_call_operand.hbm [shape: f32[64,512], index: 9, kind: input, shape index: {}]
  %s10 = inlined_call_operand.hbm [shape: f32[64,256], index: 10, kind: input, shape index: {}]
  %s11 = inlined_call_operand.vmem [shape: f32[1,512], index: 11, kind: input, shape index: {}]
  %s12 = inlined_call_operand.vmem [shape: f32[1,64], index: 12, kind: input, shape index: {}]
  %s13 = inlined_call_operand.vmem [shape: f32[64,1], index: 13, kind: input, shape index: {}]
  %s14 = inlined_call_operand.<no memory space> [shape: f32[1,1], index: 14, kind: input, shape index: {}]
  %s15 = inlined_call_operand.vmem [shape: f32[64,32], index: 15, kind: input, shape index: {}]
  %s16 = inlined_call_operand.vmem [shape: f32[1,32], index: 16, kind: input, shape index: {}]
  %s17 = inlined_call_operand.vmem [shape: f32[32,3], index: 17, kind: input, shape index: {}]
  %s18 = inlined_call_operand.vmem [shape: f32[1,3], index: 18, kind: input, shape index: {}]
  %s19 = inlined_call_operand.hbm [shape: f32[2,3], index: 19, kind: output, shape index: {0}]
  %s20 = inlined_call_operand.hbm [shape: f32[2,8], index: 20, kind: output, shape index: {1}]
  %21 = xla_tuple %s19, %s20
  %s22 = sld [smem:[#allocation0]]
  $region106: #{atae_lstm_forward.1} parent=0
    _
  %s24 = ssub.s32 1, %s22
  %s25 = scalar_select 0, %s24, %s22
  %v26 = vstv %s14
  %27 = vst [vmem:[#allocation7] sm:$0x1] %v26
  $region1: #{atae_lstm_forward.1} parent=0
    #allocation8 [shape = 'u8[65536]{0}', space=vmem, size = 0x10000, scoped, tag = 'input window, operand 7, single buffered']
    #allocation9 [shape = 's32[1]{0}', space=sflag, size = 0x4, scoped, tag = 'scoped memory for atae_lstm_forward.1']
    #allocation10 [shape = 's32[1]{0}', space=sflag, size = 0x4, scoped, tag = 'scoped memory for atae_lstm_forward.1']
    #allocation11 [shape = 'u8[131072]{0}', space=vmem, size = 0x20000, scoped, tag = 'input window, operand 9, single buffered']
    #allocation12 [shape = 's32[1]{0}', space=sflag, size = 0x4, scoped, tag = 'scoped memory for atae_lstm_forward.1']
    #allocation13 [shape = 'u8[65536]{0}', space=vmem, size = 0x10000, scoped, tag = 'input window, operand 10, single buffered']
    #allocation14 [shape = 'u8[1024]{0}', space=vmem, size = 0x400, scoped, tag = 'output window, operand 0, single buffered']
    #allocation15 [shape = 'u8[1024]{0}', space=vmem, size = 0x400, scoped, tag = 'output window, operand 1, single buffered']
    #allocation16 [shape = 's32[1]{0}', space=sflag, size = 0x4, scoped, tag = 'scoped memory for atae_lstm_forward.1']
    %28 = vsyncpa [#allocation9], 0
    %29 = vsyncpa [#allocation12], 0
    %30 = vsyncpa [#allocation10], 0
    %31 = vsyncpa [#allocation16], 0
    // Predicated region
    $region2: #{atae_lstm_forward.1} parent=1 // pred_check
      _
    $region3: #{atae_lstm_forward.1} parent=1 // pred_check_branch
      %33 = sbr.rel (0) target = $region5
    $region4: #{atae_lstm_forward.1} parent=1 // pred_region
      _
    $region5: #{atae_lstm_forward.1} parent=1 // pred_fallthru
      _
    // Predicated region
    $region6: #{atae_lstm_forward.1} parent=1 // pred_check
      _
    $region7: #{atae_lstm_forward.1} parent=1 // pred_check_branch
      %35 = sbr.rel (0) target = $region9
    $region8: #{atae_lstm_forward.1} parent=1 // pred_region
      _
    $region9: #{atae_lstm_forward.1} parent=1 // pred_fallthru
      _
    // Predicated region
    $region10: #{atae_lstm_forward.1} parent=1 // pred_check
      _
    $region11: #{atae_lstm_forward.1} parent=1 // pred_check_branch
      %37 = sbr.rel (0) target = $region13
    $region12: #{atae_lstm_forward.1} parent=1 // pred_region
      _
    $region13: #{atae_lstm_forward.1} parent=1 // pred_fallthru
      _
    // Predicated region
    $region14: #{atae_lstm_forward.1} parent=1 // pred_check
      _
    $region15: #{atae_lstm_forward.1} parent=1 // pred_check_branch
      %39 = sbr.rel (0) target = $region17
    $region16: #{atae_lstm_forward.1} parent=1 // pred_region
      _
    $region17: #{atae_lstm_forward.1} parent=1 // pred_fallthru
      _
    // Predicated region
    $region18: #{atae_lstm_forward.1} parent=1 // pred_check
      _
    $region19: #{atae_lstm_forward.1} parent=1 // pred_check_branch
      %41 = sbr.rel (0) target = $region21
    $region20: #{atae_lstm_forward.1} parent=1 // pred_region
      _
    $region21: #{atae_lstm_forward.1} parent=1 // pred_fallthru
      _
    // Predicated region
    $region22: #{atae_lstm_forward.1} parent=1 // pred_check
      _
    $region23: #{atae_lstm_forward.1} parent=1 // pred_check_branch
      %43 = sbr.rel (0) target = $region25
    $region24: #{atae_lstm_forward.1} parent=1 // pred_region
      _
    $region25: #{atae_lstm_forward.1} parent=1 // pred_fallthru
      _
    // Predicated region
    $region26: #{atae_lstm_forward.1} parent=1 // pred_check
      _
    $region27: #{atae_lstm_forward.1} parent=1 // pred_check_branch
      %45 = sbr.rel (0) target = $region29
    $region28: #{atae_lstm_forward.1} parent=1 // pred_region
      _
    $region29: #{atae_lstm_forward.1} parent=1 // pred_fallthru
      _
    // Predicated region
    $region30: #{atae_lstm_forward.1} parent=1 // pred_check
      _
    $region31: #{atae_lstm_forward.1} parent=1 // pred_check_branch
      %47 = sbr.rel (0) target = $region33
    $region32: #{atae_lstm_forward.1} parent=1 // pred_region
      %49 = vsyncadd [#allocation9], 0
      %s50 = sshll.u32 %s7, 4
      %s51 = int_to_ptr.hbm [resolvable:$true] %s50
      %s52 = sshll.u32 [#allocation8], 4
      %s53 = int_to_ptr.vmem [resolvable:$true] %s52
      %58 = dma.hbm_to_vmem [thread:$0]  %s51, 2048, %s53, [#allocation9], 256, 256, 16
    $region33: #{atae_lstm_forward.1} parent=1 // pred_fallthru
      _
    // Predicated region
    $region34: #{atae_lstm_forward.1} parent=1 // pred_check
      _
    $region35: #{atae_lstm_forward.1} parent=1 // pred_check_branch
      %60 = sbr.rel (0) target = $region37
    $region36: #{atae_lstm_forward.1} parent=1 // pred_region
      _
    $region37: #{atae_lstm_forward.1} parent=1 // pred_fallthru
      _
    // Predicated region
    $region38: #{atae_lstm_forward.1} parent=1 // pred_check
      _
    $region39: #{atae_lstm_forward.1} parent=1 // pred_check_branch
      %62 = sbr.rel (0) target = $region41
    $region40: #{atae_lstm_forward.1} parent=1 // pred_region
      %64 = vsyncadd [#allocation12], 0
      %s65 = sshll.u32 %s9, 4
      %s66 = int_to_ptr.hbm [resolvable:$true] %s65
      %s67 = sshll.u32 [#allocation11], 4
      %s68 = int_to_ptr.vmem [resolvable:$true] %s67
      %73 = dma.hbm_to_vmem [thread:$0]  %s66, 4096, %s68, [#allocation12], 512, 512, 32
    $region41: #{atae_lstm_forward.1} parent=1 // pred_fallthru
      _
    // Predicated region
    $region42: #{atae_lstm_forward.1} parent=1 // pred_check
      _
    $region43: #{atae_lstm_forward.1} parent=1 // pred_check_branch
      %75 = sbr.rel (0) target = $region45
    $region44: #{atae_lstm_forward.1} parent=1 // pred_region
      %77 = vsyncadd [#allocation12], 0
      %s78 = sshll.u32 %s10, 4
      %s79 = int_to_ptr.hbm [resolvable:$true] %s78
      %s80 = sshll.u32 [#allocation13], 4
      %s81 = int_to_ptr.vmem [resolvable:$true] %s80
      %86 = dma.hbm_to_vmem [thread:$0]  %s79, 2048, %s81, [#allocation12], 256, 256, 16
    $region45: #{atae_lstm_forward.1} parent=1 // pred_fallthru
      _
    // Predicated region
    $region46: #{atae_lstm_forward.1} parent=1 // pred_check
      _
    $region47: #{atae_lstm_forward.1} parent=1 // pred_check_branch
      %88 = sbr.rel (0) target = $region49
    $region48: #{atae_lstm_forward.1} parent=1 // pred_region
      _
    $region49: #{atae_lstm_forward.1} parent=1 // pred_fallthru
      _
    // Predicated region
    $region50: #{atae_lstm_forward.1} parent=1 // pred_check
      _
    $region51: #{atae_lstm_forward.1} parent=1 // pred_check_branch
      %90 = sbr.rel (0) target = $region53
    $region52: #{atae_lstm_forward.1} parent=1 // pred_region
      _
    $region53: #{atae_lstm_forward.1} parent=1 // pred_fallthru
      _
    // Predicated region
    $region54: #{atae_lstm_forward.1} parent=1 // pred_check
      _
    $region55: #{atae_lstm_forward.1} parent=1 // pred_check_branch
      %92 = sbr.rel (0) target = $region57
    $region56: #{atae_lstm_forward.1} parent=1 // pred_region
      _
    $region57: #{atae_lstm_forward.1} parent=1 // pred_fallthru
      _
    // Predicated region
    $region58: #{atae_lstm_forward.1} parent=1 // pred_check
      _
    $region59: #{atae_lstm_forward.1} parent=1 // pred_check_branch
      %94 = sbr.rel (0) target = $region61
    $region60: #{atae_lstm_forward.1} parent=1 // pred_region
      _
    $region61: #{atae_lstm_forward.1} parent=1 // pred_fallthru
      _
    // Predicated region
    $region62: #{atae_lstm_forward.1} parent=1 // pred_check
      _
    $region63: #{atae_lstm_forward.1} parent=1 // pred_check_branch
      %96 = sbr.rel (0) target = $region65
    $region64: #{atae_lstm_forward.1} parent=1 // pred_region
      _
    $region65: #{atae_lstm_forward.1} parent=1 // pred_fallthru
      _
    // Predicated region
    $region66: #{atae_lstm_forward.1} parent=1 // pred_check
      _
    $region67: #{atae_lstm_forward.1} parent=1 // pred_check_branch
      %98 = sbr.rel (0) target = $region69
    $region68: #{atae_lstm_forward.1} parent=1 // pred_region
      _
    $region69: #{atae_lstm_forward.1} parent=1 // pred_fallthru
      _
    // Predicated region
    $region70: #{atae_lstm_forward.1} parent=1 // pred_check
      _
    $region71: #{atae_lstm_forward.1} parent=1 // pred_check_branch
      %100 = sbr.rel (0) target = $region73
    $region72: #{atae_lstm_forward.1} parent=1 // pred_region
      _
    $region73: #{atae_lstm_forward.1} parent=1 // pred_fallthru
      _
    // Predicated region
    $region74: #{atae_lstm_forward.1} parent=1 // pred_check
      _
    $region75: #{atae_lstm_forward.1} parent=1 // pred_check_branch
      %102 = sbr.rel (0) target = $region77
    $region76: #{atae_lstm_forward.1} parent=1 // pred_region
      _
    $region77: #{atae_lstm_forward.1} parent=1 // pred_fallthru
      _
    // Predicated region
    $region78: #{atae_lstm_forward.1} parent=1 // pred_check
      _
    $region79: #{atae_lstm_forward.1} parent=1 // pred_check_branch
      %104 = sbr.rel (0) target = $region81
    $region80: #{atae_lstm_forward.1} parent=1 // pred_region
      %106 = dma.done [#allocation9], 2048
    $region81: #{atae_lstm_forward.1} parent=1 // pred_fallthru
      _
    // Predicated region
    $region82: #{atae_lstm_forward.1} parent=1 // pred_check
      _
    $region83: #{atae_lstm_forward.1} parent=1 // pred_check_branch
      %108 = sbr.rel (0) target = $region85
    $region84: #{atae_lstm_forward.1} parent=1 // pred_region
      %110 = dma.done [#allocation12], 4096
    $region85: #{atae_lstm_forward.1} parent=1 // pred_fallthru
      _
    // Predicated region
    $region86: #{atae_lstm_forward.1} parent=1 // pred_check
      _
    $region87: #{atae_lstm_forward.1} parent=1 // pred_check_branch
      %112 = sbr.rel (0) target = $region89
    $region88: #{atae_lstm_forward.1} parent=1 // pred_region
      %114 = dma.done [#allocation12], 2048
    $region89: #{atae_lstm_forward.1} parent=1 // pred_fallthru
      _
    %v115 = vld [vmem:[%s3] sm:$0xff]
    %v116 = vld [vmem:[%s3 + $0x8] sm:$0xff]
    %v117 = vld [vmem:[%s3 + $0x10] sm:$0xff]
    %v118 = vld [vmem:[%s3 + $0x18] sm:$0xff]
    %v119 = vld [vmem:[%s3 + $0x20] sm:$0xff]
    %v120 = vld [vmem:[%s3 + $0x28] sm:$0xff]
    %v121 = vld [vmem:[%s3 + $0x30] sm:$0xff]
    %v122 = vld [vmem:[%s3 + $0x38] sm:$0xff]
    %v123 = vld [vmem:[%s3 + $0x40] sm:$0xff]
    %v124 = vld [vmem:[%s3 + $0x48] sm:$0xff]
    %v125 = vld [vmem:[%s3 + $0x50] sm:$0xff]
    %v126 = vld [vmem:[%s3 + $0x58] sm:$0xff]
    %v127 = vld [vmem:[%s3 + $0x60] sm:$0xff]
    %v128 = vld [vmem:[%s3 + $0x68] sm:$0xff]
    %v129 = vld [vmem:[%s3 + $0x70] sm:$0xff]
    %v130 = vld [vmem:[%s3 + $0x78] sm:$0xff]
    %v131 = vld [vmem:[%s5] sm:$0xf]
    %v132 = vld [vmem:[%s0] sm:$0x3]
    %v134 = vperm.slane %v131, 0
    %v135 = vperm.slane %v131, 1
    %v136 = vperm.slane %v131, 2
    %v137 = vperm.slane %v131, 3
    %vm142 = vcmask 261120
    %v144 = vsel %vm142, %v132, 0
    %146 = vmatpush.msra.mxu0 0.0
    %147 = vmatpush.msra.mxu0 0.0
    %148 = vmatpush.msra.mxu0 0.0
    %149 = vmatpush.msra.mxu0 0.0
    %150 = vmatpush.msra.mxu0 0.0
    %151 = vmatpush.msra.mxu0 0.0
    %152 = vmatpush.msra.mxu0 0.0
    %153 = vmatpush.msra.mxu0 0.0
    %154 = vmatpush.msra.mxu0 0.0
    %155 = vmatpush.msra.mxu0 0.0
    %156 = vmatpush.msra.mxu0 0.0
    %157 = vmatpush.msra.mxu0 0.0
    %158 = vmatpush.msra.mxu0 %v127
    %159 = vmatpush.msra.mxu0 %v123
    %160 = vmatpush.msra.mxu0 %v119
    %161 = vmatpush.msra.mxu0 %v115
    %162 = vmatmul.f32.gmra.mxu0 %v144
    %v163 = vpop.f32.mrf.mxu0
    %v164 = vadd.f32 %v134, %v163
    %165 = vdwg.mxu0
    %166 = vmatpush.msra.mxu0 0.0
    %167 = vmatpush.msra.mxu0 0.0
    %168 = vmatpush.msra.mxu0 0.0
    %169 = vmatpush.msra.mxu0 0.0
    %170 = vmatpush.msra.mxu0 0.0
    %171 = vmatpush.msra.mxu0 0.0
    %172 = vmatpush.msra.mxu0 0.0
    %173 = vmatpush.msra.mxu0 0.0
    %174 = vmatpush.msra.mxu0 0.0
    %175 = vmatpush.msra.mxu0 0.0
    %176 = vmatpush.msra.mxu0 0.0
    %177 = vmatpush.msra.mxu0 0.0
    %178 = vmatpush.msra.mxu0 %v128
    %179 = vmatpush.msra.mxu0 %v124
    %180 = vmatpush.msra.mxu0 %v120
    %181 = vmatpush.msra.mxu0 %v116
    %182 = vmatmul.f32.gmra.mxu0 %v144
    %v183 = vpop.f32.mrf.mxu0
    %v184 = vadd.f32 %v135, %v183
    %185 = vdwg.mxu0
    %186 = vmatpush.msra.mxu0 0.0
    %187 = vmatpush.msra.mxu0 0.0
    %188 = vmatpush.msra.mxu0 0.0
    %189 = vmatpush.msra.mxu0 0.0
    %190 = vmatpush.msra.mxu0 0.0
    %191 = vmatpush.msra.mxu0 0.0
    %192 = vmatpush.msra.mxu0 0.0
    %193 = vmatpush.msra.mxu0 0.0
    %194 = vmatpush.msra.mxu0 0.0
    %195 = vmatpush.msra.mxu0 0.0
    %196 = vmatpush.msra.mxu0 0.0
    %197 = vmatpush.msra.mxu0 0.0
    %198 = vmatpush.msra.mxu0 %v129
    %199 = vmatpush.msra.mxu0 %v125
    %200 = vmatpush.msra.mxu0 %v121
    %201 = vmatpush.msra.mxu0 %v117
    %202 = vmatmul.f32.gmra.mxu0 %v144
    %v203 = vpop.f32.mrf.mxu0
    %v204 = vadd.f32 %v136, %v203
    %205 = vdwg.mxu0
    %206 = vmatpush.msra.mxu0 0.0
    %207 = vmatpush.msra.mxu0 0.0
    %208 = vmatpush.msra.mxu0 0.0
    %209 = vmatpush.msra.mxu0 0.0
    %210 = vmatpush.msra.mxu0 0.0
    %211 = vmatpush.msra.mxu0 0.0
    %212 = vmatpush.msra.mxu0 0.0
    %213 = vmatpush.msra.mxu0 0.0
    %214 = vmatpush.msra.mxu0 0.0
    %215 = vmatpush.msra.mxu0 0.0
    %216 = vmatpush.msra.mxu0 0.0
    %217 = vmatpush.msra.mxu0 0.0
    %218 = vmatpush.msra.mxu0 %v130
    %219 = vmatpush.msra.mxu0 %v126
    %220 = vmatpush.msra.mxu0 %v122
    %221 = vmatpush.msra.mxu0 %v118
    %222 = vmatmul.f32.gmra.mxu0 %v144
    %v223 = vpop.f32.mrf.mxu0
    %v224 = vadd.f32 %v137, %v223
    %225 = vdwg.mxu0
    %v230 = vrot.slane %v184, 6
    %v231 = vrot.slane %v204, 4
    %v232 = vrot.slane %v224, 2
    %vm233 = vcmask 1041408
    %v234 = vsel %vm233, %v164, %v230
    %vm235 = vcmask 1045508
    %v236 = vsel %vm235, %v231, %v232
    %vm237 = vcmask 1043456
    %v238 = vsel %vm237, %v234, %v236
    %240 = vst [vmem:[#allocation2] sm:$0xff] %v238
    %s241 = scalar_lea.vmem %s0, 2
    %v242 = vld [vmem:[%s241] sm:$0x3]
    %v244 = vsel %vm142, %v242, 0
    %246 = vmatpush.msra.mxu0 0.0
    %247 = vmatpush.msra.mxu0 0.0
    %248 = vmatpush.msra.mxu0 0.0
    %249 = vmatpush.msra.mxu0 0.0
    %250 = vmatpush.msra.mxu0 0.0
    %251 = vmatpush.msra.mxu0 0.0
    %252 = vmatpush.msra.mxu0 0.0
    %253 = vmatpush.msra.mxu0 0.0
    %254 = vmatpush.msra.mxu0 0.0
    %255 = vmatpush.msra.mxu0 0.0
    %256 = vmatpush.msra.mxu0 0.0
    %257 = vmatpush.msra.mxu0 0.0
    %258 = vmatpush.msra.mxu0 %v127
    %259 = vmatpush.msra.mxu0 %v123
    %260 = vmatpush.msra.mxu0 %v119
    %261 = vmatpush.msra.mxu0 %v115
    %262 = vmatmul.f32.gmra.mxu0 %v244
    %v263 = vpop.f32.mrf.mxu0
    %v264 = vadd.f32 %v134, %v263
    %265 = vdwg.mxu0
    %266 = vmatpush.msra.mxu0 0.0
    %267 = vmatpush.msra.mxu0 0.0
    %268 = vmatpush.msra.mxu0 0.0
    %269 = vmatpush.msra.mxu0 0.0
    %270 = vmatpush.msra.mxu0 0.0
    %271 = vmatpush.msra.mxu0 0.0
    %272 = vmatpush.msra.mxu0 0.0
    %273 = vmatpush.msra.mxu0 0.0
    %274 = vmatpush.msra.mxu0 0.0
    %275 = vmatpush.msra.mxu0 0.0
    %276 = vmatpush.msra.mxu0 0.0
    %277 = vmatpush.msra.mxu0 0.0
    %278 = vmatpush.msra.mxu0 %v128
    %279 = vmatpush.msra.mxu0 %v124
    %280 = vmatpush.msra.mxu0 %v120
    %281 = vmatpush.msra.mxu0 %v116
    %282 = vmatmul.f32.gmra.mxu0 %v244
    %v283 = vpop.f32.mrf.mxu0
    %v284 = vadd.f32 %v135, %v283
    %285 = vdwg.mxu0
    %286 = vmatpush.msra.mxu0 0.0
    %287 = vmatpush.msra.mxu0 0.0
    %288 = vmatpush.msra.mxu0 0.0
    %289 = vmatpush.msra.mxu0 0.0
    %290 = vmatpush.msra.mxu0 0.0
    %291 = vmatpush.msra.mxu0 0.0
    %292 = vmatpush.msra.mxu0 0.0
    %293 = vmatpush.msra.mxu0 0.0
    %294 = vmatpush.msra.mxu0 0.0
    %295 = vmatpush.msra.mxu0 0.0
    %296 = vmatpush.msra.mxu0 0.0
    %297 = vmatpush.msra.mxu0 0.0
    %298 = vmatpush.msra.mxu0 %v129
    %299 = vmatpush.msra.mxu0 %v125
    %300 = vmatpush.msra.mxu0 %v121
    %301 = vmatpush.msra.mxu0 %v117
    %302 = vmatmul.f32.gmra.mxu0 %v244
    %v303 = vpop.f32.mrf.mxu0
    %v304 = vadd.f32 %v136, %v303
    %305 = vdwg.mxu0
    %306 = vmatpush.msra.mxu0 0.0
    %307 = vmatpush.msra.mxu0 0.0
    %308 = vmatpush.msra.mxu0 0.0
    %309 = vmatpush.msra.mxu0 0.0
    %310 = vmatpush.msra.mxu0 0.0
    %311 = vmatpush.msra.mxu0 0.0
    %312 = vmatpush.msra.mxu0 0.0
    %313 = vmatpush.msra.mxu0 0.0
    %314 = vmatpush.msra.mxu0 0.0
    %315 = vmatpush.msra.mxu0 0.0
    %316 = vmatpush.msra.mxu0 0.0
    %317 = vmatpush.msra.mxu0 0.0
    %318 = vmatpush.msra.mxu0 %v130
    %319 = vmatpush.msra.mxu0 %v126
    %320 = vmatpush.msra.mxu0 %v122
    %321 = vmatpush.msra.mxu0 %v118
    %322 = vmatmul.f32.gmra.mxu0 %v244
    %v323 = vpop.f32.mrf.mxu0
    %v324 = vadd.f32 %v137, %v323
    %325 = vdwg.mxu0
    %v330 = vrot.slane %v284, 6
    %v331 = vrot.slane %v304, 4
    %v332 = vrot.slane %v324, 2
    %v333 = vsel %vm233, %v264, %v330
    %v334 = vsel %vm235, %v331, %v332
    %v335 = vsel %vm237, %v333, %v334
    %s337 = scalar_lea.vmem [#allocation2], 8
    %338 = vst [vmem:[%s337] sm:$0xff] %v335
    %s339 = scalar_lea.vmem %s0, 4
    %v340 = vld [vmem:[%s339] sm:$0x3]
    %v342 = vsel %vm142, %v340, 0
    %344 = vmatpush.msra.mxu0 0.0
    %345 = vmatpush.msra.mxu0 0.0
    %346 = vmatpush.msra.mxu0 0.0
    %347 = vmatpush.msra.mxu0 0.0
    %348 = vmatpush.msra.mxu0 0.0
    %349 = vmatpush.msra.mxu0 0.0
    %350 = vmatpush.msra.mxu0 0.0
    %351 = vmatpush.msra.mxu0 0.0
    %352 = vmatpush.msra.mxu0 0.0
    %353 = vmatpush.msra.mxu0 0.0
    %354 = vmatpush.msra.mxu0 0.0
    %355 = vmatpush.msra.mxu0 0.0
    %356 = vmatpush.msra.mxu0 %v127
    %357 = vmatpush.msra.mxu0 %v123
    %358 = vmatpush.msra.mxu0 %v119
    %359 = vmatpush.msra.mxu0 %v115
    %360 = vmatmul.f32.gmra.mxu0 %v342
    %v361 = vpop.f32.mrf.mxu0
    %v362 = vadd.f32 %v134, %v361
    %363 = vdwg.mxu0
    %364 = vmatpush.msra.mxu0 0.0
    %365 = vmatpush.msra.mxu0 0.0
    %366 = vmatpush.msra.mxu0 0.0
    %367 = vmatpush.msra.mxu0 0.0
    %368 = vmatpush.msra.mxu0 0.0
    %369 = vmatpush.msra.mxu0 0.0
    %370 = vmatpush.msra.mxu0 0.0
    %371 = vmatpush.msra.mxu0 0.0
    %372 = vmatpush.msra.mxu0 0.0
    %373 = vmatpush.msra.mxu0 0.0
    %374 = vmatpush.msra.mxu0 0.0
    %375 = vmatpush.msra.mxu0 0.0
    %376 = vmatpush.msra.mxu0 %v128
    %377 = vmatpush.msra.mxu0 %v124
    %378 = vmatpush.msra.mxu0 %v120
    %379 = vmatpush.msra.mxu0 %v116
    %380 = vmatmul.f32.gmra.mxu0 %v342
    %v381 = vpop.f32.mrf.mxu0
    %v382 = vadd.f32 %v135, %v381
    %383 = vdwg.mxu0
    %384 = vmatpush.msra.mxu0 0.0
    %385 = vmatpush.msra.mxu0 0.0
    %386 = vmatpush.msra.mxu0 0.0
    %387 = vmatpush.msra.mxu0 0.0
    %388 = vmatpush.msra.mxu0 0.0
    %389 = vmatpush.msra.mxu0 0.0
    %390 = vmatpush.msra.mxu0 0.0
    %391 = vmatpush.msra.mxu0 0.0
    %392 = vmatpush.msra.mxu0 0.0
    %393 = vmatpush.msra.mxu0 0.0
    %394 = vmatpush.msra.mxu0 0.0
    %395 = vmatpush.msra.mxu0 0.0
    %396 = vmatpush.msra.mxu0 %v129
    %397 = vmatpush.msra.mxu0 %v125
    %398 = vmatpush.msra.mxu0 %v121
    %399 = vmatpush.msra.mxu0 %v117
    %400 = vmatmul.f32.gmra.mxu0 %v342
    %v401 = vpop.f32.mrf.mxu0
    %v402 = vadd.f32 %v136, %v401
    %403 = vdwg.mxu0
    %404 = vmatpush.msra.mxu0 0.0
    %405 = vmatpush.msra.mxu0 0.0
    %406 = vmatpush.msra.mxu0 0.0
    %407 = vmatpush.msra.mxu0 0.0
    %408 = vmatpush.msra.mxu0 0.0
    %409 = vmatpush.msra.mxu0 0.0
    %410 = vmatpush.msra.mxu0 0.0
    %411 = vmatpush.msra.mxu0 0.0
    %412 = vmatpush.msra.mxu0 0.0
    %413 = vmatpush.msra.mxu0 0.0
    %414 = vmatpush.msra.mxu0 0.0
    %415 = vmatpush.msra.mxu0 0.0
    %416 = vmatpush.msra.mxu0 %v130
    %417 = vmatpush.msra.mxu0 %v126
    %418 = vmatpush.msra.mxu0 %v122
    %419 = vmatpush.msra.mxu0 %v118
    %420 = vmatmul.f32.gmra.mxu0 %v342
    %v421 = vpop.f32.mrf.mxu0
    %v422 = vadd.f32 %v137, %v421
    %423 = vdwg.mxu0
    %v428 = vrot.slane %v382, 6
    %v429 = vrot.slane %v402, 4
    %v430 = vrot.slane %v422, 2
    %v431 = vsel %vm233, %v362, %v428
    %v432 = vsel %vm235, %v429, %v430
    %v433 = vsel %vm237, %v431, %v432
    %s435 = scalar_lea.vmem [#allocation2], 16
    %436 = vst [vmem:[%s435] sm:$0xff] %v433
    %s437 = scalar_lea.vmem %s0, 6
    %v438 = vld [vmem:[%s437] sm:$0x3]
    %v440 = vsel %vm142, %v438, 0
    %442 = vmatpush.msra.mxu0 0.0
    %443 = vmatpush.msra.mxu0 0.0
    %444 = vmatpush.msra.mxu0 0.0
    %445 = vmatpush.msra.mxu0 0.0
    %446 = vmatpush.msra.mxu0 0.0
    %447 = vmatpush.msra.mxu0 0.0
    %448 = vmatpush.msra.mxu0 0.0
    %449 = vmatpush.msra.mxu0 0.0
    %450 = vmatpush.msra.mxu0 0.0
    %451 = vmatpush.msra.mxu0 0.0
    %452 = vmatpush.msra.mxu0 0.0
    %453 = vmatpush.msra.mxu0 0.0
    %454 = vmatpush.msra.mxu0 %v127
    %455 = vmatpush.msra.mxu0 %v123
    %456 = vmatpush.msra.mxu0 %v119
    %457 = vmatpush.msra.mxu0 %v115
    %458 = vmatmul.f32.gmra.mxu0 %v440
    %v459 = vpop.f32.mrf.mxu0
    %v460 = vadd.f32 %v134, %v459
    %461 = vdwg.mxu0
    %462 = vmatpush.msra.mxu0 0.0
    %463 = vmatpush.msra.mxu0 0.0
    %464 = vmatpush.msra.mxu0 0.0
    %465 = vmatpush.msra.mxu0 0.0
    %466 = vmatpush.msra.mxu0 0.0
    %467 = vmatpush.msra.mxu0 0.0
    %468 = vmatpush.msra.mxu0 0.0
    %469 = vmatpush.msra.mxu0 0.0
    %470 = vmatpush.msra.mxu0 0.0
    %471 = vmatpush.msra.mxu0 0.0
    %472 = vmatpush.msra.mxu0 0.0
    %473 = vmatpush.msra.mxu0 0.0
    %474 = vmatpush.msra.mxu0 %v128
    %475 = vmatpush.msra.mxu0 %v124
    %476 = vmatpush.msra.mxu0 %v120
    %477 = vmatpush.msra.mxu0 %v116
    %478 = vmatmul.f32.gmra.mxu0 %v440
    %v479 = vpop.f32.mrf.mxu0
    %v480 = vadd.f32 %v135, %v479
    %481 = vdwg.mxu0
    %482 = vmatpush.msra.mxu0 0.0
    %483 = vmatpush.msra.mxu0 0.0
    %484 = vmatpush.msra.mxu0 0.0
    %485 = vmatpush.msra.mxu0 0.0
    %486 = vmatpush.msra.mxu0 0.0
    %487 = vmatpush.msra.mxu0 0.0
    %488 = vmatpush.msra.mxu0 0.0
    %489 = vmatpush.msra.mxu0 0.0
    %490 = vmatpush.msra.mxu0 0.0
    %491 = vmatpush.msra.mxu0 0.0
    %492 = vmatpush.msra.mxu0 0.0
    %493 = vmatpush.msra.mxu0 0.0
    %494 = vmatpush.msra.mxu0 %v129
    %495 = vmatpush.msra.mxu0 %v125
    %496 = vmatpush.msra.mxu0 %v121
    %497 = vmatpush.msra.mxu0 %v117
    %498 = vmatmul.f32.gmra.mxu0 %v440
    %v499 = vpop.f32.mrf.mxu0
    %v500 = vadd.f32 %v136, %v499
    %501 = vdwg.mxu0
    %502 = vmatpush.msra.mxu0 0.0
    %503 = vmatpush.msra.mxu0 0.0
    %504 = vmatpush.msra.mxu0 0.0
    %505 = vmatpush.msra.mxu0 0.0
    %506 = vmatpush.msra.mxu0 0.0
    %507 = vmatpush.msra.mxu0 0.0
    %508 = vmatpush.msra.mxu0 0.0
    %509 = vmatpush.msra.mxu0 0.0
    %510 = vmatpush.msra.mxu0 0.0
    %511 = vmatpush.msra.mxu0 0.0
    %512 = vmatpush.msra.mxu0 0.0
    %513 = vmatpush.msra.mxu0 0.0
    %514 = vmatpush.msra.mxu0 %v130
    %515 = vmatpush.msra.mxu0 %v126
    %516 = vmatpush.msra.mxu0 %v122
    %517 = vmatpush.msra.mxu0 %v118
    %518 = vmatmul.f32.gmra.mxu0 %v440
    %v519 = vpop.f32.mrf.mxu0
    %v520 = vadd.f32 %v137, %v519
    %521 = vdwg.mxu0
    %v526 = vrot.slane %v480, 6
    %v527 = vrot.slane %v500, 4
    %v528 = vrot.slane %v520, 2
    %v529 = vsel %vm233, %v460, %v526
    %v530 = vsel %vm235, %v527, %v528
    %v531 = vsel %vm237, %v529, %v530
    %s533 = scalar_lea.vmem [#allocation2], 24
    %534 = vst [vmem:[%s533] sm:$0xff] %v531
    %v535 = vld [vmem:[%s4] sm:$0xff]
    %v536 = vld [vmem:[%s4 + $0x8] sm:$0xff]
    %v537 = vld [vmem:[%s4 + $0x10] sm:$0xff]
    %v538 = vld [vmem:[%s4 + $0x18] sm:$0xff]
    %v539 = vld [vmem:[%s4 + $0x20] sm:$0xff]
    %v540 = vld [vmem:[%s4 + $0x28] sm:$0xff]
    %v541 = vld [vmem:[%s4 + $0x30] sm:$0xff]
    %v542 = vld [vmem:[%s4 + $0x38] sm:$0xff]
    %v543 = vld [vmem:[%s4 + $0x40] sm:$0xff]
    %v544 = vld [vmem:[%s4 + $0x48] sm:$0xff]
    %v545 = vld [vmem:[%s4 + $0x50] sm:$0xff]
    %v546 = vld [vmem:[%s4 + $0x58] sm:$0xff]
    %v547 = vld [vmem:[%s4 + $0x60] sm:$0xff]
    %v548 = vld [vmem:[%s4 + $0x68] sm:$0xff]
    %v549 = vld [vmem:[%s4 + $0x70] sm:$0xff]
    %v550 = vld [vmem:[%s4 + $0x78] sm:$0xff]
    %v551 = vld [vmem:[#allocation2] sm:$0xff]
    %v552 = vld [vmem:[%s533] sm:$0xff]
    %554 = vst [vmem:[#allocation1] ss:$4 sm:$0xff] %v551
    %v555 = vld.sshfl [vmem:[#allocation1] sm:$0xff pattern:$0x73625140]
    %v556 = vld.sshfl [vmem:[#allocation1 + $0x8] sm:$0xff pattern:$0x73625140]
    %vm559 = vcmask 523264
    %v561 = vsel %vm559, 0.0, 0
    %563 = vmatpush.msra.mxu0 0.0
    %564 = vmatpush.msra.mxu0 0.0
    %565 = vmatpush.msra.mxu0 0.0
    %566 = vmatpush.msra.mxu0 0.0
    %567 = vmatpush.msra.mxu0 0.0
    %568 = vmatpush.msra.mxu0 0.0
    %569 = vmatpush.msra.mxu0 0.0
    %570 = vmatpush.msra.mxu0 0.0
    %571 = vmatpush.msra.mxu0 %v549
    %572 = vmatpush.msra.mxu0 %v547
    %573 = vmatpush.msra.mxu0 %v545
    %574 = vmatpush.msra.mxu0 %v543
    %575 = vmatpush.msra.mxu0 %v541
    %576 = vmatpush.msra.mxu0 %v539
    %577 = vmatpush.msra.mxu0 %v537
    %578 = vmatpush.msra.mxu0 %v535
    %579 = vmatmul.f32.gmra.mxu0 %v561
    %v580 = vpop.f32.mrf.mxu0
    %v581 = vadd.f32 %v555, %v580
    %582 = vdwg.mxu0
    %583 = vmatpush.msra.mxu0 0.0
    %584 = vmatpush.msra.mxu0 0.0
    %585 = vmatpush.msra.mxu0 0.0
    %586 = vmatpush.msra.mxu0 0.0
    %587 = vmatpush.msra.mxu0 0.0
    %588 = vmatpush.msra.mxu0 0.0
    %589 = vmatpush.msra.mxu0 0.0
    %590 = vmatpush.msra.mxu0 0.0
    %591 = vmatpush.msra.mxu0 %v550
    %592 = vmatpush.msra.mxu0 %v548
    %593 = vmatpush.msra.mxu0 %v546
    %594 = vmatpush.msra.mxu0 %v544
    %595 = vmatpush.msra.mxu0 %v542
    %596 = vmatpush.msra.mxu0 %v540
    %597 = vmatpush.msra.mxu0 %v538
    %598 = vmatpush.msra.mxu0 %v536
    %599 = vmatmul.f32.gmra.mxu0 %v561
    %v600 = vpop.f32.mrf.mxu0
    %v601 = vadd.f32 %v556, %v600
    %602 = vdwg.mxu0
    %604 = vst [vmem:[#allocation1] ss:$4 sm:$0xff] %v552
    %v605 = vld.sshfl [vmem:[#allocation1 + $0x10] sm:$0xff pattern:$0x73625140]
    %v606 = vld.sshfl [vmem:[#allocation1 + $0x18] sm:$0xff pattern:$0x73625140]
    %v609 = vadd.f32 %v581, %v605
    %v610 = vadd.f32 %v601, %v606
    %v611 = vxor.u32 %v609, 2147483648
    %v612 = vxor.u32 %v610, 2147483648
    %v613 = vmul.f32 %v611, 1.442695
    %v614 = vpow.pop %v613
    %v615 = vmul.f32 %v612, 1.442695
    %v616 = vpow.pop %v615
    %v617 = vadd.f32 %v614, 1.0
    %v618 = vadd.f32 %v616, 1.0
    %v619 = vrcp.pop %v617
    %v620 = vmul.f32 %v617, %v619
    %v621 = vsub.f32 1.0, %v620
    %v622 = vmul.f32 %v619, %v621
    %v623 = vadd.f32 %v619, %v622
    %vm624 = vweird.f32 %v617
    %vm625 = vweird.f32 %v619
    %vm626 = vmor %vm624, %vm625
    %v627 = vsel %vm626, %v619, %v623
    %v628 = vand.u32 2147483647, %v617
    %vm629 = vcmp.eq.f32.partialorder %v628, 8.507059e+37
    %v630 = vand.u32 %v617, 2147483648
    %v631 = vor.u32 1.1754944e-38, %v630
    %v632 = vsel %vm629, %v631, %v627
    %v633 = vmul.f32 1.0, %v632
    %v634 = vrcp.pop %v618
    %v635 = vmul.f32 %v618, %v634
    %v636 = vsub.f32 1.0, %v635
    %v637 = vmul.f32 %v634, %v636
    %v638 = vadd.f32 %v634, %v637
    %vm639 = vweird.f32 %v618
    %vm640 = vweird.f32 %v634
    %vm641 = vmor %vm639, %vm640
    %v642 = vsel %vm641, %v634, %v638
    %v643 = vand.u32 2147483647, %v618
    %vm644 = vcmp.eq.f32.partialorder %v643, 8.507059e+37
    %v645 = vand.u32 %v618, 2147483648
    %v646 = vor.u32 1.1754944e-38, %v645
    %v647 = vsel %vm644, %v646, %v642
    %v648 = vmul.f32 1.0, %v647
    %v649 = vtanh.pop %v610
    %v650 = vmul.f32 %v633, 0.0
    %v651 = vmul.f32 %v633, %v649
    %653 = vrot.lane.b32.xlu0 %v651, 64
    %v654 = vpop.permute.xlu0 %653
    %v656 = vadd.f32 %v650, %v654
    %v657 = vtanh.pop %v656
    %v658 = vmul.f32 %v648, %v657
    %v659 = vld [vmem:[%s337] sm:$0xff]
    %v660 = vld [vmem:[%s435] sm:$0xff]
    %662 = vrot.lane.b32.xlu0 %v658, 64
    %v663 = vpop.permute.xlu0 %662
    %665 = vst [vmem:[#allocation1] ss:$4 sm:$0xff] %v659
    %v666 = vld.sshfl [vmem:[#allocation1] sm:$0xff pattern:$0x73625140]
    %v667 = vld.sshfl [vmem:[#allocation1 + $0x8] sm:$0xff pattern:$0x73625140]
    %v670 = vsel %vm559, %v663, 0
    %672 = vmatpush.msra.mxu0 0.0
    %673 = vmatpush.msra.mxu0 0.0
    %674 = vmatpush.msra.mxu0 0.0
    %675 = vmatpush.msra.mxu0 0.0
    %676 = vmatpush.msra.mxu0 0.0
    %677 = vmatpush.msra.mxu0 0.0
    %678 = vmatpush.msra.mxu0 0.0
    %679 = vmatpush.msra.mxu0 0.0
    %680 = vmatpush.msra.mxu0 %v549
    %681 = vmatpush.msra.mxu0 %v547
    %682 = vmatpush.msra.mxu0 %v545
    %683 = vmatpush.msra.mxu0 %v543
    %684 = vmatpush.msra.mxu0 %v541
    %685 = vmatpush.msra.mxu0 %v539
    %686 = vmatpush.msra.mxu0 %v537
    %687 = vmatpush.msra.mxu0 %v535
    %688 = vmatmul.f32.gmra.mxu0 %v670
    %v689 = vpop.f32.mrf.mxu0
    %v690 = vadd.f32 %v666, %v689
    %691 = vdwg.mxu0
    %692 = vmatpush.msra.mxu0 0.0
    %693 = vmatpush.msra.mxu0 0.0
    %694 = vmatpush.msra.mxu0 0.0
    %695 = vmatpush.msra.mxu0 0.0
    %696 = vmatpush.msra.mxu0 0.0
    %697 = vmatpush.msra.mxu0 0.0
    %698 = vmatpush.msra.mxu0 0.0
    %699 = vmatpush.msra.mxu0 0.0
    %700 = vmatpush.msra.mxu0 %v550
    %701 = vmatpush.msra.mxu0 %v548
    %702 = vmatpush.msra.mxu0 %v546
    %703 = vmatpush.msra.mxu0 %v544
    %704 = vmatpush.msra.mxu0 %v542
    %705 = vmatpush.msra.mxu0 %v540
    %706 = vmatpush.msra.mxu0 %v538
    %707 = vmatpush.msra.mxu0 %v536
    %708 = vmatmul.f32.gmra.mxu0 %v670
    %v709 = vpop.f32.mrf.mxu0
    %v710 = vadd.f32 %v667, %v709
    %711 = vdwg.mxu0
    %713 = vst [vmem:[#allocation1] ss:$4 sm:$0xff] %v660
    %v714 = vld.sshfl [vmem:[#allocation1 + $0x10] sm:$0xff pattern:$0x73625140]
    %v715 = vld.sshfl [vmem:[#allocation1 + $0x18] sm:$0xff pattern:$0x73625140]
    %v718 = vadd.f32 %v690, %v714
    %v719 = vadd.f32 %v710, %v715
    %v720 = vxor.u32 %v718, 2147483648
    %v721 = vxor.u32 %v719, 2147483648
    %v722 = vmul.f32 %v720, 1.442695
    %v723 = vpow.pop %v722
    %v724 = vmul.f32 %v721, 1.442695
    %v725 = vpow.pop %v724
    %v726 = vadd.f32 %v723, 1.0
    %v727 = vadd.f32 %v725, 1.0
    %v728 = vrcp.pop %v726
    %v729 = vmul.f32 %v726, %v728
    %v730 = vsub.f32 1.0, %v729
    %v731 = vmul.f32 %v728, %v730
    %v732 = vadd.f32 %v728, %v731
    %vm733 = vweird.f32 %v726
    %vm734 = vweird.f32 %v728
    %vm735 = vmor %vm733, %vm734
    %v736 = vsel %vm735, %v728, %v732
    %v737 = vand.u32 2147483647, %v726
    %vm738 = vcmp.eq.f32.partialorder %v737, 8.507059e+37
    %v739 = vand.u32 %v726, 2147483648
    %v740 = vor.u32 1.1754944e-38, %v739
    %v741 = vsel %vm738, %v740, %v736
    %v742 = vmul.f32 1.0, %v741
    %v743 = vrcp.pop %v727
    %v744 = vmul.f32 %v727, %v743
    %v745 = vsub.f32 1.0, %v744
    %v746 = vmul.f32 %v743, %v745
    %v747 = vadd.f32 %v743, %v746
    %vm748 = vweird.f32 %v727
    %vm749 = vweird.f32 %v743
    %vm750 = vmor %vm748, %vm749
    %v751 = vsel %vm750, %v743, %v747
    %v752 = vand.u32 2147483647, %v727
    %vm753 = vcmp.eq.f32.partialorder %v752, 8.507059e+37
    %v754 = vand.u32 %v727, 2147483648
    %v755 = vor.u32 1.1754944e-38, %v754
    %v756 = vsel %vm753, %v755, %v751
    %v757 = vmul.f32 1.0, %v756
    %v758 = vtanh.pop %v719
    %v759 = vmul.f32 %v742, %v656
    %v760 = vmul.f32 %v742, %v758
    %762 = vrot.lane.b32.xlu0 %v760, 64
    %v763 = vpop.permute.xlu0 %762
    %v765 = vadd.f32 %v759, %v763
    %v766 = vtanh.pop %v765
    %v767 = vmul.f32 %v757, %v766
    %769 = vrot.lane.b32.xlu0 %v767, 64
    %v770 = vpop.permute.xlu0 %769
    %771 = vst [vmem:[#allocation1] ss:$4 sm:$0xff] %v660
    %v772 = vld.sshfl [vmem:[#allocation1] sm:$0xff pattern:$0x73625140]
    %v773 = vld.sshfl [vmem:[#allocation1 + $0x8] sm:$0xff pattern:$0x73625140]
    %v776 = vsel %vm559, %v770, 0
    %778 = vmatpush.msra.mxu0 0.0
    %779 = vmatpush.msra.mxu0 0.0
    %780 = vmatpush.msra.mxu0 0.0
    %781 = vmatpush.msra.mxu0 0.0
    %782 = vmatpush.msra.mxu0 0.0
    %783 = vmatpush.msra.mxu0 0.0
    %784 = vmatpush.msra.mxu0 0.0
    %785 = vmatpush.msra.mxu0 0.0
    %786 = vmatpush.msra.mxu0 %v549
    %787 = vmatpush.msra.mxu0 %v547
    %788 = vmatpush.msra.mxu0 %v545
    %789 = vmatpush.msra.mxu0 %v543
    %790 = vmatpush.msra.mxu0 %v541
    %791 = vmatpush.msra.mxu0 %v539
    %792 = vmatpush.msra.mxu0 %v537
    %793 = vmatpush.msra.mxu0 %v535
    %794 = vmatmul.f32.gmra.mxu0 %v776
    %v795 = vpop.f32.mrf.mxu0
    %v796 = vadd.f32 %v772, %v795
    %797 = vdwg.mxu0
    %798 = vmatpush.msra.mxu0 0.0
    %799 = vmatpush.msra.mxu0 0.0
    %800 = vmatpush.msra.mxu0 0.0
    %801 = vmatpush.msra.mxu0 0.0
    %802 = vmatpush.msra.mxu0 0.0
    %803 = vmatpush.msra.mxu0 0.0
    %804 = vmatpush.msra.mxu0 0.0
    %805 = vmatpush.msra.mxu0 0.0
    %806 = vmatpush.msra.mxu0 %v550
    %807 = vmatpush.msra.mxu0 %v548
    %808 = vmatpush.msra.mxu0 %v546
    %809 = vmatpush.msra.mxu0 %v544
    %810 = vmatpush.msra.mxu0 %v542
    %811 = vmatpush.msra.mxu0 %v540
    %812 = vmatpush.msra.mxu0 %v538
    %813 = vmatpush.msra.mxu0 %v536
    %814 = vmatmul.f32.gmra.mxu0 %v776
    %v815 = vpop.f32.mrf.mxu0
    %v816 = vadd.f32 %v773, %v815
    %817 = vdwg.mxu0
    %818 = vst [vmem:[#allocation1] ss:$4 sm:$0xff] %v659
    %v819 = vld.sshfl [vmem:[#allocation1 + $0x10] sm:$0xff pattern:$0x73625140]
    %v820 = vld.sshfl [vmem:[#allocation1 + $0x18] sm:$0xff pattern:$0x73625140]
    %v823 = vadd.f32 %v796, %v819
    %v824 = vadd.f32 %v816, %v820
    %v825 = vxor.u32 %v823, 2147483648
    %v826 = vxor.u32 %v824, 2147483648
    %v827 = vmul.f32 %v825, 1.442695
    %v828 = vpow.pop %v827
    %v829 = vmul.f32 %v826, 1.442695
    %v830 = vpow.pop %v829
    %v831 = vadd.f32 %v828, 1.0
    %v832 = vadd.f32 %v830, 1.0
    %v833 = vrcp.pop %v831
    %v834 = vmul.f32 %v831, %v833
    %v835 = vsub.f32 1.0, %v834
    %v836 = vmul.f32 %v833, %v835
    %v837 = vadd.f32 %v833, %v836
    %vm838 = vweird.f32 %v831
    %vm839 = vweird.f32 %v833
    %vm840 = vmor %vm838, %vm839
    %v841 = vsel %vm840, %v833, %v837
    %v842 = vand.u32 2147483647, %v831
    %vm843 = vcmp.eq.f32.partialorder %v842, 8.507059e+37
    %v844 = vand.u32 %v831, 2147483648
    %v845 = vor.u32 1.1754944e-38, %v844
    %v846 = vsel %vm843, %v845, %v841
    %v847 = vmul.f32 1.0, %v846
    %v848 = vrcp.pop %v832
    %v849 = vmul.f32 %v832, %v848
    %v850 = vsub.f32 1.0, %v849
    %v851 = vmul.f32 %v848, %v850
    %v852 = vadd.f32 %v848, %v851
    %vm853 = vweird.f32 %v832
    %vm854 = vweird.f32 %v848
    %vm855 = vmor %vm853, %vm854
    %v856 = vsel %vm855, %v848, %v852
    %v857 = vand.u32 2147483647, %v832
    %vm858 = vcmp.eq.f32.partialorder %v857, 8.507059e+37
    %v859 = vand.u32 %v832, 2147483648
    %v860 = vor.u32 1.1754944e-38, %v859
    %v861 = vsel %vm858, %v860, %v856
    %v862 = vmul.f32 1.0, %v861
    %v863 = vtanh.pop %v824
    %v864 = vmul.f32 %v847, %v765
    %v865 = vmul.f32 %v847, %v863
    %867 = vrot.lane.b32.xlu0 %v865, 64
    %v868 = vpop.permute.xlu0 %867
    %v870 = vadd.f32 %v864, %v868
    %v871 = vtanh.pop %v870
    %v872 = vmul.f32 %v862, %v871
    %874 = vrot.lane.b32.xlu0 %v872, 64
    %v875 = vpop.permute.xlu0 %874
    %876 = vst [vmem:[#allocation1] ss:$4 sm:$0xff] %v552
    %v877 = vld.sshfl [vmem:[#allocation1] sm:$0xff pattern:$0x73625140]
    %v878 = vld.sshfl [vmem:[#allocation1 + $0x8] sm:$0xff pattern:$0x73625140]
    %v881 = vsel %vm559, %v875, 0
    %883 = vmatpush.msra.mxu0 0.0
    %884 = vmatpush.msra.mxu0 0.0
    %885 = vmatpush.msra.mxu0 0.0
    %886 = vmatpush.msra.mxu0 0.0
    %887 = vmatpush.msra.mxu0 0.0
    %888 = vmatpush.msra.mxu0 0.0
    %889 = vmatpush.msra.mxu0 0.0
    %890 = vmatpush.msra.mxu0 0.0
    %891 = vmatpush.msra.mxu0 %v549
    %892 = vmatpush.msra.mxu0 %v547
    %893 = vmatpush.msra.mxu0 %v545
    %894 = vmatpush.msra.mxu0 %v543
    %895 = vmatpush.msra.mxu0 %v541
    %896 = vmatpush.msra.mxu0 %v539
    %897 = vmatpush.msra.mxu0 %v537
    %898 = vmatpush.msra.mxu0 %v535
    %899 = vmatmul.f32.gmra.mxu0 %v881
    %v900 = vpop.f32.mrf.mxu0
    %v901 = vadd.f32 %v877, %v900
    %902 = vdwg.mxu0
    %903 = vmatpush.msra.mxu0 0.0
    %904 = vmatpush.msra.mxu0 0.0
    %905 = vmatpush.msra.mxu0 0.0
    %906 = vmatpush.msra.mxu0 0.0
    %907 = vmatpush.msra.mxu0 0.0
    %908 = vmatpush.msra.mxu0 0.0
    %909 = vmatpush.msra.mxu0 0.0
    %910 = vmatpush.msra.mxu0 0.0
    %911 = vmatpush.msra.mxu0 %v550
    %912 = vmatpush.msra.mxu0 %v548
    %913 = vmatpush.msra.mxu0 %v546
    %914 = vmatpush.msra.mxu0 %v544
    %915 = vmatpush.msra.mxu0 %v542
    %916 = vmatpush.msra.mxu0 %v540
    %917 = vmatpush.msra.mxu0 %v538
    %918 = vmatpush.msra.mxu0 %v536
    %919 = vmatmul.f32.gmra.mxu0 %v881
    %v920 = vpop.f32.mrf.mxu0
    %v921 = vadd.f32 %v878, %v920
    %922 = vdwg.mxu0
    %923 = vst [vmem:[#allocation1] ss:$4 sm:$0xff] %v551
    %v924 = vld.sshfl [vmem:[#allocation1 + $0x10] sm:$0xff pattern:$0x73625140]
    %v925 = vld.sshfl [vmem:[#allocation1 + $0x18] sm:$0xff pattern:$0x73625140]
    %v928 = vadd.f32 %v901, %v924
    %v929 = vadd.f32 %v921, %v925
    %v930 = vxor.u32 %v928, 2147483648
    %v931 = vxor.u32 %v929, 2147483648
    %v932 = vmul.f32 %v930, 1.442695
    %v933 = vpow.pop %v932
    %v934 = vmul.f32 %v931, 1.442695
    %v935 = vpow.pop %v934
    %v936 = vadd.f32 %v933, 1.0
    %v937 = vadd.f32 %v935, 1.0
    %v938 = vrcp.pop %v936
    %v939 = vmul.f32 %v936, %v938
    %v940 = vsub.f32 1.0, %v939
    %v941 = vmul.f32 %v938, %v940
    %v942 = vadd.f32 %v938, %v941
    %vm943 = vweird.f32 %v936
    %vm944 = vweird.f32 %v938
    %vm945 = vmor %vm943, %vm944
    %v946 = vsel %vm945, %v938, %v942
    %v947 = vand.u32 2147483647, %v936
    %vm948 = vcmp.eq.f32.partialorder %v947, 8.507059e+37
    %v949 = vand.u32 %v936, 2147483648
    %v950 = vor.u32 1.1754944e-38, %v949
    %v951 = vsel %vm948, %v950, %v946
    %v952 = vmul.f32 1.0, %v951
    %v953 = vrcp.pop %v937
    %v954 = vmul.f32 %v937, %v953
    %v955 = vsub.f32 1.0, %v954
    %v956 = vmul.f32 %v953, %v955
    %v957 = vadd.f32 %v953, %v956
    %vm958 = vweird.f32 %v937
    %vm959 = vweird.f32 %v953
    %vm960 = vmor %vm958, %vm959
    %v961 = vsel %vm960, %v953, %v957
    %v962 = vand.u32 2147483647, %v937
    %vm963 = vcmp.eq.f32.partialorder %v962, 8.507059e+37
    %v964 = vand.u32 %v937, 2147483648
    %v965 = vor.u32 1.1754944e-38, %v964
    %v966 = vsel %vm963, %v965, %v961
    %v967 = vmul.f32 1.0, %v966
    %v968 = vtanh.pop %v929
    %v969 = vmul.f32 %v952, %v870
    %v970 = vmul.f32 %v952, %v968
    %972 = vrot.lane.b32.xlu0 %v970, 64
    %v973 = vpop.permute.xlu0 %972
    %v975 = vadd.f32 %v969, %v973
    %v976 = vtanh.pop %v975
    %v977 = vmul.f32 %v967, %v976
    %v978 = vld [vmem:[%s6] sm:$0xff]
    %v979 = vld [vmem:[%s6 + $0x8] sm:$0xff]
    %v980 = vld [vmem:[%s6 + $0x10] sm:$0xff]
    %v981 = vld [vmem:[%s6 + $0x18] sm:$0xff]
    %v982 = vld [vmem:[%s6 + $0x20] sm:$0xff]
    %v983 = vld [vmem:[%s6 + $0x28] sm:$0xff]
    %v984 = vld [vmem:[%s6 + $0x30] sm:$0xff]
    %v985 = vld [vmem:[%s6 + $0x38] sm:$0xff]
    %v986 = vld [vmem:[%s6 + $0x40] sm:$0xff]
    %v987 = vld [vmem:[%s6 + $0x48] sm:$0xff]
    %v988 = vld [vmem:[%s6 + $0x50] sm:$0xff]
    %v989 = vld [vmem:[%s6 + $0x58] sm:$0xff]
    %v990 = vld [vmem:[%s6 + $0x60] sm:$0xff]
    %v991 = vld [vmem:[%s6 + $0x68] sm:$0xff]
    %v992 = vld [vmem:[%s6 + $0x70] sm:$0xff]
    %v993 = vld [vmem:[%s6 + $0x78] sm:$0xff]
    %v994 = vld [vmem:[%s6 + $0x80] sm:$0xff]
    %v995 = vld [vmem:[%s6 + $0x88] sm:$0xff]
    %v996 = vld [vmem:[%s6 + $0x90] sm:$0xff]
    %v997 = vld [vmem:[%s6 + $0x98] sm:$0xff]
    %v998 = vld [vmem:[%s6 + $0xa0] sm:$0xff]
    %v999 = vld [vmem:[%s6 + $0xa8] sm:$0xff]
    %v1000 = vld [vmem:[%s6 + $0xb0] sm:$0xff]
    %v1001 = vld [vmem:[%s6 + $0xb8] sm:$0xff]
    %v1002 = vld [vmem:[%s6 + $0xc0] sm:$0xff]
    %v1003 = vld [vmem:[%s6 + $0xc8] sm:$0xff]
    %v1004 = vld [vmem:[%s6 + $0xd0] sm:$0xff]
    %v1005 = vld [vmem:[%s6 + $0xd8] sm:$0xff]
    %v1006 = vld [vmem:[%s6 + $0xe0] sm:$0xff]
    %v1007 = vld [vmem:[%s6 + $0xe8] sm:$0xff]
    %v1008 = vld [vmem:[%s6 + $0xf0] sm:$0xff]
    %v1009 = vld [vmem:[%s6 + $0xf8] sm:$0xff]
    %v1010 = vld [vmem:[%s8] sm:$0xf]
    %v1011 = vld [vmem:[%s1] sm:$0x3]
    %v1013 = vperm.slane %v1010, 0
    %v1014 = vperm.slane %v1010, 1
    %v1015 = vperm.slane %v1010, 2
    %v1016 = vperm.slane %v1010, 3
    %v1022 = vsel %vm559, %v1011, 0
    %1024 = vmatpush.msra.mxu0 0.0
    %1025 = vmatpush.msra.mxu0 0.0
    %1026 = vmatpush.msra.mxu0 0.0
    %1027 = vmatpush.msra.mxu0 0.0
    %1028 = vmatpush.msra.mxu0 0.0
    %1029 = vmatpush.msra.mxu0 0.0
    %1030 = vmatpush.msra.mxu0 0.0
    %1031 = vmatpush.msra.mxu0 0.0
    %1032 = vmatpush.msra.mxu0 %v1006
    %1033 = vmatpush.msra.mxu0 %v1002
    %1034 = vmatpush.msra.mxu0 %v998
    %1035 = vmatpush.msra.mxu0 %v994
    %1036 = vmatpush.msra.mxu0 %v990
    %1037 = vmatpush.msra.mxu0 %v986
    %1038 = vmatpush.msra.mxu0 %v982
    %1039 = vmatpush.msra.mxu0 %v978
    %1040 = vmatmul.f32.gmra.mxu0 %v1022
    %v1041 = vpop.f32.mrf.mxu0
    %v1042 = vadd.f32 %v1013, %v1041
    %1043 = vdwg.mxu0
    %1044 = vmatpush.msra.mxu0 0.0
    %1045 = vmatpush.msra.mxu0 0.0
    %1046 = vmatpush.msra.mxu0 0.0
    %1047 = vmatpush.msra.mxu0 0.0
    %1048 = vmatpush.msra.mxu0 0.0
    %1049 = vmatpush.msra.mxu0 0.0
    %1050 = vmatpush.msra.mxu0 0.0
    %1051 = vmatpush.msra.mxu0 0.0
    %1052 = vmatpush.msra.mxu0 %v1007
    %1053 = vmatpush.msra.mxu0 %v1003
    %1054 = vmatpush.msra.mxu0 %v999
    %1055 = vmatpush.msra.mxu0 %v995
    %1056 = vmatpush.msra.mxu0 %v991
    %1057 = vmatpush.msra.mxu0 %v987
    %1058 = vmatpush.msra.mxu0 %v983
    %1059 = vmatpush.msra.mxu0 %v979
    %1060 = vmatmul.f32.gmra.mxu0 %v1022
    %v1061 = vpop.f32.mrf.mxu0
    %v1062 = vadd.f32 %v1014, %v1061
    %1063 = vdwg.mxu0
    %1064 = vmatpush.msra.mxu0 0.0
    %1065 = vmatpush.msra.mxu0 0.0
    %1066 = vmatpush.msra.mxu0 0.0
    %1067 = vmatpush.msra.mxu0 0.0
    %1068 = vmatpush.msra.mxu0 0.0
    %1069 = vmatpush.msra.mxu0 0.0
    %1070 = vmatpush.msra.mxu0 0.0
    %1071 = vmatpush.msra.mxu0 0.0
    %1072 = vmatpush.msra.mxu0 %v1008
    %1073 = vmatpush.msra.mxu0 %v1004
    %1074 = vmatpush.msra.mxu0 %v1000
    %1075 = vmatpush.msra.mxu0 %v996
    %1076 = vmatpush.msra.mxu0 %v992
    %1077 = vmatpush.msra.mxu0 %v988
    %1078 = vmatpush.msra.mxu0 %v984
    %1079 = vmatpush.msra.mxu0 %v980
    %1080 = vmatmul.f32.gmra.mxu0 %v1022
    %v1081 = vpop.f32.mrf.mxu0
    %v1082 = vadd.f32 %v1015, %v1081
    %1083 = vdwg.mxu0
    %1084 = vmatpush.msra.mxu0 0.0
    %1085 = vmatpush.msra.mxu0 0.0
    %1086 = vmatpush.msra.mxu0 0.0
    %1087 = vmatpush.msra.mxu0 0.0
    %1088 = vmatpush.msra.mxu0 0.0
    %1089 = vmatpush.msra.mxu0 0.0
    %1090 = vmatpush.msra.mxu0 0.0
    %1091 = vmatpush.msra.mxu0 0.0
    %1092 = vmatpush.msra.mxu0 %v1009
    %1093 = vmatpush.msra.mxu0 %v1005
    %1094 = vmatpush.msra.mxu0 %v1001
    %1095 = vmatpush.msra.mxu0 %v997
    %1096 = vmatpush.msra.mxu0 %v993
    %1097 = vmatpush.msra.mxu0 %v989
    %1098 = vmatpush.msra.mxu0 %v985
    %1099 = vmatpush.msra.mxu0 %v981
    %1100 = vmatmul.f32.gmra.mxu0 %v1022
    %v1101 = vpop.f32.mrf.mxu0
    %v1102 = vadd.f32 %v1016, %v1101
    %1103 = vdwg.mxu0
    %v1108 = vrot.slane %v1062, 6
    %v1109 = vrot.slane %v1082, 4
    %v1110 = vrot.slane %v1102, 2
    %v1111 = vsel %vm233, %v1042, %v1108
    %v1112 = vsel %vm235, %v1109, %v1110
    %v1113 = vsel %vm237, %v1111, %v1112
    %1115 = vst [vmem:[#allocation2] sm:$0xff] %v1113
    %s1116 = scalar_lea.vmem %s1, 2
    %v1117 = vld [vmem:[%s1116] sm:$0x3]
    %v1119 = vsel %vm559, %v1117, 0
    %1121 = vmatpush.msra.mxu0 0.0
    %1122 = vmatpush.msra.mxu0 0.0
    %1123 = vmatpush.msra.mxu0 0.0
    %1124 = vmatpush.msra.mxu0 0.0
    %1125 = vmatpush.msra.mxu0 0.0
    %1126 = vmatpush.msra.mxu0 0.0
    %1127 = vmatpush.msra.mxu0 0.0
    %1128 = vmatpush.msra.mxu0 0.0
    %1129 = vmatpush.msra.mxu0 %v1006
    %1130 = vmatpush.msra.mxu0 %v1002
    %1131 = vmatpush.msra.mxu0 %v998
    %1132 = vmatpush.msra.mxu0 %v994
    %1133 = vmatpush.msra.mxu0 %v990
    %1134 = vmatpush.msra.mxu0 %v986
    %1135 = vmatpush.msra.mxu0 %v982
    %1136 = vmatpush.msra.mxu0 %v978
    %1137 = vmatmul.f32.gmra.mxu0 %v1119
    %v1138 = vpop.f32.mrf.mxu0
    %v1139 = vadd.f32 %v1013, %v1138
    %1140 = vdwg.mxu0
    %1141 = vmatpush.msra.mxu0 0.0
    %1142 = vmatpush.msra.mxu0 0.0
    %1143 = vmatpush.msra.mxu0 0.0
    %1144 = vmatpush.msra.mxu0 0.0
    %1145 = vmatpush.msra.mxu0 0.0
    %1146 = vmatpush.msra.mxu0 0.0
    %1147 = vmatpush.msra.mxu0 0.0
    %1148 = vmatpush.msra.mxu0 0.0
    %1149 = vmatpush.msra.mxu0 %v1007
    %1150 = vmatpush.msra.mxu0 %v1003
    %1151 = vmatpush.msra.mxu0 %v999
    %1152 = vmatpush.msra.mxu0 %v995
    %1153 = vmatpush.msra.mxu0 %v991
    %1154 = vmatpush.msra.mxu0 %v987
    %1155 = vmatpush.msra.mxu0 %v983
    %1156 = vmatpush.msra.mxu0 %v979
    %1157 = vmatmul.f32.gmra.mxu0 %v1119
    %v1158 = vpop.f32.mrf.mxu0
    %v1159 = vadd.f32 %v1014, %v1158
    %1160 = vdwg.mxu0
    %1161 = vmatpush.msra.mxu0 0.0
    %1162 = vmatpush.msra.mxu0 0.0
    %1163 = vmatpush.msra.mxu0 0.0
    %1164 = vmatpush.msra.mxu0 0.0
    %1165 = vmatpush.msra.mxu0 0.0
    %1166 = vmatpush.msra.mxu0 0.0
    %1167 = vmatpush.msra.mxu0 0.0
    %1168 = vmatpush.msra.mxu0 0.0
    %1169 = vmatpush.msra.mxu0 %v1008
    %1170 = vmatpush.msra.mxu0 %v1004
    %1171 = vmatpush.msra.mxu0 %v1000
    %1172 = vmatpush.msra.mxu0 %v996
    %1173 = vmatpush.msra.mxu0 %v992
    %1174 = vmatpush.msra.mxu0 %v988
    %1175 = vmatpush.msra.mxu0 %v984
    %1176 = vmatpush.msra.mxu0 %v980
    %1177 = vmatmul.f32.gmra.mxu0 %v1119
    %v1178 = vpop.f32.mrf.mxu0
    %v1179 = vadd.f32 %v1015, %v1178
    %1180 = vdwg.mxu0
    %1181 = vmatpush.msra.mxu0 0.0
    %1182 = vmatpush.msra.mxu0 0.0
    %1183 = vmatpush.msra.mxu0 0.0
    %1184 = vmatpush.msra.mxu0 0.0
    %1185 = vmatpush.msra.mxu0 0.0
    %1186 = vmatpush.msra.mxu0 0.0
    %1187 = vmatpush.msra.mxu0 0.0
    %1188 = vmatpush.msra.mxu0 0.0
    %1189 = vmatpush.msra.mxu0 %v1009
    %1190 = vmatpush.msra.mxu0 %v1005
    %1191 = vmatpush.msra.mxu0 %v1001
    %1192 = vmatpush.msra.mxu0 %v997
    %1193 = vmatpush.msra.mxu0 %v993
    %1194 = vmatpush.msra.mxu0 %v989
    %1195 = vmatpush.msra.mxu0 %v985
    %1196 = vmatpush.msra.mxu0 %v981
    %1197 = vmatmul.f32.gmra.mxu0 %v1119
    %v1198 = vpop.f32.mrf.mxu0
    %v1199 = vadd.f32 %v1016, %v1198
    %1200 = vdwg.mxu0
    %v1205 = vrot.slane %v1159, 6
    %v1206 = vrot.slane %v1179, 4
    %v1207 = vrot.slane %v1199, 2
    %v1208 = vsel %vm233, %v1139, %v1205
    %v1209 = vsel %vm235, %v1206, %v1207
    %v1210 = vsel %vm237, %v1208, %v1209
    %1212 = vst [vmem:[%s337] sm:$0xff] %v1210
    %s1213 = scalar_lea.vmem %s1, 4
    %v1214 = vld [vmem:[%s1213] sm:$0x3]
    %v1216 = vsel %vm559, %v1214, 0
    %1218 = vmatpush.msra.mxu0 0.0
    %1219 = vmatpush.msra.mxu0 0.0
    %1220 = vmatpush.msra.mxu0 0.0
    %1221 = vmatpush.msra.mxu0 0.0
    %1222 = vmatpush.msra.mxu0 0.0
    %1223 = vmatpush.msra.mxu0 0.0
    %1224 = vmatpush.msra.mxu0 0.0
    %1225 = vmatpush.msra.mxu0 0.0
    %1226 = vmatpush.msra.mxu0 %v1006
    %1227 = vmatpush.msra.mxu0 %v1002
    %1228 = vmatpush.msra.mxu0 %v998
    %1229 = vmatpush.msra.mxu0 %v994
    %1230 = vmatpush.msra.mxu0 %v990
    %1231 = vmatpush.msra.mxu0 %v986
    %1232 = vmatpush.msra.mxu0 %v982
    %1233 = vmatpush.msra.mxu0 %v978
    %1234 = vmatmul.f32.gmra.mxu0 %v1216
    %v1235 = vpop.f32.mrf.mxu0
    %v1236 = vadd.f32 %v1013, %v1235
    %1237 = vdwg.mxu0
    %1238 = vmatpush.msra.mxu0 0.0
    %1239 = vmatpush.msra.mxu0 0.0
    %1240 = vmatpush.msra.mxu0 0.0
    %1241 = vmatpush.msra.mxu0 0.0
    %1242 = vmatpush.msra.mxu0 0.0
    %1243 = vmatpush.msra.mxu0 0.0
    %1244 = vmatpush.msra.mxu0 0.0
    %1245 = vmatpush.msra.mxu0 0.0
    %1246 = vmatpush.msra.mxu0 %v1007
    %1247 = vmatpush.msra.mxu0 %v1003
    %1248 = vmatpush.msra.mxu0 %v999
    %1249 = vmatpush.msra.mxu0 %v995
    %1250 = vmatpush.msra.mxu0 %v991
    %1251 = vmatpush.msra.mxu0 %v987
    %1252 = vmatpush.msra.mxu0 %v983
    %1253 = vmatpush.msra.mxu0 %v979
    %1254 = vmatmul.f32.gmra.mxu0 %v1216
    %v1255 = vpop.f32.mrf.mxu0
    %v1256 = vadd.f32 %v1014, %v1255
    %1257 = vdwg.mxu0
    %1258 = vmatpush.msra.mxu0 0.0
    %1259 = vmatpush.msra.mxu0 0.0
    %1260 = vmatpush.msra.mxu0 0.0
    %1261 = vmatpush.msra.mxu0 0.0
    %1262 = vmatpush.msra.mxu0 0.0
    %1263 = vmatpush.msra.mxu0 0.0
    %1264 = vmatpush.msra.mxu0 0.0
    %1265 = vmatpush.msra.mxu0 0.0
    %1266 = vmatpush.msra.mxu0 %v1008
    %1267 = vmatpush.msra.mxu0 %v1004
    %1268 = vmatpush.msra.mxu0 %v1000
    %1269 = vmatpush.msra.mxu0 %v996
    %1270 = vmatpush.msra.mxu0 %v992
    %1271 = vmatpush.msra.mxu0 %v988
    %1272 = vmatpush.msra.mxu0 %v984
    %1273 = vmatpush.msra.mxu0 %v980
    %1274 = vmatmul.f32.gmra.mxu0 %v1216
    %v1275 = vpop.f32.mrf.mxu0
    %v1276 = vadd.f32 %v1015, %v1275
    %1277 = vdwg.mxu0
    %1278 = vmatpush.msra.mxu0 0.0
    %1279 = vmatpush.msra.mxu0 0.0
    %1280 = vmatpush.msra.mxu0 0.0
    %1281 = vmatpush.msra.mxu0 0.0
    %1282 = vmatpush.msra.mxu0 0.0
    %1283 = vmatpush.msra.mxu0 0.0
    %1284 = vmatpush.msra.mxu0 0.0
    %1285 = vmatpush.msra.mxu0 0.0
    %1286 = vmatpush.msra.mxu0 %v1009
    %1287 = vmatpush.msra.mxu0 %v1005
    %1288 = vmatpush.msra.mxu0 %v1001
    %1289 = vmatpush.msra.mxu0 %v997
    %1290 = vmatpush.msra.mxu0 %v993
    %1291 = vmatpush.msra.mxu0 %v989
    %1292 = vmatpush.msra.mxu0 %v985
    %1293 = vmatpush.msra.mxu0 %v981
    %1294 = vmatmul.f32.gmra.mxu0 %v1216
    %v1295 = vpop.f32.mrf.mxu0
    %v1296 = vadd.f32 %v1016, %v1295
    %1297 = vdwg.mxu0
    %v1302 = vrot.slane %v1256, 6
    %v1303 = vrot.slane %v1276, 4
    %v1304 = vrot.slane %v1296, 2
    %v1305 = vsel %vm233, %v1236, %v1302
    %v1306 = vsel %vm235, %v1303, %v1304
    %v1307 = vsel %vm237, %v1305, %v1306
    %1309 = vst [vmem:[%s435] sm:$0xff] %v1307
    %s1310 = scalar_lea.vmem %s1, 6
    %v1311 = vld [vmem:[%s1310] sm:$0x3]
    %v1313 = vsel %vm559, %v1311, 0
    %1315 = vmatpush.msra.mxu0 0.0
    %1316 = vmatpush.msra.mxu0 0.0
    %1317 = vmatpush.msra.mxu0 0.0
    %1318 = vmatpush.msra.mxu0 0.0
    %1319 = vmatpush.msra.mxu0 0.0
    %1320 = vmatpush.msra.mxu0 0.0
    %1321 = vmatpush.msra.mxu0 0.0
    %1322 = vmatpush.msra.mxu0 0.0
    %1323 = vmatpush.msra.mxu0 %v1006
    %1324 = vmatpush.msra.mxu0 %v1002
    %1325 = vmatpush.msra.mxu0 %v998
    %1326 = vmatpush.msra.mxu0 %v994
    %1327 = vmatpush.msra.mxu0 %v990
    %1328 = vmatpush.msra.mxu0 %v986
    %1329 = vmatpush.msra.mxu0 %v982
    %1330 = vmatpush.msra.mxu0 %v978
    %1331 = vmatmul.f32.gmra.mxu0 %v1313
    %v1332 = vpop.f32.mrf.mxu0
    %v1333 = vadd.f32 %v1013, %v1332
    %1334 = vdwg.mxu0
    %1335 = vmatpush.msra.mxu0 0.0
    %1336 = vmatpush.msra.mxu0 0.0
    %1337 = vmatpush.msra.mxu0 0.0
    %1338 = vmatpush.msra.mxu0 0.0
    %1339 = vmatpush.msra.mxu0 0.0
    %1340 = vmatpush.msra.mxu0 0.0
    %1341 = vmatpush.msra.mxu0 0.0
    %1342 = vmatpush.msra.mxu0 0.0
    %1343 = vmatpush.msra.mxu0 %v1007
    %1344 = vmatpush.msra.mxu0 %v1003
    %1345 = vmatpush.msra.mxu0 %v999
    %1346 = vmatpush.msra.mxu0 %v995
    %1347 = vmatpush.msra.mxu0 %v991
    %1348 = vmatpush.msra.mxu0 %v987
    %1349 = vmatpush.msra.mxu0 %v983
    %1350 = vmatpush.msra.mxu0 %v979
    %1351 = vmatmul.f32.gmra.mxu0 %v1313
    %v1352 = vpop.f32.mrf.mxu0
    %v1353 = vadd.f32 %v1014, %v1352
    %1354 = vdwg.mxu0
    %1355 = vmatpush.msra.mxu0 0.0
    %1356 = vmatpush.msra.mxu0 0.0
    %1357 = vmatpush.msra.mxu0 0.0
    %1358 = vmatpush.msra.mxu0 0.0
    %1359 = vmatpush.msra.mxu0 0.0
    %1360 = vmatpush.msra.mxu0 0.0
    %1361 = vmatpush.msra.mxu0 0.0
    %1362 = vmatpush.msra.mxu0 0.0
    %1363 = vmatpush.msra.mxu0 %v1008
    %1364 = vmatpush.msra.mxu0 %v1004
    %1365 = vmatpush.msra.mxu0 %v1000
    %1366 = vmatpush.msra.mxu0 %v996
    %1367 = vmatpush.msra.mxu0 %v992
    %1368 = vmatpush.msra.mxu0 %v988
    %1369 = vmatpush.msra.mxu0 %v984
    %1370 = vmatpush.msra.mxu0 %v980
    %1371 = vmatmul.f32.gmra.mxu0 %v1313
    %v1372 = vpop.f32.mrf.mxu0
    %v1373 = vadd.f32 %v1015, %v1372
    %1374 = vdwg.mxu0
    %1375 = vmatpush.msra.mxu0 0.0
    %1376 = vmatpush.msra.mxu0 0.0
    %1377 = vmatpush.msra.mxu0 0.0
    %1378 = vmatpush.msra.mxu0 0.0
    %1379 = vmatpush.msra.mxu0 0.0
    %1380 = vmatpush.msra.mxu0 0.0
    %1381 = vmatpush.msra.mxu0 0.0
    %1382 = vmatpush.msra.mxu0 0.0
    %1383 = vmatpush.msra.mxu0 %v1009
    %1384 = vmatpush.msra.mxu0 %v1005
    %1385 = vmatpush.msra.mxu0 %v1001
    %1386 = vmatpush.msra.mxu0 %v997
    %1387 = vmatpush.msra.mxu0 %v993
    %1388 = vmatpush.msra.mxu0 %v989
    %1389 = vmatpush.msra.mxu0 %v985
    %1390 = vmatpush.msra.mxu0 %v981
    %1391 = vmatmul.f32.gmra.mxu0 %v1313
    %v1392 = vpop.f32.mrf.mxu0
    %v1393 = vadd.f32 %v1016, %v1392
    %1394 = vdwg.mxu0
    %v1399 = vrot.slane %v1353, 6
    %v1400 = vrot.slane %v1373, 4
    %v1401 = vrot.slane %v1393, 2
    %v1402 = vsel %vm233, %v1333, %v1399
    %v1403 = vsel %vm235, %v1400, %v1401
    %v1404 = vsel %vm237, %v1402, %v1403
    %1406 = vst [vmem:[%s533] sm:$0xff] %v1404
    %s1407 = scalar_lea.vmem %s1, 8
    %v1408 = vld [vmem:[%s1407] sm:$0x3]
    %v1410 = vsel %vm559, %v1408, 0
    %1412 = vmatpush.msra.mxu0 0.0
    %1413 = vmatpush.msra.mxu0 0.0
    %1414 = vmatpush.msra.mxu0 0.0
    %1415 = vmatpush.msra.mxu0 0.0
    %1416 = vmatpush.msra.mxu0 0.0
    %1417 = vmatpush.msra.mxu0 0.0
    %1418 = vmatpush.msra.mxu0 0.0
    %1419 = vmatpush.msra.mxu0 0.0
    %1420 = vmatpush.msra.mxu0 %v1006
    %1421 = vmatpush.msra.mxu0 %v1002
    %1422 = vmatpush.msra.mxu0 %v998
    %1423 = vmatpush.msra.mxu0 %v994
    %1424 = vmatpush.msra.mxu0 %v990
    %1425 = vmatpush.msra.mxu0 %v986
    %1426 = vmatpush.msra.mxu0 %v982
    %1427 = vmatpush.msra.mxu0 %v978
    %1428 = vmatmul.f32.gmra.mxu0 %v1410
    %v1429 = vpop.f32.mrf.mxu0
    %v1430 = vadd.f32 %v1013, %v1429
    %1431 = vdwg.mxu0
    %1432 = vmatpush.msra.mxu0 0.0
    %1433 = vmatpush.msra.mxu0 0.0
    %1434 = vmatpush.msra.mxu0 0.0
    %1435 = vmatpush.msra.mxu0 0.0
    %1436 = vmatpush.msra.mxu0 0.0
    %1437 = vmatpush.msra.mxu0 0.0
    %1438 = vmatpush.msra.mxu0 0.0
    %1439 = vmatpush.msra.mxu0 0.0
    %1440 = vmatpush.msra.mxu0 %v1007
    %1441 = vmatpush.msra.mxu0 %v1003
    %1442 = vmatpush.msra.mxu0 %v999
    %1443 = vmatpush.msra.mxu0 %v995
    %1444 = vmatpush.msra.mxu0 %v991
    %1445 = vmatpush.msra.mxu0 %v987
    %1446 = vmatpush.msra.mxu0 %v983
    %1447 = vmatpush.msra.mxu0 %v979
    %1448 = vmatmul.f32.gmra.mxu0 %v1410
    %v1449 = vpop.f32.mrf.mxu0
    %v1450 = vadd.f32 %v1014, %v1449
    %1451 = vdwg.mxu0
    %1452 = vmatpush.msra.mxu0 0.0
    %1453 = vmatpush.msra.mxu0 0.0
    %1454 = vmatpush.msra.mxu0 0.0
    %1455 = vmatpush.msra.mxu0 0.0
    %1456 = vmatpush.msra.mxu0 0.0
    %1457 = vmatpush.msra.mxu0 0.0
    %1458 = vmatpush.msra.mxu0 0.0
    %1459 = vmatpush.msra.mxu0 0.0
    %1460 = vmatpush.msra.mxu0 %v1008
    %1461 = vmatpush.msra.mxu0 %v1004
    %1462 = vmatpush.msra.mxu0 %v1000
    %1463 = vmatpush.msra.mxu0 %v996
    %1464 = vmatpush.msra.mxu0 %v992
    %1465 = vmatpush.msra.mxu0 %v988
    %1466 = vmatpush.msra.mxu0 %v984
    %1467 = vmatpush.msra.mxu0 %v980
    %1468 = vmatmul.f32.gmra.mxu0 %v1410
    %v1469 = vpop.f32.mrf.mxu0
    %v1470 = vadd.f32 %v1015, %v1469
    %1471 = vdwg.mxu0
    %1472 = vmatpush.msra.mxu0 0.0
    %1473 = vmatpush.msra.mxu0 0.0
    %1474 = vmatpush.msra.mxu0 0.0
    %1475 = vmatpush.msra.mxu0 0.0
    %1476 = vmatpush.msra.mxu0 0.0
    %1477 = vmatpush.msra.mxu0 0.0
    %1478 = vmatpush.msra.mxu0 0.0
    %1479 = vmatpush.msra.mxu0 0.0
    %1480 = vmatpush.msra.mxu0 %v1009
    %1481 = vmatpush.msra.mxu0 %v1005
    %1482 = vmatpush.msra.mxu0 %v1001
    %1483 = vmatpush.msra.mxu0 %v997
    %1484 = vmatpush.msra.mxu0 %v993
    %1485 = vmatpush.msra.mxu0 %v989
    %1486 = vmatpush.msra.mxu0 %v985
    %1487 = vmatpush.msra.mxu0 %v981
    %1488 = vmatmul.f32.gmra.mxu0 %v1410
    %v1489 = vpop.f32.mrf.mxu0
    %v1490 = vadd.f32 %v1016, %v1489
    %1491 = vdwg.mxu0
    %v1496 = vrot.slane %v1450, 6
    %v1497 = vrot.slane %v1470, 4
    %v1498 = vrot.slane %v1490, 2
    %v1499 = vsel %vm233, %v1430, %v1496
    %v1500 = vsel %vm235, %v1497, %v1498
    %v1501 = vsel %vm237, %v1499, %v1500
    %s1503 = scalar_lea.vmem [#allocation2], 32
    %1504 = vst [vmem:[%s1503] sm:$0xff] %v1501
    %s1505 = scalar_lea.vmem %s1, 10
    %v1506 = vld [vmem:[%s1505] sm:$0x3]
    %v1508 = vsel %vm559, %v1506, 0
    %1510 = vmatpush.msra.mxu0 0.0
    %1511 = vmatpush.msra.mxu0 0.0
    %1512 = vmatpush.msra.mxu0 0.0
    %1513 = vmatpush.msra.mxu0 0.0
    %1514 = vmatpush.msra.mxu0 0.0
    %1515 = vmatpush.msra.mxu0 0.0
    %1516 = vmatpush.msra.mxu0 0.0
    %1517 = vmatpush.msra.mxu0 0.0
    %1518 = vmatpush.msra.mxu0 %v1006
    %1519 = vmatpush.msra.mxu0 %v1002
    %1520 = vmatpush.msra.mxu0 %v998
    %1521 = vmatpush.msra.mxu0 %v994
    %1522 = vmatpush.msra.mxu0 %v990
    %1523 = vmatpush.msra.mxu0 %v986
    %1524 = vmatpush.msra.mxu0 %v982
    %1525 = vmatpush.msra.mxu0 %v978
    %1526 = vmatmul.f32.gmra.mxu0 %v1508
    %v1527 = vpop.f32.mrf.mxu0
    %v1528 = vadd.f32 %v1013, %v1527
    %1529 = vdwg.mxu0
    %1530 = vmatpush.msra.mxu0 0.0
    %1531 = vmatpush.msra.mxu0 0.0
    %1532 = vmatpush.msra.mxu0 0.0
    %1533 = vmatpush.msra.mxu0 0.0
    %1534 = vmatpush.msra.mxu0 0.0
    %1535 = vmatpush.msra.mxu0 0.0
    %1536 = vmatpush.msra.mxu0 0.0
    %1537 = vmatpush.msra.mxu0 0.0
    %1538 = vmatpush.msra.mxu0 %v1007
    %1539 = vmatpush.msra.mxu0 %v1003
    %1540 = vmatpush.msra.mxu0 %v999
    %1541 = vmatpush.msra.mxu0 %v995
    %1542 = vmatpush.msra.mxu0 %v991
    %1543 = vmatpush.msra.mxu0 %v987
    %1544 = vmatpush.msra.mxu0 %v983
    %1545 = vmatpush.msra.mxu0 %v979
    %1546 = vmatmul.f32.gmra.mxu0 %v1508
    %v1547 = vpop.f32.mrf.mxu0
    %v1548 = vadd.f32 %v1014, %v1547
    %1549 = vdwg.mxu0
    %1550 = vmatpush.msra.mxu0 0.0
    %1551 = vmatpush.msra.mxu0 0.0
    %1552 = vmatpush.msra.mxu0 0.0
    %1553 = vmatpush.msra.mxu0 0.0
    %1554 = vmatpush.msra.mxu0 0.0
    %1555 = vmatpush.msra.mxu0 0.0
    %1556 = vmatpush.msra.mxu0 0.0
    %1557 = vmatpush.msra.mxu0 0.0
    %1558 = vmatpush.msra.mxu0 %v1008
    %1559 = vmatpush.msra.mxu0 %v1004
    %1560 = vmatpush.msra.mxu0 %v1000
    %1561 = vmatpush.msra.mxu0 %v996
    %1562 = vmatpush.msra.mxu0 %v992
    %1563 = vmatpush.msra.mxu0 %v988
    %1564 = vmatpush.msra.mxu0 %v984
    %1565 = vmatpush.msra.mxu0 %v980
    %1566 = vmatmul.f32.gmra.mxu0 %v1508
    %v1567 = vpop.f32.mrf.mxu0
    %v1568 = vadd.f32 %v1015, %v1567
    %1569 = vdwg.mxu0
    %1570 = vmatpush.msra.mxu0 0.0
    %1571 = vmatpush.msra.mxu0 0.0
    %1572 = vmatpush.msra.mxu0 0.0
    %1573 = vmatpush.msra.mxu0 0.0
    %1574 = vmatpush.msra.mxu0 0.0
    %1575 = vmatpush.msra.mxu0 0.0
    %1576 = vmatpush.msra.mxu0 0.0
    %1577 = vmatpush.msra.mxu0 0.0
    %1578 = vmatpush.msra.mxu0 %v1009
    %1579 = vmatpush.msra.mxu0 %v1005
    %1580 = vmatpush.msra.mxu0 %v1001
    %1581 = vmatpush.msra.mxu0 %v997
    %1582 = vmatpush.msra.mxu0 %v993
    %1583 = vmatpush.msra.mxu0 %v989
    %1584 = vmatpush.msra.mxu0 %v985
    %1585 = vmatpush.msra.mxu0 %v981
    %1586 = vmatmul.f32.gmra.mxu0 %v1508
    %v1587 = vpop.f32.mrf.mxu0
    %v1588 = vadd.f32 %v1016, %v1587
    %1589 = vdwg.mxu0
    %v1594 = vrot.slane %v1548, 6
    %v1595 = vrot.slane %v1568, 4
    %v1596 = vrot.slane %v1588, 2
    %v1597 = vsel %vm233, %v1528, %v1594
    %v1598 = vsel %vm235, %v1595, %v1596
    %v1599 = vsel %vm237, %v1597, %v1598
    %s1601 = scalar_lea.vmem [#allocation2], 40
    %1602 = vst [vmem:[%s1601] sm:$0xff] %v1599
    %s1603 = scalar_lea.vmem %s1, 12
    %v1604 = vld [vmem:[%s1603] sm:$0x3]
    %v1606 = vsel %vm559, %v1604, 0
    %1608 = vmatpush.msra.mxu0 0.0
    %1609 = vmatpush.msra.mxu0 0.0
    %1610 = vmatpush.msra.mxu0 0.0
    %1611 = vmatpush.msra.mxu0 0.0
    %1612 = vmatpush.msra.mxu0 0.0
    %1613 = vmatpush.msra.mxu0 0.0
    %1614 = vmatpush.msra.mxu0 0.0
    %1615 = vmatpush.msra.mxu0 0.0
    %1616 = vmatpush.msra.mxu0 %v1006
    %1617 = vmatpush.msra.mxu0 %v1002
    %1618 = vmatpush.msra.mxu0 %v998
    %1619 = vmatpush.msra.mxu0 %v994
    %1620 = vmatpush.msra.mxu0 %v990
    %1621 = vmatpush.msra.mxu0 %v986
    %1622 = vmatpush.msra.mxu0 %v982
    %1623 = vmatpush.msra.mxu0 %v978
    %1624 = vmatmul.f32.gmra.mxu0 %v1606
    %v1625 = vpop.f32.mrf.mxu0
    %v1626 = vadd.f32 %v1013, %v1625
    %1627 = vdwg.mxu0
    %1628 = vmatpush.msra.mxu0 0.0
    %1629 = vmatpush.msra.mxu0 0.0
    %1630 = vmatpush.msra.mxu0 0.0
    %1631 = vmatpush.msra.mxu0 0.0
    %1632 = vmatpush.msra.mxu0 0.0
    %1633 = vmatpush.msra.mxu0 0.0
    %1634 = vmatpush.msra.mxu0 0.0
    %1635 = vmatpush.msra.mxu0 0.0
    %1636 = vmatpush.msra.mxu0 %v1007
    %1637 = vmatpush.msra.mxu0 %v1003
    %1638 = vmatpush.msra.mxu0 %v999
    %1639 = vmatpush.msra.mxu0 %v995
    %1640 = vmatpush.msra.mxu0 %v991
    %1641 = vmatpush.msra.mxu0 %v987
    %1642 = vmatpush.msra.mxu0 %v983
    %1643 = vmatpush.msra.mxu0 %v979
    %1644 = vmatmul.f32.gmra.mxu0 %v1606
    %v1645 = vpop.f32.mrf.mxu0
    %v1646 = vadd.f32 %v1014, %v1645
    %1647 = vdwg.mxu0
    %1648 = vmatpush.msra.mxu0 0.0
    %1649 = vmatpush.msra.mxu0 0.0
    %1650 = vmatpush.msra.mxu0 0.0
    %1651 = vmatpush.msra.mxu0 0.0
    %1652 = vmatpush.msra.mxu0 0.0
    %1653 = vmatpush.msra.mxu0 0.0
    %1654 = vmatpush.msra.mxu0 0.0
    %1655 = vmatpush.msra.mxu0 0.0
    %1656 = vmatpush.msra.mxu0 %v1008
    %1657 = vmatpush.msra.mxu0 %v1004
    %1658 = vmatpush.msra.mxu0 %v1000
    %1659 = vmatpush.msra.mxu0 %v996
    %1660 = vmatpush.msra.mxu0 %v992
    %1661 = vmatpush.msra.mxu0 %v988
    %1662 = vmatpush.msra.mxu0 %v984
    %1663 = vmatpush.msra.mxu0 %v980
    %1664 = vmatmul.f32.gmra.mxu0 %v1606
    %v1665 = vpop.f32.mrf.mxu0
    %v1666 = vadd.f32 %v1015, %v1665
    %1667 = vdwg.mxu0
    %1668 = vmatpush.msra.mxu0 0.0
    %1669 = vmatpush.msra.mxu0 0.0
    %1670 = vmatpush.msra.mxu0 0.0
    %1671 = vmatpush.msra.mxu0 0.0
    %1672 = vmatpush.msra.mxu0 0.0
    %1673 = vmatpush.msra.mxu0 0.0
    %1674 = vmatpush.msra.mxu0 0.0
    %1675 = vmatpush.msra.mxu0 0.0
    %1676 = vmatpush.msra.mxu0 %v1009
    %1677 = vmatpush.msra.mxu0 %v1005
    %1678 = vmatpush.msra.mxu0 %v1001
    %1679 = vmatpush.msra.mxu0 %v997
    %1680 = vmatpush.msra.mxu0 %v993
    %1681 = vmatpush.msra.mxu0 %v989
    %1682 = vmatpush.msra.mxu0 %v985
    %1683 = vmatpush.msra.mxu0 %v981
    %1684 = vmatmul.f32.gmra.mxu0 %v1606
    %v1685 = vpop.f32.mrf.mxu0
    %v1686 = vadd.f32 %v1016, %v1685
    %1687 = vdwg.mxu0
    %v1692 = vrot.slane %v1646, 6
    %v1693 = vrot.slane %v1666, 4
    %v1694 = vrot.slane %v1686, 2
    %v1695 = vsel %vm233, %v1626, %v1692
    %v1696 = vsel %vm235, %v1693, %v1694
    %v1697 = vsel %vm237, %v1695, %v1696
    %s1699 = scalar_lea.vmem [#allocation2], 48
    %1700 = vst [vmem:[%s1699] sm:$0xff] %v1697
    %s1701 = scalar_lea.vmem %s1, 14
    %v1702 = vld [vmem:[%s1701] sm:$0x3]
    %v1704 = vsel %vm559, %v1702, 0
    %1706 = vmatpush.msra.mxu0 0.0
    %1707 = vmatpush.msra.mxu0 0.0
    %1708 = vmatpush.msra.mxu0 0.0
    %1709 = vmatpush.msra.mxu0 0.0
    %1710 = vmatpush.msra.mxu0 0.0
    %1711 = vmatpush.msra.mxu0 0.0
    %1712 = vmatpush.msra.mxu0 0.0
    %1713 = vmatpush.msra.mxu0 0.0
    %1714 = vmatpush.msra.mxu0 %v1006
    %1715 = vmatpush.msra.mxu0 %v1002
    %1716 = vmatpush.msra.mxu0 %v998
    %1717 = vmatpush.msra.mxu0 %v994
    %1718 = vmatpush.msra.mxu0 %v990
    %1719 = vmatpush.msra.mxu0 %v986
    %1720 = vmatpush.msra.mxu0 %v982
    %1721 = vmatpush.msra.mxu0 %v978
    %1722 = vmatmul.f32.gmra.mxu0 %v1704
    %v1723 = vpop.f32.mrf.mxu0
    %v1724 = vadd.f32 %v1013, %v1723
    %1725 = vdwg.mxu0
    %1726 = vmatpush.msra.mxu0 0.0
    %1727 = vmatpush.msra.mxu0 0.0
    %1728 = vmatpush.msra.mxu0 0.0
    %1729 = vmatpush.msra.mxu0 0.0
    %1730 = vmatpush.msra.mxu0 0.0
    %1731 = vmatpush.msra.mxu0 0.0
    %1732 = vmatpush.msra.mxu0 0.0
    %1733 = vmatpush.msra.mxu0 0.0
    %1734 = vmatpush.msra.mxu0 %v1007
    %1735 = vmatpush.msra.mxu0 %v1003
    %1736 = vmatpush.msra.mxu0 %v999
    %1737 = vmatpush.msra.mxu0 %v995
    %1738 = vmatpush.msra.mxu0 %v991
    %1739 = vmatpush.msra.mxu0 %v987
    %1740 = vmatpush.msra.mxu0 %v983
    %1741 = vmatpush.msra.mxu0 %v979
    %1742 = vmatmul.f32.gmra.mxu0 %v1704
    %v1743 = vpop.f32.mrf.mxu0
    %v1744 = vadd.f32 %v1014, %v1743
    %1745 = vdwg.mxu0
    %1746 = vmatpush.msra.mxu0 0.0
    %1747 = vmatpush.msra.mxu0 0.0
    %1748 = vmatpush.msra.mxu0 0.0
    %1749 = vmatpush.msra.mxu0 0.0
    %1750 = vmatpush.msra.mxu0 0.0
    %1751 = vmatpush.msra.mxu0 0.0
    %1752 = vmatpush.msra.mxu0 0.0
    %1753 = vmatpush.msra.mxu0 0.0
    %1754 = vmatpush.msra.mxu0 %v1008
    %1755 = vmatpush.msra.mxu0 %v1004
    %1756 = vmatpush.msra.mxu0 %v1000
    %1757 = vmatpush.msra.mxu0 %v996
    %1758 = vmatpush.msra.mxu0 %v992
    %1759 = vmatpush.msra.mxu0 %v988
    %1760 = vmatpush.msra.mxu0 %v984
    %1761 = vmatpush.msra.mxu0 %v980
    %1762 = vmatmul.f32.gmra.mxu0 %v1704
    %v1763 = vpop.f32.mrf.mxu0
    %v1764 = vadd.f32 %v1015, %v1763
    %1765 = vdwg.mxu0
    %1766 = vmatpush.msra.mxu0 0.0
    %1767 = vmatpush.msra.mxu0 0.0
    %1768 = vmatpush.msra.mxu0 0.0
    %1769 = vmatpush.msra.mxu0 0.0
    %1770 = vmatpush.msra.mxu0 0.0
    %1771 = vmatpush.msra.mxu0 0.0
    %1772 = vmatpush.msra.mxu0 0.0
    %1773 = vmatpush.msra.mxu0 0.0
    %1774 = vmatpush.msra.mxu0 %v1009
    %1775 = vmatpush.msra.mxu0 %v1005
    %1776 = vmatpush.msra.mxu0 %v1001
    %1777 = vmatpush.msra.mxu0 %v997
    %1778 = vmatpush.msra.mxu0 %v993
    %1779 = vmatpush.msra.mxu0 %v989
    %1780 = vmatpush.msra.mxu0 %v985
    %1781 = vmatpush.msra.mxu0 %v981
    %1782 = vmatmul.f32.gmra.mxu0 %v1704
    %v1783 = vpop.f32.mrf.mxu0
    %v1784 = vadd.f32 %v1016, %v1783
    %1785 = vdwg.mxu0
    %v1790 = vrot.slane %v1744, 6
    %v1791 = vrot.slane %v1764, 4
    %v1792 = vrot.slane %v1784, 2
    %v1793 = vsel %vm233, %v1724, %v1790
    %v1794 = vsel %vm235, %v1791, %v1792
    %v1795 = vsel %vm237, %v1793, %v1794
    %s1797 = scalar_lea.vmem [#allocation2], 56
    %1798 = vst [vmem:[%s1797] sm:$0xff] %v1795
    %v1799 = vld [vmem:[#allocation8] sm:$0xff]
    %v1800 = vld [vmem:[#allocation8 + $0x8] sm:$0xff]
    %v1801 = vld [vmem:[#allocation8 + $0x10] sm:$0xff]
    %v1802 = vld [vmem:[#allocation8 + $0x18] sm:$0xff]
    %v1803 = vld [vmem:[#allocation8 + $0x20] sm:$0xff]
    %v1804 = vld [vmem:[#allocation8 + $0x28] sm:$0xff]
    %v1805 = vld [vmem:[#allocation8 + $0x30] sm:$0xff]
    %v1806 = vld [vmem:[#allocation8 + $0x38] sm:$0xff]
    %v1807 = vld [vmem:[#allocation8 + $0x40] sm:$0xff]
    %v1808 = vld [vmem:[#allocation8 + $0x48] sm:$0xff]
    %v1809 = vld [vmem:[#allocation8 + $0x50] sm:$0xff]
    %v1810 = vld [vmem:[#allocation8 + $0x58] sm:$0xff]
    %v1811 = vld [vmem:[#allocation8 + $0x60] sm:$0xff]
    %v1812 = vld [vmem:[#allocation8 + $0x68] sm:$0xff]
    %v1813 = vld [vmem:[#allocation8 + $0x70] sm:$0xff]
    %v1814 = vld [vmem:[#allocation8 + $0x78] sm:$0xff]
    %v1815 = vld [vmem:[#allocation2] sm:$0xff]
    %v1816 = vld [vmem:[%s1797] sm:$0xff]
    %1818 = vst [vmem:[#allocation1] ss:$4 sm:$0xff] %v1815
    %v1819 = vld.sshfl [vmem:[#allocation1] sm:$0xff pattern:$0x73625140]
    %v1820 = vld.sshfl [vmem:[#allocation1 + $0x8] sm:$0xff pattern:$0x73625140]
    %1823 = vmatpush.msra.mxu0 0.0
    %1824 = vmatpush.msra.mxu0 0.0
    %1825 = vmatpush.msra.mxu0 0.0
    %1826 = vmatpush.msra.mxu0 0.0
    %1827 = vmatpush.msra.mxu0 0.0
    %1828 = vmatpush.msra.mxu0 0.0
    %1829 = vmatpush.msra.mxu0 0.0
    %1830 = vmatpush.msra.mxu0 0.0
    %1831 = vmatpush.msra.mxu0 %v1813
    %1832 = vmatpush.msra.mxu0 %v1811
    %1833 = vmatpush.msra.mxu0 %v1809
    %1834 = vmatpush.msra.mxu0 %v1807
    %1835 = vmatpush.msra.mxu0 %v1805
    %1836 = vmatpush.msra.mxu0 %v1803
    %1837 = vmatpush.msra.mxu0 %v1801
    %1838 = vmatpush.msra.mxu0 %v1799
    %1839 = vmatmul.f32.gmra.mxu0 %v561
    %v1840 = vpop.f32.mrf.mxu0
    %v1841 = vadd.f32 %v1819, %v1840
    %1842 = vdwg.mxu0
    %1843 = vmatpush.msra.mxu0 0.0
    %1844 = vmatpush.msra.mxu0 0.0
    %1845 = vmatpush.msra.mxu0 0.0
    %1846 = vmatpush.msra.mxu0 0.0
    %1847 = vmatpush.msra.mxu0 0.0
    %1848 = vmatpush.msra.mxu0 0.0
    %1849 = vmatpush.msra.mxu0 0.0
    %1850 = vmatpush.msra.mxu0 0.0
    %1851 = vmatpush.msra.mxu0 %v1814
    %1852 = vmatpush.msra.mxu0 %v1812
    %1853 = vmatpush.msra.mxu0 %v1810
    %1854 = vmatpush.msra.mxu0 %v1808
    %1855 = vmatpush.msra.mxu0 %v1806
    %1856 = vmatpush.msra.mxu0 %v1804
    %1857 = vmatpush.msra.mxu0 %v1802
    %1858 = vmatpush.msra.mxu0 %v1800
    %1859 = vmatmul.f32.gmra.mxu0 %v561
    %v1860 = vpop.f32.mrf.mxu0
    %v1861 = vadd.f32 %v1820, %v1860
    %1862 = vdwg.mxu0
    %1864 = vst [vmem:[#allocation1] ss:$4 sm:$0xff] %v1816
    %v1865 = vld.sshfl [vmem:[#allocation1 + $0x10] sm:$0xff pattern:$0x73625140]
    %v1866 = vld.sshfl [vmem:[#allocation1 + $0x18] sm:$0xff pattern:$0x73625140]
    %v1869 = vadd.f32 %v1841, %v1865
    %v1870 = vadd.f32 %v1861, %v1866
    %v1871 = vxor.u32 %v1869, 2147483648
    %v1872 = vxor.u32 %v1870, 2147483648
    %v1873 = vmul.f32 %v1871, 1.442695
    %v1874 = vpow.pop %v1873
    %v1875 = vmul.f32 %v1872, 1.442695
    %v1876 = vpow.pop %v1875
    %v1877 = vadd.f32 %v1874, 1.0
    %v1878 = vadd.f32 %v1876, 1.0
    %v1879 = vrcp.pop %v1877
    %v1880 = vmul.f32 %v1877, %v1879
    %v1881 = vsub.f32 1.0, %v1880
    %v1882 = vmul.f32 %v1879, %v1881
    %v1883 = vadd.f32 %v1879, %v1882
    %vm1884 = vweird.f32 %v1877
    %vm1885 = vweird.f32 %v1879
    %vm1886 = vmor %vm1884, %vm1885
    %v1887 = vsel %vm1886, %v1879, %v1883
    %v1888 = vand.u32 2147483647, %v1877
    %vm1889 = vcmp.eq.f32.partialorder %v1888, 8.507059e+37
    %v1890 = vand.u32 %v1877, 2147483648
    %v1891 = vor.u32 1.1754944e-38, %v1890
    %v1892 = vsel %vm1889, %v1891, %v1887
    %v1893 = vmul.f32 1.0, %v1892
    %v1894 = vrcp.pop %v1878
    %v1895 = vmul.f32 %v1878, %v1894
    %v1896 = vsub.f32 1.0, %v1895
    %v1897 = vmul.f32 %v1894, %v1896
    %v1898 = vadd.f32 %v1894, %v1897
    %vm1899 = vweird.f32 %v1878
    %vm1900 = vweird.f32 %v1894
    %vm1901 = vmor %vm1899, %vm1900
    %v1902 = vsel %vm1901, %v1894, %v1898
    %v1903 = vand.u32 2147483647, %v1878
    %vm1904 = vcmp.eq.f32.partialorder %v1903, 8.507059e+37
    %v1905 = vand.u32 %v1878, 2147483648
    %v1906 = vor.u32 1.1754944e-38, %v1905
    %v1907 = vsel %vm1904, %v1906, %v1902
    %v1908 = vmul.f32 1.0, %v1907
    %v1909 = vtanh.pop %v1870
    %v1910 = vmul.f32 %v1893, 0.0
    %v1911 = vmul.f32 %v1893, %v1909
    %1913 = vrot.lane.b32.xlu0 %v1911, 64
    %v1914 = vpop.permute.xlu0 %1913
    %v1916 = vadd.f32 %v1910, %v1914
    %v1917 = vtanh.pop %v1916
    %v1918 = vmul.f32 %v1908, %v1917
    %1920 = vrot.lane.b32.xlu0 %v1918, 64
    %v1921 = vpop.permute.xlu0 %1920
    %vm1923 = vcmask 254976
    %1924 = vst.msk [vmem:[#allocation3] sm:$0x3] %vm1923, %v1921
    %1925 = vrot.lane.b32.xlu0 %v1918, 32
    %v1926 = vpop.permute.xlu0 %1925
    %s1928 = scalar_lea.vmem [#allocation4], 14
    %1929 = vst.msk [vmem:[%s1928] sm:$0x3] %vm1923, %v1926
    %v1930 = vld [vmem:[%s337] sm:$0xff]
    %v1931 = vld [vmem:[%s1699] sm:$0xff]
    %1933 = vst [vmem:[#allocation1] ss:$4 sm:$0xff] %v1930
    %v1934 = vld.sshfl [vmem:[#allocation1] sm:$0xff pattern:$0x73625140]
    %v1935 = vld.sshfl [vmem:[#allocation1 + $0x8] sm:$0xff pattern:$0x73625140]
    %v1938 = vsel %vm559, %v1921, 0
    %1940 = vmatpush.msra.mxu0 0.0
    %1941 = vmatpush.msra.mxu0 0.0
    %1942 = vmatpush.msra.mxu0 0.0
    %1943 = vmatpush.msra.mxu0 0.0
    %1944 = vmatpush.msra.mxu0 0.0
    %1945 = vmatpush.msra.mxu0 0.0
    %1946 = vmatpush.msra.mxu0 0.0
    %1947 = vmatpush.msra.mxu0 0.0
    %1948 = vmatpush.msra.mxu0 %v1813
    %1949 = vmatpush.msra.mxu0 %v1811
    %1950 = vmatpush.msra.mxu0 %v1809
    %1951 = vmatpush.msra.mxu0 %v1807
    %1952 = vmatpush.msra.mxu0 %v1805
    %1953 = vmatpush.msra.mxu0 %v1803
    %1954 = vmatpush.msra.mxu0 %v1801
    %1955 = vmatpush.msra.mxu0 %v1799
    %1956 = vmatmul.f32.gmra.mxu0 %v1938
    %v1957 = vpop.f32.mrf.mxu0
    %v1958 = vadd.f32 %v1934, %v1957
    %1959 = vdwg.mxu0
    %1960 = vmatpush.msra.mxu0 0.0
    %1961 = vmatpush.msra.mxu0 0.0
    %1962 = vmatpush.msra.mxu0 0.0
    %1963 = vmatpush.msra.mxu0 0.0
    %1964 = vmatpush.msra.mxu0 0.0
    %1965 = vmatpush.msra.mxu0 0.0
    %1966 = vmatpush.msra.mxu0 0.0
    %1967 = vmatpush.msra.mxu0 0.0
    %1968 = vmatpush.msra.mxu0 %v1814
    %1969 = vmatpush.msra.mxu0 %v1812
    %1970 = vmatpush.msra.mxu0 %v1810
    %1971 = vmatpush.msra.mxu0 %v1808
    %1972 = vmatpush.msra.mxu0 %v1806
    %1973 = vmatpush.msra.mxu0 %v1804
    %1974 = vmatpush.msra.mxu0 %v1802
    %1975 = vmatpush.msra.mxu0 %v1800
    %1976 = vmatmul.f32.gmra.mxu0 %v1938
    %v1977 = vpop.f32.mrf.mxu0
    %v1978 = vadd.f32 %v1935, %v1977
    %1979 = vdwg.mxu0
    %1981 = vst [vmem:[#allocation1] ss:$4 sm:$0xff] %v1931
    %v1982 = vld.sshfl [vmem:[#allocation1 + $0x10] sm:$0xff pattern:$0x73625140]
    %v1983 = vld.sshfl [vmem:[#allocation1 + $0x18] sm:$0xff pattern:$0x73625140]
    %v1986 = vadd.f32 %v1958, %v1982
    %v1987 = vadd.f32 %v1978, %v1983
    %v1988 = vxor.u32 %v1986, 2147483648
    %v1989 = vxor.u32 %v1987, 2147483648
    %v1990 = vmul.f32 %v1988, 1.442695
    %v1991 = vpow.pop %v1990
    %v1992 = vmul.f32 %v1989, 1.442695
    %v1993 = vpow.pop %v1992
    %v1994 = vadd.f32 %v1991, 1.0
    %v1995 = vadd.f32 %v1993, 1.0
    %v1996 = vrcp.pop %v1994
    %v1997 = vmul.f32 %v1994, %v1996
    %v1998 = vsub.f32 1.0, %v1997
    %v1999 = vmul.f32 %v1996, %v1998
    %v2000 = vadd.f32 %v1996, %v1999
    %vm2001 = vweird.f32 %v1994
    %vm2002 = vweird.f32 %v1996
    %vm2003 = vmor %vm2001, %vm2002
    %v2004 = vsel %vm2003, %v1996, %v2000
    %v2005 = vand.u32 2147483647, %v1994
    %vm2006 = vcmp.eq.f32.partialorder %v2005, 8.507059e+37
    %v2007 = vand.u32 %v1994, 2147483648
    %v2008 = vor.u32 1.1754944e-38, %v2007
    %v2009 = vsel %vm2006, %v2008, %v2004
    %v2010 = vmul.f32 1.0, %v2009
    %v2011 = vrcp.pop %v1995
    %v2012 = vmul.f32 %v1995, %v2011
    %v2013 = vsub.f32 1.0, %v2012
    %v2014 = vmul.f32 %v2011, %v2013
    %v2015 = vadd.f32 %v2011, %v2014
    %vm2016 = vweird.f32 %v1995
    %vm2017 = vweird.f32 %v2011
    %vm2018 = vmor %vm2016, %vm2017
    %v2019 = vsel %vm2018, %v2011, %v2015
    %v2020 = vand.u32 2147483647, %v1995
    %vm2021 = vcmp.eq.f32.partialorder %v2020, 8.507059e+37
    %v2022 = vand.u32 %v1995, 2147483648
    %v2023 = vor.u32 1.1754944e-38, %v2022
    %v2024 = vsel %vm2021, %v2023, %v2019
    %v2025 = vmul.f32 1.0, %v2024
    %v2026 = vtanh.pop %v1987
    %v2027 = vmul.f32 %v2010, %v1916
    %v2028 = vmul.f32 %v2010, %v2026
    %2030 = vrot.lane.b32.xlu0 %v2028, 64
    %v2031 = vpop.permute.xlu0 %2030
    %v2033 = vadd.f32 %v2027, %v2031
    %v2034 = vtanh.pop %v2033
    %v2035 = vmul.f32 %v2025, %v2034
    %2037 = vrot.lane.b32.xlu0 %v2035, 64
    %v2038 = vpop.permute.xlu0 %2037
    %s2040 = scalar_lea.vmem [#allocation3], 2
    %2041 = vst.msk [vmem:[%s2040] sm:$0x3] %vm1923, %v2038
    %2042 = vrot.lane.b32.xlu0 %v2035, 32
    %v2043 = vpop.permute.xlu0 %2042
    %s2045 = scalar_lea.vmem [#allocation4], 12
    %2046 = vst.msk [vmem:[%s2045] sm:$0x3] %vm1923, %v2043
    %v2047 = vld [vmem:[%s435] sm:$0xff]
    %v2048 = vld [vmem:[%s1601] sm:$0xff]
    %2050 = vst [vmem:[#allocation1] ss:$4 sm:$0xff] %v2047
    %v2051 = vld.sshfl [vmem:[#allocation1] sm:$0xff pattern:$0x73625140]
    %v2052 = vld.sshfl [vmem:[#allocation1 + $0x8] sm:$0xff pattern:$0x73625140]
    %v2055 = vsel %vm559, %v2038, 0
    %2057 = vmatpush.msra.mxu0 0.0
    %2058 = vmatpush.msra.mxu0 0.0
    %2059 = vmatpush.msra.mxu0 0.0
    %2060 = vmatpush.msra.mxu0 0.0
    %2061 = vmatpush.msra.mxu0 0.0
    %2062 = vmatpush.msra.mxu0 0.0
    %2063 = vmatpush.msra.mxu0 0.0
    %2064 = vmatpush.msra.mxu0 0.0
    %2065 = vmatpush.msra.mxu0 %v1813
    %2066 = vmatpush.msra.mxu0 %v1811
    %2067 = vmatpush.msra.mxu0 %v1809
    %2068 = vmatpush.msra.mxu0 %v1807
    %2069 = vmatpush.msra.mxu0 %v1805
    %2070 = vmatpush.msra.mxu0 %v1803
    %2071 = vmatpush.msra.mxu0 %v1801
    %2072 = vmatpush.msra.mxu0 %v1799
    %2073 = vmatmul.f32.gmra.mxu0 %v2055
    %v2074 = vpop.f32.mrf.mxu0
    %v2075 = vadd.f32 %v2051, %v2074
    %2076 = vdwg.mxu0
    %2077 = vmatpush.msra.mxu0 0.0
    %2078 = vmatpush.msra.mxu0 0.0
    %2079 = vmatpush.msra.mxu0 0.0
    %2080 = vmatpush.msra.mxu0 0.0
    %2081 = vmatpush.msra.mxu0 0.0
    %2082 = vmatpush.msra.mxu0 0.0
    %2083 = vmatpush.msra.mxu0 0.0
    %2084 = vmatpush.msra.mxu0 0.0
    %2085 = vmatpush.msra.mxu0 %v1814
    %2086 = vmatpush.msra.mxu0 %v1812
    %2087 = vmatpush.msra.mxu0 %v1810
    %2088 = vmatpush.msra.mxu0 %v1808
    %2089 = vmatpush.msra.mxu0 %v1806
    %2090 = vmatpush.msra.mxu0 %v1804
    %2091 = vmatpush.msra.mxu0 %v1802
    %2092 = vmatpush.msra.mxu0 %v1800
    %2093 = vmatmul.f32.gmra.mxu0 %v2055
    %v2094 = vpop.f32.mrf.mxu0
    %v2095 = vadd.f32 %v2052, %v2094
    %2096 = vdwg.mxu0
    %2098 = vst [vmem:[#allocation1] ss:$4 sm:$0xff] %v2048
    %v2099 = vld.sshfl [vmem:[#allocation1 + $0x10] sm:$0xff pattern:$0x73625140]
    %v2100 = vld.sshfl [vmem:[#allocation1 + $0x18] sm:$0xff pattern:$0x73625140]
    %v2103 = vadd.f32 %v2075, %v2099
    %v2104 = vadd.f32 %v2095, %v2100
    %v2105 = vxor.u32 %v2103, 2147483648
    %v2106 = vxor.u32 %v2104, 2147483648
    %v2107 = vmul.f32 %v2105, 1.442695
    %v2108 = vpow.pop %v2107
    %v2109 = vmul.f32 %v2106, 1.442695
    %v2110 = vpow.pop %v2109
    %v2111 = vadd.f32 %v2108, 1.0
    %v2112 = vadd.f32 %v2110, 1.0
    %v2113 = vrcp.pop %v2111
    %v2114 = vmul.f32 %v2111, %v2113
    %v2115 = vsub.f32 1.0, %v2114
    %v2116 = vmul.f32 %v2113, %v2115
    %v2117 = vadd.f32 %v2113, %v2116
    %vm2118 = vweird.f32 %v2111
    %vm2119 = vweird.f32 %v2113
    %vm2120 = vmor %vm2118, %vm2119
    %v2121 = vsel %vm2120, %v2113, %v2117
    %v2122 = vand.u32 2147483647, %v2111
    %vm2123 = vcmp.eq.f32.partialorder %v2122, 8.507059e+37
    %v2124 = vand.u32 %v2111, 2147483648
    %v2125 = vor.u32 1.1754944e-38, %v2124
    %v2126 = vsel %vm2123, %v2125, %v2121
    %v2127 = vmul.f32 1.0, %v2126
    %v2128 = vrcp.pop %v2112
    %v2129 = vmul.f32 %v2112, %v2128
    %v2130 = vsub.f32 1.0, %v2129
    %v2131 = vmul.f32 %v2128, %v2130
    %v2132 = vadd.f32 %v2128, %v2131
    %vm2133 = vweird.f32 %v2112
    %vm2134 = vweird.f32 %v2128
    %vm2135 = vmor %vm2133, %vm2134
    %v2136 = vsel %vm2135, %v2128, %v2132
    %v2137 = vand.u32 2147483647, %v2112
    %vm2138 = vcmp.eq.f32.partialorder %v2137, 8.507059e+37
    %v2139 = vand.u32 %v2112, 2147483648
    %v2140 = vor.u32 1.1754944e-38, %v2139
    %v2141 = vsel %vm2138, %v2140, %v2136
    %v2142 = vmul.f32 1.0, %v2141
    %v2143 = vtanh.pop %v2104
    %v2144 = vmul.f32 %v2127, %v2033
    %v2145 = vmul.f32 %v2127, %v2143
    %2147 = vrot.lane.b32.xlu0 %v2145, 64
    %v2148 = vpop.permute.xlu0 %2147
    %v2150 = vadd.f32 %v2144, %v2148
    %v2151 = vtanh.pop %v2150
    %v2152 = vmul.f32 %v2142, %v2151
    %2154 = vrot.lane.b32.xlu0 %v2152, 64
    %v2155 = vpop.permute.xlu0 %2154
    %s2157 = scalar_lea.vmem [#allocation3], 4
    %2158 = vst.msk [vmem:[%s2157] sm:$0x3] %vm1923, %v2155
    %2159 = vrot.lane.b32.xlu0 %v2152, 32
    %v2160 = vpop.permute.xlu0 %2159
    %s2162 = scalar_lea.vmem [#allocation4], 10
    %2163 = vst.msk [vmem:[%s2162] sm:$0x3] %vm1923, %v2160
    %v2164 = vld [vmem:[%s533] sm:$0xff]
    %v2165 = vld [vmem:[%s1503] sm:$0xff]
    %2167 = vst [vmem:[#allocation1] ss:$4 sm:$0xff] %v2164
    %v2168 = vld.sshfl [vmem:[#allocation1] sm:$0xff pattern:$0x73625140]
    %v2169 = vld.sshfl [vmem:[#allocation1 + $0x8] sm:$0xff pattern:$0x73625140]
    %v2172 = vsel %vm559, %v2155, 0
    %2174 = vmatpush.msra.mxu0 0.0
    %2175 = vmatpush.msra.mxu0 0.0
    %2176 = vmatpush.msra.mxu0 0.0
    %2177 = vmatpush.msra.mxu0 0.0
    %2178 = vmatpush.msra.mxu0 0.0
    %2179 = vmatpush.msra.mxu0 0.0
    %2180 = vmatpush.msra.mxu0 0.0
    %2181 = vmatpush.msra.mxu0 0.0
    %2182 = vmatpush.msra.mxu0 %v1813
    %2183 = vmatpush.msra.mxu0 %v1811
    %2184 = vmatpush.msra.mxu0 %v1809
    %2185 = vmatpush.msra.mxu0 %v1807
    %2186 = vmatpush.msra.mxu0 %v1805
    %2187 = vmatpush.msra.mxu0 %v1803
    %2188 = vmatpush.msra.mxu0 %v1801
    %2189 = vmatpush.msra.mxu0 %v1799
    %2190 = vmatmul.f32.gmra.mxu0 %v2172
    %v2191 = vpop.f32.mrf.mxu0
    %v2192 = vadd.f32 %v2168, %v2191
    %2193 = vdwg.mxu0
    %2194 = vmatpush.msra.mxu0 0.0
    %2195 = vmatpush.msra.mxu0 0.0
    %2196 = vmatpush.msra.mxu0 0.0
    %2197 = vmatpush.msra.mxu0 0.0
    %2198 = vmatpush.msra.mxu0 0.0
    %2199 = vmatpush.msra.mxu0 0.0
    %2200 = vmatpush.msra.mxu0 0.0
    %2201 = vmatpush.msra.mxu0 0.0
    %2202 = vmatpush.msra.mxu0 %v1814
    %2203 = vmatpush.msra.mxu0 %v1812
    %2204 = vmatpush.msra.mxu0 %v1810
    %2205 = vmatpush.msra.mxu0 %v1808
    %2206 = vmatpush.msra.mxu0 %v1806
    %2207 = vmatpush.msra.mxu0 %v1804
    %2208 = vmatpush.msra.mxu0 %v1802
    %2209 = vmatpush.msra.mxu0 %v1800
    %2210 = vmatmul.f32.gmra.mxu0 %v2172
    %v2211 = vpop.f32.mrf.mxu0
    %v2212 = vadd.f32 %v2169, %v2211
    %2213 = vdwg.mxu0
    %2215 = vst [vmem:[#allocation1] ss:$4 sm:$0xff] %v2165
    %v2216 = vld.sshfl [vmem:[#allocation1 + $0x10] sm:$0xff pattern:$0x73625140]
    %v2217 = vld.sshfl [vmem:[#allocation1 + $0x18] sm:$0xff pattern:$0x73625140]
    %v2220 = vadd.f32 %v2192, %v2216
    %v2221 = vadd.f32 %v2212, %v2217
    %v2222 = vxor.u32 %v2220, 2147483648
    %v2223 = vxor.u32 %v2221, 2147483648
    %v2224 = vmul.f32 %v2222, 1.442695
    %v2225 = vpow.pop %v2224
    %v2226 = vmul.f32 %v2223, 1.442695
    %v2227 = vpow.pop %v2226
    %v2228 = vadd.f32 %v2225, 1.0
    %v2229 = vadd.f32 %v2227, 1.0
    %v2230 = vrcp.pop %v2228
    %v2231 = vmul.f32 %v2228, %v2230
    %v2232 = vsub.f32 1.0, %v2231
    %v2233 = vmul.f32 %v2230, %v2232
    %v2234 = vadd.f32 %v2230, %v2233
    %vm2235 = vweird.f32 %v2228
    %vm2236 = vweird.f32 %v2230
    %vm2237 = vmor %vm2235, %vm2236
    %v2238 = vsel %vm2237, %v2230, %v2234
    %v2239 = vand.u32 2147483647, %v2228
    %vm2240 = vcmp.eq.f32.partialorder %v2239, 8.507059e+37
    %v2241 = vand.u32 %v2228, 2147483648
    %v2242 = vor.u32 1.1754944e-38, %v2241
    %v2243 = vsel %vm2240, %v2242, %v2238
    %v2244 = vmul.f32 1.0, %v2243
    %v2245 = vrcp.pop %v2229
    %v2246 = vmul.f32 %v2229, %v2245
    %v2247 = vsub.f32 1.0, %v2246
    %v2248 = vmul.f32 %v2245, %v2247
    %v2249 = vadd.f32 %v2245, %v2248
    %vm2250 = vweird.f32 %v2229
    %vm2251 = vweird.f32 %v2245
    %vm2252 = vmor %vm2250, %vm2251
    %v2253 = vsel %vm2252, %v2245, %v2249
    %v2254 = vand.u32 2147483647, %v2229
    %vm2255 = vcmp.eq.f32.partialorder %v2254, 8.507059e+37
    %v2256 = vand.u32 %v2229, 2147483648
    %v2257 = vor.u32 1.1754944e-38, %v2256
    %v2258 = vsel %vm2255, %v2257, %v2253
    %v2259 = vmul.f32 1.0, %v2258
    %v2260 = vtanh.pop %v2221
    %v2261 = vmul.f32 %v2244, %v2150
    %v2262 = vmul.f32 %v2244, %v2260
    %2264 = vrot.lane.b32.xlu0 %v2262, 64
    %v2265 = vpop.permute.xlu0 %2264
    %v2267 = vadd.f32 %v2261, %v2265
    %v2268 = vtanh.pop %v2267
    %v2269 = vmul.f32 %v2259, %v2268
    %2271 = vrot.lane.b32.xlu0 %v2269, 64
    %v2272 = vpop.permute.xlu0 %2271
    %s2274 = scalar_lea.vmem [#allocation3], 6
    %2275 = vst.msk [vmem:[%s2274] sm:$0x3] %vm1923, %v2272
    %2276 = vrot.lane.b32.xlu0 %v2269, 32
    %v2277 = vpop.permute.xlu0 %2276
    %s2279 = scalar_lea.vmem [#allocation4], 8
    %2280 = vst.msk [vmem:[%s2279] sm:$0x3] %vm1923, %v2277
    %v2281 = vld [vmem:[%s1503] sm:$0xff]
    %v2282 = vld [vmem:[%s533] sm:$0xff]
    %2284 = vst [vmem:[#allocation1] ss:$4 sm:$0xff] %v2281
    %v2285 = vld.sshfl [vmem:[#allocation1] sm:$0xff pattern:$0x73625140]
    %v2286 = vld.sshfl [vmem:[#allocation1 + $0x8] sm:$0xff pattern:$0x73625140]
    %v2289 = vsel %vm559, %v2272, 0
    %2291 = vmatpush.msra.mxu0 0.0
    %2292 = vmatpush.msra.mxu0 0.0
    %2293 = vmatpush.msra.mxu0 0.0
    %2294 = vmatpush.msra.mxu0 0.0
    %2295 = vmatpush.msra.mxu0 0.0
    %2296 = vmatpush.msra.mxu0 0.0
    %2297 = vmatpush.msra.mxu0 0.0
    %2298 = vmatpush.msra.mxu0 0.0
    %2299 = vmatpush.msra.mxu0 %v1813
    %2300 = vmatpush.msra.mxu0 %v1811
    %2301 = vmatpush.msra.mxu0 %v1809
    %2302 = vmatpush.msra.mxu0 %v1807
    %2303 = vmatpush.msra.mxu0 %v1805
    %2304 = vmatpush.msra.mxu0 %v1803
    %2305 = vmatpush.msra.mxu0 %v1801
    %2306 = vmatpush.msra.mxu0 %v1799
    %2307 = vmatmul.f32.gmra.mxu0 %v2289
    %v2308 = vpop.f32.mrf.mxu0
    %v2309 = vadd.f32 %v2285, %v2308
    %2310 = vdwg.mxu0
    %2311 = vmatpush.msra.mxu0 0.0
    %2312 = vmatpush.msra.mxu0 0.0
    %2313 = vmatpush.msra.mxu0 0.0
    %2314 = vmatpush.msra.mxu0 0.0
    %2315 = vmatpush.msra.mxu0 0.0
    %2316 = vmatpush.msra.mxu0 0.0
    %2317 = vmatpush.msra.mxu0 0.0
    %2318 = vmatpush.msra.mxu0 0.0
    %2319 = vmatpush.msra.mxu0 %v1814
    %2320 = vmatpush.msra.mxu0 %v1812
    %2321 = vmatpush.msra.mxu0 %v1810
    %2322 = vmatpush.msra.mxu0 %v1808
    %2323 = vmatpush.msra.mxu0 %v1806
    %2324 = vmatpush.msra.mxu0 %v1804
    %2325 = vmatpush.msra.mxu0 %v1802
    %2326 = vmatpush.msra.mxu0 %v1800
    %2327 = vmatmul.f32.gmra.mxu0 %v2289
    %v2328 = vpop.f32.mrf.mxu0
    %v2329 = vadd.f32 %v2286, %v2328
    %2330 = vdwg.mxu0
    %2332 = vst [vmem:[#allocation1] ss:$4 sm:$0xff] %v2282
    %v2333 = vld.sshfl [vmem:[#allocation1 + $0x10] sm:$0xff pattern:$0x73625140]
    %v2334 = vld.sshfl [vmem:[#allocation1 + $0x18] sm:$0xff pattern:$0x73625140]
    %v2337 = vadd.f32 %v2309, %v2333
    %v2338 = vadd.f32 %v2329, %v2334
    %v2339 = vxor.u32 %v2337, 2147483648
    %v2340 = vxor.u32 %v2338, 2147483648
    %v2341 = vmul.f32 %v2339, 1.442695
    %v2342 = vpow.pop %v2341
    %v2343 = vmul.f32 %v2340, 1.442695
    %v2344 = vpow.pop %v2343
    %v2345 = vadd.f32 %v2342, 1.0
    %v2346 = vadd.f32 %v2344, 1.0
    %v2347 = vrcp.pop %v2345
    %v2348 = vmul.f32 %v2345, %v2347
    %v2349 = vsub.f32 1.0, %v2348
    %v2350 = vmul.f32 %v2347, %v2349
    %v2351 = vadd.f32 %v2347, %v2350
    %vm2352 = vweird.f32 %v2345
    %vm2353 = vweird.f32 %v2347
    %vm2354 = vmor %vm2352, %vm2353
    %v2355 = vsel %vm2354, %v2347, %v2351
    %v2356 = vand.u32 2147483647, %v2345
    %vm2357 = vcmp.eq.f32.partialorder %v2356, 8.507059e+37
    %v2358 = vand.u32 %v2345, 2147483648
    %v2359 = vor.u32 1.1754944e-38, %v2358
    %v2360 = vsel %vm2357, %v2359, %v2355
    %v2361 = vmul.f32 1.0, %v2360
    %v2362 = vrcp.pop %v2346
    %v2363 = vmul.f32 %v2346, %v2362
    %v2364 = vsub.f32 1.0, %v2363
    %v2365 = vmul.f32 %v2362, %v2364
    %v2366 = vadd.f32 %v2362, %v2365
    %vm2367 = vweird.f32 %v2346
    %vm2368 = vweird.f32 %v2362
    %vm2369 = vmor %vm2367, %vm2368
    %v2370 = vsel %vm2369, %v2362, %v2366
    %v2371 = vand.u32 2147483647, %v2346
    %vm2372 = vcmp.eq.f32.partialorder %v2371, 8.507059e+37
    %v2373 = vand.u32 %v2346, 2147483648
    %v2374 = vor.u32 1.1754944e-38, %v2373
    %v2375 = vsel %vm2372, %v2374, %v2370
    %v2376 = vmul.f32 1.0, %v2375
    %v2377 = vtanh.pop %v2338
    %v2378 = vmul.f32 %v2361, %v2267
    %v2379 = vmul.f32 %v2361, %v2377
    %2381 = vrot.lane.b32.xlu0 %v2379, 64
    %v2382 = vpop.permute.xlu0 %2381
    %v2384 = vadd.f32 %v2378, %v2382
    %v2385 = vtanh.pop %v2384
    %v2386 = vmul.f32 %v2376, %v2385
    %2388 = vrot.lane.b32.xlu0 %v2386, 64
    %v2389 = vpop.permute.xlu0 %2388
    %s2391 = scalar_lea.vmem [#allocation3], 8
    %2392 = vst.msk [vmem:[%s2391] sm:$0x3] %vm1923, %v2389
    %2393 = vrot.lane.b32.xlu0 %v2386, 32
    %v2394 = vpop.permute.xlu0 %2393
    %s2396 = scalar_lea.vmem [#allocation4], 6
    %2397 = vst.msk [vmem:[%s2396] sm:$0x3] %vm1923, %v2394
    %v2398 = vld [vmem:[%s1601] sm:$0xff]
    %v2399 = vld [vmem:[%s435] sm:$0xff]
    %2401 = vst [vmem:[#allocation1] ss:$4 sm:$0xff] %v2398
    %v2402 = vld.sshfl [vmem:[#allocation1] sm:$0xff pattern:$0x73625140]
    %v2403 = vld.sshfl [vmem:[#allocation1 + $0x8] sm:$0xff pattern:$0x73625140]
    %v2406 = vsel %vm559, %v2389, 0
    %2408 = vmatpush.msra.mxu0 0.0
    %2409 = vmatpush.msra.mxu0 0.0
    %2410 = vmatpush.msra.mxu0 0.0
    %2411 = vmatpush.msra.mxu0 0.0
    %2412 = vmatpush.msra.mxu0 0.0
    %2413 = vmatpush.msra.mxu0 0.0
    %2414 = vmatpush.msra.mxu0 0.0
    %2415 = vmatpush.msra.mxu0 0.0
    %2416 = vmatpush.msra.mxu0 %v1813
    %2417 = vmatpush.msra.mxu0 %v1811
    %2418 = vmatpush.msra.mxu0 %v1809
    %2419 = vmatpush.msra.mxu0 %v1807
    %2420 = vmatpush.msra.mxu0 %v1805
    %2421 = vmatpush.msra.mxu0 %v1803
    %2422 = vmatpush.msra.mxu0 %v1801
    %2423 = vmatpush.msra.mxu0 %v1799
    %2424 = vmatmul.f32.gmra.mxu0 %v2406
    %v2425 = vpop.f32.mrf.mxu0
    %v2426 = vadd.f32 %v2402, %v2425
    %2427 = vdwg.mxu0
    %2428 = vmatpush.msra.mxu0 0.0
    %2429 = vmatpush.msra.mxu0 0.0
    %2430 = vmatpush.msra.mxu0 0.0
    %2431 = vmatpush.msra.mxu0 0.0
    %2432 = vmatpush.msra.mxu0 0.0
    %2433 = vmatpush.msra.mxu0 0.0
    %2434 = vmatpush.msra.mxu0 0.0
    %2435 = vmatpush.msra.mxu0 0.0
    %2436 = vmatpush.msra.mxu0 %v1814
    %2437 = vmatpush.msra.mxu0 %v1812
    %2438 = vmatpush.msra.mxu0 %v1810
    %2439 = vmatpush.msra.mxu0 %v1808
    %2440 = vmatpush.msra.mxu0 %v1806
    %2441 = vmatpush.msra.mxu0 %v1804
    %2442 = vmatpush.msra.mxu0 %v1802
    %2443 = vmatpush.msra.mxu0 %v1800
    %2444 = vmatmul.f32.gmra.mxu0 %v2406
    %v2445 = vpop.f32.mrf.mxu0
    %v2446 = vadd.f32 %v2403, %v2445
    %2447 = vdwg.mxu0
    %2449 = vst [vmem:[#allocation1] ss:$4 sm:$0xff] %v2399
    %v2450 = vld.sshfl [vmem:[#allocation1 + $0x10] sm:$0xff pattern:$0x73625140]
    %v2451 = vld.sshfl [vmem:[#allocation1 + $0x18] sm:$0xff pattern:$0x73625140]
    %v2454 = vadd.f32 %v2426, %v2450
    %v2455 = vadd.f32 %v2446, %v2451
    %v2456 = vxor.u32 %v2454, 2147483648
    %v2457 = vxor.u32 %v2455, 2147483648
    %v2458 = vmul.f32 %v2456, 1.442695
    %v2459 = vpow.pop %v2458
    %v2460 = vmul.f32 %v2457, 1.442695
    %v2461 = vpow.pop %v2460
    %v2462 = vadd.f32 %v2459, 1.0
    %v2463 = vadd.f32 %v2461, 1.0
    %v2464 = vrcp.pop %v2462
    %v2465 = vmul.f32 %v2462, %v2464
    %v2466 = vsub.f32 1.0, %v2465
    %v2467 = vmul.f32 %v2464, %v2466
    %v2468 = vadd.f32 %v2464, %v2467
    %vm2469 = vweird.f32 %v2462
    %vm2470 = vweird.f32 %v2464
    %vm2471 = vmor %vm2469, %vm2470
    %v2472 = vsel %vm2471, %v2464, %v2468
    %v2473 = vand.u32 2147483647, %v2462
    %vm2474 = vcmp.eq.f32.partialorder %v2473, 8.507059e+37
    %v2475 = vand.u32 %v2462, 2147483648
    %v2476 = vor.u32 1.1754944e-38, %v2475
    %v2477 = vsel %vm2474, %v2476, %v2472
    %v2478 = vmul.f32 1.0, %v2477
    %v2479 = vrcp.pop %v2463
    %v2480 = vmul.f32 %v2463, %v2479
    %v2481 = vsub.f32 1.0, %v2480
    %v2482 = vmul.f32 %v2479, %v2481
    %v2483 = vadd.f32 %v2479, %v2482
    %vm2484 = vweird.f32 %v2463
    %vm2485 = vweird.f32 %v2479
    %vm2486 = vmor %vm2484, %vm2485
    %v2487 = vsel %vm2486, %v2479, %v2483
    %v2488 = vand.u32 2147483647, %v2463
    %vm2489 = vcmp.eq.f32.partialorder %v2488, 8.507059e+37
    %v2490 = vand.u32 %v2463, 2147483648
    %v2491 = vor.u32 1.1754944e-38, %v2490
    %v2492 = vsel %vm2489, %v2491, %v2487
    %v2493 = vmul.f32 1.0, %v2492
    %v2494 = vtanh.pop %v2455
    %v2495 = vmul.f32 %v2478, %v2384
    %v2496 = vmul.f32 %v2478, %v2494
    %2498 = vrot.lane.b32.xlu0 %v2496, 64
    %v2499 = vpop.permute.xlu0 %2498
    %v2501 = vadd.f32 %v2495, %v2499
    %v2502 = vtanh.pop %v2501
    %v2503 = vmul.f32 %v2493, %v2502
    %2505 = vrot.lane.b32.xlu0 %v2503, 64
    %v2506 = vpop.permute.xlu0 %2505
    %s2508 = scalar_lea.vmem [#allocation3], 10
    %2509 = vst.msk [vmem:[%s2508] sm:$0x3] %vm1923, %v2506
    %2510 = vrot.lane.b32.xlu0 %v2503, 32
    %v2511 = vpop.permute.xlu0 %2510
    %s2513 = scalar_lea.vmem [#allocation4], 4
    %2514 = vst.msk [vmem:[%s2513] sm:$0x3] %vm1923, %v2511
    %v2515 = vld [vmem:[%s1699] sm:$0xff]
    %v2516 = vld [vmem:[%s337] sm:$0xff]
    %2518 = vst [vmem:[#allocation1] ss:$4 sm:$0xff] %v2515
    %v2519 = vld.sshfl [vmem:[#allocation1] sm:$0xff pattern:$0x73625140]
    %v2520 = vld.sshfl [vmem:[#allocation1 + $0x8] sm:$0xff pattern:$0x73625140]
    %v2523 = vsel %vm559, %v2506, 0
    %2525 = vmatpush.msra.mxu0 0.0
    %2526 = vmatpush.msra.mxu0 0.0
    %2527 = vmatpush.msra.mxu0 0.0
    %2528 = vmatpush.msra.mxu0 0.0
    %2529 = vmatpush.msra.mxu0 0.0
    %2530 = vmatpush.msra.mxu0 0.0
    %2531 = vmatpush.msra.mxu0 0.0
    %2532 = vmatpush.msra.mxu0 0.0
    %2533 = vmatpush.msra.mxu0 %v1813
    %2534 = vmatpush.msra.mxu0 %v1811
    %2535 = vmatpush.msra.mxu0 %v1809
    %2536 = vmatpush.msra.mxu0 %v1807
    %2537 = vmatpush.msra.mxu0 %v1805
    %2538 = vmatpush.msra.mxu0 %v1803
    %2539 = vmatpush.msra.mxu0 %v1801
    %2540 = vmatpush.msra.mxu0 %v1799
    %2541 = vmatmul.f32.gmra.mxu0 %v2523
    %v2542 = vpop.f32.mrf.mxu0
    %v2543 = vadd.f32 %v2519, %v2542
    %2544 = vdwg.mxu0
    %2545 = vmatpush.msra.mxu0 0.0
    %2546 = vmatpush.msra.mxu0 0.0
    %2547 = vmatpush.msra.mxu0 0.0
    %2548 = vmatpush.msra.mxu0 0.0
    %2549 = vmatpush.msra.mxu0 0.0
    %2550 = vmatpush.msra.mxu0 0.0
    %2551 = vmatpush.msra.mxu0 0.0
    %2552 = vmatpush.msra.mxu0 0.0
    %2553 = vmatpush.msra.mxu0 %v1814
    %2554 = vmatpush.msra.mxu0 %v1812
    %2555 = vmatpush.msra.mxu0 %v1810
    %2556 = vmatpush.msra.mxu0 %v1808
    %2557 = vmatpush.msra.mxu0 %v1806
    %2558 = vmatpush.msra.mxu0 %v1804
    %2559 = vmatpush.msra.mxu0 %v1802
    %2560 = vmatpush.msra.mxu0 %v1800
    %2561 = vmatmul.f32.gmra.mxu0 %v2523
    %v2562 = vpop.f32.mrf.mxu0
    %v2563 = vadd.f32 %v2520, %v2562
    %2564 = vdwg.mxu0
    %2566 = vst [vmem:[#allocation1] ss:$4 sm:$0xff] %v2516
    %v2567 = vld.sshfl [vmem:[#allocation1 + $0x10] sm:$0xff pattern:$0x73625140]
    %v2568 = vld.sshfl [vmem:[#allocation1 + $0x18] sm:$0xff pattern:$0x73625140]
    %v2571 = vadd.f32 %v2543, %v2567
    %v2572 = vadd.f32 %v2563, %v2568
    %v2573 = vxor.u32 %v2571, 2147483648
    %v2574 = vxor.u32 %v2572, 2147483648
    %v2575 = vmul.f32 %v2573, 1.442695
    %v2576 = vpow.pop %v2575
    %v2577 = vmul.f32 %v2574, 1.442695
    %v2578 = vpow.pop %v2577
    %v2579 = vadd.f32 %v2576, 1.0
    %v2580 = vadd.f32 %v2578, 1.0
    %v2581 = vrcp.pop %v2579
    %v2582 = vmul.f32 %v2579, %v2581
    %v2583 = vsub.f32 1.0, %v2582
    %v2584 = vmul.f32 %v2581, %v2583
    %v2585 = vadd.f32 %v2581, %v2584
    %vm2586 = vweird.f32 %v2579
    %vm2587 = vweird.f32 %v2581
    %vm2588 = vmor %vm2586, %vm2587
    %v2589 = vsel %vm2588, %v2581, %v2585
    %v2590 = vand.u32 2147483647, %v2579
    %vm2591 = vcmp.eq.f32.partialorder %v2590, 8.507059e+37
    %v2592 = vand.u32 %v2579, 2147483648
    %v2593 = vor.u32 1.1754944e-38, %v2592
    %v2594 = vsel %vm2591, %v2593, %v2589
    %v2595 = vmul.f32 1.0, %v2594
    %v2596 = vrcp.pop %v2580
    %v2597 = vmul.f32 %v2580, %v2596
    %v2598 = vsub.f32 1.0, %v2597
    %v2599 = vmul.f32 %v2596, %v2598
    %v2600 = vadd.f32 %v2596, %v2599
    %vm2601 = vweird.f32 %v2580
    %vm2602 = vweird.f32 %v2596
    %vm2603 = vmor %vm2601, %vm2602
    %v2604 = vsel %vm2603, %v2596, %v2600
    %v2605 = vand.u32 2147483647, %v2580
    %vm2606 = vcmp.eq.f32.partialorder %v2605, 8.507059e+37
    %v2607 = vand.u32 %v2580, 2147483648
    %v2608 = vor.u32 1.1754944e-38, %v2607
    %v2609 = vsel %vm2606, %v2608, %v2604
    %v2610 = vmul.f32 1.0, %v2609
    %v2611 = vtanh.pop %v2572
    %v2612 = vmul.f32 %v2595, %v2501
    %v2613 = vmul.f32 %v2595, %v2611
    %2615 = vrot.lane.b32.xlu0 %v2613, 64
    %v2616 = vpop.permute.xlu0 %2615
    %v2618 = vadd.f32 %v2612, %v2616
    %v2619 = vtanh.pop %v2618
    %v2620 = vmul.f32 %v2610, %v2619
    %2622 = vrot.lane.b32.xlu0 %v2620, 64
    %v2623 = vpop.permute.xlu0 %2622
    %s2625 = scalar_lea.vmem [#allocation3], 12
    %2626 = vst.msk [vmem:[%s2625] sm:$0x3] %vm1923, %v2623
    %2627 = vrot.lane.b32.xlu0 %v2620, 32
    %v2628 = vpop.permute.xlu0 %2627
    %s2630 = scalar_lea.vmem [#allocation4], 2
    %2631 = vst.msk [vmem:[%s2630] sm:$0x3] %vm1923, %v2628
    %v2632 = vld [vmem:[%s1797] sm:$0xff]
    %v2633 = vld [vmem:[#allocation2] sm:$0xff]
    %2635 = vst [vmem:[#allocation1] ss:$4 sm:$0xff] %v2632
    %v2636 = vld.sshfl [vmem:[#allocation1] sm:$0xff pattern:$0x73625140]
    %v2637 = vld.sshfl [vmem:[#allocation1 + $0x8] sm:$0xff pattern:$0x73625140]
    %v2640 = vsel %vm559, %v2623, 0
    %2642 = vmatpush.msra.mxu0 0.0
    %2643 = vmatpush.msra.mxu0 0.0
    %2644 = vmatpush.msra.mxu0 0.0
    %2645 = vmatpush.msra.mxu0 0.0
    %2646 = vmatpush.msra.mxu0 0.0
    %2647 = vmatpush.msra.mxu0 0.0
    %2648 = vmatpush.msra.mxu0 0.0
    %2649 = vmatpush.msra.mxu0 0.0
    %2650 = vmatpush.msra.mxu0 %v1813
    %2651 = vmatpush.msra.mxu0 %v1811
    %2652 = vmatpush.msra.mxu0 %v1809
    %2653 = vmatpush.msra.mxu0 %v1807
    %2654 = vmatpush.msra.mxu0 %v1805
    %2655 = vmatpush.msra.mxu0 %v1803
    %2656 = vmatpush.msra.mxu0 %v1801
    %2657 = vmatpush.msra.mxu0 %v1799
    %2658 = vmatmul.f32.gmra.mxu0 %v2640
    %v2659 = vpop.f32.mrf.mxu0
    %v2660 = vadd.f32 %v2636, %v2659
    %2661 = vdwg.mxu0
    %2662 = vmatpush.msra.mxu0 0.0
    %2663 = vmatpush.msra.mxu0 0.0
    %2664 = vmatpush.msra.mxu0 0.0
    %2665 = vmatpush.msra.mxu0 0.0
    %2666 = vmatpush.msra.mxu0 0.0
    %2667 = vmatpush.msra.mxu0 0.0
    %2668 = vmatpush.msra.mxu0 0.0
    %2669 = vmatpush.msra.mxu0 0.0
    %2670 = vmatpush.msra.mxu0 %v1814
    %2671 = vmatpush.msra.mxu0 %v1812
    %2672 = vmatpush.msra.mxu0 %v1810
    %2673 = vmatpush.msra.mxu0 %v1808
    %2674 = vmatpush.msra.mxu0 %v1806
    %2675 = vmatpush.msra.mxu0 %v1804
    %2676 = vmatpush.msra.mxu0 %v1802
    %2677 = vmatpush.msra.mxu0 %v1800
    %2678 = vmatmul.f32.gmra.mxu0 %v2640
    %v2679 = vpop.f32.mrf.mxu0
    %v2680 = vadd.f32 %v2637, %v2679
    %2681 = vdwg.mxu0
    %2683 = vst [vmem:[#allocation1] ss:$4 sm:$0xff] %v2633
    %v2684 = vld.sshfl [vmem:[#allocation1 + $0x10] sm:$0xff pattern:$0x73625140]
    %v2685 = vld.sshfl [vmem:[#allocation1 + $0x18] sm:$0xff pattern:$0x73625140]
    %v2688 = vadd.f32 %v2660, %v2684
    %v2689 = vadd.f32 %v2680, %v2685
    %v2690 = vxor.u32 %v2688, 2147483648
    %v2691 = vxor.u32 %v2689, 2147483648
    %v2692 = vmul.f32 %v2690, 1.442695
    %v2693 = vpow.pop %v2692
    %v2694 = vmul.f32 %v2691, 1.442695
    %v2695 = vpow.pop %v2694
    %v2696 = vadd.f32 %v2693, 1.0
    %v2697 = vadd.f32 %v2695, 1.0
    %v2698 = vrcp.pop %v2696
    %v2699 = vmul.f32 %v2696, %v2698
    %v2700 = vsub.f32 1.0, %v2699
    %v2701 = vmul.f32 %v2698, %v2700
    %v2702 = vadd.f32 %v2698, %v2701
    %vm2703 = vweird.f32 %v2696
    %vm2704 = vweird.f32 %v2698
    %vm2705 = vmor %vm2703, %vm2704
    %v2706 = vsel %vm2705, %v2698, %v2702
    %v2707 = vand.u32 2147483647, %v2696
    %vm2708 = vcmp.eq.f32.partialorder %v2707, 8.507059e+37
    %v2709 = vand.u32 %v2696, 2147483648
    %v2710 = vor.u32 1.1754944e-38, %v2709
    %v2711 = vsel %vm2708, %v2710, %v2706
    %v2712 = vmul.f32 1.0, %v2711
    %v2713 = vrcp.pop %v2697
    %v2714 = vmul.f32 %v2697, %v2713
    %v2715 = vsub.f32 1.0, %v2714
    %v2716 = vmul.f32 %v2713, %v2715
    %v2717 = vadd.f32 %v2713, %v2716
    %vm2718 = vweird.f32 %v2697
    %vm2719 = vweird.f32 %v2713
    %vm2720 = vmor %vm2718, %vm2719
    %v2721 = vsel %vm2720, %v2713, %v2717
    %v2722 = vand.u32 2147483647, %v2697
    %vm2723 = vcmp.eq.f32.partialorder %v2722, 8.507059e+37
    %v2724 = vand.u32 %v2697, 2147483648
    %v2725 = vor.u32 1.1754944e-38, %v2724
    %v2726 = vsel %vm2723, %v2725, %v2721
    %v2727 = vmul.f32 1.0, %v2726
    %v2728 = vtanh.pop %v2689
    %v2729 = vmul.f32 %v2712, %v2618
    %v2730 = vmul.f32 %v2712, %v2728
    %2732 = vrot.lane.b32.xlu0 %v2730, 64
    %v2733 = vpop.permute.xlu0 %2732
    %v2735 = vadd.f32 %v2729, %v2733
    %v2736 = vtanh.pop %v2735
    %v2737 = vmul.f32 %v2727, %v2736
    %2739 = vrot.lane.b32.xlu0 %v2737, 64
    %v2740 = vpop.permute.xlu0 %2739
    %s2742 = scalar_lea.vmem [#allocation3], 14
    %2743 = vst.msk [vmem:[%s2742] sm:$0x3] %vm1923, %v2740
    %2744 = vrot.lane.b32.xlu0 %v2737, 32
    %v2745 = vpop.permute.xlu0 %2744
    %2747 = vst.msk [vmem:[#allocation4] sm:$0x3] %vm1923, %v2745
    %v2748 = vld [vmem:[#allocation11] sm:$0xff]
    %v2749 = vld [vmem:[#allocation11 + $0x8] sm:$0xff]
    %v2750 = vld [vmem:[#allocation11 + $0x10] sm:$0xff]
    %v2751 = vld [vmem:[#allocation11 + $0x18] sm:$0xff]
    %v2752 = vld [vmem:[#allocation11 + $0x20] sm:$0xff]
    %v2753 = vld [vmem:[#allocation11 + $0x28] sm:$0xff]
    %v2754 = vld [vmem:[#allocation11 + $0x30] sm:$0xff]
    %v2755 = vld [vmem:[#allocation11 + $0x38] sm:$0xff]
    %v2756 = vld [vmem:[#allocation11 + $0x40] sm:$0xff]
    %v2757 = vld [vmem:[#allocation11 + $0x48] sm:$0xff]
    %v2758 = vld [vmem:[#allocation11 + $0x50] sm:$0xff]
    %v2759 = vld [vmem:[#allocation11 + $0x58] sm:$0xff]
    %v2760 = vld [vmem:[#allocation11 + $0x60] sm:$0xff]
    %v2761 = vld [vmem:[#allocation11 + $0x68] sm:$0xff]
    %v2762 = vld [vmem:[#allocation11 + $0x70] sm:$0xff]
    %v2763 = vld [vmem:[#allocation11 + $0x78] sm:$0xff]
    %v2764 = vld [vmem:[#allocation11 + $0x80] sm:$0xff]
    %v2765 = vld [vmem:[#allocation11 + $0x88] sm:$0xff]
    %v2766 = vld [vmem:[#allocation11 + $0x90] sm:$0xff]
    %v2767 = vld [vmem:[#allocation11 + $0x98] sm:$0xff]
    %v2768 = vld [vmem:[#allocation11 + $0xa0] sm:$0xff]
    %v2769 = vld [vmem:[#allocation11 + $0xa8] sm:$0xff]
    %v2770 = vld [vmem:[#allocation11 + $0xb0] sm:$0xff]
    %v2771 = vld [vmem:[#allocation11 + $0xb8] sm:$0xff]
    %v2772 = vld [vmem:[#allocation11 + $0xc0] sm:$0xff]
    %v2773 = vld [vmem:[#allocation11 + $0xc8] sm:$0xff]
    %v2774 = vld [vmem:[#allocation11 + $0xd0] sm:$0xff]
    %v2775 = vld [vmem:[#allocation11 + $0xd8] sm:$0xff]
    %v2776 = vld [vmem:[#allocation11 + $0xe0] sm:$0xff]
    %v2777 = vld [vmem:[#allocation11 + $0xe8] sm:$0xff]
    %v2778 = vld [vmem:[#allocation11 + $0xf0] sm:$0xff]
    %v2779 = vld [vmem:[#allocation11 + $0xf8] sm:$0xff]
    %v2780 = vld [vmem:[%s11] sm:$0xf]
    %v2781 = vld [vmem:[#allocation3] sm:$0x3]
    %v2782 = vld [vmem:[#allocation4] sm:$0x3]
    %v2784 = vsel %vm142, %v2782, 0
    %2786 = vmatpush.msra.mxu0 0.0
    %2787 = vmatpush.msra.mxu0 0.0
    %2788 = vmatpush.msra.mxu0 0.0
    %2789 = vmatpush.msra.mxu0 0.0
    %2790 = vmatpush.msra.mxu0 0.0
    %2791 = vmatpush.msra.mxu0 0.0
    %2792 = vmatpush.msra.mxu0 0.0
    %2793 = vmatpush.msra.mxu0 0.0
    %2794 = vmatpush.msra.mxu0 0.0
    %2795 = vmatpush.msra.mxu0 0.0
    %2796 = vmatpush.msra.mxu0 0.0
    %2797 = vmatpush.msra.mxu0 0.0
    %2798 = vmatpush.msra.mxu0 %v2776
    %2799 = vmatpush.msra.mxu0 %v2772
    %2800 = vmatpush.msra.mxu0 %v2768
    %2801 = vmatpush.msra.mxu0 %v2764
    %2802 = vmatmul.f32.gmra.mxu0 %v2784
    %v2803 = vpop.f32.mrf.mxu0
    %v2804 = vadd.f32 0.0, %v2803
    %2805 = vdwg.mxu0
    %2806 = vmatpush.msra.mxu0 0.0
    %2807 = vmatpush.msra.mxu0 0.0
    %2808 = vmatpush.msra.mxu0 0.0
    %2809 = vmatpush.msra.mxu0 0.0
    %2810 = vmatpush.msra.mxu0 0.0
    %2811 = vmatpush.msra.mxu0 0.0
    %2812 = vmatpush.msra.mxu0 0.0
    %2813 = vmatpush.msra.mxu0 0.0
    %2814 = vmatpush.msra.mxu0 0.0
    %2815 = vmatpush.msra.mxu0 0.0
    %2816 = vmatpush.msra.mxu0 0.0
    %2817 = vmatpush.msra.mxu0 0.0
    %2818 = vmatpush.msra.mxu0 %v2777
    %2819 = vmatpush.msra.mxu0 %v2773
    %2820 = vmatpush.msra.mxu0 %v2769
    %2821 = vmatpush.msra.mxu0 %v2765
    %2822 = vmatmul.f32.gmra.mxu0 %v2784
    %v2823 = vpop.f32.mrf.mxu0
    %v2824 = vadd.f32 0.0, %v2823
    %2825 = vdwg.mxu0
    %2826 = vmatpush.msra.mxu0 0.0
    %2827 = vmatpush.msra.mxu0 0.0
    %2828 = vmatpush.msra.mxu0 0.0
    %2829 = vmatpush.msra.mxu0 0.0
    %2830 = vmatpush.msra.mxu0 0.0
    %2831 = vmatpush.msra.mxu0 0.0
    %2832 = vmatpush.msra.mxu0 0.0
    %2833 = vmatpush.msra.mxu0 0.0
    %2834 = vmatpush.msra.mxu0 0.0
    %2835 = vmatpush.msra.mxu0 0.0
    %2836 = vmatpush.msra.mxu0 0.0
    %2837 = vmatpush.msra.mxu0 0.0
    %2838 = vmatpush.msra.mxu0 %v2778
    %2839 = vmatpush.msra.mxu0 %v2774
    %2840 = vmatpush.msra.mxu0 %v2770
    %2841 = vmatpush.msra.mxu0 %v2766
    %2842 = vmatmul.f32.gmra.mxu0 %v2784
    %v2843 = vpop.f32.mrf.mxu0
    %v2844 = vadd.f32 0.0, %v2843
    %2845 = vdwg.mxu0
    %2846 = vmatpush.msra.mxu0 0.0
    %2847 = vmatpush.msra.mxu0 0.0
    %2848 = vmatpush.msra.mxu0 0.0
    %2849 = vmatpush.msra.mxu0 0.0
    %2850 = vmatpush.msra.mxu0 0.0
    %2851 = vmatpush.msra.mxu0 0.0
    %2852 = vmatpush.msra.mxu0 0.0
    %2853 = vmatpush.msra.mxu0 0.0
    %2854 = vmatpush.msra.mxu0 0.0
    %2855 = vmatpush.msra.mxu0 0.0
    %2856 = vmatpush.msra.mxu0 0.0
    %2857 = vmatpush.msra.mxu0 0.0
    %2858 = vmatpush.msra.mxu0 %v2779
    %2859 = vmatpush.msra.mxu0 %v2775
    %2860 = vmatpush.msra.mxu0 %v2771
    %2861 = vmatpush.msra.mxu0 %v2767
    %2862 = vmatmul.f32.gmra.mxu0 %v2784
    %v2863 = vpop.f32.mrf.mxu0
    %v2864 = vadd.f32 0.0, %v2863
    %2865 = vdwg.mxu0
    %v2867 = vsel %vm142, %v2781, 0
    %2869 = vmatpush.msra.mxu0 0.0
    %2870 = vmatpush.msra.mxu0 0.0
    %2871 = vmatpush.msra.mxu0 0.0
    %2872 = vmatpush.msra.mxu0 0.0
    %2873 = vmatpush.msra.mxu0 0.0
    %2874 = vmatpush.msra.mxu0 0.0
    %2875 = vmatpush.msra.mxu0 0.0
    %2876 = vmatpush.msra.mxu0 0.0
    %2877 = vmatpush.msra.mxu0 0.0
    %2878 = vmatpush.msra.mxu0 0.0
    %2879 = vmatpush.msra.mxu0 0.0
    %2880 = vmatpush.msra.mxu0 0.0
    %2881 = vmatpush.msra.mxu0 %v2760
    %2882 = vmatpush.msra.mxu0 %v2756
    %2883 = vmatpush.msra.mxu0 %v2752
    %2884 = vmatpush.msra.mxu0 %v2748
    %2885 = vmatmul.f32.gmra.mxu0 %v2867
    %v2886 = vpop.f32.mrf.mxu0
    %v2887 = vadd.f32 %v2804, %v2886
    %2888 = vdwg.mxu0
    %2889 = vmatpush.msra.mxu0 0.0
    %2890 = vmatpush.msra.mxu0 0.0
    %2891 = vmatpush.msra.mxu0 0.0
    %2892 = vmatpush.msra.mxu0 0.0
    %2893 = vmatpush.msra.mxu0 0.0
    %2894 = vmatpush.msra.mxu0 0.0
    %2895 = vmatpush.msra.mxu0 0.0
    %2896 = vmatpush.msra.mxu0 0.0
    %2897 = vmatpush.msra.mxu0 0.0
    %2898 = vmatpush.msra.mxu0 0.0
    %2899 = vmatpush.msra.mxu0 0.0
    %2900 = vmatpush.msra.mxu0 0.0
    %2901 = vmatpush.msra.mxu0 %v2761
    %2902 = vmatpush.msra.mxu0 %v2757
    %2903 = vmatpush.msra.mxu0 %v2753
    %2904 = vmatpush.msra.mxu0 %v2749
    %2905 = vmatmul.f32.gmra.mxu0 %v2867
    %v2906 = vpop.f32.mrf.mxu0
    %v2907 = vadd.f32 %v2824, %v2906
    %2908 = vdwg.mxu0
    %2909 = vmatpush.msra.mxu0 0.0
    %2910 = vmatpush.msra.mxu0 0.0
    %2911 = vmatpush.msra.mxu0 0.0
    %2912 = vmatpush.msra.mxu0 0.0
    %2913 = vmatpush.msra.mxu0 0.0
    %2914 = vmatpush.msra.mxu0 0.0
    %2915 = vmatpush.msra.mxu0 0.0
    %2916 = vmatpush.msra.mxu0 0.0
    %2917 = vmatpush.msra.mxu0 0.0
    %2918 = vmatpush.msra.mxu0 0.0
    %2919 = vmatpush.msra.mxu0 0.0
    %2920 = vmatpush.msra.mxu0 0.0
    %2921 = vmatpush.msra.mxu0 %v2762
    %2922 = vmatpush.msra.mxu0 %v2758
    %2923 = vmatpush.msra.mxu0 %v2754
    %2924 = vmatpush.msra.mxu0 %v2750
    %2925 = vmatmul.f32.gmra.mxu0 %v2867
    %v2926 = vpop.f32.mrf.mxu0
    %v2927 = vadd.f32 %v2844, %v2926
    %2928 = vdwg.mxu0
    %2929 = vmatpush.msra.mxu0 0.0
    %2930 = vmatpush.msra.mxu0 0.0
    %2931 = vmatpush.msra.mxu0 0.0
    %2932 = vmatpush.msra.mxu0 0.0
    %2933 = vmatpush.msra.mxu0 0.0
    %2934 = vmatpush.msra.mxu0 0.0
    %2935 = vmatpush.msra.mxu0 0.0
    %2936 = vmatpush.msra.mxu0 0.0
    %2937 = vmatpush.msra.mxu0 0.0
    %2938 = vmatpush.msra.mxu0 0.0
    %2939 = vmatpush.msra.mxu0 0.0
    %2940 = vmatpush.msra.mxu0 0.0
    %2941 = vmatpush.msra.mxu0 %v2763
    %2942 = vmatpush.msra.mxu0 %v2759
    %2943 = vmatpush.msra.mxu0 %v2755
    %2944 = vmatpush.msra.mxu0 %v2751
    %2945 = vmatmul.f32.gmra.mxu0 %v2867
    %v2946 = vpop.f32.mrf.mxu0
    %v2947 = vadd.f32 %v2864, %v2946
    %2948 = vdwg.mxu0
    %v2950 = vperm.slane %v2780, 0
    %v2951 = vperm.slane %v2780, 1
    %v2952 = vperm.slane %v2780, 2
    %v2953 = vperm.slane %v2780, 3
    %v2958 = vadd.f32 %v2887, %v2950
    %v2959 = vadd.f32 %v2907, %v2951
    %v2960 = vadd.f32 %v2927, %v2952
    %v2961 = vadd.f32 %v2947, %v2953
    %v2966 = vrot.slane %v2959, 6
    %v2967 = vrot.slane %v2960, 4
    %v2968 = vrot.slane %v2961, 2
    %v2969 = vsel %vm233, %v2958, %v2966
    %v2970 = vsel %vm235, %v2967, %v2968
    %v2971 = vsel %vm237, %v2969, %v2970
    %2973 = vst [vmem:[#allocation2] sm:$0xff] %v2971
    %v2974 = vld [vmem:[%s2040] sm:$0x3]
    %v2975 = vld [vmem:[%s2630] sm:$0x3]
    %v2977 = vsel %vm142, %v2975, 0
    %2979 = vmatpush.msra.mxu0 0.0
    %2980 = vmatpush.msra.mxu0 0.0
    %2981 = vmatpush.msra.mxu0 0.0
    %2982 = vmatpush.msra.mxu0 0.0
    %2983 = vmatpush.msra.mxu0 0.0
    %2984 = vmatpush.msra.mxu0 0.0
    %2985 = vmatpush.msra.mxu0 0.0
    %2986 = vmatpush.msra.mxu0 0.0
    %2987 = vmatpush.msra.mxu0 0.0
    %2988 = vmatpush.msra.mxu0 0.0
    %2989 = vmatpush.msra.mxu0 0.0
    %2990 = vmatpush.msra.mxu0 0.0
    %2991 = vmatpush.msra.mxu0 %v2776
    %2992 = vmatpush.msra.mxu0 %v2772
    %2993 = vmatpush.msra.mxu0 %v2768
    %2994 = vmatpush.msra.mxu0 %v2764
    %2995 = vmatmul.f32.gmra.mxu0 %v2977
    %v2996 = vpop.f32.mrf.mxu0
    %v2997 = vadd.f32 0.0, %v2996
    %2998 = vdwg.mxu0
    %2999 = vmatpush.msra.mxu0 0.0
    %3000 = vmatpush.msra.mxu0 0.0
    %3001 = vmatpush.msra.mxu0 0.0
    %3002 = vmatpush.msra.mxu0 0.0
    %3003 = vmatpush.msra.mxu0 0.0
    %3004 = vmatpush.msra.mxu0 0.0
    %3005 = vmatpush.msra.mxu0 0.0
    %3006 = vmatpush.msra.mxu0 0.0
    %3007 = vmatpush.msra.mxu0 0.0
    %3008 = vmatpush.msra.mxu0 0.0
    %3009 = vmatpush.msra.mxu0 0.0
    %3010 = vmatpush.msra.mxu0 0.0
    %3011 = vmatpush.msra.mxu0 %v2777
    %3012 = vmatpush.msra.mxu0 %v2773
    %3013 = vmatpush.msra.mxu0 %v2769
    %3014 = vmatpush.msra.mxu0 %v2765
    %3015 = vmatmul.f32.gmra.mxu0 %v2977
    %v3016 = vpop.f32.mrf.mxu0
    %v3017 = vadd.f32 0.0, %v3016
    %3018 = vdwg.mxu0
    %3019 = vmatpush.msra.mxu0 0.0
    %3020 = vmatpush.msra.mxu0 0.0
    %3021 = vmatpush.msra.mxu0 0.0
    %3022 = vmatpush.msra.mxu0 0.0
    %3023 = vmatpush.msra.mxu0 0.0
    %3024 = vmatpush.msra.mxu0 0.0
    %3025 = vmatpush.msra.mxu0 0.0
    %3026 = vmatpush.msra.mxu0 0.0
    %3027 = vmatpush.msra.mxu0 0.0
    %3028 = vmatpush.msra.mxu0 0.0
    %3029 = vmatpush.msra.mxu0 0.0
    %3030 = vmatpush.msra.mxu0 0.0
    %3031 = vmatpush.msra.mxu0 %v2778
    %3032 = vmatpush.msra.mxu0 %v2774
    %3033 = vmatpush.msra.mxu0 %v2770
    %3034 = vmatpush.msra.mxu0 %v2766
    %3035 = vmatmul.f32.gmra.mxu0 %v2977
    %v3036 = vpop.f32.mrf.mxu0
    %v3037 = vadd.f32 0.0, %v3036
    %3038 = vdwg.mxu0
    %3039 = vmatpush.msra.mxu0 0.0
    %3040 = vmatpush.msra.mxu0 0.0
    %3041 = vmatpush.msra.mxu0 0.0
    %3042 = vmatpush.msra.mxu0 0.0
    %3043 = vmatpush.msra.mxu0 0.0
    %3044 = vmatpush.msra.mxu0 0.0
    %3045 = vmatpush.msra.mxu0 0.0
    %3046 = vmatpush.msra.mxu0 0.0
    %3047 = vmatpush.msra.mxu0 0.0
    %3048 = vmatpush.msra.mxu0 0.0
    %3049 = vmatpush.msra.mxu0 0.0
    %3050 = vmatpush.msra.mxu0 0.0
    %3051 = vmatpush.msra.mxu0 %v2779
    %3052 = vmatpush.msra.mxu0 %v2775
    %3053 = vmatpush.msra.mxu0 %v2771
    %3054 = vmatpush.msra.mxu0 %v2767
    %3055 = vmatmul.f32.gmra.mxu0 %v2977
    %v3056 = vpop.f32.mrf.mxu0
    %v3057 = vadd.f32 0.0, %v3056
    %3058 = vdwg.mxu0
    %v3060 = vsel %vm142, %v2974, 0
    %3062 = vmatpush.msra.mxu0 0.0
    %3063 = vmatpush.msra.mxu0 0.0
    %3064 = vmatpush.msra.mxu0 0.0
    %3065 = vmatpush.msra.mxu0 0.0
    %3066 = vmatpush.msra.mxu0 0.0
    %3067 = vmatpush.msra.mxu0 0.0
    %3068 = vmatpush.msra.mxu0 0.0
    %3069 = vmatpush.msra.mxu0 0.0
    %3070 = vmatpush.msra.mxu0 0.0
    %3071 = vmatpush.msra.mxu0 0.0
    %3072 = vmatpush.msra.mxu0 0.0
    %3073 = vmatpush.msra.mxu0 0.0
    %3074 = vmatpush.msra.mxu0 %v2760
    %3075 = vmatpush.msra.mxu0 %v2756
    %3076 = vmatpush.msra.mxu0 %v2752
    %3077 = vmatpush.msra.mxu0 %v2748
    %3078 = vmatmul.f32.gmra.mxu0 %v3060
    %v3079 = vpop.f32.mrf.mxu0
    %v3080 = vadd.f32 %v2997, %v3079
    %3081 = vdwg.mxu0
    %3082 = vmatpush.msra.mxu0 0.0
    %3083 = vmatpush.msra.mxu0 0.0
    %3084 = vmatpush.msra.mxu0 0.0
    %3085 = vmatpush.msra.mxu0 0.0
    %3086 = vmatpush.msra.mxu0 0.0
    %3087 = vmatpush.msra.mxu0 0.0
    %3088 = vmatpush.msra.mxu0 0.0
    %3089 = vmatpush.msra.mxu0 0.0
    %3090 = vmatpush.msra.mxu0 0.0
    %3091 = vmatpush.msra.mxu0 0.0
    %3092 = vmatpush.msra.mxu0 0.0
    %3093 = vmatpush.msra.mxu0 0.0
    %3094 = vmatpush.msra.mxu0 %v2761
    %3095 = vmatpush.msra.mxu0 %v2757
    %3096 = vmatpush.msra.mxu0 %v2753
    %3097 = vmatpush.msra.mxu0 %v2749
    %3098 = vmatmul.f32.gmra.mxu0 %v3060
    %v3099 = vpop.f32.mrf.mxu0
    %v3100 = vadd.f32 %v3017, %v3099
    %3101 = vdwg.mxu0
    %3102 = vmatpush.msra.mxu0 0.0
    %3103 = vmatpush.msra.mxu0 0.0
    %3104 = vmatpush.msra.mxu0 0.0
    %3105 = vmatpush.msra.mxu0 0.0
    %3106 = vmatpush.msra.mxu0 0.0
    %3107 = vmatpush.msra.mxu0 0.0
    %3108 = vmatpush.msra.mxu0 0.0
    %3109 = vmatpush.msra.mxu0 0.0
    %3110 = vmatpush.msra.mxu0 0.0
    %3111 = vmatpush.msra.mxu0 0.0
    %3112 = vmatpush.msra.mxu0 0.0
    %3113 = vmatpush.msra.mxu0 0.0
    %3114 = vmatpush.msra.mxu0 %v2762
    %3115 = vmatpush.msra.mxu0 %v2758
    %3116 = vmatpush.msra.mxu0 %v2754
    %3117 = vmatpush.msra.mxu0 %v2750
    %3118 = vmatmul.f32.gmra.mxu0 %v3060
    %v3119 = vpop.f32.mrf.mxu0
    %v3120 = vadd.f32 %v3037, %v3119
    %3121 = vdwg.mxu0
    %3122 = vmatpush.msra.mxu0 0.0
    %3123 = vmatpush.msra.mxu0 0.0
    %3124 = vmatpush.msra.mxu0 0.0
    %3125 = vmatpush.msra.mxu0 0.0
    %3126 = vmatpush.msra.mxu0 0.0
    %3127 = vmatpush.msra.mxu0 0.0
    %3128 = vmatpush.msra.mxu0 0.0
    %3129 = vmatpush.msra.mxu0 0.0
    %3130 = vmatpush.msra.mxu0 0.0
    %3131 = vmatpush.msra.mxu0 0.0
    %3132 = vmatpush.msra.mxu0 0.0
    %3133 = vmatpush.msra.mxu0 0.0
    %3134 = vmatpush.msra.mxu0 %v2763
    %3135 = vmatpush.msra.mxu0 %v2759
    %3136 = vmatpush.msra.mxu0 %v2755
    %3137 = vmatpush.msra.mxu0 %v2751
    %3138 = vmatmul.f32.gmra.mxu0 %v3060
    %v3139 = vpop.f32.mrf.mxu0
    %v3140 = vadd.f32 %v3057, %v3139
    %3141 = vdwg.mxu0
    %v3142 = vadd.f32 %v3080, %v2950
    %v3143 = vadd.f32 %v3100, %v2951
    %v3144 = vadd.f32 %v3120, %v2952
    %v3145 = vadd.f32 %v3140, %v2953
    %v3150 = vrot.slane %v3143, 6
    %v3151 = vrot.slane %v3144, 4
    %v3152 = vrot.slane %v3145, 2
    %v3153 = vsel %vm233, %v3142, %v3150
    %v3154 = vsel %vm235, %v3151, %v3152
    %v3155 = vsel %vm237, %v3153, %v3154
    %3157 = vst [vmem:[%s337] sm:$0xff] %v3155
    %v3158 = vld [vmem:[%s2157] sm:$0x3]
    %v3159 = vld [vmem:[%s2513] sm:$0x3]
    %v3161 = vsel %vm142, %v3159, 0
    %3163 = vmatpush.msra.mxu0 0.0
    %3164 = vmatpush.msra.mxu0 0.0
    %3165 = vmatpush.msra.mxu0 0.0
    %3166 = vmatpush.msra.mxu0 0.0
    %3167 = vmatpush.msra.mxu0 0.0
    %3168 = vmatpush.msra.mxu0 0.0
    %3169 = vmatpush.msra.mxu0 0.0
    %3170 = vmatpush.msra.mxu0 0.0
    %3171 = vmatpush.msra.mxu0 0.0
    %3172 = vmatpush.msra.mxu0 0.0
    %3173 = vmatpush.msra.mxu0 0.0
    %3174 = vmatpush.msra.mxu0 0.0
    %3175 = vmatpush.msra.mxu0 %v2776
    %3176 = vmatpush.msra.mxu0 %v2772
    %3177 = vmatpush.msra.mxu0 %v2768
    %3178 = vmatpush.msra.mxu0 %v2764
    %3179 = vmatmul.f32.gmra.mxu0 %v3161
    %v3180 = vpop.f32.mrf.mxu0
    %v3181 = vadd.f32 0.0, %v3180
    %3182 = vdwg.mxu0
    %3183 = vmatpush.msra.mxu0 0.0
    %3184 = vmatpush.msra.mxu0 0.0
    %3185 = vmatpush.msra.mxu0 0.0
    %3186 = vmatpush.msra.mxu0 0.0
    %3187 = vmatpush.msra.mxu0 0.0
    %3188 = vmatpush.msra.mxu0 0.0
    %3189 = vmatpush.msra.mxu0 0.0
    %3190 = vmatpush.msra.mxu0 0.0
    %3191 = vmatpush.msra.mxu0 0.0
    %3192 = vmatpush.msra.mxu0 0.0
    %3193 = vmatpush.msra.mxu0 0.0
    %3194 = vmatpush.msra.mxu0 0.0
    %3195 = vmatpush.msra.mxu0 %v2777
    %3196 = vmatpush.msra.mxu0 %v2773
    %3197 = vmatpush.msra.mxu0 %v2769
    %3198 = vmatpush.msra.mxu0 %v2765
    %3199 = vmatmul.f32.gmra.mxu0 %v3161
    %v3200 = vpop.f32.mrf.mxu0
    %v3201 = vadd.f32 0.0, %v3200
    %3202 = vdwg.mxu0
    %3203 = vmatpush.msra.mxu0 0.0
    %3204 = vmatpush.msra.mxu0 0.0
    %3205 = vmatpush.msra.mxu0 0.0
    %3206 = vmatpush.msra.mxu0 0.0
    %3207 = vmatpush.msra.mxu0 0.0
    %3208 = vmatpush.msra.mxu0 0.0
    %3209 = vmatpush.msra.mxu0 0.0
    %3210 = vmatpush.msra.mxu0 0.0
    %3211 = vmatpush.msra.mxu0 0.0
    %3212 = vmatpush.msra.mxu0 0.0
    %3213 = vmatpush.msra.mxu0 0.0
    %3214 = vmatpush.msra.mxu0 0.0
    %3215 = vmatpush.msra.mxu0 %v2778
    %3216 = vmatpush.msra.mxu0 %v2774
    %3217 = vmatpush.msra.mxu0 %v2770
    %3218 = vmatpush.msra.mxu0 %v2766
    %3219 = vmatmul.f32.gmra.mxu0 %v3161
    %v3220 = vpop.f32.mrf.mxu0
    %v3221 = vadd.f32 0.0, %v3220
    %3222 = vdwg.mxu0
    %3223 = vmatpush.msra.mxu0 0.0
    %3224 = vmatpush.msra.mxu0 0.0
    %3225 = vmatpush.msra.mxu0 0.0
    %3226 = vmatpush.msra.mxu0 0.0
    %3227 = vmatpush.msra.mxu0 0.0
    %3228 = vmatpush.msra.mxu0 0.0
    %3229 = vmatpush.msra.mxu0 0.0
    %3230 = vmatpush.msra.mxu0 0.0
    %3231 = vmatpush.msra.mxu0 0.0
    %3232 = vmatpush.msra.mxu0 0.0
    %3233 = vmatpush.msra.mxu0 0.0
    %3234 = vmatpush.msra.mxu0 0.0
    %3235 = vmatpush.msra.mxu0 %v2779
    %3236 = vmatpush.msra.mxu0 %v2775
    %3237 = vmatpush.msra.mxu0 %v2771
    %3238 = vmatpush.msra.mxu0 %v2767
    %3239 = vmatmul.f32.gmra.mxu0 %v3161
    %v3240 = vpop.f32.mrf.mxu0
    %v3241 = vadd.f32 0.0, %v3240
    %3242 = vdwg.mxu0
    %v3244 = vsel %vm142, %v3158, 0
    %3246 = vmatpush.msra.mxu0 0.0
    %3247 = vmatpush.msra.mxu0 0.0
    %3248 = vmatpush.msra.mxu0 0.0
    %3249 = vmatpush.msra.mxu0 0.0
    %3250 = vmatpush.msra.mxu0 0.0
    %3251 = vmatpush.msra.mxu0 0.0
    %3252 = vmatpush.msra.mxu0 0.0
    %3253 = vmatpush.msra.mxu0 0.0
    %3254 = vmatpush.msra.mxu0 0.0
    %3255 = vmatpush.msra.mxu0 0.0
    %3256 = vmatpush.msra.mxu0 0.0
    %3257 = vmatpush.msra.mxu0 0.0
    %3258 = vmatpush.msra.mxu0 %v2760
    %3259 = vmatpush.msra.mxu0 %v2756
    %3260 = vmatpush.msra.mxu0 %v2752
    %3261 = vmatpush.msra.mxu0 %v2748
    %3262 = vmatmul.f32.gmra.mxu0 %v3244
    %v3263 = vpop.f32.mrf.mxu0
    %v3264 = vadd.f32 %v3181, %v3263
    %3265 = vdwg.mxu0
    %3266 = vmatpush.msra.mxu0 0.0
    %3267 = vmatpush.msra.mxu0 0.0
    %3268 = vmatpush.msra.mxu0 0.0
    %3269 = vmatpush.msra.mxu0 0.0
    %3270 = vmatpush.msra.mxu0 0.0
    %3271 = vmatpush.msra.mxu0 0.0
    %3272 = vmatpush.msra.mxu0 0.0
    %3273 = vmatpush.msra.mxu0 0.0
    %3274 = vmatpush.msra.mxu0 0.0
    %3275 = vmatpush.msra.mxu0 0.0
    %3276 = vmatpush.msra.mxu0 0.0
    %3277 = vmatpush.msra.mxu0 0.0
    %3278 = vmatpush.msra.mxu0 %v2761
    %3279 = vmatpush.msra.mxu0 %v2757
    %3280 = vmatpush.msra.mxu0 %v2753
    %3281 = vmatpush.msra.mxu0 %v2749
    %3282 = vmatmul.f32.gmra.mxu0 %v3244
    %v3283 = vpop.f32.mrf.mxu0
    %v3284 = vadd.f32 %v3201, %v3283
    %3285 = vdwg.mxu0
    %3286 = vmatpush.msra.mxu0 0.0
    %3287 = vmatpush.msra.mxu0 0.0
    %3288 = vmatpush.msra.mxu0 0.0
    %3289 = vmatpush.msra.mxu0 0.0
    %3290 = vmatpush.msra.mxu0 0.0
    %3291 = vmatpush.msra.mxu0 0.0
    %3292 = vmatpush.msra.mxu0 0.0
    %3293 = vmatpush.msra.mxu0 0.0
    %3294 = vmatpush.msra.mxu0 0.0
    %3295 = vmatpush.msra.mxu0 0.0
    %3296 = vmatpush.msra.mxu0 0.0
    %3297 = vmatpush.msra.mxu0 0.0
    %3298 = vmatpush.msra.mxu0 %v2762
    %3299 = vmatpush.msra.mxu0 %v2758
    %3300 = vmatpush.msra.mxu0 %v2754
    %3301 = vmatpush.msra.mxu0 %v2750
    %3302 = vmatmul.f32.gmra.mxu0 %v3244
    %v3303 = vpop.f32.mrf.mxu0
    %v3304 = vadd.f32 %v3221, %v3303
    %3305 = vdwg.mxu0
    %3306 = vmatpush.msra.mxu0 0.0
    %3307 = vmatpush.msra.mxu0 0.0
    %3308 = vmatpush.msra.mxu0 0.0
    %3309 = vmatpush.msra.mxu0 0.0
    %3310 = vmatpush.msra.mxu0 0.0
    %3311 = vmatpush.msra.mxu0 0.0
    %3312 = vmatpush.msra.mxu0 0.0
    %3313 = vmatpush.msra.mxu0 0.0
    %3314 = vmatpush.msra.mxu0 0.0
    %3315 = vmatpush.msra.mxu0 0.0
    %3316 = vmatpush.msra.mxu0 0.0
    %3317 = vmatpush.msra.mxu0 0.0
    %3318 = vmatpush.msra.mxu0 %v2763
    %3319 = vmatpush.msra.mxu0 %v2759
    %3320 = vmatpush.msra.mxu0 %v2755
    %3321 = vmatpush.msra.mxu0 %v2751
    %3322 = vmatmul.f32.gmra.mxu0 %v3244
    %v3323 = vpop.f32.mrf.mxu0
    %v3324 = vadd.f32 %v3241, %v3323
    %3325 = vdwg.mxu0
    %v3326 = vadd.f32 %v3264, %v2950
    %v3327 = vadd.f32 %v3284, %v2951
    %v3328 = vadd.f32 %v3304, %v2952
    %v3329 = vadd.f32 %v3324, %v2953
    %v3334 = vrot.slane %v3327, 6
    %v3335 = vrot.slane %v3328, 4
    %v3336 = vrot.slane %v3329, 2
    %v3337 = vsel %vm233, %v3326, %v3334
    %v3338 = vsel %vm235, %v3335, %v3336
    %v3339 = vsel %vm237, %v3337, %v3338
    %3341 = vst [vmem:[%s435] sm:$0xff] %v3339
    %v3342 = vld [vmem:[%s2274] sm:$0x3]
    %v3343 = vld [vmem:[%s2396] sm:$0x3]
    %v3345 = vsel %vm142, %v3343, 0
    %3347 = vmatpush.msra.mxu0 0.0
    %3348 = vmatpush.msra.mxu0 0.0
    %3349 = vmatpush.msra.mxu0 0.0
    %3350 = vmatpush.msra.mxu0 0.0
    %3351 = vmatpush.msra.mxu0 0.0
    %3352 = vmatpush.msra.mxu0 0.0
    %3353 = vmatpush.msra.mxu0 0.0
    %3354 = vmatpush.msra.mxu0 0.0
    %3355 = vmatpush.msra.mxu0 0.0
    %3356 = vmatpush.msra.mxu0 0.0
    %3357 = vmatpush.msra.mxu0 0.0
    %3358 = vmatpush.msra.mxu0 0.0
    %3359 = vmatpush.msra.mxu0 %v2776
    %3360 = vmatpush.msra.mxu0 %v2772
    %3361 = vmatpush.msra.mxu0 %v2768
    %3362 = vmatpush.msra.mxu0 %v2764
    %3363 = vmatmul.f32.gmra.mxu0 %v3345
    %v3364 = vpop.f32.mrf.mxu0
    %v3365 = vadd.f32 0.0, %v3364
    %3366 = vdwg.mxu0
    %3367 = vmatpush.msra.mxu0 0.0
    %3368 = vmatpush.msra.mxu0 0.0
    %3369 = vmatpush.msra.mxu0 0.0
    %3370 = vmatpush.msra.mxu0 0.0
    %3371 = vmatpush.msra.mxu0 0.0
    %3372 = vmatpush.msra.mxu0 0.0
    %3373 = vmatpush.msra.mxu0 0.0
    %3374 = vmatpush.msra.mxu0 0.0
    %3375 = vmatpush.msra.mxu0 0.0
    %3376 = vmatpush.msra.mxu0 0.0
    %3377 = vmatpush.msra.mxu0 0.0
    %3378 = vmatpush.msra.mxu0 0.0
    %3379 = vmatpush.msra.mxu0 %v2777
    %3380 = vmatpush.msra.mxu0 %v2773
    %3381 = vmatpush.msra.mxu0 %v2769
    %3382 = vmatpush.msra.mxu0 %v2765
    %3383 = vmatmul.f32.gmra.mxu0 %v3345
    %v3384 = vpop.f32.mrf.mxu0
    %v3385 = vadd.f32 0.0, %v3384
    %3386 = vdwg.mxu0
    %3387 = vmatpush.msra.mxu0 0.0
    %3388 = vmatpush.msra.mxu0 0.0
    %3389 = vmatpush.msra.mxu0 0.0
    %3390 = vmatpush.msra.mxu0 0.0
    %3391 = vmatpush.msra.mxu0 0.0
    %3392 = vmatpush.msra.mxu0 0.0
    %3393 = vmatpush.msra.mxu0 0.0
    %3394 = vmatpush.msra.mxu0 0.0
    %3395 = vmatpush.msra.mxu0 0.0
    %3396 = vmatpush.msra.mxu0 0.0
    %3397 = vmatpush.msra.mxu0 0.0
    %3398 = vmatpush.msra.mxu0 0.0
    %3399 = vmatpush.msra.mxu0 %v2778
    %3400 = vmatpush.msra.mxu0 %v2774
    %3401 = vmatpush.msra.mxu0 %v2770
    %3402 = vmatpush.msra.mxu0 %v2766
    %3403 = vmatmul.f32.gmra.mxu0 %v3345
    %v3404 = vpop.f32.mrf.mxu0
    %v3405 = vadd.f32 0.0, %v3404
    %3406 = vdwg.mxu0
    %3407 = vmatpush.msra.mxu0 0.0
    %3408 = vmatpush.msra.mxu0 0.0
    %3409 = vmatpush.msra.mxu0 0.0
    %3410 = vmatpush.msra.mxu0 0.0
    %3411 = vmatpush.msra.mxu0 0.0
    %3412 = vmatpush.msra.mxu0 0.0
    %3413 = vmatpush.msra.mxu0 0.0
    %3414 = vmatpush.msra.mxu0 0.0
    %3415 = vmatpush.msra.mxu0 0.0
    %3416 = vmatpush.msra.mxu0 0.0
    %3417 = vmatpush.msra.mxu0 0.0
    %3418 = vmatpush.msra.mxu0 0.0
    %3419 = vmatpush.msra.mxu0 %v2779
    %3420 = vmatpush.msra.mxu0 %v2775
    %3421 = vmatpush.msra.mxu0 %v2771
    %3422 = vmatpush.msra.mxu0 %v2767
    %3423 = vmatmul.f32.gmra.mxu0 %v3345
    %v3424 = vpop.f32.mrf.mxu0
    %v3425 = vadd.f32 0.0, %v3424
    %3426 = vdwg.mxu0
    %v3428 = vsel %vm142, %v3342, 0
    %3430 = vmatpush.msra.mxu0 0.0
    %3431 = vmatpush.msra.mxu0 0.0
    %3432 = vmatpush.msra.mxu0 0.0
    %3433 = vmatpush.msra.mxu0 0.0
    %3434 = vmatpush.msra.mxu0 0.0
    %3435 = vmatpush.msra.mxu0 0.0
    %3436 = vmatpush.msra.mxu0 0.0
    %3437 = vmatpush.msra.mxu0 0.0
    %3438 = vmatpush.msra.mxu0 0.0
    %3439 = vmatpush.msra.mxu0 0.0
    %3440 = vmatpush.msra.mxu0 0.0
    %3441 = vmatpush.msra.mxu0 0.0
    %3442 = vmatpush.msra.mxu0 %v2760
    %3443 = vmatpush.msra.mxu0 %v2756
    %3444 = vmatpush.msra.mxu0 %v2752
    %3445 = vmatpush.msra.mxu0 %v2748
    %3446 = vmatmul.f32.gmra.mxu0 %v3428
    %v3447 = vpop.f32.mrf.mxu0
    %v3448 = vadd.f32 %v3365, %v3447
    %3449 = vdwg.mxu0
    %3450 = vmatpush.msra.mxu0 0.0
    %3451 = vmatpush.msra.mxu0 0.0
    %3452 = vmatpush.msra.mxu0 0.0
    %3453 = vmatpush.msra.mxu0 0.0
    %3454 = vmatpush.msra.mxu0 0.0
    %3455 = vmatpush.msra.mxu0 0.0
    %3456 = vmatpush.msra.mxu0 0.0
    %3457 = vmatpush.msra.mxu0 0.0
    %3458 = vmatpush.msra.mxu0 0.0
    %3459 = vmatpush.msra.mxu0 0.0
    %3460 = vmatpush.msra.mxu0 0.0
    %3461 = vmatpush.msra.mxu0 0.0
    %3462 = vmatpush.msra.mxu0 %v2761
    %3463 = vmatpush.msra.mxu0 %v2757
    %3464 = vmatpush.msra.mxu0 %v2753
    %3465 = vmatpush.msra.mxu0 %v2749
    %3466 = vmatmul.f32.gmra.mxu0 %v3428
    %v3467 = vpop.f32.mrf.mxu0
    %v3468 = vadd.f32 %v3385, %v3467
    %3469 = vdwg.mxu0
    %3470 = vmatpush.msra.mxu0 0.0
    %3471 = vmatpush.msra.mxu0 0.0
    %3472 = vmatpush.msra.mxu0 0.0
    %3473 = vmatpush.msra.mxu0 0.0
    %3474 = vmatpush.msra.mxu0 0.0
    %3475 = vmatpush.msra.mxu0 0.0
    %3476 = vmatpush.msra.mxu0 0.0
    %3477 = vmatpush.msra.mxu0 0.0
    %3478 = vmatpush.msra.mxu0 0.0
    %3479 = vmatpush.msra.mxu0 0.0
    %3480 = vmatpush.msra.mxu0 0.0
    %3481 = vmatpush.msra.mxu0 0.0
    %3482 = vmatpush.msra.mxu0 %v2762
    %3483 = vmatpush.msra.mxu0 %v2758
    %3484 = vmatpush.msra.mxu0 %v2754
    %3485 = vmatpush.msra.mxu0 %v2750
    %3486 = vmatmul.f32.gmra.mxu0 %v3428
    %v3487 = vpop.f32.mrf.mxu0
    %v3488 = vadd.f32 %v3405, %v3487
    %3489 = vdwg.mxu0
    %3490 = vmatpush.msra.mxu0 0.0
    %3491 = vmatpush.msra.mxu0 0.0
    %3492 = vmatpush.msra.mxu0 0.0
    %3493 = vmatpush.msra.mxu0 0.0
    %3494 = vmatpush.msra.mxu0 0.0
    %3495 = vmatpush.msra.mxu0 0.0
    %3496 = vmatpush.msra.mxu0 0.0
    %3497 = vmatpush.msra.mxu0 0.0
    %3498 = vmatpush.msra.mxu0 0.0
    %3499 = vmatpush.msra.mxu0 0.0
    %3500 = vmatpush.msra.mxu0 0.0
    %3501 = vmatpush.msra.mxu0 0.0
    %3502 = vmatpush.msra.mxu0 %v2763
    %3503 = vmatpush.msra.mxu0 %v2759
    %3504 = vmatpush.msra.mxu0 %v2755
    %3505 = vmatpush.msra.mxu0 %v2751
    %3506 = vmatmul.f32.gmra.mxu0 %v3428
    %v3507 = vpop.f32.mrf.mxu0
    %v3508 = vadd.f32 %v3425, %v3507
    %3509 = vdwg.mxu0
    %v3510 = vadd.f32 %v3448, %v2950
    %v3511 = vadd.f32 %v3468, %v2951
    %v3512 = vadd.f32 %v3488, %v2952
    %v3513 = vadd.f32 %v3508, %v2953
    %v3518 = vrot.slane %v3511, 6
    %v3519 = vrot.slane %v3512, 4
    %v3520 = vrot.slane %v3513, 2
    %v3521 = vsel %vm233, %v3510, %v3518
    %v3522 = vsel %vm235, %v3519, %v3520
    %v3523 = vsel %vm237, %v3521, %v3522
    %3525 = vst [vmem:[%s533] sm:$0xff] %v3523
    %v3526 = vld [vmem:[%s2391] sm:$0x3]
    %v3527 = vld [vmem:[%s2279] sm:$0x3]
    %v3529 = vsel %vm142, %v3527, 0
    %3531 = vmatpush.msra.mxu0 0.0
    %3532 = vmatpush.msra.mxu0 0.0
    %3533 = vmatpush.msra.mxu0 0.0
    %3534 = vmatpush.msra.mxu0 0.0
    %3535 = vmatpush.msra.mxu0 0.0
    %3536 = vmatpush.msra.mxu0 0.0
    %3537 = vmatpush.msra.mxu0 0.0
    %3538 = vmatpush.msra.mxu0 0.0
    %3539 = vmatpush.msra.mxu0 0.0
    %3540 = vmatpush.msra.mxu0 0.0
    %3541 = vmatpush.msra.mxu0 0.0
    %3542 = vmatpush.msra.mxu0 0.0
    %3543 = vmatpush.msra.mxu0 %v2776
    %3544 = vmatpush.msra.mxu0 %v2772
    %3545 = vmatpush.msra.mxu0 %v2768
    %3546 = vmatpush.msra.mxu0 %v2764
    %3547 = vmatmul.f32.gmra.mxu0 %v3529
    %v3548 = vpop.f32.mrf.mxu0
    %v3549 = vadd.f32 0.0, %v3548
    %3550 = vdwg.mxu0
    %3551 = vmatpush.msra.mxu0 0.0
    %3552 = vmatpush.msra.mxu0 0.0
    %3553 = vmatpush.msra.mxu0 0.0
    %3554 = vmatpush.msra.mxu0 0.0
    %3555 = vmatpush.msra.mxu0 0.0
    %3556 = vmatpush.msra.mxu0 0.0
    %3557 = vmatpush.msra.mxu0 0.0
    %3558 = vmatpush.msra.mxu0 0.0
    %3559 = vmatpush.msra.mxu0 0.0
    %3560 = vmatpush.msra.mxu0 0.0
    %3561 = vmatpush.msra.mxu0 0.0
    %3562 = vmatpush.msra.mxu0 0.0
    %3563 = vmatpush.msra.mxu0 %v2777
    %3564 = vmatpush.msra.mxu0 %v2773
    %3565 = vmatpush.msra.mxu0 %v2769
    %3566 = vmatpush.msra.mxu0 %v2765
    %3567 = vmatmul.f32.gmra.mxu0 %v3529
    %v3568 = vpop.f32.mrf.mxu0
    %v3569 = vadd.f32 0.0, %v3568
    %3570 = vdwg.mxu0
    %3571 = vmatpush.msra.mxu0 0.0
    %3572 = vmatpush.msra.mxu0 0.0
    %3573 = vmatpush.msra.mxu0 0.0
    %3574 = vmatpush.msra.mxu0 0.0
    %3575 = vmatpush.msra.mxu0 0.0
    %3576 = vmatpush.msra.mxu0 0.0
    %3577 = vmatpush.msra.mxu0 0.0
    %3578 = vmatpush.msra.mxu0 0.0
    %3579 = vmatpush.msra.mxu0 0.0
    %3580 = vmatpush.msra.mxu0 0.0
    %3581 = vmatpush.msra.mxu0 0.0
    %3582 = vmatpush.msra.mxu0 0.0
    %3583 = vmatpush.msra.mxu0 %v2778
    %3584 = vmatpush.msra.mxu0 %v2774
    %3585 = vmatpush.msra.mxu0 %v2770
    %3586 = vmatpush.msra.mxu0 %v2766
    %3587 = vmatmul.f32.gmra.mxu0 %v3529
    %v3588 = vpop.f32.mrf.mxu0
    %v3589 = vadd.f32 0.0, %v3588
    %3590 = vdwg.mxu0
    %3591 = vmatpush.msra.mxu0 0.0
    %3592 = vmatpush.msra.mxu0 0.0
    %3593 = vmatpush.msra.mxu0 0.0
    %3594 = vmatpush.msra.mxu0 0.0
    %3595 = vmatpush.msra.mxu0 0.0
    %3596 = vmatpush.msra.mxu0 0.0
    %3597 = vmatpush.msra.mxu0 0.0
    %3598 = vmatpush.msra.mxu0 0.0
    %3599 = vmatpush.msra.mxu0 0.0
    %3600 = vmatpush.msra.mxu0 0.0
    %3601 = vmatpush.msra.mxu0 0.0
    %3602 = vmatpush.msra.mxu0 0.0
    %3603 = vmatpush.msra.mxu0 %v2779
    %3604 = vmatpush.msra.mxu0 %v2775
    %3605 = vmatpush.msra.mxu0 %v2771
    %3606 = vmatpush.msra.mxu0 %v2767
    %3607 = vmatmul.f32.gmra.mxu0 %v3529
    %v3608 = vpop.f32.mrf.mxu0
    %v3609 = vadd.f32 0.0, %v3608
    %3610 = vdwg.mxu0
    %v3612 = vsel %vm142, %v3526, 0
    %3614 = vmatpush.msra.mxu0 0.0
    %3615 = vmatpush.msra.mxu0 0.0
    %3616 = vmatpush.msra.mxu0 0.0
    %3617 = vmatpush.msra.mxu0 0.0
    %3618 = vmatpush.msra.mxu0 0.0
    %3619 = vmatpush.msra.mxu0 0.0
    %3620 = vmatpush.msra.mxu0 0.0
    %3621 = vmatpush.msra.mxu0 0.0
    %3622 = vmatpush.msra.mxu0 0.0
    %3623 = vmatpush.msra.mxu0 0.0
    %3624 = vmatpush.msra.mxu0 0.0
    %3625 = vmatpush.msra.mxu0 0.0
    %3626 = vmatpush.msra.mxu0 %v2760
    %3627 = vmatpush.msra.mxu0 %v2756
    %3628 = vmatpush.msra.mxu0 %v2752
    %3629 = vmatpush.msra.mxu0 %v2748
    %3630 = vmatmul.f32.gmra.mxu0 %v3612
    %v3631 = vpop.f32.mrf.mxu0
    %v3632 = vadd.f32 %v3549, %v3631
    %3633 = vdwg.mxu0
    %3634 = vmatpush.msra.mxu0 0.0
    %3635 = vmatpush.msra.mxu0 0.0
    %3636 = vmatpush.msra.mxu0 0.0
    %3637 = vmatpush.msra.mxu0 0.0
    %3638 = vmatpush.msra.mxu0 0.0
    %3639 = vmatpush.msra.mxu0 0.0
    %3640 = vmatpush.msra.mxu0 0.0
    %3641 = vmatpush.msra.mxu0 0.0
    %3642 = vmatpush.msra.mxu0 0.0
    %3643 = vmatpush.msra.mxu0 0.0
    %3644 = vmatpush.msra.mxu0 0.0
    %3645 = vmatpush.msra.mxu0 0.0
    %3646 = vmatpush.msra.mxu0 %v2761
    %3647 = vmatpush.msra.mxu0 %v2757
    %3648 = vmatpush.msra.mxu0 %v2753
    %3649 = vmatpush.msra.mxu0 %v2749
    %3650 = vmatmul.f32.gmra.mxu0 %v3612
    %v3651 = vpop.f32.mrf.mxu0
    %v3652 = vadd.f32 %v3569, %v3651
    %3653 = vdwg.mxu0
    %3654 = vmatpush.msra.mxu0 0.0
    %3655 = vmatpush.msra.mxu0 0.0
    %3656 = vmatpush.msra.mxu0 0.0
    %3657 = vmatpush.msra.mxu0 0.0
    %3658 = vmatpush.msra.mxu0 0.0
    %3659 = vmatpush.msra.mxu0 0.0
    %3660 = vmatpush.msra.mxu0 0.0
    %3661 = vmatpush.msra.mxu0 0.0
    %3662 = vmatpush.msra.mxu0 0.0
    %3663 = vmatpush.msra.mxu0 0.0
    %3664 = vmatpush.msra.mxu0 0.0
    %3665 = vmatpush.msra.mxu0 0.0
    %3666 = vmatpush.msra.mxu0 %v2762
    %3667 = vmatpush.msra.mxu0 %v2758
    %3668 = vmatpush.msra.mxu0 %v2754
    %3669 = vmatpush.msra.mxu0 %v2750
    %3670 = vmatmul.f32.gmra.mxu0 %v3612
    %v3671 = vpop.f32.mrf.mxu0
    %v3672 = vadd.f32 %v3589, %v3671
    %3673 = vdwg.mxu0
    %3674 = vmatpush.msra.mxu0 0.0
    %3675 = vmatpush.msra.mxu0 0.0
    %3676 = vmatpush.msra.mxu0 0.0
    %3677 = vmatpush.msra.mxu0 0.0
    %3678 = vmatpush.msra.mxu0 0.0
    %3679 = vmatpush.msra.mxu0 0.0
    %3680 = vmatpush.msra.mxu0 0.0
    %3681 = vmatpush.msra.mxu0 0.0
    %3682 = vmatpush.msra.mxu0 0.0
    %3683 = vmatpush.msra.mxu0 0.0
    %3684 = vmatpush.msra.mxu0 0.0
    %3685 = vmatpush.msra.mxu0 0.0
    %3686 = vmatpush.msra.mxu0 %v2763
    %3687 = vmatpush.msra.mxu0 %v2759
    %3688 = vmatpush.msra.mxu0 %v2755
    %3689 = vmatpush.msra.mxu0 %v2751
    %3690 = vmatmul.f32.gmra.mxu0 %v3612
    %v3691 = vpop.f32.mrf.mxu0
    %v3692 = vadd.f32 %v3609, %v3691
    %3693 = vdwg.mxu0
    %v3694 = vadd.f32 %v3632, %v2950
    %v3695 = vadd.f32 %v3652, %v2951
    %v3696 = vadd.f32 %v3672, %v2952
    %v3697 = vadd.f32 %v3692, %v2953
    %v3702 = vrot.slane %v3695, 6
    %v3703 = vrot.slane %v3696, 4
    %v3704 = vrot.slane %v3697, 2
    %v3705 = vsel %vm233, %v3694, %v3702
    %v3706 = vsel %vm235, %v3703, %v3704
    %v3707 = vsel %vm237, %v3705, %v3706
    %3709 = vst [vmem:[%s1503] sm:$0xff] %v3707
    %v3710 = vld [vmem:[%s2508] sm:$0x3]
    %v3711 = vld [vmem:[%s2162] sm:$0x3]
    %v3713 = vsel %vm142, %v3711, 0
    %3715 = vmatpush.msra.mxu0 0.0
    %3716 = vmatpush.msra.mxu0 0.0
    %3717 = vmatpush.msra.mxu0 0.0
    %3718 = vmatpush.msra.mxu0 0.0
    %3719 = vmatpush.msra.mxu0 0.0
    %3720 = vmatpush.msra.mxu0 0.0
    %3721 = vmatpush.msra.mxu0 0.0
    %3722 = vmatpush.msra.mxu0 0.0
    %3723 = vmatpush.msra.mxu0 0.0
    %3724 = vmatpush.msra.mxu0 0.0
    %3725 = vmatpush.msra.mxu0 0.0
    %3726 = vmatpush.msra.mxu0 0.0
    %3727 = vmatpush.msra.mxu0 %v2776
    %3728 = vmatpush.msra.mxu0 %v2772
    %3729 = vmatpush.msra.mxu0 %v2768
    %3730 = vmatpush.msra.mxu0 %v2764
    %3731 = vmatmul.f32.gmra.mxu0 %v3713
    %v3732 = vpop.f32.mrf.mxu0
    %v3733 = vadd.f32 0.0, %v3732
    %3734 = vdwg.mxu0
    %3735 = vmatpush.msra.mxu0 0.0
    %3736 = vmatpush.msra.mxu0 0.0
    %3737 = vmatpush.msra.mxu0 0.0
    %3738 = vmatpush.msra.mxu0 0.0
    %3739 = vmatpush.msra.mxu0 0.0
    %3740 = vmatpush.msra.mxu0 0.0
    %3741 = vmatpush.msra.mxu0 0.0
    %3742 = vmatpush.msra.mxu0 0.0
    %3743 = vmatpush.msra.mxu0 0.0
    %3744 = vmatpush.msra.mxu0 0.0
    %3745 = vmatpush.msra.mxu0 0.0
    %3746 = vmatpush.msra.mxu0 0.0
    %3747 = vmatpush.msra.mxu0 %v2777
    %3748 = vmatpush.msra.mxu0 %v2773
    %3749 = vmatpush.msra.mxu0 %v2769
    %3750 = vmatpush.msra.mxu0 %v2765
    %3751 = vmatmul.f32.gmra.mxu0 %v3713
    %v3752 = vpop.f32.mrf.mxu0
    %v3753 = vadd.f32 0.0, %v3752
    %3754 = vdwg.mxu0
    %3755 = vmatpush.msra.mxu0 0.0
    %3756 = vmatpush.msra.mxu0 0.0
    %3757 = vmatpush.msra.mxu0 0.0
    %3758 = vmatpush.msra.mxu0 0.0
    %3759 = vmatpush.msra.mxu0 0.0
    %3760 = vmatpush.msra.mxu0 0.0
    %3761 = vmatpush.msra.mxu0 0.0
    %3762 = vmatpush.msra.mxu0 0.0
    %3763 = vmatpush.msra.mxu0 0.0
    %3764 = vmatpush.msra.mxu0 0.0
    %3765 = vmatpush.msra.mxu0 0.0
    %3766 = vmatpush.msra.mxu0 0.0
    %3767 = vmatpush.msra.mxu0 %v2778
    %3768 = vmatpush.msra.mxu0 %v2774
    %3769 = vmatpush.msra.mxu0 %v2770
    %3770 = vmatpush.msra.mxu0 %v2766
    %3771 = vmatmul.f32.gmra.mxu0 %v3713
    %v3772 = vpop.f32.mrf.mxu0
    %v3773 = vadd.f32 0.0, %v3772
    %3774 = vdwg.mxu0
    %3775 = vmatpush.msra.mxu0 0.0
    %3776 = vmatpush.msra.mxu0 0.0
    %3777 = vmatpush.msra.mxu0 0.0
    %3778 = vmatpush.msra.mxu0 0.0
    %3779 = vmatpush.msra.mxu0 0.0
    %3780 = vmatpush.msra.mxu0 0.0
    %3781 = vmatpush.msra.mxu0 0.0
    %3782 = vmatpush.msra.mxu0 0.0
    %3783 = vmatpush.msra.mxu0 0.0
    %3784 = vmatpush.msra.mxu0 0.0
    %3785 = vmatpush.msra.mxu0 0.0
    %3786 = vmatpush.msra.mxu0 0.0
    %3787 = vmatpush.msra.mxu0 %v2779
    %3788 = vmatpush.msra.mxu0 %v2775
    %3789 = vmatpush.msra.mxu0 %v2771
    %3790 = vmatpush.msra.mxu0 %v2767
    %3791 = vmatmul.f32.gmra.mxu0 %v3713
    %v3792 = vpop.f32.mrf.mxu0
    %v3793 = vadd.f32 0.0, %v3792
    %3794 = vdwg.mxu0
    %v3796 = vsel %vm142, %v3710, 0
    %3798 = vmatpush.msra.mxu0 0.0
    %3799 = vmatpush.msra.mxu0 0.0
    %3800 = vmatpush.msra.mxu0 0.0
    %3801 = vmatpush.msra.mxu0 0.0
    %3802 = vmatpush.msra.mxu0 0.0
    %3803 = vmatpush.msra.mxu0 0.0
    %3804 = vmatpush.msra.mxu0 0.0
    %3805 = vmatpush.msra.mxu0 0.0
    %3806 = vmatpush.msra.mxu0 0.0
    %3807 = vmatpush.msra.mxu0 0.0
    %3808 = vmatpush.msra.mxu0 0.0
    %3809 = vmatpush.msra.mxu0 0.0
    %3810 = vmatpush.msra.mxu0 %v2760
    %3811 = vmatpush.msra.mxu0 %v2756
    %3812 = vmatpush.msra.mxu0 %v2752
    %3813 = vmatpush.msra.mxu0 %v2748
    %3814 = vmatmul.f32.gmra.mxu0 %v3796
    %v3815 = vpop.f32.mrf.mxu0
    %v3816 = vadd.f32 %v3733, %v3815
    %3817 = vdwg.mxu0
    %3818 = vmatpush.msra.mxu0 0.0
    %3819 = vmatpush.msra.mxu0 0.0
    %3820 = vmatpush.msra.mxu0 0.0
    %3821 = vmatpush.msra.mxu0 0.0
    %3822 = vmatpush.msra.mxu0 0.0
    %3823 = vmatpush.msra.mxu0 0.0
    %3824 = vmatpush.msra.mxu0 0.0
    %3825 = vmatpush.msra.mxu0 0.0
    %3826 = vmatpush.msra.mxu0 0.0
    %3827 = vmatpush.msra.mxu0 0.0
    %3828 = vmatpush.msra.mxu0 0.0
    %3829 = vmatpush.msra.mxu0 0.0
    %3830 = vmatpush.msra.mxu0 %v2761
    %3831 = vmatpush.msra.mxu0 %v2757
    %3832 = vmatpush.msra.mxu0 %v2753
    %3833 = vmatpush.msra.mxu0 %v2749
    %3834 = vmatmul.f32.gmra.mxu0 %v3796
    %v3835 = vpop.f32.mrf.mxu0
    %v3836 = vadd.f32 %v3753, %v3835
    %3837 = vdwg.mxu0
    %3838 = vmatpush.msra.mxu0 0.0
    %3839 = vmatpush.msra.mxu0 0.0
    %3840 = vmatpush.msra.mxu0 0.0
    %3841 = vmatpush.msra.mxu0 0.0
    %3842 = vmatpush.msra.mxu0 0.0
    %3843 = vmatpush.msra.mxu0 0.0
    %3844 = vmatpush.msra.mxu0 0.0
    %3845 = vmatpush.msra.mxu0 0.0
    %3846 = vmatpush.msra.mxu0 0.0
    %3847 = vmatpush.msra.mxu0 0.0
    %3848 = vmatpush.msra.mxu0 0.0
    %3849 = vmatpush.msra.mxu0 0.0
    %3850 = vmatpush.msra.mxu0 %v2762
    %3851 = vmatpush.msra.mxu0 %v2758
    %3852 = vmatpush.msra.mxu0 %v2754
    %3853 = vmatpush.msra.mxu0 %v2750
    %3854 = vmatmul.f32.gmra.mxu0 %v3796
    %v3855 = vpop.f32.mrf.mxu0
    %v3856 = vadd.f32 %v3773, %v3855
    %3857 = vdwg.mxu0
    %3858 = vmatpush.msra.mxu0 0.0
    %3859 = vmatpush.msra.mxu0 0.0
    %3860 = vmatpush.msra.mxu0 0.0
    %3861 = vmatpush.msra.mxu0 0.0
    %3862 = vmatpush.msra.mxu0 0.0
    %3863 = vmatpush.msra.mxu0 0.0
    %3864 = vmatpush.msra.mxu0 0.0
    %3865 = vmatpush.msra.mxu0 0.0
    %3866 = vmatpush.msra.mxu0 0.0
    %3867 = vmatpush.msra.mxu0 0.0
    %3868 = vmatpush.msra.mxu0 0.0
    %3869 = vmatpush.msra.mxu0 0.0
    %3870 = vmatpush.msra.mxu0 %v2763
    %3871 = vmatpush.msra.mxu0 %v2759
    %3872 = vmatpush.msra.mxu0 %v2755
    %3873 = vmatpush.msra.mxu0 %v2751
    %3874 = vmatmul.f32.gmra.mxu0 %v3796
    %v3875 = vpop.f32.mrf.mxu0
    %v3876 = vadd.f32 %v3793, %v3875
    %3877 = vdwg.mxu0
    %v3878 = vadd.f32 %v3816, %v2950
    %v3879 = vadd.f32 %v3836, %v2951
    %v3880 = vadd.f32 %v3856, %v2952
    %v3881 = vadd.f32 %v3876, %v2953
    %v3886 = vrot.slane %v3879, 6
    %v3887 = vrot.slane %v3880, 4
    %v3888 = vrot.slane %v3881, 2
    %v3889 = vsel %vm233, %v3878, %v3886
    %v3890 = vsel %vm235, %v3887, %v3888
    %v3891 = vsel %vm237, %v3889, %v3890
    %3893 = vst [vmem:[%s1601] sm:$0xff] %v3891
    %v3894 = vld [vmem:[%s2625] sm:$0x3]
    %v3895 = vld [vmem:[%s2045] sm:$0x3]
    %v3897 = vsel %vm142, %v3895, 0
    %3899 = vmatpush.msra.mxu0 0.0
    %3900 = vmatpush.msra.mxu0 0.0
    %3901 = vmatpush.msra.mxu0 0.0
    %3902 = vmatpush.msra.mxu0 0.0
    %3903 = vmatpush.msra.mxu0 0.0
    %3904 = vmatpush.msra.mxu0 0.0
    %3905 = vmatpush.msra.mxu0 0.0
    %3906 = vmatpush.msra.mxu0 0.0
    %3907 = vmatpush.msra.mxu0 0.0
    %3908 = vmatpush.msra.mxu0 0.0
    %3909 = vmatpush.msra.mxu0 0.0
    %3910 = vmatpush.msra.mxu0 0.0
    %3911 = vmatpush.msra.mxu0 %v2776
    %3912 = vmatpush.msra.mxu0 %v2772
    %3913 = vmatpush.msra.mxu0 %v2768
    %3914 = vmatpush.msra.mxu0 %v2764
    %3915 = vmatmul.f32.gmra.mxu0 %v3897
    %v3916 = vpop.f32.mrf.mxu0
    %v3917 = vadd.f32 0.0, %v3916
    %3918 = vdwg.mxu0
    %3919 = vmatpush.msra.mxu0 0.0
    %3920 = vmatpush.msra.mxu0 0.0
    %3921 = vmatpush.msra.mxu0 0.0
    %3922 = vmatpush.msra.mxu0 0.0
    %3923 = vmatpush.msra.mxu0 0.0
    %3924 = vmatpush.msra.mxu0 0.0
    %3925 = vmatpush.msra.mxu0 0.0
    %3926 = vmatpush.msra.mxu0 0.0
    %3927 = vmatpush.msra.mxu0 0.0
    %3928 = vmatpush.msra.mxu0 0.0
    %3929 = vmatpush.msra.mxu0 0.0
    %3930 = vmatpush.msra.mxu0 0.0
    %3931 = vmatpush.msra.mxu0 %v2777
    %3932 = vmatpush.msra.mxu0 %v2773
    %3933 = vmatpush.msra.mxu0 %v2769
    %3934 = vmatpush.msra.mxu0 %v2765
    %3935 = vmatmul.f32.gmra.mxu0 %v3897
    %v3936 = vpop.f32.mrf.mxu0
    %v3937 = vadd.f32 0.0, %v3936
    %3938 = vdwg.mxu0
    %3939 = vmatpush.msra.mxu0 0.0
    %3940 = vmatpush.msra.mxu0 0.0
    %3941 = vmatpush.msra.mxu0 0.0
    %3942 = vmatpush.msra.mxu0 0.0
    %3943 = vmatpush.msra.mxu0 0.0
    %3944 = vmatpush.msra.mxu0 0.0
    %3945 = vmatpush.msra.mxu0 0.0
    %3946 = vmatpush.msra.mxu0 0.0
    %3947 = vmatpush.msra.mxu0 0.0
    %3948 = vmatpush.msra.mxu0 0.0
    %3949 = vmatpush.msra.mxu0 0.0
    %3950 = vmatpush.msra.mxu0 0.0
    %3951 = vmatpush.msra.mxu0 %v2778
    %3952 = vmatpush.msra.mxu0 %v2774
    %3953 = vmatpush.msra.mxu0 %v2770
    %3954 = vmatpush.msra.mxu0 %v2766
    %3955 = vmatmul.f32.gmra.mxu0 %v3897
    %v3956 = vpop.f32.mrf.mxu0
    %v3957 = vadd.f32 0.0, %v3956
    %3958 = vdwg.mxu0
    %3959 = vmatpush.msra.mxu0 0.0
    %3960 = vmatpush.msra.mxu0 0.0
    %3961 = vmatpush.msra.mxu0 0.0
    %3962 = vmatpush.msra.mxu0 0.0
    %3963 = vmatpush.msra.mxu0 0.0
    %3964 = vmatpush.msra.mxu0 0.0
    %3965 = vmatpush.msra.mxu0 0.0
    %3966 = vmatpush.msra.mxu0 0.0
    %3967 = vmatpush.msra.mxu0 0.0
    %3968 = vmatpush.msra.mxu0 0.0
    %3969 = vmatpush.msra.mxu0 0.0
    %3970 = vmatpush.msra.mxu0 0.0
    %3971 = vmatpush.msra.mxu0 %v2779
    %3972 = vmatpush.msra.mxu0 %v2775
    %3973 = vmatpush.msra.mxu0 %v2771
    %3974 = vmatpush.msra.mxu0 %v2767
    %3975 = vmatmul.f32.gmra.mxu0 %v3897
    %v3976 = vpop.f32.mrf.mxu0
    %v3977 = vadd.f32 0.0, %v3976
    %3978 = vdwg.mxu0
    %v3980 = vsel %vm142, %v3894, 0
    %3982 = vmatpush.msra.mxu0 0.0
    %3983 = vmatpush.msra.mxu0 0.0
    %3984 = vmatpush.msra.mxu0 0.0
    %3985 = vmatpush.msra.mxu0 0.0
    %3986 = vmatpush.msra.mxu0 0.0
    %3987 = vmatpush.msra.mxu0 0.0
    %3988 = vmatpush.msra.mxu0 0.0
    %3989 = vmatpush.msra.mxu0 0.0
    %3990 = vmatpush.msra.mxu0 0.0
    %3991 = vmatpush.msra.mxu0 0.0
    %3992 = vmatpush.msra.mxu0 0.0
    %3993 = vmatpush.msra.mxu0 0.0
    %3994 = vmatpush.msra.mxu0 %v2760
    %3995 = vmatpush.msra.mxu0 %v2756
    %3996 = vmatpush.msra.mxu0 %v2752
    %3997 = vmatpush.msra.mxu0 %v2748
    %3998 = vmatmul.f32.gmra.mxu0 %v3980
    %v3999 = vpop.f32.mrf.mxu0
    %v4000 = vadd.f32 %v3917, %v3999
    %4001 = vdwg.mxu0
    %4002 = vmatpush.msra.mxu0 0.0
    %4003 = vmatpush.msra.mxu0 0.0
    %4004 = vmatpush.msra.mxu0 0.0
    %4005 = vmatpush.msra.mxu0 0.0
    %4006 = vmatpush.msra.mxu0 0.0
    %4007 = vmatpush.msra.mxu0 0.0
    %4008 = vmatpush.msra.mxu0 0.0
    %4009 = vmatpush.msra.mxu0 0.0
    %4010 = vmatpush.msra.mxu0 0.0
    %4011 = vmatpush.msra.mxu0 0.0
    %4012 = vmatpush.msra.mxu0 0.0
    %4013 = vmatpush.msra.mxu0 0.0
    %4014 = vmatpush.msra.mxu0 %v2761
    %4015 = vmatpush.msra.mxu0 %v2757
    %4016 = vmatpush.msra.mxu0 %v2753
    %4017 = vmatpush.msra.mxu0 %v2749
    %4018 = vmatmul.f32.gmra.mxu0 %v3980
    %v4019 = vpop.f32.mrf.mxu0
    %v4020 = vadd.f32 %v3937, %v4019
    %4021 = vdwg.mxu0
    %4022 = vmatpush.msra.mxu0 0.0
    %4023 = vmatpush.msra.mxu0 0.0
    %4024 = vmatpush.msra.mxu0 0.0
    %4025 = vmatpush.msra.mxu0 0.0
    %4026 = vmatpush.msra.mxu0 0.0
    %4027 = vmatpush.msra.mxu0 0.0
    %4028 = vmatpush.msra.mxu0 0.0
    %4029 = vmatpush.msra.mxu0 0.0
    %4030 = vmatpush.msra.mxu0 0.0
    %4031 = vmatpush.msra.mxu0 0.0
    %4032 = vmatpush.msra.mxu0 0.0
    %4033 = vmatpush.msra.mxu0 0.0
    %4034 = vmatpush.msra.mxu0 %v2762
    %4035 = vmatpush.msra.mxu0 %v2758
    %4036 = vmatpush.msra.mxu0 %v2754
    %4037 = vmatpush.msra.mxu0 %v2750
    %4038 = vmatmul.f32.gmra.mxu0 %v3980
    %v4039 = vpop.f32.mrf.mxu0
    %v4040 = vadd.f32 %v3957, %v4039
    %4041 = vdwg.mxu0
    %4042 = vmatpush.msra.mxu0 0.0
    %4043 = vmatpush.msra.mxu0 0.0
    %4044 = vmatpush.msra.mxu0 0.0
    %4045 = vmatpush.msra.mxu0 0.0
    %4046 = vmatpush.msra.mxu0 0.0
    %4047 = vmatpush.msra.mxu0 0.0
    %4048 = vmatpush.msra.mxu0 0.0
    %4049 = vmatpush.msra.mxu0 0.0
    %4050 = vmatpush.msra.mxu0 0.0
    %4051 = vmatpush.msra.mxu0 0.0
    %4052 = vmatpush.msra.mxu0 0.0
    %4053 = vmatpush.msra.mxu0 0.0
    %4054 = vmatpush.msra.mxu0 %v2763
    %4055 = vmatpush.msra.mxu0 %v2759
    %4056 = vmatpush.msra.mxu0 %v2755
    %4057 = vmatpush.msra.mxu0 %v2751
    %4058 = vmatmul.f32.gmra.mxu0 %v3980
    %v4059 = vpop.f32.mrf.mxu0
    %v4060 = vadd.f32 %v3977, %v4059
    %4061 = vdwg.mxu0
    %v4062 = vadd.f32 %v4000, %v2950
    %v4063 = vadd.f32 %v4020, %v2951
    %v4064 = vadd.f32 %v4040, %v2952
    %v4065 = vadd.f32 %v4060, %v2953
    %v4070 = vrot.slane %v4063, 6
    %v4071 = vrot.slane %v4064, 4
    %v4072 = vrot.slane %v4065, 2
    %v4073 = vsel %vm233, %v4062, %v4070
    %v4074 = vsel %vm235, %v4071, %v4072
    %v4075 = vsel %vm237, %v4073, %v4074
    %4077 = vst [vmem:[%s1699] sm:$0xff] %v4075
    %v4078 = vld [vmem:[%s2742] sm:$0x3]
    %v4079 = vld [vmem:[%s1928] sm:$0x3]
    %v4081 = vsel %vm142, %v4079, 0
    %4083 = vmatpush.msra.mxu0 0.0
    %4084 = vmatpush.msra.mxu0 0.0
    %4085 = vmatpush.msra.mxu0 0.0
    %4086 = vmatpush.msra.mxu0 0.0
    %4087 = vmatpush.msra.mxu0 0.0
    %4088 = vmatpush.msra.mxu0 0.0
    %4089 = vmatpush.msra.mxu0 0.0
    %4090 = vmatpush.msra.mxu0 0.0
    %4091 = vmatpush.msra.mxu0 0.0
    %4092 = vmatpush.msra.mxu0 0.0
    %4093 = vmatpush.msra.mxu0 0.0
    %4094 = vmatpush.msra.mxu0 0.0
    %4095 = vmatpush.msra.mxu0 %v2776
    %4096 = vmatpush.msra.mxu0 %v2772
    %4097 = vmatpush.msra.mxu0 %v2768
    %4098 = vmatpush.msra.mxu0 %v2764
    %4099 = vmatmul.f32.gmra.mxu0 %v4081
    %v4100 = vpop.f32.mrf.mxu0
    %v4101 = vadd.f32 0.0, %v4100
    %4102 = vdwg.mxu0
    %4103 = vmatpush.msra.mxu0 0.0
    %4104 = vmatpush.msra.mxu0 0.0
    %4105 = vmatpush.msra.mxu0 0.0
    %4106 = vmatpush.msra.mxu0 0.0
    %4107 = vmatpush.msra.mxu0 0.0
    %4108 = vmatpush.msra.mxu0 0.0
    %4109 = vmatpush.msra.mxu0 0.0
    %4110 = vmatpush.msra.mxu0 0.0
    %4111 = vmatpush.msra.mxu0 0.0
    %4112 = vmatpush.msra.mxu0 0.0
    %4113 = vmatpush.msra.mxu0 0.0
    %4114 = vmatpush.msra.mxu0 0.0
    %4115 = vmatpush.msra.mxu0 %v2777
    %4116 = vmatpush.msra.mxu0 %v2773
    %4117 = vmatpush.msra.mxu0 %v2769
    %4118 = vmatpush.msra.mxu0 %v2765
    %4119 = vmatmul.f32.gmra.mxu0 %v4081
    %v4120 = vpop.f32.mrf.mxu0
    %v4121 = vadd.f32 0.0, %v4120
    %4122 = vdwg.mxu0
    %4123 = vmatpush.msra.mxu0 0.0
    %4124 = vmatpush.msra.mxu0 0.0
    %4125 = vmatpush.msra.mxu0 0.0
    %4126 = vmatpush.msra.mxu0 0.0
    %4127 = vmatpush.msra.mxu0 0.0
    %4128 = vmatpush.msra.mxu0 0.0
    %4129 = vmatpush.msra.mxu0 0.0
    %4130 = vmatpush.msra.mxu0 0.0
    %4131 = vmatpush.msra.mxu0 0.0
    %4132 = vmatpush.msra.mxu0 0.0
    %4133 = vmatpush.msra.mxu0 0.0
    %4134 = vmatpush.msra.mxu0 0.0
    %4135 = vmatpush.msra.mxu0 %v2778
    %4136 = vmatpush.msra.mxu0 %v2774
    %4137 = vmatpush.msra.mxu0 %v2770
    %4138 = vmatpush.msra.mxu0 %v2766
    %4139 = vmatmul.f32.gmra.mxu0 %v4081
    %v4140 = vpop.f32.mrf.mxu0
    %v4141 = vadd.f32 0.0, %v4140
    %4142 = vdwg.mxu0
    %4143 = vmatpush.msra.mxu0 0.0
    %4144 = vmatpush.msra.mxu0 0.0
    %4145 = vmatpush.msra.mxu0 0.0
    %4146 = vmatpush.msra.mxu0 0.0
    %4147 = vmatpush.msra.mxu0 0.0
    %4148 = vmatpush.msra.mxu0 0.0
    %4149 = vmatpush.msra.mxu0 0.0
    %4150 = vmatpush.msra.mxu0 0.0
    %4151 = vmatpush.msra.mxu0 0.0
    %4152 = vmatpush.msra.mxu0 0.0
    %4153 = vmatpush.msra.mxu0 0.0
    %4154 = vmatpush.msra.mxu0 0.0
    %4155 = vmatpush.msra.mxu0 %v2779
    %4156 = vmatpush.msra.mxu0 %v2775
    %4157 = vmatpush.msra.mxu0 %v2771
    %4158 = vmatpush.msra.mxu0 %v2767
    %4159 = vmatmul.f32.gmra.mxu0 %v4081
    %v4160 = vpop.f32.mrf.mxu0
    %v4161 = vadd.f32 0.0, %v4160
    %4162 = vdwg.mxu0
    %v4164 = vsel %vm142, %v4078, 0
    %4166 = vmatpush.msra.mxu0 0.0
    %4167 = vmatpush.msra.mxu0 0.0
    %4168 = vmatpush.msra.mxu0 0.0
    %4169 = vmatpush.msra.mxu0 0.0
    %4170 = vmatpush.msra.mxu0 0.0
    %4171 = vmatpush.msra.mxu0 0.0
    %4172 = vmatpush.msra.mxu0 0.0
    %4173 = vmatpush.msra.mxu0 0.0
    %4174 = vmatpush.msra.mxu0 0.0
    %4175 = vmatpush.msra.mxu0 0.0
    %4176 = vmatpush.msra.mxu0 0.0
    %4177 = vmatpush.msra.mxu0 0.0
    %4178 = vmatpush.msra.mxu0 %v2760
    %4179 = vmatpush.msra.mxu0 %v2756
    %4180 = vmatpush.msra.mxu0 %v2752
    %4181 = vmatpush.msra.mxu0 %v2748
    %4182 = vmatmul.f32.gmra.mxu0 %v4164
    %v4183 = vpop.f32.mrf.mxu0
    %v4184 = vadd.f32 %v4101, %v4183
    %4185 = vdwg.mxu0
    %4186 = vmatpush.msra.mxu0 0.0
    %4187 = vmatpush.msra.mxu0 0.0
    %4188 = vmatpush.msra.mxu0 0.0
    %4189 = vmatpush.msra.mxu0 0.0
    %4190 = vmatpush.msra.mxu0 0.0
    %4191 = vmatpush.msra.mxu0 0.0
    %4192 = vmatpush.msra.mxu0 0.0
    %4193 = vmatpush.msra.mxu0 0.0
    %4194 = vmatpush.msra.mxu0 0.0
    %4195 = vmatpush.msra.mxu0 0.0
    %4196 = vmatpush.msra.mxu0 0.0
    %4197 = vmatpush.msra.mxu0 0.0
    %4198 = vmatpush.msra.mxu0 %v2761
    %4199 = vmatpush.msra.mxu0 %v2757
    %4200 = vmatpush.msra.mxu0 %v2753
    %4201 = vmatpush.msra.mxu0 %v2749
    %4202 = vmatmul.f32.gmra.mxu0 %v4164
    %v4203 = vpop.f32.mrf.mxu0
    %v4204 = vadd.f32 %v4121, %v4203
    %4205 = vdwg.mxu0
    %4206 = vmatpush.msra.mxu0 0.0
    %4207 = vmatpush.msra.mxu0 0.0
    %4208 = vmatpush.msra.mxu0 0.0
    %4209 = vmatpush.msra.mxu0 0.0
    %4210 = vmatpush.msra.mxu0 0.0
    %4211 = vmatpush.msra.mxu0 0.0
    %4212 = vmatpush.msra.mxu0 0.0
    %4213 = vmatpush.msra.mxu0 0.0
    %4214 = vmatpush.msra.mxu0 0.0
    %4215 = vmatpush.msra.mxu0 0.0
    %4216 = vmatpush.msra.mxu0 0.0
    %4217 = vmatpush.msra.mxu0 0.0
    %4218 = vmatpush.msra.mxu0 %v2762
    %4219 = vmatpush.msra.mxu0 %v2758
    %4220 = vmatpush.msra.mxu0 %v2754
    %4221 = vmatpush.msra.mxu0 %v2750
    %4222 = vmatmul.f32.gmra.mxu0 %v4164
    %v4223 = vpop.f32.mrf.mxu0
    %v4224 = vadd.f32 %v4141, %v4223
    %4225 = vdwg.mxu0
    %4226 = vmatpush.msra.mxu0 0.0
    %4227 = vmatpush.msra.mxu0 0.0
    %4228 = vmatpush.msra.mxu0 0.0
    %4229 = vmatpush.msra.mxu0 0.0
    %4230 = vmatpush.msra.mxu0 0.0
    %4231 = vmatpush.msra.mxu0 0.0
    %4232 = vmatpush.msra.mxu0 0.0
    %4233 = vmatpush.msra.mxu0 0.0
    %4234 = vmatpush.msra.mxu0 0.0
    %4235 = vmatpush.msra.mxu0 0.0
    %4236 = vmatpush.msra.mxu0 0.0
    %4237 = vmatpush.msra.mxu0 0.0
    %4238 = vmatpush.msra.mxu0 %v2763
    %4239 = vmatpush.msra.mxu0 %v2759
    %4240 = vmatpush.msra.mxu0 %v2755
    %4241 = vmatpush.msra.mxu0 %v2751
    %4242 = vmatmul.f32.gmra.mxu0 %v4164
    %v4243 = vpop.f32.mrf.mxu0
    %v4244 = vadd.f32 %v4161, %v4243
    %4245 = vdwg.mxu0
    %v4246 = vadd.f32 %v4184, %v2950
    %v4247 = vadd.f32 %v4204, %v2951
    %v4248 = vadd.f32 %v4224, %v2952
    %v4249 = vadd.f32 %v4244, %v2953
    %v4254 = vrot.slane %v4247, 6
    %v4255 = vrot.slane %v4248, 4
    %v4256 = vrot.slane %v4249, 2
    %v4257 = vsel %vm233, %v4246, %v4254
    %v4258 = vsel %vm235, %v4255, %v4256
    %v4259 = vsel %vm237, %v4257, %v4258
    %4261 = vst [vmem:[%s1797] sm:$0xff] %v4259
    %v4262 = vld [vmem:[#allocation13] sm:$0xff]
    %v4263 = vld [vmem:[#allocation13 + $0x8] sm:$0xff]
    %v4264 = vld [vmem:[#allocation13 + $0x10] sm:$0xff]
    %v4265 = vld [vmem:[#allocation13 + $0x18] sm:$0xff]
    %v4266 = vld [vmem:[#allocation13 + $0x20] sm:$0xff]
    %v4267 = vld [vmem:[#allocation13 + $0x28] sm:$0xff]
    %v4268 = vld [vmem:[#allocation13 + $0x30] sm:$0xff]
    %v4269 = vld [vmem:[#allocation13 + $0x38] sm:$0xff]
    %v4270 = vld [vmem:[#allocation13 + $0x40] sm:$0xff]
    %v4271 = vld [vmem:[#allocation13 + $0x48] sm:$0xff]
    %v4272 = vld [vmem:[#allocation13 + $0x50] sm:$0xff]
    %v4273 = vld [vmem:[#allocation13 + $0x58] sm:$0xff]
    %v4274 = vld [vmem:[#allocation13 + $0x60] sm:$0xff]
    %v4275 = vld [vmem:[#allocation13 + $0x68] sm:$0xff]
    %v4276 = vld [vmem:[#allocation13 + $0x70] sm:$0xff]
    %v4277 = vld [vmem:[#allocation13 + $0x78] sm:$0xff]
    %v4278 = vld [vmem:[#allocation2] sm:$0xff]
    %v4279 = vld [vmem:[%s1797] sm:$0xff]
    %4281 = vst [vmem:[#allocation1] ss:$4 sm:$0xff] %v4278
    %v4282 = vld.sshfl [vmem:[#allocation1] sm:$0xff pattern:$0x73625140]
    %v4283 = vld.sshfl [vmem:[#allocation1 + $0x8] sm:$0xff pattern:$0x73625140]
    %4286 = vmatpush.msra.mxu0 0.0
    %4287 = vmatpush.msra.mxu0 0.0
    %4288 = vmatpush.msra.mxu0 0.0
    %4289 = vmatpush.msra.mxu0 0.0
    %4290 = vmatpush.msra.mxu0 0.0
    %4291 = vmatpush.msra.mxu0 0.0
    %4292 = vmatpush.msra.mxu0 0.0
    %4293 = vmatpush.msra.mxu0 0.0
    %4294 = vmatpush.msra.mxu0 %v4276
    %4295 = vmatpush.msra.mxu0 %v4274
    %4296 = vmatpush.msra.mxu0 %v4272
    %4297 = vmatpush.msra.mxu0 %v4270
    %4298 = vmatpush.msra.mxu0 %v4268
    %4299 = vmatpush.msra.mxu0 %v4266
    %4300 = vmatpush.msra.mxu0 %v4264
    %4301 = vmatpush.msra.mxu0 %v4262
    %4302 = vmatmul.f32.gmra.mxu0 %v561
    %v4303 = vpop.f32.mrf.mxu0
    %v4304 = vadd.f32 %v4282, %v4303
    %4305 = vdwg.mxu0
    %4306 = vmatpush.msra.mxu0 0.0
    %4307 = vmatpush.msra.mxu0 0.0
    %4308 = vmatpush.msra.mxu0 0.0
    %4309 = vmatpush.msra.mxu0 0.0
    %4310 = vmatpush.msra.mxu0 0.0
    %4311 = vmatpush.msra.mxu0 0.0
    %4312 = vmatpush.msra.mxu0 0.0
    %4313 = vmatpush.msra.mxu0 0.0
    %4314 = vmatpush.msra.mxu0 %v4277
    %4315 = vmatpush.msra.mxu0 %v4275
    %4316 = vmatpush.msra.mxu0 %v4273
    %4317 = vmatpush.msra.mxu0 %v4271
    %4318 = vmatpush.msra.mxu0 %v4269
    %4319 = vmatpush.msra.mxu0 %v4267
    %4320 = vmatpush.msra.mxu0 %v4265
    %4321 = vmatpush.msra.mxu0 %v4263
    %4322 = vmatmul.f32.gmra.mxu0 %v561
    %v4323 = vpop.f32.mrf.mxu0
    %v4324 = vadd.f32 %v4283, %v4323
    %4325 = vdwg.mxu0
    %4327 = vst [vmem:[#allocation1] ss:$4 sm:$0xff] %v4279
    %v4328 = vld.sshfl [vmem:[#allocation1 + $0x10] sm:$0xff pattern:$0x73625140]
    %v4329 = vld.sshfl [vmem:[#allocation1 + $0x18] sm:$0xff pattern:$0x73625140]
    %v4332 = vadd.f32 %v4304, %v4328
    %v4333 = vadd.f32 %v4324, %v4329
    %v4334 = vxor.u32 %v4332, 2147483648
    %v4335 = vxor.u32 %v4333, 2147483648
    %v4336 = vmul.f32 %v4334, 1.442695
    %v4337 = vpow.pop %v4336
    %v4338 = vmul.f32 %v4335, 1.442695
    %v4339 = vpow.pop %v4338
    %v4340 = vadd.f32 %v4337, 1.0
    %v4341 = vadd.f32 %v4339, 1.0
    %v4342 = vrcp.pop %v4340
    %v4343 = vmul.f32 %v4340, %v4342
    %v4344 = vsub.f32 1.0, %v4343
    %v4345 = vmul.f32 %v4342, %v4344
    %v4346 = vadd.f32 %v4342, %v4345
    %vm4347 = vweird.f32 %v4340
    %vm4348 = vweird.f32 %v4342
    %vm4349 = vmor %vm4347, %vm4348
    %v4350 = vsel %vm4349, %v4342, %v4346
    %v4351 = vand.u32 2147483647, %v4340
    %vm4352 = vcmp.eq.f32.partialorder %v4351, 8.507059e+37
    %v4353 = vand.u32 %v4340, 2147483648
    %v4354 = vor.u32 1.1754944e-38, %v4353
    %v4355 = vsel %vm4352, %v4354, %v4350
    %v4356 = vmul.f32 1.0, %v4355
    %v4357 = vrcp.pop %v4341
    %v4358 = vmul.f32 %v4341, %v4357
    %v4359 = vsub.f32 1.0, %v4358
    %v4360 = vmul.f32 %v4357, %v4359
    %v4361 = vadd.f32 %v4357, %v4360
    %vm4362 = vweird.f32 %v4341
    %vm4363 = vweird.f32 %v4357
    %vm4364 = vmor %vm4362, %vm4363
    %v4365 = vsel %vm4364, %v4357, %v4361
    %v4366 = vand.u32 2147483647, %v4341
    %vm4367 = vcmp.eq.f32.partialorder %v4366, 8.507059e+37
    %v4368 = vand.u32 %v4341, 2147483648
    %v4369 = vor.u32 1.1754944e-38, %v4368
    %v4370 = vsel %vm4367, %v4369, %v4365
    %v4371 = vmul.f32 1.0, %v4370
    %v4372 = vtanh.pop %v4333
    %v4373 = vmul.f32 %v4356, 0.0
    %v4374 = vmul.f32 %v4356, %v4372
    %4376 = vrot.lane.b32.xlu0 %v4374, 64
    %v4377 = vpop.permute.xlu0 %4376
    %v4379 = vadd.f32 %v4373, %v4377
    %v4380 = vtanh.pop %v4379
    %v4381 = vmul.f32 %v4371, %v4380
    %4383 = vrot.lane.b32.xlu0 %v4381, 64
    %v4384 = vpop.permute.xlu0 %4383
    %4386 = vst.msk [vmem:[#allocation5] sm:$0x3] %vm1923, %v4384
    %4387 = vrot.lane.b32.xlu0 %v4381, 32
    %v4388 = vpop.permute.xlu0 %4387
    %s4390 = scalar_lea.vmem [#allocation6], 14
    %4391 = vst.msk [vmem:[%s4390] sm:$0x3] %vm1923, %v4388
    %v4392 = vld [vmem:[%s337] sm:$0xff]
    %v4393 = vld [vmem:[%s1699] sm:$0xff]
    %4395 = vst [vmem:[#allocation1] ss:$4 sm:$0xff] %v4392
    %v4396 = vld.sshfl [vmem:[#allocation1] sm:$0xff pattern:$0x73625140]
    %v4397 = vld.sshfl [vmem:[#allocation1 + $0x8] sm:$0xff pattern:$0x73625140]
    %v4400 = vsel %vm559, %v4384, 0
    %4402 = vmatpush.msra.mxu0 0.0
    %4403 = vmatpush.msra.mxu0 0.0
    %4404 = vmatpush.msra.mxu0 0.0
    %4405 = vmatpush.msra.mxu0 0.0
    %4406 = vmatpush.msra.mxu0 0.0
    %4407 = vmatpush.msra.mxu0 0.0
    %4408 = vmatpush.msra.mxu0 0.0
    %4409 = vmatpush.msra.mxu0 0.0
    %4410 = vmatpush.msra.mxu0 %v4276
    %4411 = vmatpush.msra.mxu0 %v4274
    %4412 = vmatpush.msra.mxu0 %v4272
    %4413 = vmatpush.msra.mxu0 %v4270
    %4414 = vmatpush.msra.mxu0 %v4268
    %4415 = vmatpush.msra.mxu0 %v4266
    %4416 = vmatpush.msra.mxu0 %v4264
    %4417 = vmatpush.msra.mxu0 %v4262
    %4418 = vmatmul.f32.gmra.mxu0 %v4400
    %v4419 = vpop.f32.mrf.mxu0
    %v4420 = vadd.f32 %v4396, %v4419
    %4421 = vdwg.mxu0
    %4422 = vmatpush.msra.mxu0 0.0
    %4423 = vmatpush.msra.mxu0 0.0
    %4424 = vmatpush.msra.mxu0 0.0
    %4425 = vmatpush.msra.mxu0 0.0
    %4426 = vmatpush.msra.mxu0 0.0
    %4427 = vmatpush.msra.mxu0 0.0
    %4428 = vmatpush.msra.mxu0 0.0
    %4429 = vmatpush.msra.mxu0 0.0
    %4430 = vmatpush.msra.mxu0 %v4277
    %4431 = vmatpush.msra.mxu0 %v4275
    %4432 = vmatpush.msra.mxu0 %v4273
    %4433 = vmatpush.msra.mxu0 %v4271
    %4434 = vmatpush.msra.mxu0 %v4269
    %4435 = vmatpush.msra.mxu0 %v4267
    %4436 = vmatpush.msra.mxu0 %v4265
    %4437 = vmatpush.msra.mxu0 %v4263
    %4438 = vmatmul.f32.gmra.mxu0 %v4400
    %v4439 = vpop.f32.mrf.mxu0
    %v4440 = vadd.f32 %v4397, %v4439
    %4441 = vdwg.mxu0
    %4443 = vst [vmem:[#allocation1] ss:$4 sm:$0xff] %v4393
    %v4444 = vld.sshfl [vmem:[#allocation1 + $0x10] sm:$0xff pattern:$0x73625140]
    %v4445 = vld.sshfl [vmem:[#allocation1 + $0x18] sm:$0xff pattern:$0x73625140]
    %v4448 = vadd.f32 %v4420, %v4444
    %v4449 = vadd.f32 %v4440, %v4445
    %v4450 = vxor.u32 %v4448, 2147483648
    %v4451 = vxor.u32 %v4449, 2147483648
    %v4452 = vmul.f32 %v4450, 1.442695
    %v4453 = vpow.pop %v4452
    %v4454 = vmul.f32 %v4451, 1.442695
    %v4455 = vpow.pop %v4454
    %v4456 = vadd.f32 %v4453, 1.0
    %v4457 = vadd.f32 %v4455, 1.0
    %v4458 = vrcp.pop %v4456
    %v4459 = vmul.f32 %v4456, %v4458
    %v4460 = vsub.f32 1.0, %v4459
    %v4461 = vmul.f32 %v4458, %v4460
    %v4462 = vadd.f32 %v4458, %v4461
    %vm4463 = vweird.f32 %v4456
    %vm4464 = vweird.f32 %v4458
    %vm4465 = vmor %vm4463, %vm4464
    %v4466 = vsel %vm4465, %v4458, %v4462
    %v4467 = vand.u32 2147483647, %v4456
    %vm4468 = vcmp.eq.f32.partialorder %v4467, 8.507059e+37
    %v4469 = vand.u32 %v4456, 2147483648
    %v4470 = vor.u32 1.1754944e-38, %v4469
    %v4471 = vsel %vm4468, %v4470, %v4466
    %v4472 = vmul.f32 1.0, %v4471
    %v4473 = vrcp.pop %v4457
    %v4474 = vmul.f32 %v4457, %v4473
    %v4475 = vsub.f32 1.0, %v4474
    %v4476 = vmul.f32 %v4473, %v4475
    %v4477 = vadd.f32 %v4473, %v4476
    %vm4478 = vweird.f32 %v4457
    %vm4479 = vweird.f32 %v4473
    %vm4480 = vmor %vm4478, %vm4479
    %v4481 = vsel %vm4480, %v4473, %v4477
    %v4482 = vand.u32 2147483647, %v4457
    %vm4483 = vcmp.eq.f32.partialorder %v4482, 8.507059e+37
    %v4484 = vand.u32 %v4457, 2147483648
    %v4485 = vor.u32 1.1754944e-38, %v4484
    %v4486 = vsel %vm4483, %v4485, %v4481
    %v4487 = vmul.f32 1.0, %v4486
    %v4488 = vtanh.pop %v4449
    %v4489 = vmul.f32 %v4472, %v4379
    %v4490 = vmul.f32 %v4472, %v4488
    %4492 = vrot.lane.b32.xlu0 %v4490, 64
    %v4493 = vpop.permute.xlu0 %4492
    %v4495 = vadd.f32 %v4489, %v4493
    %v4496 = vtanh.pop %v4495
    %v4497 = vmul.f32 %v4487, %v4496
    %4499 = vrot.lane.b32.xlu0 %v4497, 64
    %v4500 = vpop.permute.xlu0 %4499
    %s4502 = scalar_lea.vmem [#allocation5], 2
    %4503 = vst.msk [vmem:[%s4502] sm:$0x3] %vm1923, %v4500
    %4504 = vrot.lane.b32.xlu0 %v4497, 32
    %v4505 = vpop.permute.xlu0 %4504
    %s4507 = scalar_lea.vmem [#allocation6], 12
    %4508 = vst.msk [vmem:[%s4507] sm:$0x3] %vm1923, %v4505
    %v4509 = vld [vmem:[%s435] sm:$0xff]
    %v4510 = vld [vmem:[%s1601] sm:$0xff]
    %4512 = vst [vmem:[#allocation1] ss:$4 sm:$0xff] %v4509
    %v4513 = vld.sshfl [vmem:[#allocation1] sm:$0xff pattern:$0x73625140]
    %v4514 = vld.sshfl [vmem:[#allocation1 + $0x8] sm:$0xff pattern:$0x73625140]
    %v4517 = vsel %vm559, %v4500, 0
    %4519 = vmatpush.msra.mxu0 0.0
    %4520 = vmatpush.msra.mxu0 0.0
    %4521 = vmatpush.msra.mxu0 0.0
    %4522 = vmatpush.msra.mxu0 0.0
    %4523 = vmatpush.msra.mxu0 0.0
    %4524 = vmatpush.msra.mxu0 0.0
    %4525 = vmatpush.msra.mxu0 0.0
    %4526 = vmatpush.msra.mxu0 0.0
    %4527 = vmatpush.msra.mxu0 %v4276
    %4528 = vmatpush.msra.mxu0 %v4274
    %4529 = vmatpush.msra.mxu0 %v4272
    %4530 = vmatpush.msra.mxu0 %v4270
    %4531 = vmatpush.msra.mxu0 %v4268
    %4532 = vmatpush.msra.mxu0 %v4266
    %4533 = vmatpush.msra.mxu0 %v4264
    %4534 = vmatpush.msra.mxu0 %v4262
    %4535 = vmatmul.f32.gmra.mxu0 %v4517
    %v4536 = vpop.f32.mrf.mxu0
    %v4537 = vadd.f32 %v4513, %v4536
    %4538 = vdwg.mxu0
    %4539 = vmatpush.msra.mxu0 0.0
    %4540 = vmatpush.msra.mxu0 0.0
    %4541 = vmatpush.msra.mxu0 0.0
    %4542 = vmatpush.msra.mxu0 0.0
    %4543 = vmatpush.msra.mxu0 0.0
    %4544 = vmatpush.msra.mxu0 0.0
    %4545 = vmatpush.msra.mxu0 0.0
    %4546 = vmatpush.msra.mxu0 0.0
    %4547 = vmatpush.msra.mxu0 %v4277
    %4548 = vmatpush.msra.mxu0 %v4275
    %4549 = vmatpush.msra.mxu0 %v4273
    %4550 = vmatpush.msra.mxu0 %v4271
    %4551 = vmatpush.msra.mxu0 %v4269
    %4552 = vmatpush.msra.mxu0 %v4267
    %4553 = vmatpush.msra.mxu0 %v4265
    %4554 = vmatpush.msra.mxu0 %v4263
    %4555 = vmatmul.f32.gmra.mxu0 %v4517
    %v4556 = vpop.f32.mrf.mxu0
    %v4557 = vadd.f32 %v4514, %v4556
    %4558 = vdwg.mxu0
    %4560 = vst [vmem:[#allocation1] ss:$4 sm:$0xff] %v4510
    %v4561 = vld.sshfl [vmem:[#allocation1 + $0x10] sm:$0xff pattern:$0x73625140]
    %v4562 = vld.sshfl [vmem:[#allocation1 + $0x18] sm:$0xff pattern:$0x73625140]
    %v4565 = vadd.f32 %v4537, %v4561
    %v4566 = vadd.f32 %v4557, %v4562
    %v4567 = vxor.u32 %v4565, 2147483648
    %v4568 = vxor.u32 %v4566, 2147483648
    %v4569 = vmul.f32 %v4567, 1.442695
    %v4570 = vpow.pop %v4569
    %v4571 = vmul.f32 %v4568, 1.442695
    %v4572 = vpow.pop %v4571
    %v4573 = vadd.f32 %v4570, 1.0
    %v4574 = vadd.f32 %v4572, 1.0
    %v4575 = vrcp.pop %v4573
    %v4576 = vmul.f32 %v4573, %v4575
    %v4577 = vsub.f32 1.0, %v4576
    %v4578 = vmul.f32 %v4575, %v4577
    %v4579 = vadd.f32 %v4575, %v4578
    %vm4580 = vweird.f32 %v4573
    %vm4581 = vweird.f32 %v4575
    %vm4582 = vmor %vm4580, %vm4581
    %v4583 = vsel %vm4582, %v4575, %v4579
    %v4584 = vand.u32 2147483647, %v4573
    %vm4585 = vcmp.eq.f32.partialorder %v4584, 8.507059e+37
    %v4586 = vand.u32 %v4573, 2147483648
    %v4587 = vor.u32 1.1754944e-38, %v4586
    %v4588 = vsel %vm4585, %v4587, %v4583
    %v4589 = vmul.f32 1.0, %v4588
    %v4590 = vrcp.pop %v4574
    %v4591 = vmul.f32 %v4574, %v4590
    %v4592 = vsub.f32 1.0, %v4591
    %v4593 = vmul.f32 %v4590, %v4592
    %v4594 = vadd.f32 %v4590, %v4593
    %vm4595 = vweird.f32 %v4574
    %vm4596 = vweird.f32 %v4590
    %vm4597 = vmor %vm4595, %vm4596
    %v4598 = vsel %vm4597, %v4590, %v4594
    %v4599 = vand.u32 2147483647, %v4574
    %vm4600 = vcmp.eq.f32.partialorder %v4599, 8.507059e+37
    %v4601 = vand.u32 %v4574, 2147483648
    %v4602 = vor.u32 1.1754944e-38, %v4601
    %v4603 = vsel %vm4600, %v4602, %v4598
    %v4604 = vmul.f32 1.0, %v4603
    %v4605 = vtanh.pop %v4566
    %v4606 = vmul.f32 %v4589, %v4495
    %v4607 = vmul.f32 %v4589, %v4605
    %4609 = vrot.lane.b32.xlu0 %v4607, 64
    %v4610 = vpop.permute.xlu0 %4609
    %v4612 = vadd.f32 %v4606, %v4610
    %v4613 = vtanh.pop %v4612
    %v4614 = vmul.f32 %v4604, %v4613
    %4616 = vrot.lane.b32.xlu0 %v4614, 64
    %v4617 = vpop.permute.xlu0 %4616
    %s4619 = scalar_lea.vmem [#allocation5], 4
    %4620 = vst.msk [vmem:[%s4619] sm:$0x3] %vm1923, %v4617
    %4621 = vrot.lane.b32.xlu0 %v4614, 32
    %v4622 = vpop.permute.xlu0 %4621
    %s4624 = scalar_lea.vmem [#allocation6], 10
    %4625 = vst.msk [vmem:[%s4624] sm:$0x3] %vm1923, %v4622
    %v4626 = vld [vmem:[%s533] sm:$0xff]
    %v4627 = vld [vmem:[%s1503] sm:$0xff]
    %4629 = vst [vmem:[#allocation1] ss:$4 sm:$0xff] %v4626
    %v4630 = vld.sshfl [vmem:[#allocation1] sm:$0xff pattern:$0x73625140]
    %v4631 = vld.sshfl [vmem:[#allocation1 + $0x8] sm:$0xff pattern:$0x73625140]
    %v4634 = vsel %vm559, %v4617, 0
    %4636 = vmatpush.msra.mxu0 0.0
    %4637 = vmatpush.msra.mxu0 0.0
    %4638 = vmatpush.msra.mxu0 0.0
    %4639 = vmatpush.msra.mxu0 0.0
    %4640 = vmatpush.msra.mxu0 0.0
    %4641 = vmatpush.msra.mxu0 0.0
    %4642 = vmatpush.msra.mxu0 0.0
    %4643 = vmatpush.msra.mxu0 0.0
    %4644 = vmatpush.msra.mxu0 %v4276
    %4645 = vmatpush.msra.mxu0 %v4274
    %4646 = vmatpush.msra.mxu0 %v4272
    %4647 = vmatpush.msra.mxu0 %v4270
    %4648 = vmatpush.msra.mxu0 %v4268
    %4649 = vmatpush.msra.mxu0 %v4266
    %4650 = vmatpush.msra.mxu0 %v4264
    %4651 = vmatpush.msra.mxu0 %v4262
    %4652 = vmatmul.f32.gmra.mxu0 %v4634
    %v4653 = vpop.f32.mrf.mxu0
    %v4654 = vadd.f32 %v4630, %v4653
    %4655 = vdwg.mxu0
    %4656 = vmatpush.msra.mxu0 0.0
    %4657 = vmatpush.msra.mxu0 0.0
    %4658 = vmatpush.msra.mxu0 0.0
    %4659 = vmatpush.msra.mxu0 0.0
    %4660 = vmatpush.msra.mxu0 0.0
    %4661 = vmatpush.msra.mxu0 0.0
    %4662 = vmatpush.msra.mxu0 0.0
    %4663 = vmatpush.msra.mxu0 0.0
    %4664 = vmatpush.msra.mxu0 %v4277
    %4665 = vmatpush.msra.mxu0 %v4275
    %4666 = vmatpush.msra.mxu0 %v4273
    %4667 = vmatpush.msra.mxu0 %v4271
    %4668 = vmatpush.msra.mxu0 %v4269
    %4669 = vmatpush.msra.mxu0 %v4267
    %4670 = vmatpush.msra.mxu0 %v4265
    %4671 = vmatpush.msra.mxu0 %v4263
    %4672 = vmatmul.f32.gmra.mxu0 %v4634
    %v4673 = vpop.f32.mrf.mxu0
    %v4674 = vadd.f32 %v4631, %v4673
    %4675 = vdwg.mxu0
    %4677 = vst [vmem:[#allocation1] ss:$4 sm:$0xff] %v4627
    %v4678 = vld.sshfl [vmem:[#allocation1 + $0x10] sm:$0xff pattern:$0x73625140]
    %v4679 = vld.sshfl [vmem:[#allocation1 + $0x18] sm:$0xff pattern:$0x73625140]
    %v4682 = vadd.f32 %v4654, %v4678
    %v4683 = vadd.f32 %v4674, %v4679
    %v4684 = vxor.u32 %v4682, 2147483648
    %v4685 = vxor.u32 %v4683, 2147483648
    %v4686 = vmul.f32 %v4684, 1.442695
    %v4687 = vpow.pop %v4686
    %v4688 = vmul.f32 %v4685, 1.442695
    %v4689 = vpow.pop %v4688
    %v4690 = vadd.f32 %v4687, 1.0
    %v4691 = vadd.f32 %v4689, 1.0
    %v4692 = vrcp.pop %v4690
    %v4693 = vmul.f32 %v4690, %v4692
    %v4694 = vsub.f32 1.0, %v4693
    %v4695 = vmul.f32 %v4692, %v4694
    %v4696 = vadd.f32 %v4692, %v4695
    %vm4697 = vweird.f32 %v4690
    %vm4698 = vweird.f32 %v4692
    %vm4699 = vmor %vm4697, %vm4698
    %v4700 = vsel %vm4699, %v4692, %v4696
    %v4701 = vand.u32 2147483647, %v4690
    %vm4702 = vcmp.eq.f32.partialorder %v4701, 8.507059e+37
    %v4703 = vand.u32 %v4690, 2147483648
    %v4704 = vor.u32 1.1754944e-38, %v4703
    %v4705 = vsel %vm4702, %v4704, %v4700
    %v4706 = vmul.f32 1.0, %v4705
    %v4707 = vrcp.pop %v4691
    %v4708 = vmul.f32 %v4691, %v4707
    %v4709 = vsub.f32 1.0, %v4708
    %v4710 = vmul.f32 %v4707, %v4709
    %v4711 = vadd.f32 %v4707, %v4710
    %vm4712 = vweird.f32 %v4691
    %vm4713 = vweird.f32 %v4707
    %vm4714 = vmor %vm4712, %vm4713
    %v4715 = vsel %vm4714, %v4707, %v4711
    %v4716 = vand.u32 2147483647, %v4691
    %vm4717 = vcmp.eq.f32.partialorder %v4716, 8.507059e+37
    %v4718 = vand.u32 %v4691, 2147483648
    %v4719 = vor.u32 1.1754944e-38, %v4718
    %v4720 = vsel %vm4717, %v4719, %v4715
    %v4721 = vmul.f32 1.0, %v4720
    %v4722 = vtanh.pop %v4683
    %v4723 = vmul.f32 %v4706, %v4612
    %v4724 = vmul.f32 %v4706, %v4722
    %4726 = vrot.lane.b32.xlu0 %v4724, 64
    %v4727 = vpop.permute.xlu0 %4726
    %v4729 = vadd.f32 %v4723, %v4727
    %v4730 = vtanh.pop %v4729
    %v4731 = vmul.f32 %v4721, %v4730
    %4733 = vrot.lane.b32.xlu0 %v4731, 64
    %v4734 = vpop.permute.xlu0 %4733
    %s4736 = scalar_lea.vmem [#allocation5], 6
    %4737 = vst.msk [vmem:[%s4736] sm:$0x3] %vm1923, %v4734
    %4738 = vrot.lane.b32.xlu0 %v4731, 32
    %v4739 = vpop.permute.xlu0 %4738
    %s4741 = scalar_lea.vmem [#allocation6], 8
    %4742 = vst.msk [vmem:[%s4741] sm:$0x3] %vm1923, %v4739
    %v4743 = vld [vmem:[%s1503] sm:$0xff]
    %v4744 = vld [vmem:[%s533] sm:$0xff]
    %4746 = vst [vmem:[#allocation1] ss:$4 sm:$0xff] %v4743
    %v4747 = vld.sshfl [vmem:[#allocation1] sm:$0xff pattern:$0x73625140]
    %v4748 = vld.sshfl [vmem:[#allocation1 + $0x8] sm:$0xff pattern:$0x73625140]
    %v4751 = vsel %vm559, %v4734, 0
    %4753 = vmatpush.msra.mxu0 0.0
    %4754 = vmatpush.msra.mxu0 0.0
    %4755 = vmatpush.msra.mxu0 0.0
    %4756 = vmatpush.msra.mxu0 0.0
    %4757 = vmatpush.msra.mxu0 0.0
    %4758 = vmatpush.msra.mxu0 0.0
    %4759 = vmatpush.msra.mxu0 0.0
    %4760 = vmatpush.msra.mxu0 0.0
    %4761 = vmatpush.msra.mxu0 %v4276
    %4762 = vmatpush.msra.mxu0 %v4274
    %4763 = vmatpush.msra.mxu0 %v4272
    %4764 = vmatpush.msra.mxu0 %v4270
    %4765 = vmatpush.msra.mxu0 %v4268
    %4766 = vmatpush.msra.mxu0 %v4266
    %4767 = vmatpush.msra.mxu0 %v4264
    %4768 = vmatpush.msra.mxu0 %v4262
    %4769 = vmatmul.f32.gmra.mxu0 %v4751
    %v4770 = vpop.f32.mrf.mxu0
    %v4771 = vadd.f32 %v4747, %v4770
    %4772 = vdwg.mxu0
    %4773 = vmatpush.msra.mxu0 0.0
    %4774 = vmatpush.msra.mxu0 0.0
    %4775 = vmatpush.msra.mxu0 0.0
    %4776 = vmatpush.msra.mxu0 0.0
    %4777 = vmatpush.msra.mxu0 0.0
    %4778 = vmatpush.msra.mxu0 0.0
    %4779 = vmatpush.msra.mxu0 0.0
    %4780 = vmatpush.msra.mxu0 0.0
    %4781 = vmatpush.msra.mxu0 %v4277
    %4782 = vmatpush.msra.mxu0 %v4275
    %4783 = vmatpush.msra.mxu0 %v4273
    %4784 = vmatpush.msra.mxu0 %v4271
    %4785 = vmatpush.msra.mxu0 %v4269
    %4786 = vmatpush.msra.mxu0 %v4267
    %4787 = vmatpush.msra.mxu0 %v4265
    %4788 = vmatpush.msra.mxu0 %v4263
    %4789 = vmatmul.f32.gmra.mxu0 %v4751
    %v4790 = vpop.f32.mrf.mxu0
    %v4791 = vadd.f32 %v4748, %v4790
    %4792 = vdwg.mxu0
    %4794 = vst [vmem:[#allocation1] ss:$4 sm:$0xff] %v4744
    %v4795 = vld.sshfl [vmem:[#allocation1 + $0x10] sm:$0xff pattern:$0x73625140]
    %v4796 = vld.sshfl [vmem:[#allocation1 + $0x18] sm:$0xff pattern:$0x73625140]
    %v4799 = vadd.f32 %v4771, %v4795
    %v4800 = vadd.f32 %v4791, %v4796
    %v4801 = vxor.u32 %v4799, 2147483648
    %v4802 = vxor.u32 %v4800, 2147483648
    %v4803 = vmul.f32 %v4801, 1.442695
    %v4804 = vpow.pop %v4803
    %v4805 = vmul.f32 %v4802, 1.442695
    %v4806 = vpow.pop %v4805
    %v4807 = vadd.f32 %v4804, 1.0
    %v4808 = vadd.f32 %v4806, 1.0
    %v4809 = vrcp.pop %v4807
    %v4810 = vmul.f32 %v4807, %v4809
    %v4811 = vsub.f32 1.0, %v4810
    %v4812 = vmul.f32 %v4809, %v4811
    %v4813 = vadd.f32 %v4809, %v4812
    %vm4814 = vweird.f32 %v4807
    %vm4815 = vweird.f32 %v4809
    %vm4816 = vmor %vm4814, %vm4815
    %v4817 = vsel %vm4816, %v4809, %v4813
    %v4818 = vand.u32 2147483647, %v4807
    %vm4819 = vcmp.eq.f32.partialorder %v4818, 8.507059e+37
    %v4820 = vand.u32 %v4807, 2147483648
    %v4821 = vor.u32 1.1754944e-38, %v4820
    %v4822 = vsel %vm4819, %v4821, %v4817
    %v4823 = vmul.f32 1.0, %v4822
    %v4824 = vrcp.pop %v4808
    %v4825 = vmul.f32 %v4808, %v4824
    %v4826 = vsub.f32 1.0, %v4825
    %v4827 = vmul.f32 %v4824, %v4826
    %v4828 = vadd.f32 %v4824, %v4827
    %vm4829 = vweird.f32 %v4808
    %vm4830 = vweird.f32 %v4824
    %vm4831 = vmor %vm4829, %vm4830
    %v4832 = vsel %vm4831, %v4824, %v4828
    %v4833 = vand.u32 2147483647, %v4808
    %vm4834 = vcmp.eq.f32.partialorder %v4833, 8.507059e+37
    %v4835 = vand.u32 %v4808, 2147483648
    %v4836 = vor.u32 1.1754944e-38, %v4835
    %v4837 = vsel %vm4834, %v4836, %v4832
    %v4838 = vmul.f32 1.0, %v4837
    %v4839 = vtanh.pop %v4800
    %v4840 = vmul.f32 %v4823, %v4729
    %v4841 = vmul.f32 %v4823, %v4839
    %4843 = vrot.lane.b32.xlu0 %v4841, 64
    %v4844 = vpop.permute.xlu0 %4843
    %v4846 = vadd.f32 %v4840, %v4844
    %v4847 = vtanh.pop %v4846
    %v4848 = vmul.f32 %v4838, %v4847
    %4850 = vrot.lane.b32.xlu0 %v4848, 64
    %v4851 = vpop.permute.xlu0 %4850
    %s4853 = scalar_lea.vmem [#allocation5], 8
    %4854 = vst.msk [vmem:[%s4853] sm:$0x3] %vm1923, %v4851
    %4855 = vrot.lane.b32.xlu0 %v4848, 32
    %v4856 = vpop.permute.xlu0 %4855
    %s4858 = scalar_lea.vmem [#allocation6], 6
    %4859 = vst.msk [vmem:[%s4858] sm:$0x3] %vm1923, %v4856
    %v4860 = vld [vmem:[%s1601] sm:$0xff]
    %v4861 = vld [vmem:[%s435] sm:$0xff]
    %4863 = vst [vmem:[#allocation1] ss:$4 sm:$0xff] %v4860
    %v4864 = vld.sshfl [vmem:[#allocation1] sm:$0xff pattern:$0x73625140]
    %v4865 = vld.sshfl [vmem:[#allocation1 + $0x8] sm:$0xff pattern:$0x73625140]
    %v4868 = vsel %vm559, %v4851, 0
    %4870 = vmatpush.msra.mxu0 0.0
    %4871 = vmatpush.msra.mxu0 0.0
    %4872 = vmatpush.msra.mxu0 0.0
    %4873 = vmatpush.msra.mxu0 0.0
    %4874 = vmatpush.msra.mxu0 0.0
    %4875 = vmatpush.msra.mxu0 0.0
    %4876 = vmatpush.msra.mxu0 0.0
    %4877 = vmatpush.msra.mxu0 0.0
    %4878 = vmatpush.msra.mxu0 %v4276
    %4879 = vmatpush.msra.mxu0 %v4274
    %4880 = vmatpush.msra.mxu0 %v4272
    %4881 = vmatpush.msra.mxu0 %v4270
    %4882 = vmatpush.msra.mxu0 %v4268
    %4883 = vmatpush.msra.mxu0 %v4266
    %4884 = vmatpush.msra.mxu0 %v4264
    %4885 = vmatpush.msra.mxu0 %v4262
    %4886 = vmatmul.f32.gmra.mxu0 %v4868
    %v4887 = vpop.f32.mrf.mxu0
    %v4888 = vadd.f32 %v4864, %v4887
    %4889 = vdwg.mxu0
    %4890 = vmatpush.msra.mxu0 0.0
    %4891 = vmatpush.msra.mxu0 0.0
    %4892 = vmatpush.msra.mxu0 0.0
    %4893 = vmatpush.msra.mxu0 0.0
    %4894 = vmatpush.msra.mxu0 0.0
    %4895 = vmatpush.msra.mxu0 0.0
    %4896 = vmatpush.msra.mxu0 0.0
    %4897 = vmatpush.msra.mxu0 0.0
    %4898 = vmatpush.msra.mxu0 %v4277
    %4899 = vmatpush.msra.mxu0 %v4275
    %4900 = vmatpush.msra.mxu0 %v4273
    %4901 = vmatpush.msra.mxu0 %v4271
    %4902 = vmatpush.msra.mxu0 %v4269
    %4903 = vmatpush.msra.mxu0 %v4267
    %4904 = vmatpush.msra.mxu0 %v4265
    %4905 = vmatpush.msra.mxu0 %v4263
    %4906 = vmatmul.f32.gmra.mxu0 %v4868
    %v4907 = vpop.f32.mrf.mxu0
    %v4908 = vadd.f32 %v4865, %v4907
    %4909 = vdwg.mxu0
    %4911 = vst [vmem:[#allocation1] ss:$4 sm:$0xff] %v4861
    %v4912 = vld.sshfl [vmem:[#allocation1 + $0x10] sm:$0xff pattern:$0x73625140]
    %v4913 = vld.sshfl [vmem:[#allocation1 + $0x18] sm:$0xff pattern:$0x73625140]
    %v4916 = vadd.f32 %v4888, %v4912
    %v4917 = vadd.f32 %v4908, %v4913
    %v4918 = vxor.u32 %v4916, 2147483648
    %v4919 = vxor.u32 %v4917, 2147483648
    %v4920 = vmul.f32 %v4918, 1.442695
    %v4921 = vpow.pop %v4920
    %v4922 = vmul.f32 %v4919, 1.442695
    %v4923 = vpow.pop %v4922
    %v4924 = vadd.f32 %v4921, 1.0
    %v4925 = vadd.f32 %v4923, 1.0
    %v4926 = vrcp.pop %v4924
    %v4927 = vmul.f32 %v4924, %v4926
    %v4928 = vsub.f32 1.0, %v4927
    %v4929 = vmul.f32 %v4926, %v4928
    %v4930 = vadd.f32 %v4926, %v4929
    %vm4931 = vweird.f32 %v4924
    %vm4932 = vweird.f32 %v4926
    %vm4933 = vmor %vm4931, %vm4932
    %v4934 = vsel %vm4933, %v4926, %v4930
    %v4935 = vand.u32 2147483647, %v4924
    %vm4936 = vcmp.eq.f32.partialorder %v4935, 8.507059e+37
    %v4937 = vand.u32 %v4924, 2147483648
    %v4938 = vor.u32 1.1754944e-38, %v4937
    %v4939 = vsel %vm4936, %v4938, %v4934
    %v4940 = vmul.f32 1.0, %v4939
    %v4941 = vrcp.pop %v4925
    %v4942 = vmul.f32 %v4925, %v4941
    %v4943 = vsub.f32 1.0, %v4942
    %v4944 = vmul.f32 %v4941, %v4943
    %v4945 = vadd.f32 %v4941, %v4944
    %vm4946 = vweird.f32 %v4925
    %vm4947 = vweird.f32 %v4941
    %vm4948 = vmor %vm4946, %vm4947
    %v4949 = vsel %vm4948, %v4941, %v4945
    %v4950 = vand.u32 2147483647, %v4925
    %vm4951 = vcmp.eq.f32.partialorder %v4950, 8.507059e+37
    %v4952 = vand.u32 %v4925, 2147483648
    %v4953 = vor.u32 1.1754944e-38, %v4952
    %v4954 = vsel %vm4951, %v4953, %v4949
    %v4955 = vmul.f32 1.0, %v4954
    %v4956 = vtanh.pop %v4917
    %v4957 = vmul.f32 %v4940, %v4846
    %v4958 = vmul.f32 %v4940, %v4956
    %4960 = vrot.lane.b32.xlu0 %v4958, 64
    %v4961 = vpop.permute.xlu0 %4960
    %v4963 = vadd.f32 %v4957, %v4961
    %v4964 = vtanh.pop %v4963
    %v4965 = vmul.f32 %v4955, %v4964
    %4967 = vrot.lane.b32.xlu0 %v4965, 64
    %v4968 = vpop.permute.xlu0 %4967
    %s4970 = scalar_lea.vmem [#allocation5], 10
    %4971 = vst.msk [vmem:[%s4970] sm:$0x3] %vm1923, %v4968
    %4972 = vrot.lane.b32.xlu0 %v4965, 32
    %v4973 = vpop.permute.xlu0 %4972
    %s4975 = scalar_lea.vmem [#allocation6], 4
    %4976 = vst.msk [vmem:[%s4975] sm:$0x3] %vm1923, %v4973
    %v4977 = vld [vmem:[%s1699] sm:$0xff]
    %v4978 = vld [vmem:[%s337] sm:$0xff]
    %4980 = vst [vmem:[#allocation1] ss:$4 sm:$0xff] %v4977
    %v4981 = vld.sshfl [vmem:[#allocation1] sm:$0xff pattern:$0x73625140]
    %v4982 = vld.sshfl [vmem:[#allocation1 + $0x8] sm:$0xff pattern:$0x73625140]
    %v4985 = vsel %vm559, %v4968, 0
    %4987 = vmatpush.msra.mxu0 0.0
    %4988 = vmatpush.msra.mxu0 0.0
    %4989 = vmatpush.msra.mxu0 0.0
    %4990 = vmatpush.msra.mxu0 0.0
    %4991 = vmatpush.msra.mxu0 0.0
    %4992 = vmatpush.msra.mxu0 0.0
    %4993 = vmatpush.msra.mxu0 0.0
    %4994 = vmatpush.msra.mxu0 0.0
    %4995 = vmatpush.msra.mxu0 %v4276
    %4996 = vmatpush.msra.mxu0 %v4274
    %4997 = vmatpush.msra.mxu0 %v4272
    %4998 = vmatpush.msra.mxu0 %v4270
    %4999 = vmatpush.msra.mxu0 %v4268
    %5000 = vmatpush.msra.mxu0 %v4266
    %5001 = vmatpush.msra.mxu0 %v4264
    %5002 = vmatpush.msra.mxu0 %v4262
    %5003 = vmatmul.f32.gmra.mxu0 %v4985
    %v5004 = vpop.f32.mrf.mxu0
    %v5005 = vadd.f32 %v4981, %v5004
    %5006 = vdwg.mxu0
    %5007 = vmatpush.msra.mxu0 0.0
    %5008 = vmatpush.msra.mxu0 0.0
    %5009 = vmatpush.msra.mxu0 0.0
    %5010 = vmatpush.msra.mxu0 0.0
    %5011 = vmatpush.msra.mxu0 0.0
    %5012 = vmatpush.msra.mxu0 0.0
    %5013 = vmatpush.msra.mxu0 0.0
    %5014 = vmatpush.msra.mxu0 0.0
    %5015 = vmatpush.msra.mxu0 %v4277
    %5016 = vmatpush.msra.mxu0 %v4275
    %5017 = vmatpush.msra.mxu0 %v4273
    %5018 = vmatpush.msra.mxu0 %v4271
    %5019 = vmatpush.msra.mxu0 %v4269
    %5020 = vmatpush.msra.mxu0 %v4267
    %5021 = vmatpush.msra.mxu0 %v4265
    %5022 = vmatpush.msra.mxu0 %v4263
    %5023 = vmatmul.f32.gmra.mxu0 %v4985
    %v5024 = vpop.f32.mrf.mxu0
    %v5025 = vadd.f32 %v4982, %v5024
    %5026 = vdwg.mxu0
    %5028 = vst [vmem:[#allocation1] ss:$4 sm:$0xff] %v4978
    %v5029 = vld.sshfl [vmem:[#allocation1 + $0x10] sm:$0xff pattern:$0x73625140]
    %v5030 = vld.sshfl [vmem:[#allocation1 + $0x18] sm:$0xff pattern:$0x73625140]
    %v5033 = vadd.f32 %v5005, %v5029
    %v5034 = vadd.f32 %v5025, %v5030
    %v5035 = vxor.u32 %v5033, 2147483648
    %v5036 = vxor.u32 %v5034, 2147483648
    %v5037 = vmul.f32 %v5035, 1.442695
    %v5038 = vpow.pop %v5037
    %v5039 = vmul.f32 %v5036, 1.442695
    %v5040 = vpow.pop %v5039
    %v5041 = vadd.f32 %v5038, 1.0
    %v5042 = vadd.f32 %v5040, 1.0
    %v5043 = vrcp.pop %v5041
    %v5044 = vmul.f32 %v5041, %v5043
    %v5045 = vsub.f32 1.0, %v5044
    %v5046 = vmul.f32 %v5043, %v5045
    %v5047 = vadd.f32 %v5043, %v5046
    %vm5048 = vweird.f32 %v5041
    %vm5049 = vweird.f32 %v5043
    %vm5050 = vmor %vm5048, %vm5049
    %v5051 = vsel %vm5050, %v5043, %v5047
    %v5052 = vand.u32 2147483647, %v5041
    %vm5053 = vcmp.eq.f32.partialorder %v5052, 8.507059e+37
    %v5054 = vand.u32 %v5041, 2147483648
    %v5055 = vor.u32 1.1754944e-38, %v5054
    %v5056 = vsel %vm5053, %v5055, %v5051
    %v5057 = vmul.f32 1.0, %v5056
    %v5058 = vrcp.pop %v5042
    %v5059 = vmul.f32 %v5042, %v5058
    %v5060 = vsub.f32 1.0, %v5059
    %v5061 = vmul.f32 %v5058, %v5060
    %v5062 = vadd.f32 %v5058, %v5061
    %vm5063 = vweird.f32 %v5042
    %vm5064 = vweird.f32 %v5058
    %vm5065 = vmor %vm5063, %vm5064
    %v5066 = vsel %vm5065, %v5058, %v5062
    %v5067 = vand.u32 2147483647, %v5042
    %vm5068 = vcmp.eq.f32.partialorder %v5067, 8.507059e+37
    %v5069 = vand.u32 %v5042, 2147483648
    %v5070 = vor.u32 1.1754944e-38, %v5069
    %v5071 = vsel %vm5068, %v5070, %v5066
    %v5072 = vmul.f32 1.0, %v5071
    %v5073 = vtanh.pop %v5034
    %v5074 = vmul.f32 %v5057, %v4963
    %v5075 = vmul.f32 %v5057, %v5073
    %5077 = vrot.lane.b32.xlu0 %v5075, 64
    %v5078 = vpop.permute.xlu0 %5077
    %v5080 = vadd.f32 %v5074, %v5078
    %v5081 = vtanh.pop %v5080
    %v5082 = vmul.f32 %v5072, %v5081
    %5084 = vrot.lane.b32.xlu0 %v5082, 64
    %v5085 = vpop.permute.xlu0 %5084
    %s5087 = scalar_lea.vmem [#allocation5], 12
    %5088 = vst.msk [vmem:[%s5087] sm:$0x3] %vm1923, %v5085
    %5089 = vrot.lane.b32.xlu0 %v5082, 32
    %v5090 = vpop.permute.xlu0 %5089
    %s5092 = scalar_lea.vmem [#allocation6], 2
    %5093 = vst.msk [vmem:[%s5092] sm:$0x3] %vm1923, %v5090
    %v5094 = vld [vmem:[%s1797] sm:$0xff]
    %v5095 = vld [vmem:[#allocation2] sm:$0xff]
    %5097 = vst [vmem:[#allocation1] ss:$4 sm:$0xff] %v5094
    %v5098 = vld.sshfl [vmem:[#allocation1] sm:$0xff pattern:$0x73625140]
    %v5099 = vld.sshfl [vmem:[#allocation1 + $0x8] sm:$0xff pattern:$0x73625140]
    %v5102 = vsel %vm559, %v5085, 0
    %5104 = vmatpush.msra.mxu0 0.0
    %5105 = vmatpush.msra.mxu0 0.0
    %5106 = vmatpush.msra.mxu0 0.0
    %5107 = vmatpush.msra.mxu0 0.0
    %5108 = vmatpush.msra.mxu0 0.0
    %5109 = vmatpush.msra.mxu0 0.0
    %5110 = vmatpush.msra.mxu0 0.0
    %5111 = vmatpush.msra.mxu0 0.0
    %5112 = vmatpush.msra.mxu0 %v4276
    %5113 = vmatpush.msra.mxu0 %v4274
    %5114 = vmatpush.msra.mxu0 %v4272
    %5115 = vmatpush.msra.mxu0 %v4270
    %5116 = vmatpush.msra.mxu0 %v4268
    %5117 = vmatpush.msra.mxu0 %v4266
    %5118 = vmatpush.msra.mxu0 %v4264
    %5119 = vmatpush.msra.mxu0 %v4262
    %5120 = vmatmul.f32.gmra.mxu0 %v5102
    %v5121 = vpop.f32.mrf.mxu0
    %v5122 = vadd.f32 %v5098, %v5121
    %5123 = vdwg.mxu0
    %5124 = vmatpush.msra.mxu0 0.0
    %5125 = vmatpush.msra.mxu0 0.0
    %5126 = vmatpush.msra.mxu0 0.0
    %5127 = vmatpush.msra.mxu0 0.0
    %5128 = vmatpush.msra.mxu0 0.0
    %5129 = vmatpush.msra.mxu0 0.0
    %5130 = vmatpush.msra.mxu0 0.0
    %5131 = vmatpush.msra.mxu0 0.0
    %5132 = vmatpush.msra.mxu0 %v4277
    %5133 = vmatpush.msra.mxu0 %v4275
    %5134 = vmatpush.msra.mxu0 %v4273
    %5135 = vmatpush.msra.mxu0 %v4271
    %5136 = vmatpush.msra.mxu0 %v4269
    %5137 = vmatpush.msra.mxu0 %v4267
    %5138 = vmatpush.msra.mxu0 %v4265
    %5139 = vmatpush.msra.mxu0 %v4263
    %5140 = vmatmul.f32.gmra.mxu0 %v5102
    %v5141 = vpop.f32.mrf.mxu0
    %v5142 = vadd.f32 %v5099, %v5141
    %5143 = vdwg.mxu0
    %5145 = vst [vmem:[#allocation1] ss:$4 sm:$0xff] %v5095
    %v5146 = vld.sshfl [vmem:[#allocation1 + $0x10] sm:$0xff pattern:$0x73625140]
    %v5147 = vld.sshfl [vmem:[#allocation1 + $0x18] sm:$0xff pattern:$0x73625140]
    %v5150 = vadd.f32 %v5122, %v5146
    %v5151 = vadd.f32 %v5142, %v5147
    %v5152 = vxor.u32 %v5150, 2147483648
    %v5153 = vxor.u32 %v5151, 2147483648
    %v5154 = vmul.f32 %v5152, 1.442695
    %v5155 = vpow.pop %v5154
    %v5156 = vmul.f32 %v5153, 1.442695
    %v5157 = vpow.pop %v5156
    %v5158 = vadd.f32 %v5155, 1.0
    %v5159 = vadd.f32 %v5157, 1.0
    %v5160 = vrcp.pop %v5158
    %v5161 = vmul.f32 %v5158, %v5160
    %v5162 = vsub.f32 1.0, %v5161
    %v5163 = vmul.f32 %v5160, %v5162
    %v5164 = vadd.f32 %v5160, %v5163
    %vm5165 = vweird.f32 %v5158
    %vm5166 = vweird.f32 %v5160
    %vm5167 = vmor %vm5165, %vm5166
    %v5168 = vsel %vm5167, %v5160, %v5164
    %v5169 = vand.u32 2147483647, %v5158
    %vm5170 = vcmp.eq.f32.partialorder %v5169, 8.507059e+37
    %v5171 = vand.u32 %v5158, 2147483648
    %v5172 = vor.u32 1.1754944e-38, %v5171
    %v5173 = vsel %vm5170, %v5172, %v5168
    %v5174 = vmul.f32 1.0, %v5173
    %v5175 = vrcp.pop %v5159
    %v5176 = vmul.f32 %v5159, %v5175
    %v5177 = vsub.f32 1.0, %v5176
    %v5178 = vmul.f32 %v5175, %v5177
    %v5179 = vadd.f32 %v5175, %v5178
    %vm5180 = vweird.f32 %v5159
    %vm5181 = vweird.f32 %v5175
    %vm5182 = vmor %vm5180, %vm5181
    %v5183 = vsel %vm5182, %v5175, %v5179
    %v5184 = vand.u32 2147483647, %v5159
    %vm5185 = vcmp.eq.f32.partialorder %v5184, 8.507059e+37
    %v5186 = vand.u32 %v5159, 2147483648
    %v5187 = vor.u32 1.1754944e-38, %v5186
    %v5188 = vsel %vm5185, %v5187, %v5183
    %v5189 = vmul.f32 1.0, %v5188
    %v5190 = vtanh.pop %v5151
    %v5191 = vmul.f32 %v5174, %v5080
    %v5192 = vmul.f32 %v5174, %v5190
    %5194 = vrot.lane.b32.xlu0 %v5192, 64
    %v5195 = vpop.permute.xlu0 %5194
    %v5197 = vadd.f32 %v5191, %v5195
    %v5198 = vtanh.pop %v5197
    %v5199 = vmul.f32 %v5189, %v5198
    %5201 = vrot.lane.b32.xlu0 %v5199, 64
    %v5202 = vpop.permute.xlu0 %5201
    %s5204 = scalar_lea.vmem [#allocation5], 14
    %5205 = vst.msk [vmem:[%s5204] sm:$0x3] %vm1923, %v5202
    %5206 = vrot.lane.b32.xlu0 %v5199, 32
    %v5207 = vpop.permute.xlu0 %5206
    %5209 = vst.msk [vmem:[#allocation6] sm:$0x3] %vm1923, %v5207
    %v5210 = vld [vmem:[#allocation5] sm:$0x3]
    %v5211 = vld [vmem:[#allocation5 + $0x2] sm:$0x3]
    %v5212 = vld [vmem:[#allocation5 + $0x4] sm:$0x3]
    %v5213 = vld [vmem:[#allocation5 + $0x6] sm:$0x3]
    %v5214 = vld [vmem:[#allocation5 + $0x8] sm:$0x3]
    %v5215 = vld [vmem:[#allocation5 + $0xa] sm:$0x3]
    %v5216 = vld [vmem:[#allocation5 + $0xc] sm:$0x3]
    %v5217 = vld [vmem:[#allocation5 + $0xe] sm:$0x3]
    %v5218 = vld [vmem:[#allocation6] sm:$0x3]
    %v5219 = vld [vmem:[#allocation6 + $0x2] sm:$0x3]
    %v5220 = vld [vmem:[#allocation6 + $0x4] sm:$0x3]
    %v5221 = vld [vmem:[#allocation6 + $0x6] sm:$0x3]
    %v5222 = vld [vmem:[#allocation6 + $0x8] sm:$0x3]
    %v5223 = vld [vmem:[#allocation6 + $0xa] sm:$0x3]
    %v5224 = vld [vmem:[#allocation6 + $0xc] sm:$0x3]
    %v5225 = vld [vmem:[#allocation6 + $0xe] sm:$0x3]
    %v5226 = vld [vmem:[%s12] sm:$0x1]
    %v5228 = vperm.slane %v5226, 0
    %v5230 = vmul.f32 %v5210, %v5228
    %v5231 = vmul.f32 %v5211, %v5228
    %v5232 = vmul.f32 %v5212, %v5228
    %v5233 = vmul.f32 %v5213, %v5228
    %v5234 = vmul.f32 %v5214, %v5228
    %v5235 = vmul.f32 %v5215, %v5228
    %v5236 = vmul.f32 %v5216, %v5228
    %v5237 = vmul.f32 %v5217, %v5228
    %v5238 = vsel %vm1923, %v5230, 0.0
    %5239 = vadd.xlane.f32.xlu0 %v5238
    %v5240 = vpop.xlane.xlu0 %5239
    %v5241 = vsel %vm1923, %v5231, 0.0
    %5242 = vadd.xlane.f32.xlu0 %v5241
    %v5243 = vpop.xlane.xlu0 %5242
    %v5244 = vsel %vm1923, %v5232, 0.0
    %5245 = vadd.xlane.f32.xlu0 %v5244
    %v5246 = vpop.xlane.xlu0 %5245
    %v5247 = vsel %vm1923, %v5233, 0.0
    %5248 = vadd.xlane.f32.xlu0 %v5247
    %v5249 = vpop.xlane.xlu0 %5248
    %v5250 = vsel %vm1923, %v5234, 0.0
    %5251 = vadd.xlane.f32.xlu0 %v5250
    %v5252 = vpop.xlane.xlu0 %5251
    %v5253 = vsel %vm1923, %v5235, 0.0
    %5254 = vadd.xlane.f32.xlu0 %v5253
    %v5255 = vpop.xlane.xlu0 %5254
    %v5256 = vsel %vm1923, %v5236, 0.0
    %5257 = vadd.xlane.f32.xlu0 %v5256
    %v5258 = vpop.xlane.xlu0 %5257
    %v5259 = vsel %vm1923, %v5237, 0.0
    %5260 = vadd.xlane.f32.xlu0 %v5259
    %v5261 = vpop.xlane.xlu0 %5260
    %5262 = vrot.lane.b32.xlu0 %v5228, 96
    %v5263 = vpop.permute.xlu0 %5262
    %v5265 = vmul.f32 %v5218, %v5263
    %v5266 = vmul.f32 %v5219, %v5263
    %v5267 = vmul.f32 %v5220, %v5263
    %v5268 = vmul.f32 %v5221, %v5263
    %v5269 = vmul.f32 %v5222, %v5263
    %v5270 = vmul.f32 %v5223, %v5263
    %v5271 = vmul.f32 %v5224, %v5263
    %v5272 = vmul.f32 %v5225, %v5263
    %v5273 = vsel %vm1923, %v5265, 0.0
    %5274 = vadd.xlane.f32.xlu0 %v5273
    %v5275 = vpop.xlane.xlu0 %5274
    %v5276 = vsel %vm1923, %v5266, 0.0
    %5277 = vadd.xlane.f32.xlu0 %v5276
    %v5278 = vpop.xlane.xlu0 %5277
    %v5279 = vsel %vm1923, %v5267, 0.0
    %5280 = vadd.xlane.f32.xlu0 %v5279
    %v5281 = vpop.xlane.xlu0 %5280
    %v5282 = vsel %vm1923, %v5268, 0.0
    %5283 = vadd.xlane.f32.xlu0 %v5282
    %v5284 = vpop.xlane.xlu0 %5283
    %v5285 = vsel %vm1923, %v5269, 0.0
    %5286 = vadd.xlane.f32.xlu0 %v5285
    %v5287 = vpop.xlane.xlu0 %5286
    %v5288 = vsel %vm1923, %v5270, 0.0
    %5289 = vadd.xlane.f32.xlu0 %v5288
    %v5290 = vpop.xlane.xlu0 %5289
    %v5291 = vsel %vm1923, %v5271, 0.0
    %5292 = vadd.xlane.f32.xlu0 %v5291
    %v5293 = vpop.xlane.xlu0 %5292
    %v5294 = vsel %vm1923, %v5272, 0.0
    %5295 = vadd.xlane.f32.xlu0 %v5294
    %v5296 = vpop.xlane.xlu0 %5295
    %v5297 = vadd.f32 %v5240, %v5275
    %v5298 = vadd.f32 %v5243, %v5278
    %v5299 = vadd.f32 %v5246, %v5281
    %v5300 = vadd.f32 %v5249, %v5284
    %v5301 = vadd.f32 %v5252, %v5287
    %v5302 = vadd.f32 %v5255, %v5290
    %v5303 = vadd.f32 %v5258, %v5293
    %v5304 = vadd.f32 %v5261, %v5296
    %v5313 = vlaneseq
    %v5314 = vand.u32 %v5313, 127
    %v5315 = vperm.slane %v5297, %v5314
    %v5316 = vperm.slane %v5298, %v5314
    %v5317 = vperm.slane %v5299, %v5314
    %v5318 = vperm.slane %v5300, %v5314
    %v5319 = vperm.slane %v5301, %v5314
    %v5320 = vperm.slane %v5302, %v5314
    %v5321 = vperm.slane %v5303, %v5314
    %v5322 = vperm.slane %v5304, %v5314
    %vm5323 = vcmask 1041409
    %v5324 = vsel %vm5323, %v5316, %v5315
    %vm5325 = vcmask 1042434
    %v5326 = vsel %vm5325, %v5317, %v5324
    %vm5327 = vcmask 1043459
    %v5328 = vsel %vm5327, %v5318, %v5326
    %vm5329 = vcmask 1044484
    %v5330 = vsel %vm5329, %v5319, %v5328
    %vm5331 = vcmask 1045509
    %v5332 = vsel %vm5331, %v5320, %v5330
    %vm5333 = vcmask 1046534
    %v5334 = vsel %vm5333, %v5321, %v5332
    %vm5335 = vcmask 1047559
    %v5336 = vsel %vm5335, %v5322, %v5334
    %5338 = vxpose.xlu0.b32.start [1/16] %v5336, 128
    %5339 = vxpose.xlu0.b32.cont [2/16] 0.0, 128
    %5340 = vxpose.xlu0.b32.cont [3/16] 0.0, 128
    %5341 = vxpose.xlu0.b32.cont [4/16] 0.0, 128
    %5342 = vxpose.xlu0.b32.cont [5/16] 0.0, 128
    %5343 = vxpose.xlu0.b32.cont [6/16] 0.0, 128
    %5344 = vxpose.xlu0.b32.cont [7/16] 0.0, 128
    %5345 = vxpose.xlu0.b32.cont [8/16] 0.0, 128
    %5346 = vxpose.xlu0.b32.cont [9/16] 0.0, 128
    %5347 = vxpose.xlu0.b32.cont [10/16] 0.0, 128
    %5348 = vxpose.xlu0.b32.cont [11/16] 0.0, 128
    %5349 = vxpose.xlu0.b32.cont [12/16] 0.0, 128
    %5350 = vxpose.xlu0.b32.cont [13/16] 0.0, 128
    %5351 = vxpose.xlu0.b32.cont [14/16] 0.0, 128
    %5352 = vxpose.xlu0.b32.cont [15/16] 0.0, 128
    %5353 = vxpose.xlu0.b32.end [16/16] 0.0, 128
    %v5354 = vpop.trf.xlu0
    %v5355 = vpop.trf.xlu0
    %v5356 = vpop.trf.xlu0
    %v5357 = vpop.trf.xlu0
    %v5358 = vpop.trf.xlu0
    %v5359 = vpop.trf.xlu0
    %v5360 = vpop.trf.xlu0
    %v5361 = vpop.trf.xlu0
    %v5362 = vpop.trf.xlu0
    %v5363 = vpop.trf.xlu0
    %v5364 = vpop.trf.xlu0
    %v5365 = vpop.trf.xlu0
    %v5366 = vpop.trf.xlu0
    %v5367 = vpop.trf.xlu0
    %v5368 = vpop.trf.xlu0
    %v5369 = vpop.trf.xlu0
    %v5370 = vld [vmem:[%s13] sm:$0xff]
    %v5371 = vld [vmem:[%s13 + $0x8] sm:$0xff]
    %v5372 = vld [vmem:[%s13 + $0x10] sm:$0xff]
    %v5373 = vld [vmem:[%s13 + $0x18] sm:$0xff]
    %v5374 = vld [vmem:[%s13 + $0x20] sm:$0xff]
    %v5375 = vld [vmem:[%s13 + $0x28] sm:$0xff]
    %v5376 = vld [vmem:[%s13 + $0x30] sm:$0xff]
    %v5377 = vld [vmem:[%s13 + $0x38] sm:$0xff]
    %5379 = vrot.lane.b32.xlu0 %v977, 64
    %v5380 = vpop.permute.xlu0 %5379
    %v5381 = vsel %vm559, %v5380, 0
    %5383 = vmatpush.msra.mxu0 0.0
    %5384 = vmatpush.msra.mxu0 0.0
    %5385 = vmatpush.msra.mxu0 0.0
    %5386 = vmatpush.msra.mxu0 0.0
    %5387 = vmatpush.msra.mxu0 0.0
    %5388 = vmatpush.msra.mxu0 0.0
    %5389 = vmatpush.msra.mxu0 0.0
    %5390 = vmatpush.msra.mxu0 0.0
    %5391 = vmatpush.msra.mxu0 %v5377
    %5392 = vmatpush.msra.mxu0 %v5376
    %5393 = vmatpush.msra.mxu0 %v5375
    %5394 = vmatpush.msra.mxu0 %v5374
    %5395 = vmatpush.msra.mxu0 %v5373
    %5396 = vmatpush.msra.mxu0 %v5372
    %5397 = vmatpush.msra.mxu0 %v5371
    %5398 = vmatpush.msra.mxu0 %v5370
    %5399 = vmatmul.f32.gmra.mxu0 %v5381
    %v5400 = vpop.f32.mrf.mxu0
    %v5401 = vadd.f32 0.0, %v5400
    %5402 = vdwg.mxu0
    %5404 = vset.pattern.permute.xlu0 0
    %5405 = vperm.xlu0 %5404, %v5401
    %v5406 = vpop.permute.xlu0 %5405
    %v5408 = vadd.f32 %v5354, %v5406
    %v5409 = vld [vmem:[#allocation7] sm:$0x1]
    %v5411 = vperm.slane %v5409, 0
    %5412 = vset.pattern.permute.xlu0 0
    %5413 = vperm.xlu0 %5412, %v5411
    %v5414 = vpop.permute.xlu0 %5413
    %v5416 = vadd.f32 %v5408, %v5414
    %v5417 = vld [vmem:[%s2] sm:$0x3]
    %vm5418 = vcmp.eq.f32.partialorder %v5417, 0.0
    %v5419 = vsel %vm5418, -1e+09, %v5416
    %vm5420 = vcmask 58368
    %v5421 = vsel %vm5420, %v5419, -inf
    %5422 = vmax.xlane.f32.xlu0 %v5421
    %v5423 = vpop.xlane.xlu0 %5422
    %v5424 = vsub.f32 %v5419, %v5423
    %v5425 = vmul.f32 %v5424, 1.442695
    %v5426 = vpow.pop %v5425
    %v5427 = vsel %vm5420, %v5426, 0.0
    %5428 = vadd.xlane.f32.xlu0 %v5427
    %v5429 = vpop.xlane.xlu0 %5428
    %v5430 = vrcp.pop %v5429
    %v5431 = vmul.f32 %v5429, %v5430
    %v5432 = vsub.f32 1.0, %v5431
    %v5433 = vmul.f32 %v5430, %v5432
    %v5434 = vadd.f32 %v5430, %v5433
    %vm5435 = vweird.f32 %v5429
    %vm5436 = vweird.f32 %v5430
    %vm5437 = vmor %vm5435, %vm5436
    %v5438 = vsel %vm5437, %v5430, %v5434
    %v5439 = vand.u32 2147483647, %v5429
    %vm5440 = vcmp.eq.f32.partialorder %v5439, 8.507059e+37
    %v5441 = vand.u32 %v5429, 2147483648
    %v5442 = vor.u32 1.1754944e-38, %v5441
    %v5443 = vsel %vm5440, %v5442, %v5438
    %v5444 = vmul.f32 %v5426, %v5443
    %5445 = vst.msk [vmem:[#allocation15] sm:$0x3] %vm5420, %v5444
    %5446 = vxpose.xlu0.b32.start [1/16] %v5444, 128
    %5447 = vxpose.xlu0.b32.cont [2/16] 0.0, 128
    %5448 = vxpose.xlu0.b32.cont [3/16] 0.0, 128
    %5449 = vxpose.xlu0.b32.cont [4/16] 0.0, 128
    %5450 = vxpose.xlu0.b32.cont [5/16] 0.0, 128
    %5451 = vxpose.xlu0.b32.cont [6/16] 0.0, 128
    %5452 = vxpose.xlu0.b32.cont [7/16] 0.0, 128
    %5453 = vxpose.xlu0.b32.cont [8/16] 0.0, 128
    %5454 = vxpose.xlu0.b32.cont [9/16] 0.0, 128
    %5455 = vxpose.xlu0.b32.cont [10/16] 0.0, 128
    %5456 = vxpose.xlu0.b32.cont [11/16] 0.0, 128
    %5457 = vxpose.xlu0.b32.cont [12/16] 0.0, 128
    %5458 = vxpose.xlu0.b32.cont [13/16] 0.0, 128
    %5459 = vxpose.xlu0.b32.cont [14/16] 0.0, 128
    %5460 = vxpose.xlu0.b32.cont [15/16] 0.0, 128
    %5461 = vxpose.xlu0.b32.end [16/16] 0.0, 128
    %v5462 = vpop.trf.xlu0
    %v5463 = vpop.trf.xlu0
    %v5464 = vpop.trf.xlu0
    %v5465 = vpop.trf.xlu0
    %v5466 = vpop.trf.xlu0
    %v5467 = vpop.trf.xlu0
    %v5468 = vpop.trf.xlu0
    %v5469 = vpop.trf.xlu0
    %v5470 = vpop.trf.xlu0
    %v5471 = vpop.trf.xlu0
    %v5472 = vpop.trf.xlu0
    %v5473 = vpop.trf.xlu0
    %v5474 = vpop.trf.xlu0
    %v5475 = vpop.trf.xlu0
    %v5476 = vpop.trf.xlu0
    %v5477 = vpop.trf.xlu0
    %v5478 = vperm.slane %v5462, 0
    %v5479 = vlaneseq
    %v5480 = vshrl.u32 %v5479, 7
    %5482 = vset.pattern.permute.xlu0 %v5480
    %5483 = vperm.xlu0 %5482, %v5478
    %v5484 = vpop.permute.xlu0 %5483
    %v5485 = vperm.slane %v5462, 1
    %v5486 = vlaneseq
    %v5487 = vshrl.u32 %v5486, 7
    %5489 = vset.pattern.permute.xlu0 %v5487
    %5490 = vperm.xlu0 %5489, %v5485
    %v5491 = vpop.permute.xlu0 %5490
    %v5492 = vperm.slane %v5462, 2
    %v5493 = vlaneseq
    %v5494 = vshrl.u32 %v5493, 7
    %5496 = vset.pattern.permute.xlu0 %v5494
    %5497 = vperm.xlu0 %5496, %v5492
    %v5498 = vpop.permute.xlu0 %5497
    %v5499 = vperm.slane %v5462, 3
    %v5500 = vlaneseq
    %v5501 = vshrl.u32 %v5500, 7
    %5503 = vset.pattern.permute.xlu0 %v5501
    %5504 = vperm.xlu0 %5503, %v5499
    %v5505 = vpop.permute.xlu0 %5504
    %v5506 = vperm.slane %v5462, 4
    %v5507 = vlaneseq
    %v5508 = vshrl.u32 %v5507, 7
    %5510 = vset.pattern.permute.xlu0 %v5508
    %5511 = vperm.xlu0 %5510, %v5506
    %v5512 = vpop.permute.xlu0 %5511
    %v5513 = vperm.slane %v5462, 5
    %v5514 = vlaneseq
    %v5515 = vshrl.u32 %v5514, 7
    %5517 = vset.pattern.permute.xlu0 %v5515
    %5518 = vperm.xlu0 %5517, %v5513
    %v5519 = vpop.permute.xlu0 %5518
    %v5520 = vperm.slane %v5462, 6
    %v5521 = vlaneseq
    %v5522 = vshrl.u32 %v5521, 7
    %5524 = vset.pattern.permute.xlu0 %v5522
    %5525 = vperm.xlu0 %5524, %v5520
    %v5526 = vpop.permute.xlu0 %5525
    %v5527 = vperm.slane %v5462, 7
    %v5528 = vlaneseq
    %v5529 = vshrl.u32 %v5528, 7
    %5531 = vset.pattern.permute.xlu0 %v5529
    %5532 = vperm.xlu0 %5531, %v5527
    %v5533 = vpop.permute.xlu0 %5532
    %v5534 = vmul.f32 %v5484, %v5210
    %v5535 = vmul.f32 %v5491, %v5211
    %v5536 = vmul.f32 %v5498, %v5212
    %v5537 = vmul.f32 %v5505, %v5213
    %v5538 = vmul.f32 %v5512, %v5214
    %v5539 = vmul.f32 %v5519, %v5215
    %v5540 = vmul.f32 %v5526, %v5216
    %v5541 = vmul.f32 %v5533, %v5217
    %v5542 = vsel %vm1923, %v5534, 0.0
    %v5543 = vsel %vm1923, %v5535, 0.0
    %v5544 = vadd.f32 %v5542, %v5543
    %v5545 = vsel %vm1923, %v5536, 0.0
    %v5546 = vadd.f32 %v5544, %v5545
    %v5547 = vsel %vm1923, %v5537, 0.0
    %v5548 = vadd.f32 %v5546, %v5547
    %v5549 = vsel %vm1923, %v5538, 0.0
    %v5550 = vadd.f32 %v5548, %v5549
    %v5551 = vsel %vm1923, %v5539, 0.0
    %v5552 = vadd.f32 %v5550, %v5551
    %v5553 = vsel %vm1923, %v5540, 0.0
    %v5554 = vadd.f32 %v5552, %v5553
    %v5555 = vsel %vm1923, %v5541, 0.0
    %v5556 = vadd.f32 %v5554, %v5555
    %v5557 = vmul.f32 %v5484, %v5218
    %v5558 = vmul.f32 %v5491, %v5219
    %v5559 = vmul.f32 %v5498, %v5220
    %v5560 = vmul.f32 %v5505, %v5221
    %v5561 = vmul.f32 %v5512, %v5222
    %v5562 = vmul.f32 %v5519, %v5223
    %v5563 = vmul.f32 %v5526, %v5224
    %v5564 = vmul.f32 %v5533, %v5225
    %v5565 = vsel %vm1923, %v5557, 0.0
    %v5566 = vsel %vm1923, %v5558, 0.0
    %v5567 = vadd.f32 %v5565, %v5566
    %v5568 = vsel %vm1923, %v5559, 0.0
    %v5569 = vadd.f32 %v5567, %v5568
    %v5570 = vsel %vm1923, %v5560, 0.0
    %v5571 = vadd.f32 %v5569, %v5570
    %v5572 = vsel %vm1923, %v5561, 0.0
    %v5573 = vadd.f32 %v5571, %v5572
    %v5574 = vsel %vm1923, %v5562, 0.0
    %v5575 = vadd.f32 %v5573, %v5574
    %v5576 = vsel %vm1923, %v5563, 0.0
    %v5577 = vadd.f32 %v5575, %v5576
    %v5578 = vsel %vm1923, %v5564, 0.0
    %v5579 = vadd.f32 %v5577, %v5578
    %v5580 = vld [vmem:[%s15] sm:$0xff]
    %v5581 = vld [vmem:[%s15 + $0x8] sm:$0xff]
    %v5582 = vld [vmem:[%s15 + $0x10] sm:$0xff]
    %v5583 = vld [vmem:[%s15 + $0x18] sm:$0xff]
    %v5584 = vld [vmem:[%s15 + $0x20] sm:$0xff]
    %v5585 = vld [vmem:[%s15 + $0x28] sm:$0xff]
    %v5586 = vld [vmem:[%s15 + $0x30] sm:$0xff]
    %v5587 = vld [vmem:[%s15 + $0x38] sm:$0xff]
    %v5589 = vsel %vm142, %v5579, 0
    %5591 = vmatpush.msra.mxu0 0.0
    %5592 = vmatpush.msra.mxu0 0.0
    %5593 = vmatpush.msra.mxu0 0.0
    %5594 = vmatpush.msra.mxu0 0.0
    %5595 = vmatpush.msra.mxu0 0.0
    %5596 = vmatpush.msra.mxu0 0.0
    %5597 = vmatpush.msra.mxu0 0.0
    %5598 = vmatpush.msra.mxu0 0.0
    %5599 = vmatpush.msra.mxu0 0.0
    %5600 = vmatpush.msra.mxu0 0.0
    %5601 = vmatpush.msra.mxu0 0.0
    %5602 = vmatpush.msra.mxu0 0.0
    %5603 = vmatpush.msra.mxu0 %v5587
    %5604 = vmatpush.msra.mxu0 %v5586
    %5605 = vmatpush.msra.mxu0 %v5585
    %5606 = vmatpush.msra.mxu0 %v5584
    %5607 = vmatmul.f32.gmra.mxu0 %v5589
    %v5608 = vpop.f32.mrf.mxu0
    %v5609 = vadd.f32 0.0, %v5608
    %5610 = vdwg.mxu0
    %v5612 = vsel %vm142, %v5556, 0
    %5614 = vmatpush.msra.mxu0 0.0
    %5615 = vmatpush.msra.mxu0 0.0
    %5616 = vmatpush.msra.mxu0 0.0
    %5617 = vmatpush.msra.mxu0 0.0
    %5618 = vmatpush.msra.mxu0 0.0
    %5619 = vmatpush.msra.mxu0 0.0
    %5620 = vmatpush.msra.mxu0 0.0
    %5621 = vmatpush.msra.mxu0 0.0
    %5622 = vmatpush.msra.mxu0 0.0
    %5623 = vmatpush.msra.mxu0 0.0
    %5624 = vmatpush.msra.mxu0 0.0
    %5625 = vmatpush.msra.mxu0 0.0
    %5626 = vmatpush.msra.mxu0 %v5583
    %5627 = vmatpush.msra.mxu0 %v5582
    %5628 = vmatpush.msra.mxu0 %v5581
    %5629 = vmatpush.msra.mxu0 %v5580
    %5630 = vmatmul.f32.gmra.mxu0 %v5612
    %v5631 = vpop.f32.mrf.mxu0
    %v5632 = vadd.f32 %v5609, %v5631
    %5633 = vdwg.mxu0
    %v5634 = vld [vmem:[%s16] sm:$0x1]
    %v5636 = vperm.slane %v5634, 0
    %v5638 = vadd.f32 %v5632, %v5636
    %v5639 = vmax.f32 %v5638, 0.0
    %v5640 = vld [vmem:[%s17] sm:$0xff]
    %v5641 = vld [vmem:[%s17 + $0x8] sm:$0xff]
    %v5642 = vld [vmem:[%s17 + $0x10] sm:$0xff]
    %v5643 = vld [vmem:[%s17 + $0x18] sm:$0xff]
    %v5644 = vld [vmem:[%s18] sm:$0x1]
    %v5646 = vperm.slane %v5644, 0
    %v5649 = vsel %vm142, %v5639, 0
    %5651 = vmatpush.msra.mxu0 0.0
    %5652 = vmatpush.msra.mxu0 0.0
    %5653 = vmatpush.msra.mxu0 0.0
    %5654 = vmatpush.msra.mxu0 0.0
    %5655 = vmatpush.msra.mxu0 0.0
    %5656 = vmatpush.msra.mxu0 0.0
    %5657 = vmatpush.msra.mxu0 0.0
    %5658 = vmatpush.msra.mxu0 0.0
    %5659 = vmatpush.msra.mxu0 0.0
    %5660 = vmatpush.msra.mxu0 0.0
    %5661 = vmatpush.msra.mxu0 0.0
    %5662 = vmatpush.msra.mxu0 0.0
    %5663 = vmatpush.msra.mxu0 %v5643
    %5664 = vmatpush.msra.mxu0 %v5642
    %5665 = vmatpush.msra.mxu0 %v5641
    %5666 = vmatpush.msra.mxu0 %v5640
    %5667 = vmatmul.f32.gmra.mxu0 %v5649
    %v5668 = vpop.f32.mrf.mxu0
    %v5669 = vadd.f32 %v5646, %v5668
    %5670 = vdwg.mxu0
    %vm5671 = vcmask 17408
    %5672 = vst.msk [vmem:[#allocation14] sm:$0x3] %vm5671, %v5669
    // Predicated region
    $region90: #{atae_lstm_forward.1} parent=1 // pred_check
      _
    $region91: #{atae_lstm_forward.1} parent=1 // pred_check_branch
      %5674 = sbr.rel (0) target = $region93
    $region92: #{atae_lstm_forward.1} parent=1 // pred_region
      %5676 = vsyncadd [#allocation10], 0
      %s5678 = sshll.u32 [#allocation14], 4
      %s5679 = int_to_ptr.vmem [resolvable:$true] %s5678
      %s5680 = sshll.u32 %s19, 4
      %s5681 = int_to_ptr.hbm [resolvable:$true] %s5680
      %5683 = dma.vmem_to_hbm [thread:$0]  %s5679, 32, %s5681, [#allocation10]
    $region93: #{atae_lstm_forward.1} parent=1 // pred_fallthru
      _
    // Predicated region
    $region94: #{atae_lstm_forward.1} parent=1 // pred_check
      _
    $region95: #{atae_lstm_forward.1} parent=1 // pred_check_branch
      %5685 = sbr.rel (0) target = $region97
    $region96: #{atae_lstm_forward.1} parent=1 // pred_region
      %5687 = vsyncadd [#allocation16], 0
      %s5689 = sshll.u32 [#allocation15], 4
      %s5690 = int_to_ptr.vmem [resolvable:$true] %s5689
      %s5691 = sshll.u32 %s20, 4
      %s5692 = int_to_ptr.hbm [resolvable:$true] %s5691
      %5694 = dma.vmem_to_hbm [thread:$0]  %s5690, 32, %s5692, [#allocation16]
    $region97: #{atae_lstm_forward.1} parent=1 // pred_fallthru
      _
    // Predicated region
    $region98: #{atae_lstm_forward.1} parent=1 // pred_check
      _
    $region99: #{atae_lstm_forward.1} parent=1 // pred_check_branch
      %5696 = sbr.rel (0) target = $region101
    $region100: #{atae_lstm_forward.1} parent=1 // pred_region
      %5698 = dma.done [#allocation10], 32
    $region101: #{atae_lstm_forward.1} parent=1 // pred_fallthru
      _
    // Predicated region
    $region102: #{atae_lstm_forward.1} parent=1 // pred_check
      _
    $region103: #{atae_lstm_forward.1} parent=1 // pred_check_branch
      %5700 = sbr.rel (0) target = $region105
    $region104: #{atae_lstm_forward.1} parent=1 // pred_region
      %5702 = dma.done [#allocation16], 32
    $region105: #{atae_lstm_forward.1} parent=1 // pred_fallthru
      _
    %5703 = vsyncpa [#allocation9], 1
    %5704 = vsyncpa [#allocation12], 1
    %5705 = vsyncpa [#allocation10], 1
    %5706 = vsyncpa [#allocation16], 1

</llo_original>
